<compile_context>
chip_gen: v6e
topology: v6e:2x2x1
jax: 0.10.0
libtpu: 0.0.40
codegen_flags: <defaults>
</compile_context>

<pallas_src>
import functools

import jax
import jax.numpy as jnp
from jax.experimental import pallas as pl
from jax.experimental.pallas import tpu as pltpu


def _gru_fc_kernel(x_ref, wih0_ref, wihr_ref, whh_ref, bgx_ref, bhn_ref,
                   wfc_ref, bfc_ref, out_ref, *, L, T, Bp, H, G):
    """3-layer GRU (wavefront schedule) + final Linear in one kernel invocation.

    Gate layout: every (.., 3*G) tensor holds gate g in columns [g*G, g*G+H),
    remaining lanes zero.  G = 128 so each gate starts at lane 0 of its vreg.

    x_ref   : (T*Bp, D)     time-major flattened input (row = t*Bp + b), batch padded
    wih0_ref: (D, 3G)       layer-0 input weights
    wihr_ref: (L-1, G, 3G)  layers 1.. input weights (K padded to G, zero rows)
    whh_ref : (L, G, 3G)    hidden weights (K padded to G)
    bgx_ref : (L, 1, 3G)    b_ih with b_hh folded into the r,z slots
    bhn_ref : (L, 1, 3G)    b_hh, n slot only (must stay inside the r*(...) term)
    wfc_ref : (G, O), bfc_ref: (1, O)
    out_ref : (Bp, O)
    """
    # Hoisted layer-0 input projection over the whole sequence (off the serial path).
    gx0 = jnp.dot(x_ref[...], wih0_ref[...],
                  preferred_element_type=jnp.float32) + bgx_ref[0]        # (T*Bp, 3G)

    # Hoist per-layer weight reads and bias broadcasts out of the unrolled loop.
    whh = [whh_ref[l] for l in range(L)]                                  # (G, 3G)
    wih = [None] + [wihr_ref[l - 1] for l in range(1, L)]                 # (G, 3G)
    bgx_b = [None] + [jnp.broadcast_to(bgx_ref[l], (Bp, 3 * G))
                      for l in range(1, L)]
    bhn_b = [jnp.broadcast_to(bhn_ref[l], (Bp, 3 * G)) for l in range(L)]

    def cell(gx_t, gh, h_prev):
        # PyTorch gate order r, z, n; each gate in its own 128-lane block.
        r = jax.nn.sigmoid(gx_t[:, 0:G] + gh[:, 0:G])
        z = jax.nn.sigmoid(gx_t[:, G:2 * G] + gh[:, G:2 * G])
        n = jnp.tanh(gx_t[:, 2 * G:3 * G] + r * gh[:, 2 * G:3 * G])
        return n + z * (h_prev - n)                                       # (1-z)*n + z*h

    h = [jnp.zeros((Bp, G), jnp.float32) for _ in range(L)]               # h0 = 0
    prev = [None] * L       # layer-l output produced at the previous wavefront step

    # Layer-time wavefront: at step s compute h_l[t] for every layer with t = s - l
    # in range.  Cells within a step are independent -> their matmuls pipeline.
    for s in range(T + L - 1):
        new = [None] * L
        for l in range(L):
            t = s - l
            if not (0 <= t < T):
                continue
            if l == 0:
                gx_t = gx0[t * Bp:(t + 1) * Bp, :]                        # aligned slice
            else:
                gx_t = jnp.dot(prev[l - 1], wih[l],
                               preferred_element_type=jnp.float32) + bgx_b[l]
            gh = jnp.dot(h[l], whh[l],
                         preferred_element_type=jnp.float32) + bhn_b[l]
            h_new = cell(gx_t, gh, h[l])
            new[l] = h_new
            h[l] = h_new
        prev = new

    # Fused fc on out[:, -1, :] of the last layer (== final h of layer L-1).
    out_ref[...] = (jnp.dot(h[L - 1], wfc_ref[...],
                            preferred_element_type=jnp.float32) + bfc_ref[...])


def simple_rnn_forward(x, params):
    """simpleRNN forward: multi-layer GRU (batch_first) + Linear on last step.

    x: (B, T, D) float32.  Returns (B, output_dim) float32.
    """
    B, T, D = x.shape
    layer_params = params["gru"]        # list of (w_ih, w_hh, b_ih, b_hh) PyTorch shapes
    fc_w, fc_b = params["fc"]           # (O, H), (O,)
    L = len(layer_params)
    H = layer_params[0][1].shape[1]     # w_hh: (3H, H)
    O = fc_w.shape[0]
    G = 128                             # gate lane stride: one vreg per gate
    SUB = 8
    Bp = ((B + SUB - 1) // SUB) * SUB   # batch padded to a full sublane tile

    # Time-major, batch-padded, flattened input: row index = t*Bp + b.
    x_tm = jnp.transpose(x, (1, 0, 2)).astype(jnp.float32)                 # (T, B, D)
    x_tm = jnp.pad(x_tm, ((0, 0), (0, Bp - B), (0, 0)))                    # (T, Bp, D)
    x_flat = x_tm.reshape(T * Bp, D)

    def pack_gate_cols(w_t, k_pad):
        # w_t: (K, 3H) [r|z|n] contiguous -> (k_pad, 3G), gate g at cols [g*G, g*G+H).
        K = w_t.shape[0]
        out = jnp.zeros((k_pad, 3 * G), jnp.float32)
        for g in range(3):
            out = out.at[:K, g * G:g * G + H].set(w_t[:, g * H:(g + 1) * H])
        return out

    def pack_gate_vec(b):
        out = jnp.zeros((3 * G,), jnp.float32)
        for g in range(3):
            out = out.at[g * G:g * G + H].set(b[g * H:(g + 1) * H])
        return out

    wih0 = pack_gate_cols(layer_params[0][0].T.astype(jnp.float32), D)     # (D, 3G)
    if L > 1:
        wihr = jnp.stack([pack_gate_cols(layer_params[l][0].T.astype(jnp.float32), G)
                          for l in range(1, L)])                           # (L-1, G, 3G)
    else:
        wihr = jnp.zeros((1, G, 3 * G), jnp.float32)                       # unused dummy
    whh = jnp.stack([pack_gate_cols(layer_params[l][1].T.astype(jnp.float32), G)
                     for l in range(L)])                                   # (L, G, 3G)

    # Bias pre-combination: fold b_hh into b_ih for the r,z slots; keep b_hh_n
    # separate (it must sit inside the r * (...) term).
    bgx_list, bhn_list = [], []
    for (_, _, b_ih, b_hh) in layer_params:
        b_gx = b_ih + jnp.concatenate([b_hh[:2 * H], jnp.zeros((H,), jnp.float32)])
        b_hn = jnp.concatenate([jnp.zeros((2 * H,), jnp.float32), b_hh[2 * H:]])
        bgx_list.append(pack_gate_vec(b_gx))
        bhn_list.append(pack_gate_vec(b_hn))
    bgx = jnp.stack(bgx_list)[:, None, :]                                  # (L, 1, 3G)
    bhn = jnp.stack(bhn_list)[:, None, :]                                  # (L, 1, 3G)

    wfc = jnp.zeros((G, O), jnp.float32).at[:H, :].set(fc_w.T.astype(jnp.float32))
    bfc = fc_b[None, :].astype(jnp.float32)

    kernel = functools.partial(_gru_fc_kernel, L=L, T=T, Bp=Bp, H=H, G=G)
    Lr = wihr.shape[0]

    # Total VMEM footprint ~1 MiB: fine on v5e/v6e/v7x scoped defaults.  If T*Bp
    # or H ever grow, add a time-chunk grid axis for the hoisted projection
    # before touching vmem_limit_bytes (see perf review, v7x note).
    out_p = pl.pallas_call(
        kernel,
        out_shape=jax.ShapeDtypeStruct((Bp, O), jnp.float32),
        grid_spec=pltpu.PrefetchScalarGridSpec(
            num_scalar_prefetch=0,
            grid=(1,),                                   # single step: no pipeline overhead
            in_specs=[
                pl.BlockSpec((T * Bp, D), lambda i: (0, 0)),        # x (time-major flat)
                pl.BlockSpec((D, 3 * G), lambda i: (0, 0)),         # W_ih layer 0
                pl.BlockSpec((Lr, G, 3 * G), lambda i: (0, 0, 0)),  # W_ih layers 1..
                pl.BlockSpec((L, G, 3 * G), lambda i: (0, 0, 0)),   # W_hh all layers
                pl.BlockSpec((L, 1, 3 * G), lambda i: (0, 0, 0)),   # combined gx bias
                pl.BlockSpec((L, 1, 3 * G), lambda i: (0, 0, 0)),   # b_hh (n slot only)
                pl.BlockSpec((G, O), lambda i: (0, 0)),             # fc weight
                pl.BlockSpec((1, O), lambda i: (0, 0)),             # fc bias
            ],
            out_specs=pl.BlockSpec((Bp, O), lambda i: (0, 0)),
        ),
        compiler_params=pltpu.CompilerParams(
            dimension_semantics=("arbitrary",)),
    )(x_flat, wih0, wihr, whh, bgx, bhn, wfc, bfc)

    return out_p[:B]


def _gru_ref(x, layer_params, fc_w, fc_b):
    """Pure-JAX reference matching torch.nn.GRU(batch_first=True) + Linear."""
    B, T, _ = x.shape
    h_seq = x
    for (w_ih, w_hh, b_ih, b_hh) in layer_params:
        H = w_hh.shape[1]
        h = jnp.zeros((B, H), jnp.float32)
        outs = []
        for t in range(T):
            xt = h_seq[:, t, :]
            gx = xt @ w_ih.T + b_ih
            gh = h @ w_hh.T + b_hh
            r = jax.nn.sigmoid(gx[:, :H] + gh[:, :H])
            z = jax.nn.sigmoid(gx[:, H:2 * H] + gh[:, H:2 * H])
            n = jnp.tanh(gx[:, 2 * H:] + r * gh[:, 2 * H:])
            h = (1.0 - z) * n + z * h
            outs.append(h)
        h_seq = jnp.stack(outs, axis=1)
    return h_seq[:, -1, :] @ fc_w.T + fc_b


if __name__ == "__main__":
    B, T, D, H, L, O = 2, 8, 16, 32, 3, 8   # batch, seq, input_dim, hidden, layers, output_dim

    key = jax.random.PRNGKey(0)
    keys = jax.random.split(key, 4 * L + 3)
    bound = 1.0 / float(jnp.sqrt(H))

    gru_params = []
    ki = 0
    for l in range(L):
        in_l = D if l == 0 else H
        w_ih = jax.random.uniform(keys[ki], (3 * H, in_l), jnp.float32, -bound, bound); ki += 1
        w_hh = jax.random.uniform(keys[ki], (3 * H, H), jnp.float32, -bound, bound); ki += 1
        b_ih = jax.random.uniform(keys[ki], (3 * H,), jnp.float32, -bound, bound); ki += 1
        b_hh = jax.random.uniform(keys[ki], (3 * H,), jnp.float32, -bound, bound); ki += 1
        gru_params.append((w_ih, w_hh, b_ih, b_hh))
    fc_w = jax.random.uniform(keys[ki], (O, H), jnp.float32, -bound, bound); ki += 1
    fc_b = jax.random.uniform(keys[ki], (O,), jnp.float32, -bound, bound); ki += 1

    x = jax.random.normal(keys[ki], (B, T, D), jnp.float32)

    params = {"gru": gru_params, "fc": (fc_w, fc_b)}
    out = simple_rnn_forward(x, params)
    out = jax.block_until_ready(out)

    ref = _gru_ref(x, gru_params, fc_w, fc_b)
    assert out.shape == (B, O)
    assert jnp.allclose(out, ref, atol=1e-4, rtol=1e-4), (out, ref)
    print("KERNEL_OK")
</pallas_src>

<mosaic_0001>
module attributes {stable_mosaic.version = 11 : i64} {
  func.func @_gru_fc_kernel(%arg0: i32, %arg1: memref<64x16xf32, #tpu.memory_space<vmem>>, %arg2: memref<16x384xf32, #tpu.memory_space<vmem>>, %arg3: memref<2x128x384xf32, #tpu.memory_space<vmem>>, %arg4: memref<3x128x384xf32, #tpu.memory_space<vmem>>, %arg5: memref<3x1x384xf32, #tpu.memory_space<vmem>>, %arg6: memref<3x1x384xf32, #tpu.memory_space<vmem>>, %arg7: memref<128x8xf32, #tpu.memory_space<vmem>>, %arg8: memref<1x8xf32, #tpu.memory_space<vmem>>, %arg9: memref<8x8xf32, #tpu.memory_space<vmem>>) attributes {dimension_semantics = [#tpu.dimension_semantics<arbitrary>], iteration_bounds = array<i64: 1>, scalar_prefetch = 0 : i64, scratch_operands = 0 : i64, tpu.core_type = #tpu.core_type<tc>, window_params = [{pipeline_mode = #tpu.pipeline_mode<synchronous>, transform_indices = @transform_0, window_bounds = array<i64: 64, 16>}, {pipeline_mode = #tpu.pipeline_mode<synchronous>, transform_indices = @transform_1, window_bounds = array<i64: 16, 384>}, {pipeline_mode = #tpu.pipeline_mode<synchronous>, transform_indices = @transform_2, window_bounds = array<i64: 2, 128, 384>}, {pipeline_mode = #tpu.pipeline_mode<synchronous>, transform_indices = @transform_3, window_bounds = array<i64: 3, 128, 384>}, {pipeline_mode = #tpu.pipeline_mode<synchronous>, transform_indices = @transform_4, window_bounds = array<i64: 3, 1, 384>}, {pipeline_mode = #tpu.pipeline_mode<synchronous>, transform_indices = @transform_5, window_bounds = array<i64: 3, 1, 384>}, {pipeline_mode = #tpu.pipeline_mode<synchronous>, transform_indices = @transform_6, window_bounds = array<i64: 128, 8>}, {pipeline_mode = #tpu.pipeline_mode<synchronous>, transform_indices = @transform_7, window_bounds = array<i64: 1, 8>}, {pipeline_mode = #tpu.pipeline_mode<synchronous>, transform_indices = @transform_8, window_bounds = array<i64: 8, 8>}]} {
    %c0 = arith.constant 0 : index
    %c0_0 = arith.constant 0 : index
    %0 = vector.load %arg1[%c0, %c0_0] : memref<64x16xf32, #tpu.memory_space<vmem>>, vector<64x16xf32>
    %c0_1 = arith.constant 0 : index
    %c0_2 = arith.constant 0 : index
    %1 = vector.load %arg2[%c0_1, %c0_2] : memref<16x384xf32, #tpu.memory_space<vmem>>, vector<16x384xf32>
    %cst = arith.constant dense<0.000000e+00> : vector<64x384xf32>
    %2 = tpu.matmul %0, %1, %cst {dimension_numbers = #tpu.dot_dimension_numbers<[1], [0], [0], [1], [0, 0, 1, 1], [], []>} : vector<64x16xf32>, vector<16x384xf32>, vector<64x384xf32> -> vector<64x384xf32>
    %c0_3 = arith.constant 0 : index
    %c0_4 = arith.constant 0 : index
    %c0_5 = arith.constant 0 : index
    %3 = vector.load %arg5[%c0_3, %c0_4, %c0_5] : memref<3x1x384xf32, #tpu.memory_space<vmem>>, vector<1x1x384xf32>
    %4 = vector.shape_cast %3 : vector<1x1x384xf32> to vector<1x384xf32>
    %5 = vector.broadcast %4 : vector<1x384xf32> to vector<64x384xf32>
    %6 = arith.addf %2, %5 : vector<64x384xf32>
    %c0_6 = arith.constant 0 : index
    %c0_7 = arith.constant 0 : index
    %c0_8 = arith.constant 0 : index
    %7 = vector.load %arg4[%c0_6, %c0_7, %c0_8] : memref<3x128x384xf32, #tpu.memory_space<vmem>>, vector<1x128x384xf32>
    %8 = vector.shape_cast %7 : vector<1x128x384xf32> to vector<128x384xf32>
    %c1 = arith.constant 1 : index
    %c0_9 = arith.constant 0 : index
    %c0_10 = arith.constant 0 : index
    %9 = vector.load %arg4[%c1, %c0_9, %c0_10] : memref<3x128x384xf32, #tpu.memory_space<vmem>>, vector<1x128x384xf32>
    %10 = vector.shape_cast %9 : vector<1x128x384xf32> to vector<128x384xf32>
    %c2 = arith.constant 2 : index
    %c0_11 = arith.constant 0 : index
    %c0_12 = arith.constant 0 : index
    %11 = vector.load %arg4[%c2, %c0_11, %c0_12] : memref<3x128x384xf32, #tpu.memory_space<vmem>>, vector<1x128x384xf32>
    %12 = vector.shape_cast %11 : vector<1x128x384xf32> to vector<128x384xf32>
    %c0_13 = arith.constant 0 : index
    %c0_14 = arith.constant 0 : index
    %c0_15 = arith.constant 0 : index
    %13 = vector.load %arg3[%c0_13, %c0_14, %c0_15] : memref<2x128x384xf32, #tpu.memory_space<vmem>>, vector<1x128x384xf32>
    %14 = vector.shape_cast %13 : vector<1x128x384xf32> to vector<128x384xf32>
    %c1_16 = arith.constant 1 : index
    %c0_17 = arith.constant 0 : index
    %c0_18 = arith.constant 0 : index
    %15 = vector.load %arg3[%c1_16, %c0_17, %c0_18] : memref<2x128x384xf32, #tpu.memory_space<vmem>>, vector<1x128x384xf32>
    %16 = vector.shape_cast %15 : vector<1x128x384xf32> to vector<128x384xf32>
    %c1_19 = arith.constant 1 : index
    %c0_20 = arith.constant 0 : index
    %c0_21 = arith.constant 0 : index
    %17 = vector.load %arg5[%c1_19, %c0_20, %c0_21] : memref<3x1x384xf32, #tpu.memory_space<vmem>>, vector<1x1x384xf32>
    %18 = vector.shape_cast %17 : vector<1x1x384xf32> to vector<1x384xf32>
    %19 = vector.shape_cast %18 : vector<1x384xf32> to vector<1x384xf32>
    %20 = vector.broadcast %19 : vector<1x384xf32> to vector<8x384xf32>
    %c2_22 = arith.constant 2 : index
    %c0_23 = arith.constant 0 : index
    %c0_24 = arith.constant 0 : index
    %21 = vector.load %arg5[%c2_22, %c0_23, %c0_24] : memref<3x1x384xf32, #tpu.memory_space<vmem>>, vector<1x1x384xf32>
    %22 = vector.shape_cast %21 : vector<1x1x384xf32> to vector<1x384xf32>
    %23 = vector.shape_cast %22 : vector<1x384xf32> to vector<1x384xf32>
    %24 = vector.broadcast %23 : vector<1x384xf32> to vector<8x384xf32>
    %c0_25 = arith.constant 0 : index
    %c0_26 = arith.constant 0 : index
    %c0_27 = arith.constant 0 : index
    %25 = vector.load %arg6[%c0_25, %c0_26, %c0_27] : memref<3x1x384xf32, #tpu.memory_space<vmem>>, vector<1x1x384xf32>
    %26 = vector.shape_cast %25 : vector<1x1x384xf32> to vector<1x384xf32>
    %27 = vector.shape_cast %26 : vector<1x384xf32> to vector<1x384xf32>
    %28 = vector.broadcast %27 : vector<1x384xf32> to vector<8x384xf32>
    %c1_28 = arith.constant 1 : index
    %c0_29 = arith.constant 0 : index
    %c0_30 = arith.constant 0 : index
    %29 = vector.load %arg6[%c1_28, %c0_29, %c0_30] : memref<3x1x384xf32, #tpu.memory_space<vmem>>, vector<1x1x384xf32>
    %30 = vector.shape_cast %29 : vector<1x1x384xf32> to vector<1x384xf32>
    %31 = vector.shape_cast %30 : vector<1x384xf32> to vector<1x384xf32>
    %32 = vector.broadcast %31 : vector<1x384xf32> to vector<8x384xf32>
    %c2_31 = arith.constant 2 : index
    %c0_32 = arith.constant 0 : index
    %c0_33 = arith.constant 0 : index
    %33 = vector.load %arg6[%c2_31, %c0_32, %c0_33] : memref<3x1x384xf32, #tpu.memory_space<vmem>>, vector<1x1x384xf32>
    %34 = vector.shape_cast %33 : vector<1x1x384xf32> to vector<1x384xf32>
    %35 = vector.shape_cast %34 : vector<1x384xf32> to vector<1x384xf32>
    %36 = vector.broadcast %35 : vector<1x384xf32> to vector<8x384xf32>
    %cst_34 = arith.constant 0.000000e+00 : f32
    %37 = vector.broadcast %cst_34 : f32 to vector<8x128xf32>
    %cst_35 = arith.constant 0.000000e+00 : f32
    %38 = vector.broadcast %cst_35 : f32 to vector<8x128xf32>
    %cst_36 = arith.constant 0.000000e+00 : f32
    %39 = vector.broadcast %cst_36 : f32 to vector<8x128xf32>
    %40 = vector.extract_strided_slice %6 {offsets = [0, 0], sizes = [8, 384], strides = [1, 1]} : vector<64x384xf32> to vector<8x384xf32>
    %cst_37 = arith.constant dense<0.000000e+00> : vector<8x384xf32>
    %41 = tpu.matmul %37, %8, %cst_37 {dimension_numbers = #tpu.dot_dimension_numbers<[1], [0], [0], [1], [0, 0, 1, 1], [], []>} : vector<8x128xf32>, vector<128x384xf32>, vector<8x384xf32> -> vector<8x384xf32>
    %42 = arith.addf %41, %28 : vector<8x384xf32>
    %43 = vector.extract_strided_slice %40 {offsets = [0, 0], sizes = [8, 128], strides = [1, 1]} : vector<8x384xf32> to vector<8x128xf32>
    %44 = vector.extract_strided_slice %42 {offsets = [0, 0], sizes = [8, 128], strides = [1, 1]} : vector<8x384xf32> to vector<8x128xf32>
    %45 = arith.addf %43, %44 : vector<8x128xf32>
    %46 = arith.negf %45 : vector<8x128xf32>
    %47 = math.exp %46 : vector<8x128xf32>
    %cst_38 = arith.constant 1.000000e+00 : f32
    %48 = vector.broadcast %cst_38 : f32 to vector<8x128xf32>
    %49 = arith.addf %48, %47 : vector<8x128xf32>
    %50 = arith.divf %48, %49 : vector<8x128xf32>
    %51 = vector.extract_strided_slice %40 {offsets = [0, 128], sizes = [8, 128], strides = [1, 1]} : vector<8x384xf32> to vector<8x128xf32>
    %52 = vector.extract_strided_slice %42 {offsets = [0, 128], sizes = [8, 128], strides = [1, 1]} : vector<8x384xf32> to vector<8x128xf32>
    %53 = arith.addf %51, %52 : vector<8x128xf32>
    %54 = arith.negf %53 : vector<8x128xf32>
    %55 = math.exp %54 : vector<8x128xf32>
    %cst_39 = arith.constant 1.000000e+00 : f32
    %56 = vector.broadcast %cst_39 : f32 to vector<8x128xf32>
    %57 = arith.addf %56, %55 : vector<8x128xf32>
    %58 = arith.divf %56, %57 : vector<8x128xf32>
    %59 = vector.extract_strided_slice %40 {offsets = [0, 256], sizes = [8, 128], strides = [1, 1]} : vector<8x384xf32> to vector<8x128xf32>
    %60 = vector.extract_strided_slice %42 {offsets = [0, 256], sizes = [8, 128], strides = [1, 1]} : vector<8x384xf32> to vector<8x128xf32>
    %61 = arith.mulf %50, %60 : vector<8x128xf32>
    %62 = arith.addf %59, %61 : vector<8x128xf32>
    %63 = math.tanh %62 : vector<8x128xf32>
    %64 = arith.subf %37, %63 : vector<8x128xf32>
    %65 = arith.mulf %58, %64 : vector<8x128xf32>
    %66 = arith.addf %63, %65 : vector<8x128xf32>
    %67 = vector.extract_strided_slice %6 {offsets = [8, 0], sizes = [8, 384], strides = [1, 1]} : vector<64x384xf32> to vector<8x384xf32>
    %cst_40 = arith.constant dense<0.000000e+00> : vector<8x384xf32>
    %68 = tpu.matmul %66, %8, %cst_40 {dimension_numbers = #tpu.dot_dimension_numbers<[1], [0], [0], [1], [0, 0, 1, 1], [], []>} : vector<8x128xf32>, vector<128x384xf32>, vector<8x384xf32> -> vector<8x384xf32>
    %69 = arith.addf %68, %28 : vector<8x384xf32>
    %70 = vector.extract_strided_slice %67 {offsets = [0, 0], sizes = [8, 128], strides = [1, 1]} : vector<8x384xf32> to vector<8x128xf32>
    %71 = vector.extract_strided_slice %69 {offsets = [0, 0], sizes = [8, 128], strides = [1, 1]} : vector<8x384xf32> to vector<8x128xf32>
    %72 = arith.addf %70, %71 : vector<8x128xf32>
    %73 = arith.negf %72 : vector<8x128xf32>
    %74 = math.exp %73 : vector<8x128xf32>
    %cst_41 = arith.constant 1.000000e+00 : f32
    %75 = vector.broadcast %cst_41 : f32 to vector<8x128xf32>
    %76 = arith.addf %75, %74 : vector<8x128xf32>
    %77 = arith.divf %75, %76 : vector<8x128xf32>
    %78 = vector.extract_strided_slice %67 {offsets = [0, 128], sizes = [8, 128], strides = [1, 1]} : vector<8x384xf32> to vector<8x128xf32>
    %79 = vector.extract_strided_slice %69 {offsets = [0, 128], sizes = [8, 128], strides = [1, 1]} : vector<8x384xf32> to vector<8x128xf32>
    %80 = arith.addf %78, %79 : vector<8x128xf32>
    %81 = arith.negf %80 : vector<8x128xf32>
    %82 = math.exp %81 : vector<8x128xf32>
    %cst_42 = arith.constant 1.000000e+00 : f32
    %83 = vector.broadcast %cst_42 : f32 to vector<8x128xf32>
    %84 = arith.addf %83, %82 : vector<8x128xf32>
    %85 = arith.divf %83, %84 : vector<8x128xf32>
    %86 = vector.extract_strided_slice %67 {offsets = [0, 256], sizes = [8, 128], strides = [1, 1]} : vector<8x384xf32> to vector<8x128xf32>
    %87 = vector.extract_strided_slice %69 {offsets = [0, 256], sizes = [8, 128], strides = [1, 1]} : vector<8x384xf32> to vector<8x128xf32>
    %88 = arith.mulf %77, %87 : vector<8x128xf32>
    %89 = arith.addf %86, %88 : vector<8x128xf32>
    %90 = math.tanh %89 : vector<8x128xf32>
    %91 = arith.subf %66, %90 : vector<8x128xf32>
    %92 = arith.mulf %85, %91 : vector<8x128xf32>
    %93 = arith.addf %90, %92 : vector<8x128xf32>
    %cst_43 = arith.constant dense<0.000000e+00> : vector<8x384xf32>
    %94 = tpu.matmul %66, %14, %cst_43 {dimension_numbers = #tpu.dot_dimension_numbers<[1], [0], [0], [1], [0, 0, 1, 1], [], []>} : vector<8x128xf32>, vector<128x384xf32>, vector<8x384xf32> -> vector<8x384xf32>
    %95 = arith.addf %94, %20 : vector<8x384xf32>
    %cst_44 = arith.constant dense<0.000000e+00> : vector<8x384xf32>
    %96 = tpu.matmul %38, %10, %cst_44 {dimension_numbers = #tpu.dot_dimension_numbers<[1], [0], [0], [1], [0, 0, 1, 1], [], []>} : vector<8x128xf32>, vector<128x384xf32>, vector<8x384xf32> -> vector<8x384xf32>
    %97 = arith.addf %96, %32 : vector<8x384xf32>
    %98 = vector.extract_strided_slice %95 {offsets = [0, 0], sizes = [8, 128], strides = [1, 1]} : vector<8x384xf32> to vector<8x128xf32>
    %99 = vector.extract_strided_slice %97 {offsets = [0, 0], sizes = [8, 128], strides = [1, 1]} : vector<8x384xf32> to vector<8x128xf32>
    %100 = arith.addf %98, %99 : vector<8x128xf32>
    %101 = arith.negf %100 : vector<8x128xf32>
    %102 = math.exp %101 : vector<8x128xf32>
    %cst_45 = arith.constant 1.000000e+00 : f32
    %103 = vector.broadcast %cst_45 : f32 to vector<8x128xf32>
    %104 = arith.addf %103, %102 : vector<8x128xf32>
    %105 = arith.divf %103, %104 : vector<8x128xf32>
    %106 = vector.extract_strided_slice %95 {offsets = [0, 128], sizes = [8, 128], strides = [1, 1]} : vector<8x384xf32> to vector<8x128xf32>
    %107 = vector.extract_strided_slice %97 {offsets = [0, 128], sizes = [8, 128], strides = [1, 1]} : vector<8x384xf32> to vector<8x128xf32>
    %108 = arith.addf %106, %107 : vector<8x128xf32>
    %109 = arith.negf %108 : vector<8x128xf32>
    %110 = math.exp %109 : vector<8x128xf32>
    %cst_46 = arith.constant 1.000000e+00 : f32
    %111 = vector.broadcast %cst_46 : f32 to vector<8x128xf32>
    %112 = arith.addf %111, %110 : vector<8x128xf32>
    %113 = arith.divf %111, %112 : vector<8x128xf32>
    %114 = vector.extract_strided_slice %95 {offsets = [0, 256], sizes = [8, 128], strides = [1, 1]} : vector<8x384xf32> to vector<8x128xf32>
    %115 = vector.extract_strided_slice %97 {offsets = [0, 256], sizes = [8, 128], strides = [1, 1]} : vector<8x384xf32> to vector<8x128xf32>
    %116 = arith.mulf %105, %115 : vector<8x128xf32>
    %117 = arith.addf %114, %116 : vector<8x128xf32>
    %118 = math.tanh %117 : vector<8x128xf32>
    %119 = arith.subf %38, %118 : vector<8x128xf32>
    %120 = arith.mulf %113, %119 : vector<8x128xf32>
    %121 = arith.addf %118, %120 : vector<8x128xf32>
    %122 = vector.extract_strided_slice %6 {offsets = [16, 0], sizes = [8, 384], strides = [1, 1]} : vector<64x384xf32> to vector<8x384xf32>
    %cst_47 = arith.constant dense<0.000000e+00> : vector<8x384xf32>
    %123 = tpu.matmul %93, %8, %cst_47 {dimension_numbers = #tpu.dot_dimension_numbers<[1], [0], [0], [1], [0, 0, 1, 1], [], []>} : vector<8x128xf32>, vector<128x384xf32>, vector<8x384xf32> -> vector<8x384xf32>
    %124 = arith.addf %123, %28 : vector<8x384xf32>
    %125 = vector.extract_strided_slice %122 {offsets = [0, 0], sizes = [8, 128], strides = [1, 1]} : vector<8x384xf32> to vector<8x128xf32>
    %126 = vector.extract_strided_slice %124 {offsets = [0, 0], sizes = [8, 128], strides = [1, 1]} : vector<8x384xf32> to vector<8x128xf32>
    %127 = arith.addf %125, %126 : vector<8x128xf32>
    %128 = arith.negf %127 : vector<8x128xf32>
    %129 = math.exp %128 : vector<8x128xf32>
    %cst_48 = arith.constant 1.000000e+00 : f32
    %130 = vector.broadcast %cst_48 : f32 to vector<8x128xf32>
    %131 = arith.addf %130, %129 : vector<8x128xf32>
    %132 = arith.divf %130, %131 : vector<8x128xf32>
    %133 = vector.extract_strided_slice %122 {offsets = [0, 128], sizes = [8, 128], strides = [1, 1]} : vector<8x384xf32> to vector<8x128xf32>
    %134 = vector.extract_strided_slice %124 {offsets = [0, 128], sizes = [8, 128], strides = [1, 1]} : vector<8x384xf32> to vector<8x128xf32>
    %135 = arith.addf %133, %134 : vector<8x128xf32>
    %136 = arith.negf %135 : vector<8x128xf32>
    %137 = math.exp %136 : vector<8x128xf32>
    %cst_49 = arith.constant 1.000000e+00 : f32
    %138 = vector.broadcast %cst_49 : f32 to vector<8x128xf32>
    %139 = arith.addf %138, %137 : vector<8x128xf32>
    %140 = arith.divf %138, %139 : vector<8x128xf32>
    %141 = vector.extract_strided_slice %122 {offsets = [0, 256], sizes = [8, 128], strides = [1, 1]} : vector<8x384xf32> to vector<8x128xf32>
    %142 = vector.extract_strided_slice %124 {offsets = [0, 256], sizes = [8, 128], strides = [1, 1]} : vector<8x384xf32> to vector<8x128xf32>
    %143 = arith.mulf %132, %142 : vector<8x128xf32>
    %144 = arith.addf %141, %143 : vector<8x128xf32>
    %145 = math.tanh %144 : vector<8x128xf32>
    %146 = arith.subf %93, %145 : vector<8x128xf32>
    %147 = arith.mulf %140, %146 : vector<8x128xf32>
    %148 = arith.addf %145, %147 : vector<8x128xf32>
    %cst_50 = arith.constant dense<0.000000e+00> : vector<8x384xf32>
    %149 = tpu.matmul %93, %14, %cst_50 {dimension_numbers = #tpu.dot_dimension_numbers<[1], [0], [0], [1], [0, 0, 1, 1], [], []>} : vector<8x128xf32>, vector<128x384xf32>, vector<8x384xf32> -> vector<8x384xf32>
    %150 = arith.addf %149, %20 : vector<8x384xf32>
    %cst_51 = arith.constant dense<0.000000e+00> : vector<8x384xf32>
    %151 = tpu.matmul %121, %10, %cst_51 {dimension_numbers = #tpu.dot_dimension_numbers<[1], [0], [0], [1], [0, 0, 1, 1], [], []>} : vector<8x128xf32>, vector<128x384xf32>, vector<8x384xf32> -> vector<8x384xf32>
    %152 = arith.addf %151, %32 : vector<8x384xf32>
    %153 = vector.extract_strided_slice %150 {offsets = [0, 0], sizes = [8, 128], strides = [1, 1]} : vector<8x384xf32> to vector<8x128xf32>
    %154 = vector.extract_strided_slice %152 {offsets = [0, 0], sizes = [8, 128], strides = [1, 1]} : vector<8x384xf32> to vector<8x128xf32>
    %155 = arith.addf %153, %154 : vector<8x128xf32>
    %156 = arith.negf %155 : vector<8x128xf32>
    %157 = math.exp %156 : vector<8x128xf32>
    %cst_52 = arith.constant 1.000000e+00 : f32
    %158 = vector.broadcast %cst_52 : f32 to vector<8x128xf32>
    %159 = arith.addf %158, %157 : vector<8x128xf32>
    %160 = arith.divf %158, %159 : vector<8x128xf32>
    %161 = vector.extract_strided_slice %150 {offsets = [0, 128], sizes = [8, 128], strides = [1, 1]} : vector<8x384xf32> to vector<8x128xf32>
    %162 = vector.extract_strided_slice %152 {offsets = [0, 128], sizes = [8, 128], strides = [1, 1]} : vector<8x384xf32> to vector<8x128xf32>
    %163 = arith.addf %161, %162 : vector<8x128xf32>
    %164 = arith.negf %163 : vector<8x128xf32>
    %165 = math.exp %164 : vector<8x128xf32>
    %cst_53 = arith.constant 1.000000e+00 : f32
    %166 = vector.broadcast %cst_53 : f32 to vector<8x128xf32>
    %167 = arith.addf %166, %165 : vector<8x128xf32>
    %168 = arith.divf %166, %167 : vector<8x128xf32>
    %169 = vector.extract_strided_slice %150 {offsets = [0, 256], sizes = [8, 128], strides = [1, 1]} : vector<8x384xf32> to vector<8x128xf32>
    %170 = vector.extract_strided_slice %152 {offsets = [0, 256], sizes = [8, 128], strides = [1, 1]} : vector<8x384xf32> to vector<8x128xf32>
    %171 = arith.mulf %160, %170 : vector<8x128xf32>
    %172 = arith.addf %169, %171 : vector<8x128xf32>
    %173 = math.tanh %172 : vector<8x128xf32>
    %174 = arith.subf %121, %173 : vector<8x128xf32>
    %175 = arith.mulf %168, %174 : vector<8x128xf32>
    %176 = arith.addf %173, %175 : vector<8x128xf32>
    %cst_54 = arith.constant dense<0.000000e+00> : vector<8x384xf32>
    %177 = tpu.matmul %121, %16, %cst_54 {dimension_numbers = #tpu.dot_dimension_numbers<[1], [0], [0], [1], [0, 0, 1, 1], [], []>} : vector<8x128xf32>, vector<128x384xf32>, vector<8x384xf32> -> vector<8x384xf32>
    %178 = arith.addf %177, %24 : vector<8x384xf32>
    %cst_55 = arith.constant dense<0.000000e+00> : vector<8x384xf32>
    %179 = tpu.matmul %39, %12, %cst_55 {dimension_numbers = #tpu.dot_dimension_numbers<[1], [0], [0], [1], [0, 0, 1, 1], [], []>} : vector<8x128xf32>, vector<128x384xf32>, vector<8x384xf32> -> vector<8x384xf32>
    %180 = arith.addf %179, %36 : vector<8x384xf32>
    %181 = vector.extract_strided_slice %178 {offsets = [0, 0], sizes = [8, 128], strides = [1, 1]} : vector<8x384xf32> to vector<8x128xf32>
    %182 = vector.extract_strided_slice %180 {offsets = [0, 0], sizes = [8, 128], strides = [1, 1]} : vector<8x384xf32> to vector<8x128xf32>
    %183 = arith.addf %181, %182 : vector<8x128xf32>
    %184 = arith.negf %183 : vector<8x128xf32>
    %185 = math.exp %184 : vector<8x128xf32>
    %cst_56 = arith.constant 1.000000e+00 : f32
    %186 = vector.broadcast %cst_56 : f32 to vector<8x128xf32>
    %187 = arith.addf %186, %185 : vector<8x128xf32>
    %188 = arith.divf %186, %187 : vector<8x128xf32>
    %189 = vector.extract_strided_slice %178 {offsets = [0, 128], sizes = [8, 128], strides = [1, 1]} : vector<8x384xf32> to vector<8x128xf32>
    %190 = vector.extract_strided_slice %180 {offsets = [0, 128], sizes = [8, 128], strides = [1, 1]} : vector<8x384xf32> to vector<8x128xf32>
    %191 = arith.addf %189, %190 : vector<8x128xf32>
    %192 = arith.negf %191 : vector<8x128xf32>
    %193 = math.exp %192 : vector<8x128xf32>
    %cst_57 = arith.constant 1.000000e+00 : f32
    %194 = vector.broadcast %cst_57 : f32 to vector<8x128xf32>
    %195 = arith.addf %194, %193 : vector<8x128xf32>
    %196 = arith.divf %194, %195 : vector<8x128xf32>
    %197 = vector.extract_strided_slice %178 {offsets = [0, 256], sizes = [8, 128], strides = [1, 1]} : vector<8x384xf32> to vector<8x128xf32>
    %198 = vector.extract_strided_slice %180 {offsets = [0, 256], sizes = [8, 128], strides = [1, 1]} : vector<8x384xf32> to vector<8x128xf32>
    %199 = arith.mulf %188, %198 : vector<8x128xf32>
    %200 = arith.addf %197, %199 : vector<8x128xf32>
    %201 = math.tanh %200 : vector<8x128xf32>
    %202 = arith.subf %39, %201 : vector<8x128xf32>
    %203 = arith.mulf %196, %202 : vector<8x128xf32>
    %204 = arith.addf %201, %203 : vector<8x128xf32>
    %205 = vector.extract_strided_slice %6 {offsets = [24, 0], sizes = [8, 384], strides = [1, 1]} : vector<64x384xf32> to vector<8x384xf32>
    %cst_58 = arith.constant dense<0.000000e+00> : vector<8x384xf32>
    %206 = tpu.matmul %148, %8, %cst_58 {dimension_numbers = #tpu.dot_dimension_numbers<[1], [0], [0], [1], [0, 0, 1, 1], [], []>} : vector<8x128xf32>, vector<128x384xf32>, vector<8x384xf32> -> vector<8x384xf32>
    %207 = arith.addf %206, %28 : vector<8x384xf32>
    %208 = vector.extract_strided_slice %205 {offsets = [0, 0], sizes = [8, 128], strides = [1, 1]} : vector<8x384xf32> to vector<8x128xf32>
    %209 = vector.extract_strided_slice %207 {offsets = [0, 0], sizes = [8, 128], strides = [1, 1]} : vector<8x384xf32> to vector<8x128xf32>
    %210 = arith.addf %208, %209 : vector<8x128xf32>
    %211 = arith.negf %210 : vector<8x128xf32>
    %212 = math.exp %211 : vector<8x128xf32>
    %cst_59 = arith.constant 1.000000e+00 : f32
    %213 = vector.broadcast %cst_59 : f32 to vector<8x128xf32>
    %214 = arith.addf %213, %212 : vector<8x128xf32>
    %215 = arith.divf %213, %214 : vector<8x128xf32>
    %216 = vector.extract_strided_slice %205 {offsets = [0, 128], sizes = [8, 128], strides = [1, 1]} : vector<8x384xf32> to vector<8x128xf32>
    %217 = vector.extract_strided_slice %207 {offsets = [0, 128], sizes = [8, 128], strides = [1, 1]} : vector<8x384xf32> to vector<8x128xf32>
    %218 = arith.addf %216, %217 : vector<8x128xf32>
    %219 = arith.negf %218 : vector<8x128xf32>
    %220 = math.exp %219 : vector<8x128xf32>
    %cst_60 = arith.constant 1.000000e+00 : f32
    %221 = vector.broadcast %cst_60 : f32 to vector<8x128xf32>
    %222 = arith.addf %221, %220 : vector<8x128xf32>
    %223 = arith.divf %221, %222 : vector<8x128xf32>
    %224 = vector.extract_strided_slice %205 {offsets = [0, 256], sizes = [8, 128], strides = [1, 1]} : vector<8x384xf32> to vector<8x128xf32>
    %225 = vector.extract_strided_slice %207 {offsets = [0, 256], sizes = [8, 128], strides = [1, 1]} : vector<8x384xf32> to vector<8x128xf32>
    %226 = arith.mulf %215, %225 : vector<8x128xf32>
    %227 = arith.addf %224, %226 : vector<8x128xf32>
    %228 = math.tanh %227 : vector<8x128xf32>
    %229 = arith.subf %148, %228 : vector<8x128xf32>
    %230 = arith.mulf %223, %229 : vector<8x128xf32>
    %231 = arith.addf %228, %230 : vector<8x128xf32>
    %cst_61 = arith.constant dense<0.000000e+00> : vector<8x384xf32>
    %232 = tpu.matmul %148, %14, %cst_61 {dimension_numbers = #tpu.dot_dimension_numbers<[1], [0], [0], [1], [0, 0, 1, 1], [], []>} : vector<8x128xf32>, vector<128x384xf32>, vector<8x384xf32> -> vector<8x384xf32>
    %233 = arith.addf %232, %20 : vector<8x384xf32>
    %cst_62 = arith.constant dense<0.000000e+00> : vector<8x384xf32>
    %234 = tpu.matmul %176, %10, %cst_62 {dimension_numbers = #tpu.dot_dimension_numbers<[1], [0], [0], [1], [0, 0, 1, 1], [], []>} : vector<8x128xf32>, vector<128x384xf32>, vector<8x384xf32> -> vector<8x384xf32>
    %235 = arith.addf %234, %32 : vector<8x384xf32>
    %236 = vector.extract_strided_slice %233 {offsets = [0, 0], sizes = [8, 128], strides = [1, 1]} : vector<8x384xf32> to vector<8x128xf32>
    %237 = vector.extract_strided_slice %235 {offsets = [0, 0], sizes = [8, 128], strides = [1, 1]} : vector<8x384xf32> to vector<8x128xf32>
    %238 = arith.addf %236, %237 : vector<8x128xf32>
    %239 = arith.negf %238 : vector<8x128xf32>
    %240 = math.exp %239 : vector<8x128xf32>
    %cst_63 = arith.constant 1.000000e+00 : f32
    %241 = vector.broadcast %cst_63 : f32 to vector<8x128xf32>
    %242 = arith.addf %241, %240 : vector<8x128xf32>
    %243 = arith.divf %241, %242 : vector<8x128xf32>
    %244 = vector.extract_strided_slice %233 {offsets = [0, 128], sizes = [8, 128], strides = [1, 1]} : vector<8x384xf32> to vector<8x128xf32>
    %245 = vector.extract_strided_slice %235 {offsets = [0, 128], sizes = [8, 128], strides = [1, 1]} : vector<8x384xf32> to vector<8x128xf32>
    %246 = arith.addf %244, %245 : vector<8x128xf32>
    %247 = arith.negf %246 : vector<8x128xf32>
    %248 = math.exp %247 : vector<8x128xf32>
    %cst_64 = arith.constant 1.000000e+00 : f32
    %249 = vector.broadcast %cst_64 : f32 to vector<8x128xf32>
    %250 = arith.addf %249, %248 : vector<8x128xf32>
    %251 = arith.divf %249, %250 : vector<8x128xf32>
    %252 = vector.extract_strided_slice %233 {offsets = [0, 256], sizes = [8, 128], strides = [1, 1]} : vector<8x384xf32> to vector<8x128xf32>
    %253 = vector.extract_strided_slice %235 {offsets = [0, 256], sizes = [8, 128], strides = [1, 1]} : vector<8x384xf32> to vector<8x128xf32>
    %254 = arith.mulf %243, %253 : vector<8x128xf32>
    %255 = arith.addf %252, %254 : vector<8x128xf32>
    %256 = math.tanh %255 : vector<8x128xf32>
    %257 = arith.subf %176, %256 : vector<8x128xf32>
    %258 = arith.mulf %251, %257 : vector<8x128xf32>
    %259 = arith.addf %256, %258 : vector<8x128xf32>
    %cst_65 = arith.constant dense<0.000000e+00> : vector<8x384xf32>
    %260 = tpu.matmul %176, %16, %cst_65 {dimension_numbers = #tpu.dot_dimension_numbers<[1], [0], [0], [1], [0, 0, 1, 1], [], []>} : vector<8x128xf32>, vector<128x384xf32>, vector<8x384xf32> -> vector<8x384xf32>
    %261 = arith.addf %260, %24 : vector<8x384xf32>
    %cst_66 = arith.constant dense<0.000000e+00> : vector<8x384xf32>
    %262 = tpu.matmul %204, %12, %cst_66 {dimension_numbers = #tpu.dot_dimension_numbers<[1], [0], [0], [1], [0, 0, 1, 1], [], []>} : vector<8x128xf32>, vector<128x384xf32>, vector<8x384xf32> -> vector<8x384xf32>
    %263 = arith.addf %262, %36 : vector<8x384xf32>
    %264 = vector.extract_strided_slice %261 {offsets = [0, 0], sizes = [8, 128], strides = [1, 1]} : vector<8x384xf32> to vector<8x128xf32>
    %265 = vector.extract_strided_slice %263 {offsets = [0, 0], sizes = [8, 128], strides = [1, 1]} : vector<8x384xf32> to vector<8x128xf32>
    %266 = arith.addf %264, %265 : vector<8x128xf32>
    %267 = arith.negf %266 : vector<8x128xf32>
    %268 = math.exp %267 : vector<8x128xf32>
    %cst_67 = arith.constant 1.000000e+00 : f32
    %269 = vector.broadcast %cst_67 : f32 to vector<8x128xf32>
    %270 = arith.addf %269, %268 : vector<8x128xf32>
    %271 = arith.divf %269, %270 : vector<8x128xf32>
    %272 = vector.extract_strided_slice %261 {offsets = [0, 128], sizes = [8, 128], strides = [1, 1]} : vector<8x384xf32> to vector<8x128xf32>
    %273 = vector.extract_strided_slice %263 {offsets = [0, 128], sizes = [8, 128], strides = [1, 1]} : vector<8x384xf32> to vector<8x128xf32>
    %274 = arith.addf %272, %273 : vector<8x128xf32>
    %275 = arith.negf %274 : vector<8x128xf32>
    %276 = math.exp %275 : vector<8x128xf32>
    %cst_68 = arith.constant 1.000000e+00 : f32
    %277 = vector.broadcast %cst_68 : f32 to vector<8x128xf32>
    %278 = arith.addf %277, %276 : vector<8x128xf32>
    %279 = arith.divf %277, %278 : vector<8x128xf32>
    %280 = vector.extract_strided_slice %261 {offsets = [0, 256], sizes = [8, 128], strides = [1, 1]} : vector<8x384xf32> to vector<8x128xf32>
    %281 = vector.extract_strided_slice %263 {offsets = [0, 256], sizes = [8, 128], strides = [1, 1]} : vector<8x384xf32> to vector<8x128xf32>
    %282 = arith.mulf %271, %281 : vector<8x128xf32>
    %283 = arith.addf %280, %282 : vector<8x128xf32>
    %284 = math.tanh %283 : vector<8x128xf32>
    %285 = arith.subf %204, %284 : vector<8x128xf32>
    %286 = arith.mulf %279, %285 : vector<8x128xf32>
    %287 = arith.addf %284, %286 : vector<8x128xf32>
    %288 = vector.extract_strided_slice %6 {offsets = [32, 0], sizes = [8, 384], strides = [1, 1]} : vector<64x384xf32> to vector<8x384xf32>
    %cst_69 = arith.constant dense<0.000000e+00> : vector<8x384xf32>
    %289 = tpu.matmul %231, %8, %cst_69 {dimension_numbers = #tpu.dot_dimension_numbers<[1], [0], [0], [1], [0, 0, 1, 1], [], []>} : vector<8x128xf32>, vector<128x384xf32>, vector<8x384xf32> -> vector<8x384xf32>
    %290 = arith.addf %289, %28 : vector<8x384xf32>
    %291 = vector.extract_strided_slice %288 {offsets = [0, 0], sizes = [8, 128], strides = [1, 1]} : vector<8x384xf32> to vector<8x128xf32>
    %292 = vector.extract_strided_slice %290 {offsets = [0, 0], sizes = [8, 128], strides = [1, 1]} : vector<8x384xf32> to vector<8x128xf32>
    %293 = arith.addf %291, %292 : vector<8x128xf32>
    %294 = arith.negf %293 : vector<8x128xf32>
    %295 = math.exp %294 : vector<8x128xf32>
    %cst_70 = arith.constant 1.000000e+00 : f32
    %296 = vector.broadcast %cst_70 : f32 to vector<8x128xf32>
    %297 = arith.addf %296, %295 : vector<8x128xf32>
    %298 = arith.divf %296, %297 : vector<8x128xf32>
    %299 = vector.extract_strided_slice %288 {offsets = [0, 128], sizes = [8, 128], strides = [1, 1]} : vector<8x384xf32> to vector<8x128xf32>
    %300 = vector.extract_strided_slice %290 {offsets = [0, 128], sizes = [8, 128], strides = [1, 1]} : vector<8x384xf32> to vector<8x128xf32>
    %301 = arith.addf %299, %300 : vector<8x128xf32>
    %302 = arith.negf %301 : vector<8x128xf32>
    %303 = math.exp %302 : vector<8x128xf32>
    %cst_71 = arith.constant 1.000000e+00 : f32
    %304 = vector.broadcast %cst_71 : f32 to vector<8x128xf32>
    %305 = arith.addf %304, %303 : vector<8x128xf32>
    %306 = arith.divf %304, %305 : vector<8x128xf32>
    %307 = vector.extract_strided_slice %288 {offsets = [0, 256], sizes = [8, 128], strides = [1, 1]} : vector<8x384xf32> to vector<8x128xf32>
    %308 = vector.extract_strided_slice %290 {offsets = [0, 256], sizes = [8, 128], strides = [1, 1]} : vector<8x384xf32> to vector<8x128xf32>
    %309 = arith.mulf %298, %308 : vector<8x128xf32>
    %310 = arith.addf %307, %309 : vector<8x128xf32>
    %311 = math.tanh %310 : vector<8x128xf32>
    %312 = arith.subf %231, %311 : vector<8x128xf32>
    %313 = arith.mulf %306, %312 : vector<8x128xf32>
    %314 = arith.addf %311, %313 : vector<8x128xf32>
    %cst_72 = arith.constant dense<0.000000e+00> : vector<8x384xf32>
    %315 = tpu.matmul %231, %14, %cst_72 {dimension_numbers = #tpu.dot_dimension_numbers<[1], [0], [0], [1], [0, 0, 1, 1], [], []>} : vector<8x128xf32>, vector<128x384xf32>, vector<8x384xf32> -> vector<8x384xf32>
    %316 = arith.addf %315, %20 : vector<8x384xf32>
    %cst_73 = arith.constant dense<0.000000e+00> : vector<8x384xf32>
    %317 = tpu.matmul %259, %10, %cst_73 {dimension_numbers = #tpu.dot_dimension_numbers<[1], [0], [0], [1], [0, 0, 1, 1], [], []>} : vector<8x128xf32>, vector<128x384xf32>, vector<8x384xf32> -> vector<8x384xf32>
    %318 = arith.addf %317, %32 : vector<8x384xf32>
    %319 = vector.extract_strided_slice %316 {offsets = [0, 0], sizes = [8, 128], strides = [1, 1]} : vector<8x384xf32> to vector<8x128xf32>
    %320 = vector.extract_strided_slice %318 {offsets = [0, 0], sizes = [8, 128], strides = [1, 1]} : vector<8x384xf32> to vector<8x128xf32>
    %321 = arith.addf %319, %320 : vector<8x128xf32>
    %322 = arith.negf %321 : vector<8x128xf32>
    %323 = math.exp %322 : vector<8x128xf32>
    %cst_74 = arith.constant 1.000000e+00 : f32
    %324 = vector.broadcast %cst_74 : f32 to vector<8x128xf32>
    %325 = arith.addf %324, %323 : vector<8x128xf32>
    %326 = arith.divf %324, %325 : vector<8x128xf32>
    %327 = vector.extract_strided_slice %316 {offsets = [0, 128], sizes = [8, 128], strides = [1, 1]} : vector<8x384xf32> to vector<8x128xf32>
    %328 = vector.extract_strided_slice %318 {offsets = [0, 128], sizes = [8, 128], strides = [1, 1]} : vector<8x384xf32> to vector<8x128xf32>
    %329 = arith.addf %327, %328 : vector<8x128xf32>
    %330 = arith.negf %329 : vector<8x128xf32>
    %331 = math.exp %330 : vector<8x128xf32>
    %cst_75 = arith.constant 1.000000e+00 : f32
    %332 = vector.broadcast %cst_75 : f32 to vector<8x128xf32>
    %333 = arith.addf %332, %331 : vector<8x128xf32>
    %334 = arith.divf %332, %333 : vector<8x128xf32>
    %335 = vector.extract_strided_slice %316 {offsets = [0, 256], sizes = [8, 128], strides = [1, 1]} : vector<8x384xf32> to vector<8x128xf32>
    %336 = vector.extract_strided_slice %318 {offsets = [0, 256], sizes = [8, 128], strides = [1, 1]} : vector<8x384xf32> to vector<8x128xf32>
    %337 = arith.mulf %326, %336 : vector<8x128xf32>
    %338 = arith.addf %335, %337 : vector<8x128xf32>
    %339 = math.tanh %338 : vector<8x128xf32>
    %340 = arith.subf %259, %339 : vector<8x128xf32>
    %341 = arith.mulf %334, %340 : vector<8x128xf32>
    %342 = arith.addf %339, %341 : vector<8x128xf32>
    %cst_76 = arith.constant dense<0.000000e+00> : vector<8x384xf32>
    %343 = tpu.matmul %259, %16, %cst_76 {dimension_numbers = #tpu.dot_dimension_numbers<[1], [0], [0], [1], [0, 0, 1, 1], [], []>} : vector<8x128xf32>, vector<128x384xf32>, vector<8x384xf32> -> vector<8x384xf32>
    %344 = arith.addf %343, %24 : vector<8x384xf32>
    %cst_77 = arith.constant dense<0.000000e+00> : vector<8x384xf32>
    %345 = tpu.matmul %287, %12, %cst_77 {dimension_numbers = #tpu.dot_dimension_numbers<[1], [0], [0], [1], [0, 0, 1, 1], [], []>} : vector<8x128xf32>, vector<128x384xf32>, vector<8x384xf32> -> vector<8x384xf32>
    %346 = arith.addf %345, %36 : vector<8x384xf32>
    %347 = vector.extract_strided_slice %344 {offsets = [0, 0], sizes = [8, 128], strides = [1, 1]} : vector<8x384xf32> to vector<8x128xf32>
    %348 = vector.extract_strided_slice %346 {offsets = [0, 0], sizes = [8, 128], strides = [1, 1]} : vector<8x384xf32> to vector<8x128xf32>
    %349 = arith.addf %347, %348 : vector<8x128xf32>
    %350 = arith.negf %349 : vector<8x128xf32>
    %351 = math.exp %350 : vector<8x128xf32>
    %cst_78 = arith.constant 1.000000e+00 : f32
    %352 = vector.broadcast %cst_78 : f32 to vector<8x128xf32>
    %353 = arith.addf %352, %351 : vector<8x128xf32>
    %354 = arith.divf %352, %353 : vector<8x128xf32>
    %355 = vector.extract_strided_slice %344 {offsets = [0, 128], sizes = [8, 128], strides = [1, 1]} : vector<8x384xf32> to vector<8x128xf32>
    %356 = vector.extract_strided_slice %346 {offsets = [0, 128], sizes = [8, 128], strides = [1, 1]} : vector<8x384xf32> to vector<8x128xf32>
    %357 = arith.addf %355, %356 : vector<8x128xf32>
    %358 = arith.negf %357 : vector<8x128xf32>
    %359 = math.exp %358 : vector<8x128xf32>
    %cst_79 = arith.constant 1.000000e+00 : f32
    %360 = vector.broadcast %cst_79 : f32 to vector<8x128xf32>
    %361 = arith.addf %360, %359 : vector<8x128xf32>
    %362 = arith.divf %360, %361 : vector<8x128xf32>
    %363 = vector.extract_strided_slice %344 {offsets = [0, 256], sizes = [8, 128], strides = [1, 1]} : vector<8x384xf32> to vector<8x128xf32>
    %364 = vector.extract_strided_slice %346 {offsets = [0, 256], sizes = [8, 128], strides = [1, 1]} : vector<8x384xf32> to vector<8x128xf32>
    %365 = arith.mulf %354, %364 : vector<8x128xf32>
    %366 = arith.addf %363, %365 : vector<8x128xf32>
    %367 = math.tanh %366 : vector<8x128xf32>
    %368 = arith.subf %287, %367 : vector<8x128xf32>
    %369 = arith.mulf %362, %368 : vector<8x128xf32>
    %370 = arith.addf %367, %369 : vector<8x128xf32>
    %371 = vector.extract_strided_slice %6 {offsets = [40, 0], sizes = [8, 384], strides = [1, 1]} : vector<64x384xf32> to vector<8x384xf32>
    %cst_80 = arith.constant dense<0.000000e+00> : vector<8x384xf32>
    %372 = tpu.matmul %314, %8, %cst_80 {dimension_numbers = #tpu.dot_dimension_numbers<[1], [0], [0], [1], [0, 0, 1, 1], [], []>} : vector<8x128xf32>, vector<128x384xf32>, vector<8x384xf32> -> vector<8x384xf32>
    %373 = arith.addf %372, %28 : vector<8x384xf32>
    %374 = vector.extract_strided_slice %371 {offsets = [0, 0], sizes = [8, 128], strides = [1, 1]} : vector<8x384xf32> to vector<8x128xf32>
    %375 = vector.extract_strided_slice %373 {offsets = [0, 0], sizes = [8, 128], strides = [1, 1]} : vector<8x384xf32> to vector<8x128xf32>
    %376 = arith.addf %374, %375 : vector<8x128xf32>
    %377 = arith.negf %376 : vector<8x128xf32>
    %378 = math.exp %377 : vector<8x128xf32>
    %cst_81 = arith.constant 1.000000e+00 : f32
    %379 = vector.broadcast %cst_81 : f32 to vector<8x128xf32>
    %380 = arith.addf %379, %378 : vector<8x128xf32>
    %381 = arith.divf %379, %380 : vector<8x128xf32>
    %382 = vector.extract_strided_slice %371 {offsets = [0, 128], sizes = [8, 128], strides = [1, 1]} : vector<8x384xf32> to vector<8x128xf32>
    %383 = vector.extract_strided_slice %373 {offsets = [0, 128], sizes = [8, 128], strides = [1, 1]} : vector<8x384xf32> to vector<8x128xf32>
    %384 = arith.addf %382, %383 : vector<8x128xf32>
    %385 = arith.negf %384 : vector<8x128xf32>
    %386 = math.exp %385 : vector<8x128xf32>
    %cst_82 = arith.constant 1.000000e+00 : f32
    %387 = vector.broadcast %cst_82 : f32 to vector<8x128xf32>
    %388 = arith.addf %387, %386 : vector<8x128xf32>
    %389 = arith.divf %387, %388 : vector<8x128xf32>
    %390 = vector.extract_strided_slice %371 {offsets = [0, 256], sizes = [8, 128], strides = [1, 1]} : vector<8x384xf32> to vector<8x128xf32>
    %391 = vector.extract_strided_slice %373 {offsets = [0, 256], sizes = [8, 128], strides = [1, 1]} : vector<8x384xf32> to vector<8x128xf32>
    %392 = arith.mulf %381, %391 : vector<8x128xf32>
    %393 = arith.addf %390, %392 : vector<8x128xf32>
    %394 = math.tanh %393 : vector<8x128xf32>
    %395 = arith.subf %314, %394 : vector<8x128xf32>
    %396 = arith.mulf %389, %395 : vector<8x128xf32>
    %397 = arith.addf %394, %396 : vector<8x128xf32>
    %cst_83 = arith.constant dense<0.000000e+00> : vector<8x384xf32>
    %398 = tpu.matmul %314, %14, %cst_83 {dimension_numbers = #tpu.dot_dimension_numbers<[1], [0], [0], [1], [0, 0, 1, 1], [], []>} : vector<8x128xf32>, vector<128x384xf32>, vector<8x384xf32> -> vector<8x384xf32>
    %399 = arith.addf %398, %20 : vector<8x384xf32>
    %cst_84 = arith.constant dense<0.000000e+00> : vector<8x384xf32>
    %400 = tpu.matmul %342, %10, %cst_84 {dimension_numbers = #tpu.dot_dimension_numbers<[1], [0], [0], [1], [0, 0, 1, 1], [], []>} : vector<8x128xf32>, vector<128x384xf32>, vector<8x384xf32> -> vector<8x384xf32>
    %401 = arith.addf %400, %32 : vector<8x384xf32>
    %402 = vector.extract_strided_slice %399 {offsets = [0, 0], sizes = [8, 128], strides = [1, 1]} : vector<8x384xf32> to vector<8x128xf32>
    %403 = vector.extract_strided_slice %401 {offsets = [0, 0], sizes = [8, 128], strides = [1, 1]} : vector<8x384xf32> to vector<8x128xf32>
    %404 = arith.addf %402, %403 : vector<8x128xf32>
    %405 = arith.negf %404 : vector<8x128xf32>
    %406 = math.exp %405 : vector<8x128xf32>
    %cst_85 = arith.constant 1.000000e+00 : f32
    %407 = vector.broadcast %cst_85 : f32 to vector<8x128xf32>
    %408 = arith.addf %407, %406 : vector<8x128xf32>
    %409 = arith.divf %407, %408 : vector<8x128xf32>
    %410 = vector.extract_strided_slice %399 {offsets = [0, 128], sizes = [8, 128], strides = [1, 1]} : vector<8x384xf32> to vector<8x128xf32>
    %411 = vector.extract_strided_slice %401 {offsets = [0, 128], sizes = [8, 128], strides = [1, 1]} : vector<8x384xf32> to vector<8x128xf32>
    %412 = arith.addf %410, %411 : vector<8x128xf32>
    %413 = arith.negf %412 : vector<8x128xf32>
    %414 = math.exp %413 : vector<8x128xf32>
    %cst_86 = arith.constant 1.000000e+00 : f32
    %415 = vector.broadcast %cst_86 : f32 to vector<8x128xf32>
    %416 = arith.addf %415, %414 : vector<8x128xf32>
    %417 = arith.divf %415, %416 : vector<8x128xf32>
    %418 = vector.extract_strided_slice %399 {offsets = [0, 256], sizes = [8, 128], strides = [1, 1]} : vector<8x384xf32> to vector<8x128xf32>
    %419 = vector.extract_strided_slice %401 {offsets = [0, 256], sizes = [8, 128], strides = [1, 1]} : vector<8x384xf32> to vector<8x128xf32>
    %420 = arith.mulf %409, %419 : vector<8x128xf32>
    %421 = arith.addf %418, %420 : vector<8x128xf32>
    %422 = math.tanh %421 : vector<8x128xf32>
    %423 = arith.subf %342, %422 : vector<8x128xf32>
    %424 = arith.mulf %417, %423 : vector<8x128xf32>
    %425 = arith.addf %422, %424 : vector<8x128xf32>
    %cst_87 = arith.constant dense<0.000000e+00> : vector<8x384xf32>
    %426 = tpu.matmul %342, %16, %cst_87 {dimension_numbers = #tpu.dot_dimension_numbers<[1], [0], [0], [1], [0, 0, 1, 1], [], []>} : vector<8x128xf32>, vector<128x384xf32>, vector<8x384xf32> -> vector<8x384xf32>
    %427 = arith.addf %426, %24 : vector<8x384xf32>
    %cst_88 = arith.constant dense<0.000000e+00> : vector<8x384xf32>
    %428 = tpu.matmul %370, %12, %cst_88 {dimension_numbers = #tpu.dot_dimension_numbers<[1], [0], [0], [1], [0, 0, 1, 1], [], []>} : vector<8x128xf32>, vector<128x384xf32>, vector<8x384xf32> -> vector<8x384xf32>
    %429 = arith.addf %428, %36 : vector<8x384xf32>
    %430 = vector.extract_strided_slice %427 {offsets = [0, 0], sizes = [8, 128], strides = [1, 1]} : vector<8x384xf32> to vector<8x128xf32>
    %431 = vector.extract_strided_slice %429 {offsets = [0, 0], sizes = [8, 128], strides = [1, 1]} : vector<8x384xf32> to vector<8x128xf32>
    %432 = arith.addf %430, %431 : vector<8x128xf32>
    %433 = arith.negf %432 : vector<8x128xf32>
    %434 = math.exp %433 : vector<8x128xf32>
    %cst_89 = arith.constant 1.000000e+00 : f32
    %435 = vector.broadcast %cst_89 : f32 to vector<8x128xf32>
    %436 = arith.addf %435, %434 : vector<8x128xf32>
    %437 = arith.divf %435, %436 : vector<8x128xf32>
    %438 = vector.extract_strided_slice %427 {offsets = [0, 128], sizes = [8, 128], strides = [1, 1]} : vector<8x384xf32> to vector<8x128xf32>
    %439 = vector.extract_strided_slice %429 {offsets = [0, 128], sizes = [8, 128], strides = [1, 1]} : vector<8x384xf32> to vector<8x128xf32>
    %440 = arith.addf %438, %439 : vector<8x128xf32>
    %441 = arith.negf %440 : vector<8x128xf32>
    %442 = math.exp %441 : vector<8x128xf32>
    %cst_90 = arith.constant 1.000000e+00 : f32
    %443 = vector.broadcast %cst_90 : f32 to vector<8x128xf32>
    %444 = arith.addf %443, %442 : vector<8x128xf32>
    %445 = arith.divf %443, %444 : vector<8x128xf32>
    %446 = vector.extract_strided_slice %427 {offsets = [0, 256], sizes = [8, 128], strides = [1, 1]} : vector<8x384xf32> to vector<8x128xf32>
    %447 = vector.extract_strided_slice %429 {offsets = [0, 256], sizes = [8, 128], strides = [1, 1]} : vector<8x384xf32> to vector<8x128xf32>
    %448 = arith.mulf %437, %447 : vector<8x128xf32>
    %449 = arith.addf %446, %448 : vector<8x128xf32>
    %450 = math.tanh %449 : vector<8x128xf32>
    %451 = arith.subf %370, %450 : vector<8x128xf32>
    %452 = arith.mulf %445, %451 : vector<8x128xf32>
    %453 = arith.addf %450, %452 : vector<8x128xf32>
    %454 = vector.extract_strided_slice %6 {offsets = [48, 0], sizes = [8, 384], strides = [1, 1]} : vector<64x384xf32> to vector<8x384xf32>
    %cst_91 = arith.constant dense<0.000000e+00> : vector<8x384xf32>
    %455 = tpu.matmul %397, %8, %cst_91 {dimension_numbers = #tpu.dot_dimension_numbers<[1], [0], [0], [1], [0, 0, 1, 1], [], []>} : vector<8x128xf32>, vector<128x384xf32>, vector<8x384xf32> -> vector<8x384xf32>
    %456 = arith.addf %455, %28 : vector<8x384xf32>
    %457 = vector.extract_strided_slice %454 {offsets = [0, 0], sizes = [8, 128], strides = [1, 1]} : vector<8x384xf32> to vector<8x128xf32>
    %458 = vector.extract_strided_slice %456 {offsets = [0, 0], sizes = [8, 128], strides = [1, 1]} : vector<8x384xf32> to vector<8x128xf32>
    %459 = arith.addf %457, %458 : vector<8x128xf32>
    %460 = arith.negf %459 : vector<8x128xf32>
    %461 = math.exp %460 : vector<8x128xf32>
    %cst_92 = arith.constant 1.000000e+00 : f32
    %462 = vector.broadcast %cst_92 : f32 to vector<8x128xf32>
    %463 = arith.addf %462, %461 : vector<8x128xf32>
    %464 = arith.divf %462, %463 : vector<8x128xf32>
    %465 = vector.extract_strided_slice %454 {offsets = [0, 128], sizes = [8, 128], strides = [1, 1]} : vector<8x384xf32> to vector<8x128xf32>
    %466 = vector.extract_strided_slice %456 {offsets = [0, 128], sizes = [8, 128], strides = [1, 1]} : vector<8x384xf32> to vector<8x128xf32>
    %467 = arith.addf %465, %466 : vector<8x128xf32>
    %468 = arith.negf %467 : vector<8x128xf32>
    %469 = math.exp %468 : vector<8x128xf32>
    %cst_93 = arith.constant 1.000000e+00 : f32
    %470 = vector.broadcast %cst_93 : f32 to vector<8x128xf32>
    %471 = arith.addf %470, %469 : vector<8x128xf32>
    %472 = arith.divf %470, %471 : vector<8x128xf32>
    %473 = vector.extract_strided_slice %454 {offsets = [0, 256], sizes = [8, 128], strides = [1, 1]} : vector<8x384xf32> to vector<8x128xf32>
    %474 = vector.extract_strided_slice %456 {offsets = [0, 256], sizes = [8, 128], strides = [1, 1]} : vector<8x384xf32> to vector<8x128xf32>
    %475 = arith.mulf %464, %474 : vector<8x128xf32>
    %476 = arith.addf %473, %475 : vector<8x128xf32>
    %477 = math.tanh %476 : vector<8x128xf32>
    %478 = arith.subf %397, %477 : vector<8x128xf32>
    %479 = arith.mulf %472, %478 : vector<8x128xf32>
    %480 = arith.addf %477, %479 : vector<8x128xf32>
    %cst_94 = arith.constant dense<0.000000e+00> : vector<8x384xf32>
    %481 = tpu.matmul %397, %14, %cst_94 {dimension_numbers = #tpu.dot_dimension_numbers<[1], [0], [0], [1], [0, 0, 1, 1], [], []>} : vector<8x128xf32>, vector<128x384xf32>, vector<8x384xf32> -> vector<8x384xf32>
    %482 = arith.addf %481, %20 : vector<8x384xf32>
    %cst_95 = arith.constant dense<0.000000e+00> : vector<8x384xf32>
    %483 = tpu.matmul %425, %10, %cst_95 {dimension_numbers = #tpu.dot_dimension_numbers<[1], [0], [0], [1], [0, 0, 1, 1], [], []>} : vector<8x128xf32>, vector<128x384xf32>, vector<8x384xf32> -> vector<8x384xf32>
    %484 = arith.addf %483, %32 : vector<8x384xf32>
    %485 = vector.extract_strided_slice %482 {offsets = [0, 0], sizes = [8, 128], strides = [1, 1]} : vector<8x384xf32> to vector<8x128xf32>
    %486 = vector.extract_strided_slice %484 {offsets = [0, 0], sizes = [8, 128], strides = [1, 1]} : vector<8x384xf32> to vector<8x128xf32>
    %487 = arith.addf %485, %486 : vector<8x128xf32>
    %488 = arith.negf %487 : vector<8x128xf32>
    %489 = math.exp %488 : vector<8x128xf32>
    %cst_96 = arith.constant 1.000000e+00 : f32
    %490 = vector.broadcast %cst_96 : f32 to vector<8x128xf32>
    %491 = arith.addf %490, %489 : vector<8x128xf32>
    %492 = arith.divf %490, %491 : vector<8x128xf32>
    %493 = vector.extract_strided_slice %482 {offsets = [0, 128], sizes = [8, 128], strides = [1, 1]} : vector<8x384xf32> to vector<8x128xf32>
    %494 = vector.extract_strided_slice %484 {offsets = [0, 128], sizes = [8, 128], strides = [1, 1]} : vector<8x384xf32> to vector<8x128xf32>
    %495 = arith.addf %493, %494 : vector<8x128xf32>
    %496 = arith.negf %495 : vector<8x128xf32>
    %497 = math.exp %496 : vector<8x128xf32>
    %cst_97 = arith.constant 1.000000e+00 : f32
    %498 = vector.broadcast %cst_97 : f32 to vector<8x128xf32>
    %499 = arith.addf %498, %497 : vector<8x128xf32>
    %500 = arith.divf %498, %499 : vector<8x128xf32>
    %501 = vector.extract_strided_slice %482 {offsets = [0, 256], sizes = [8, 128], strides = [1, 1]} : vector<8x384xf32> to vector<8x128xf32>
    %502 = vector.extract_strided_slice %484 {offsets = [0, 256], sizes = [8, 128], strides = [1, 1]} : vector<8x384xf32> to vector<8x128xf32>
    %503 = arith.mulf %492, %502 : vector<8x128xf32>
    %504 = arith.addf %501, %503 : vector<8x128xf32>
    %505 = math.tanh %504 : vector<8x128xf32>
    %506 = arith.subf %425, %505 : vector<8x128xf32>
    %507 = arith.mulf %500, %506 : vector<8x128xf32>
    %508 = arith.addf %505, %507 : vector<8x128xf32>
    %cst_98 = arith.constant dense<0.000000e+00> : vector<8x384xf32>
    %509 = tpu.matmul %425, %16, %cst_98 {dimension_numbers = #tpu.dot_dimension_numbers<[1], [0], [0], [1], [0, 0, 1, 1], [], []>} : vector<8x128xf32>, vector<128x384xf32>, vector<8x384xf32> -> vector<8x384xf32>
    %510 = arith.addf %509, %24 : vector<8x384xf32>
    %cst_99 = arith.constant dense<0.000000e+00> : vector<8x384xf32>
    %511 = tpu.matmul %453, %12, %cst_99 {dimension_numbers = #tpu.dot_dimension_numbers<[1], [0], [0], [1], [0, 0, 1, 1], [], []>} : vector<8x128xf32>, vector<128x384xf32>, vector<8x384xf32> -> vector<8x384xf32>
    %512 = arith.addf %511, %36 : vector<8x384xf32>
    %513 = vector.extract_strided_slice %510 {offsets = [0, 0], sizes = [8, 128], strides = [1, 1]} : vector<8x384xf32> to vector<8x128xf32>
    %514 = vector.extract_strided_slice %512 {offsets = [0, 0], sizes = [8, 128], strides = [1, 1]} : vector<8x384xf32> to vector<8x128xf32>
    %515 = arith.addf %513, %514 : vector<8x128xf32>
    %516 = arith.negf %515 : vector<8x128xf32>
    %517 = math.exp %516 : vector<8x128xf32>
    %cst_100 = arith.constant 1.000000e+00 : f32
    %518 = vector.broadcast %cst_100 : f32 to vector<8x128xf32>
    %519 = arith.addf %518, %517 : vector<8x128xf32>
    %520 = arith.divf %518, %519 : vector<8x128xf32>
    %521 = vector.extract_strided_slice %510 {offsets = [0, 128], sizes = [8, 128], strides = [1, 1]} : vector<8x384xf32> to vector<8x128xf32>
    %522 = vector.extract_strided_slice %512 {offsets = [0, 128], sizes = [8, 128], strides = [1, 1]} : vector<8x384xf32> to vector<8x128xf32>
    %523 = arith.addf %521, %522 : vector<8x128xf32>
    %524 = arith.negf %523 : vector<8x128xf32>
    %525 = math.exp %524 : vector<8x128xf32>
    %cst_101 = arith.constant 1.000000e+00 : f32
    %526 = vector.broadcast %cst_101 : f32 to vector<8x128xf32>
    %527 = arith.addf %526, %525 : vector<8x128xf32>
    %528 = arith.divf %526, %527 : vector<8x128xf32>
    %529 = vector.extract_strided_slice %510 {offsets = [0, 256], sizes = [8, 128], strides = [1, 1]} : vector<8x384xf32> to vector<8x128xf32>
    %530 = vector.extract_strided_slice %512 {offsets = [0, 256], sizes = [8, 128], strides = [1, 1]} : vector<8x384xf32> to vector<8x128xf32>
    %531 = arith.mulf %520, %530 : vector<8x128xf32>
    %532 = arith.addf %529, %531 : vector<8x128xf32>
    %533 = math.tanh %532 : vector<8x128xf32>
    %534 = arith.subf %453, %533 : vector<8x128xf32>
    %535 = arith.mulf %528, %534 : vector<8x128xf32>
    %536 = arith.addf %533, %535 : vector<8x128xf32>
    %537 = vector.extract_strided_slice %6 {offsets = [56, 0], sizes = [8, 384], strides = [1, 1]} : vector<64x384xf32> to vector<8x384xf32>
    %cst_102 = arith.constant dense<0.000000e+00> : vector<8x384xf32>
    %538 = tpu.matmul %480, %8, %cst_102 {dimension_numbers = #tpu.dot_dimension_numbers<[1], [0], [0], [1], [0, 0, 1, 1], [], []>} : vector<8x128xf32>, vector<128x384xf32>, vector<8x384xf32> -> vector<8x384xf32>
    %539 = arith.addf %538, %28 : vector<8x384xf32>
    %540 = vector.extract_strided_slice %537 {offsets = [0, 0], sizes = [8, 128], strides = [1, 1]} : vector<8x384xf32> to vector<8x128xf32>
    %541 = vector.extract_strided_slice %539 {offsets = [0, 0], sizes = [8, 128], strides = [1, 1]} : vector<8x384xf32> to vector<8x128xf32>
    %542 = arith.addf %540, %541 : vector<8x128xf32>
    %543 = arith.negf %542 : vector<8x128xf32>
    %544 = math.exp %543 : vector<8x128xf32>
    %cst_103 = arith.constant 1.000000e+00 : f32
    %545 = vector.broadcast %cst_103 : f32 to vector<8x128xf32>
    %546 = arith.addf %545, %544 : vector<8x128xf32>
    %547 = arith.divf %545, %546 : vector<8x128xf32>
    %548 = vector.extract_strided_slice %537 {offsets = [0, 128], sizes = [8, 128], strides = [1, 1]} : vector<8x384xf32> to vector<8x128xf32>
    %549 = vector.extract_strided_slice %539 {offsets = [0, 128], sizes = [8, 128], strides = [1, 1]} : vector<8x384xf32> to vector<8x128xf32>
    %550 = arith.addf %548, %549 : vector<8x128xf32>
    %551 = arith.negf %550 : vector<8x128xf32>
    %552 = math.exp %551 : vector<8x128xf32>
    %cst_104 = arith.constant 1.000000e+00 : f32
    %553 = vector.broadcast %cst_104 : f32 to vector<8x128xf32>
    %554 = arith.addf %553, %552 : vector<8x128xf32>
    %555 = arith.divf %553, %554 : vector<8x128xf32>
    %556 = vector.extract_strided_slice %537 {offsets = [0, 256], sizes = [8, 128], strides = [1, 1]} : vector<8x384xf32> to vector<8x128xf32>
    %557 = vector.extract_strided_slice %539 {offsets = [0, 256], sizes = [8, 128], strides = [1, 1]} : vector<8x384xf32> to vector<8x128xf32>
    %558 = arith.mulf %547, %557 : vector<8x128xf32>
    %559 = arith.addf %556, %558 : vector<8x128xf32>
    %560 = math.tanh %559 : vector<8x128xf32>
    %561 = arith.subf %480, %560 : vector<8x128xf32>
    %562 = arith.mulf %555, %561 : vector<8x128xf32>
    %563 = arith.addf %560, %562 : vector<8x128xf32>
    %cst_105 = arith.constant dense<0.000000e+00> : vector<8x384xf32>
    %564 = tpu.matmul %480, %14, %cst_105 {dimension_numbers = #tpu.dot_dimension_numbers<[1], [0], [0], [1], [0, 0, 1, 1], [], []>} : vector<8x128xf32>, vector<128x384xf32>, vector<8x384xf32> -> vector<8x384xf32>
    %565 = arith.addf %564, %20 : vector<8x384xf32>
    %cst_106 = arith.constant dense<0.000000e+00> : vector<8x384xf32>
    %566 = tpu.matmul %508, %10, %cst_106 {dimension_numbers = #tpu.dot_dimension_numbers<[1], [0], [0], [1], [0, 0, 1, 1], [], []>} : vector<8x128xf32>, vector<128x384xf32>, vector<8x384xf32> -> vector<8x384xf32>
    %567 = arith.addf %566, %32 : vector<8x384xf32>
    %568 = vector.extract_strided_slice %565 {offsets = [0, 0], sizes = [8, 128], strides = [1, 1]} : vector<8x384xf32> to vector<8x128xf32>
    %569 = vector.extract_strided_slice %567 {offsets = [0, 0], sizes = [8, 128], strides = [1, 1]} : vector<8x384xf32> to vector<8x128xf32>
    %570 = arith.addf %568, %569 : vector<8x128xf32>
    %571 = arith.negf %570 : vector<8x128xf32>
    %572 = math.exp %571 : vector<8x128xf32>
    %cst_107 = arith.constant 1.000000e+00 : f32
    %573 = vector.broadcast %cst_107 : f32 to vector<8x128xf32>
    %574 = arith.addf %573, %572 : vector<8x128xf32>
    %575 = arith.divf %573, %574 : vector<8x128xf32>
    %576 = vector.extract_strided_slice %565 {offsets = [0, 128], sizes = [8, 128], strides = [1, 1]} : vector<8x384xf32> to vector<8x128xf32>
    %577 = vector.extract_strided_slice %567 {offsets = [0, 128], sizes = [8, 128], strides = [1, 1]} : vector<8x384xf32> to vector<8x128xf32>
    %578 = arith.addf %576, %577 : vector<8x128xf32>
    %579 = arith.negf %578 : vector<8x128xf32>
    %580 = math.exp %579 : vector<8x128xf32>
    %cst_108 = arith.constant 1.000000e+00 : f32
    %581 = vector.broadcast %cst_108 : f32 to vector<8x128xf32>
    %582 = arith.addf %581, %580 : vector<8x128xf32>
    %583 = arith.divf %581, %582 : vector<8x128xf32>
    %584 = vector.extract_strided_slice %565 {offsets = [0, 256], sizes = [8, 128], strides = [1, 1]} : vector<8x384xf32> to vector<8x128xf32>
    %585 = vector.extract_strided_slice %567 {offsets = [0, 256], sizes = [8, 128], strides = [1, 1]} : vector<8x384xf32> to vector<8x128xf32>
    %586 = arith.mulf %575, %585 : vector<8x128xf32>
    %587 = arith.addf %584, %586 : vector<8x128xf32>
    %588 = math.tanh %587 : vector<8x128xf32>
    %589 = arith.subf %508, %588 : vector<8x128xf32>
    %590 = arith.mulf %583, %589 : vector<8x128xf32>
    %591 = arith.addf %588, %590 : vector<8x128xf32>
    %cst_109 = arith.constant dense<0.000000e+00> : vector<8x384xf32>
    %592 = tpu.matmul %508, %16, %cst_109 {dimension_numbers = #tpu.dot_dimension_numbers<[1], [0], [0], [1], [0, 0, 1, 1], [], []>} : vector<8x128xf32>, vector<128x384xf32>, vector<8x384xf32> -> vector<8x384xf32>
    %593 = arith.addf %592, %24 : vector<8x384xf32>
    %cst_110 = arith.constant dense<0.000000e+00> : vector<8x384xf32>
    %594 = tpu.matmul %536, %12, %cst_110 {dimension_numbers = #tpu.dot_dimension_numbers<[1], [0], [0], [1], [0, 0, 1, 1], [], []>} : vector<8x128xf32>, vector<128x384xf32>, vector<8x384xf32> -> vector<8x384xf32>
    %595 = arith.addf %594, %36 : vector<8x384xf32>
    %596 = vector.extract_strided_slice %593 {offsets = [0, 0], sizes = [8, 128], strides = [1, 1]} : vector<8x384xf32> to vector<8x128xf32>
    %597 = vector.extract_strided_slice %595 {offsets = [0, 0], sizes = [8, 128], strides = [1, 1]} : vector<8x384xf32> to vector<8x128xf32>
    %598 = arith.addf %596, %597 : vector<8x128xf32>
    %599 = arith.negf %598 : vector<8x128xf32>
    %600 = math.exp %599 : vector<8x128xf32>
    %cst_111 = arith.constant 1.000000e+00 : f32
    %601 = vector.broadcast %cst_111 : f32 to vector<8x128xf32>
    %602 = arith.addf %601, %600 : vector<8x128xf32>
    %603 = arith.divf %601, %602 : vector<8x128xf32>
    %604 = vector.extract_strided_slice %593 {offsets = [0, 128], sizes = [8, 128], strides = [1, 1]} : vector<8x384xf32> to vector<8x128xf32>
    %605 = vector.extract_strided_slice %595 {offsets = [0, 128], sizes = [8, 128], strides = [1, 1]} : vector<8x384xf32> to vector<8x128xf32>
    %606 = arith.addf %604, %605 : vector<8x128xf32>
    %607 = arith.negf %606 : vector<8x128xf32>
    %608 = math.exp %607 : vector<8x128xf32>
    %cst_112 = arith.constant 1.000000e+00 : f32
    %609 = vector.broadcast %cst_112 : f32 to vector<8x128xf32>
    %610 = arith.addf %609, %608 : vector<8x128xf32>
    %611 = arith.divf %609, %610 : vector<8x128xf32>
    %612 = vector.extract_strided_slice %593 {offsets = [0, 256], sizes = [8, 128], strides = [1, 1]} : vector<8x384xf32> to vector<8x128xf32>
    %613 = vector.extract_strided_slice %595 {offsets = [0, 256], sizes = [8, 128], strides = [1, 1]} : vector<8x384xf32> to vector<8x128xf32>
    %614 = arith.mulf %603, %613 : vector<8x128xf32>
    %615 = arith.addf %612, %614 : vector<8x128xf32>
    %616 = math.tanh %615 : vector<8x128xf32>
    %617 = arith.subf %536, %616 : vector<8x128xf32>
    %618 = arith.mulf %611, %617 : vector<8x128xf32>
    %619 = arith.addf %616, %618 : vector<8x128xf32>
    %cst_113 = arith.constant dense<0.000000e+00> : vector<8x384xf32>
    %620 = tpu.matmul %563, %14, %cst_113 {dimension_numbers = #tpu.dot_dimension_numbers<[1], [0], [0], [1], [0, 0, 1, 1], [], []>} : vector<8x128xf32>, vector<128x384xf32>, vector<8x384xf32> -> vector<8x384xf32>
    %621 = arith.addf %620, %20 : vector<8x384xf32>
    %cst_114 = arith.constant dense<0.000000e+00> : vector<8x384xf32>
    %622 = tpu.matmul %591, %10, %cst_114 {dimension_numbers = #tpu.dot_dimension_numbers<[1], [0], [0], [1], [0, 0, 1, 1], [], []>} : vector<8x128xf32>, vector<128x384xf32>, vector<8x384xf32> -> vector<8x384xf32>
    %623 = arith.addf %622, %32 : vector<8x384xf32>
    %624 = vector.extract_strided_slice %621 {offsets = [0, 0], sizes = [8, 128], strides = [1, 1]} : vector<8x384xf32> to vector<8x128xf32>
    %625 = vector.extract_strided_slice %623 {offsets = [0, 0], sizes = [8, 128], strides = [1, 1]} : vector<8x384xf32> to vector<8x128xf32>
    %626 = arith.addf %624, %625 : vector<8x128xf32>
    %627 = arith.negf %626 : vector<8x128xf32>
    %628 = math.exp %627 : vector<8x128xf32>
    %cst_115 = arith.constant 1.000000e+00 : f32
    %629 = vector.broadcast %cst_115 : f32 to vector<8x128xf32>
    %630 = arith.addf %629, %628 : vector<8x128xf32>
    %631 = arith.divf %629, %630 : vector<8x128xf32>
    %632 = vector.extract_strided_slice %621 {offsets = [0, 128], sizes = [8, 128], strides = [1, 1]} : vector<8x384xf32> to vector<8x128xf32>
    %633 = vector.extract_strided_slice %623 {offsets = [0, 128], sizes = [8, 128], strides = [1, 1]} : vector<8x384xf32> to vector<8x128xf32>
    %634 = arith.addf %632, %633 : vector<8x128xf32>
    %635 = arith.negf %634 : vector<8x128xf32>
    %636 = math.exp %635 : vector<8x128xf32>
    %cst_116 = arith.constant 1.000000e+00 : f32
    %637 = vector.broadcast %cst_116 : f32 to vector<8x128xf32>
    %638 = arith.addf %637, %636 : vector<8x128xf32>
    %639 = arith.divf %637, %638 : vector<8x128xf32>
    %640 = vector.extract_strided_slice %621 {offsets = [0, 256], sizes = [8, 128], strides = [1, 1]} : vector<8x384xf32> to vector<8x128xf32>
    %641 = vector.extract_strided_slice %623 {offsets = [0, 256], sizes = [8, 128], strides = [1, 1]} : vector<8x384xf32> to vector<8x128xf32>
    %642 = arith.mulf %631, %641 : vector<8x128xf32>
    %643 = arith.addf %640, %642 : vector<8x128xf32>
    %644 = math.tanh %643 : vector<8x128xf32>
    %645 = arith.subf %591, %644 : vector<8x128xf32>
    %646 = arith.mulf %639, %645 : vector<8x128xf32>
    %647 = arith.addf %644, %646 : vector<8x128xf32>
    %cst_117 = arith.constant dense<0.000000e+00> : vector<8x384xf32>
    %648 = tpu.matmul %591, %16, %cst_117 {dimension_numbers = #tpu.dot_dimension_numbers<[1], [0], [0], [1], [0, 0, 1, 1], [], []>} : vector<8x128xf32>, vector<128x384xf32>, vector<8x384xf32> -> vector<8x384xf32>
    %649 = arith.addf %648, %24 : vector<8x384xf32>
    %cst_118 = arith.constant dense<0.000000e+00> : vector<8x384xf32>
    %650 = tpu.matmul %619, %12, %cst_118 {dimension_numbers = #tpu.dot_dimension_numbers<[1], [0], [0], [1], [0, 0, 1, 1], [], []>} : vector<8x128xf32>, vector<128x384xf32>, vector<8x384xf32> -> vector<8x384xf32>
    %651 = arith.addf %650, %36 : vector<8x384xf32>
    %652 = vector.extract_strided_slice %649 {offsets = [0, 0], sizes = [8, 128], strides = [1, 1]} : vector<8x384xf32> to vector<8x128xf32>
    %653 = vector.extract_strided_slice %651 {offsets = [0, 0], sizes = [8, 128], strides = [1, 1]} : vector<8x384xf32> to vector<8x128xf32>
    %654 = arith.addf %652, %653 : vector<8x128xf32>
    %655 = arith.negf %654 : vector<8x128xf32>
    %656 = math.exp %655 : vector<8x128xf32>
    %cst_119 = arith.constant 1.000000e+00 : f32
    %657 = vector.broadcast %cst_119 : f32 to vector<8x128xf32>
    %658 = arith.addf %657, %656 : vector<8x128xf32>
    %659 = arith.divf %657, %658 : vector<8x128xf32>
    %660 = vector.extract_strided_slice %649 {offsets = [0, 128], sizes = [8, 128], strides = [1, 1]} : vector<8x384xf32> to vector<8x128xf32>
    %661 = vector.extract_strided_slice %651 {offsets = [0, 128], sizes = [8, 128], strides = [1, 1]} : vector<8x384xf32> to vector<8x128xf32>
    %662 = arith.addf %660, %661 : vector<8x128xf32>
    %663 = arith.negf %662 : vector<8x128xf32>
    %664 = math.exp %663 : vector<8x128xf32>
    %cst_120 = arith.constant 1.000000e+00 : f32
    %665 = vector.broadcast %cst_120 : f32 to vector<8x128xf32>
    %666 = arith.addf %665, %664 : vector<8x128xf32>
    %667 = arith.divf %665, %666 : vector<8x128xf32>
    %668 = vector.extract_strided_slice %649 {offsets = [0, 256], sizes = [8, 128], strides = [1, 1]} : vector<8x384xf32> to vector<8x128xf32>
    %669 = vector.extract_strided_slice %651 {offsets = [0, 256], sizes = [8, 128], strides = [1, 1]} : vector<8x384xf32> to vector<8x128xf32>
    %670 = arith.mulf %659, %669 : vector<8x128xf32>
    %671 = arith.addf %668, %670 : vector<8x128xf32>
    %672 = math.tanh %671 : vector<8x128xf32>
    %673 = arith.subf %619, %672 : vector<8x128xf32>
    %674 = arith.mulf %667, %673 : vector<8x128xf32>
    %675 = arith.addf %672, %674 : vector<8x128xf32>
    %cst_121 = arith.constant dense<0.000000e+00> : vector<8x384xf32>
    %676 = tpu.matmul %647, %16, %cst_121 {dimension_numbers = #tpu.dot_dimension_numbers<[1], [0], [0], [1], [0, 0, 1, 1], [], []>} : vector<8x128xf32>, vector<128x384xf32>, vector<8x384xf32> -> vector<8x384xf32>
    %677 = arith.addf %676, %24 : vector<8x384xf32>
    %cst_122 = arith.constant dense<0.000000e+00> : vector<8x384xf32>
    %678 = tpu.matmul %675, %12, %cst_122 {dimension_numbers = #tpu.dot_dimension_numbers<[1], [0], [0], [1], [0, 0, 1, 1], [], []>} : vector<8x128xf32>, vector<128x384xf32>, vector<8x384xf32> -> vector<8x384xf32>
    %679 = arith.addf %678, %36 : vector<8x384xf32>
    %680 = vector.extract_strided_slice %677 {offsets = [0, 0], sizes = [8, 128], strides = [1, 1]} : vector<8x384xf32> to vector<8x128xf32>
    %681 = vector.extract_strided_slice %679 {offsets = [0, 0], sizes = [8, 128], strides = [1, 1]} : vector<8x384xf32> to vector<8x128xf32>
    %682 = arith.addf %680, %681 : vector<8x128xf32>
    %683 = arith.negf %682 : vector<8x128xf32>
    %684 = math.exp %683 : vector<8x128xf32>
    %cst_123 = arith.constant 1.000000e+00 : f32
    %685 = vector.broadcast %cst_123 : f32 to vector<8x128xf32>
    %686 = arith.addf %685, %684 : vector<8x128xf32>
    %687 = arith.divf %685, %686 : vector<8x128xf32>
    %688 = vector.extract_strided_slice %677 {offsets = [0, 128], sizes = [8, 128], strides = [1, 1]} : vector<8x384xf32> to vector<8x128xf32>
    %689 = vector.extract_strided_slice %679 {offsets = [0, 128], sizes = [8, 128], strides = [1, 1]} : vector<8x384xf32> to vector<8x128xf32>
    %690 = arith.addf %688, %689 : vector<8x128xf32>
    %691 = arith.negf %690 : vector<8x128xf32>
    %692 = math.exp %691 : vector<8x128xf32>
    %cst_124 = arith.constant 1.000000e+00 : f32
    %693 = vector.broadcast %cst_124 : f32 to vector<8x128xf32>
    %694 = arith.addf %693, %692 : vector<8x128xf32>
    %695 = arith.divf %693, %694 : vector<8x128xf32>
    %696 = vector.extract_strided_slice %677 {offsets = [0, 256], sizes = [8, 128], strides = [1, 1]} : vector<8x384xf32> to vector<8x128xf32>
    %697 = vector.extract_strided_slice %679 {offsets = [0, 256], sizes = [8, 128], strides = [1, 1]} : vector<8x384xf32> to vector<8x128xf32>
    %698 = arith.mulf %687, %697 : vector<8x128xf32>
    %699 = arith.addf %696, %698 : vector<8x128xf32>
    %700 = math.tanh %699 : vector<8x128xf32>
    %701 = arith.subf %675, %700 : vector<8x128xf32>
    %702 = arith.mulf %695, %701 : vector<8x128xf32>
    %703 = arith.addf %700, %702 : vector<8x128xf32>
    %c0_125 = arith.constant 0 : index
    %c0_126 = arith.constant 0 : index
    %704 = vector.load %arg7[%c0_125, %c0_126] : memref<128x8xf32, #tpu.memory_space<vmem>>, vector<128x8xf32>
    %cst_127 = arith.constant dense<0.000000e+00> : vector<8x8xf32>
    %705 = tpu.matmul %703, %704, %cst_127 {dimension_numbers = #tpu.dot_dimension_numbers<[1], [0], [0], [1], [0, 0, 1, 1], [], []>} : vector<8x128xf32>, vector<128x8xf32>, vector<8x8xf32> -> vector<8x8xf32>
    %c0_128 = arith.constant 0 : index
    %c0_129 = arith.constant 0 : index
    %706 = vector.load %arg8[%c0_128, %c0_129] : memref<1x8xf32, #tpu.memory_space<vmem>>, vector<1x8xf32>
    %707 = vector.broadcast %706 : vector<1x8xf32> to vector<8x8xf32>
    %708 = arith.addf %705, %707 : vector<8x8xf32>
    %c0_130 = arith.constant 0 : index
    %c0_131 = arith.constant 0 : index
    %709 = vector.load %arg9[%c0_130, %c0_131] : memref<8x8xf32, #tpu.memory_space<vmem>>, vector<8x8xf32>
    tpu.vector_store %arg9[%c0_130, %c0_131], %708 {strides = array<i32>} : memref<8x8xf32, #tpu.memory_space<vmem>>, vector<8x8xf32>,
    return
  }
  func.func @transform_0(%arg0: i32) -> (i32, i32) {
    %c0_i32 = arith.constant 0 : i32
    %c0_i32_0 = arith.constant 0 : i32
    %c0_i32_1 = arith.constant 0 : i32
    return %c0_i32, %c0_i32_0 : i32, i32
  }
  func.func @transform_1(%arg0: i32) -> (i32, i32) {
    %c0_i32 = arith.constant 0 : i32
    %c0_i32_0 = arith.constant 0 : i32
    %c0_i32_1 = arith.constant 0 : i32
    return %c0_i32, %c0_i32_0 : i32, i32
  }
  func.func @transform_2(%arg0: i32) -> (i32, i32, i32) {
    %c0_i32 = arith.constant 0 : i32
    %c0_i32_0 = arith.constant 0 : i32
    %c0_i32_1 = arith.constant 0 : i32
    %c0_i32_2 = arith.constant 0 : i32
    return %c0_i32, %c0_i32_0, %c0_i32_1 : i32, i32, i32
  }
  func.func @transform_3(%arg0: i32) -> (i32, i32, i32) {
    %c0_i32 = arith.constant 0 : i32
    %c0_i32_0 = arith.constant 0 : i32
    %c0_i32_1 = arith.constant 0 : i32
    %c0_i32_2 = arith.constant 0 : i32
    return %c0_i32, %c0_i32_0, %c0_i32_1 : i32, i32, i32
  }
  func.func @transform_4(%arg0: i32) -> (i32, i32, i32) {
    %c0_i32 = arith.constant 0 : i32
    %c0_i32_0 = arith.constant 0 : i32
    %c0_i32_1 = arith.constant 0 : i32
    %c0_i32_2 = arith.constant 0 : i32
    return %c0_i32, %c0_i32_0, %c0_i32_1 : i32, i32, i32
  }
  func.func @transform_5(%arg0: i32) -> (i32, i32, i32) {
    %c0_i32 = arith.constant 0 : i32
    %c0_i32_0 = arith.constant 0 : i32
    %c0_i32_1 = arith.constant 0 : i32
    %c0_i32_2 = arith.constant 0 : i32
    return %c0_i32, %c0_i32_0, %c0_i32_1 : i32, i32, i32
  }
  func.func @transform_6(%arg0: i32) -> (i32, i32) {
    %c0_i32 = arith.constant 0 : i32
    %c0_i32_0 = arith.constant 0 : i32
    %c0_i32_1 = arith.constant 0 : i32
    return %c0_i32, %c0_i32_0 : i32, i32
  }
  func.func @transform_7(%arg0: i32) -> (i32, i32) {
    %c0_i32 = arith.constant 0 : i32
    %c0_i32_0 = arith.constant 0 : i32
    %c0_i32_1 = arith.constant 0 : i32
    return %c0_i32, %c0_i32_0 : i32, i32
  }
  func.func @transform_8(%arg0: i32) -> (i32, i32) {
    %c0_i32 = arith.constant 0 : i32
    %c0_i32_0 = arith.constant 0 : i32
    %c0_i32_1 = arith.constant 0 : i32
    return %c0_i32, %c0_i32_0 : i32, i32
  }
}

</mosaic_0001>

<llo_original>
// kernel: tpu_custom_call.1
$region0: #{tpu_custom_call.1}
  #allocation0 [shape = 'u32[]', space=smem, size = 0x4, offset = 0x4, fixed_abs, tag = 'smem constant byte address 0x4 - core index']
  #allocation1 [shape = 'u32[144,128]{1,0:T(1,128)}', space=vmem, size = 0x12000, scoped, tag = 'internal scratch']
  %s0 = inlined_call_operand.vmem [shape: f32[64,16], index: 0, kind: input, shape index: {}]
  %s1 = inlined_call_operand.vmem [shape: f32[16,384], index: 1, kind: input, shape index: {}]
  %s2 = inlined_call_operand.hbm [shape: f32[2,128,384], index: 2, kind: input, shape index: {}]
  %s3 = inlined_call_operand.hbm [shape: f32[3,128,384], index: 3, kind: input, shape index: {}]
  %s4 = inlined_call_operand.vmem [shape: f32[3,1,384], index: 4, kind: input, shape index: {}]
  %s5 = inlined_call_operand.vmem [shape: f32[3,1,384], index: 5, kind: input, shape index: {}]
  %s6 = inlined_call_operand.vmem [shape: f32[128,8], index: 6, kind: input, shape index: {}]
  %s7 = inlined_call_operand.vmem [shape: f32[1,8], index: 7, kind: input, shape index: {}]
  %s8 = inlined_call_operand.hbm [shape: f32[8,8], index: 8, kind: output, shape index: {}]
  %s9 = sld [smem:[#allocation0]]
  $region50: #{tpu_custom_call.1} parent=0
    _
  %s11 = ssub.s32 1, %s9
  %s12 = scalar_select 0, %s11, %s9
  $region1: #{tpu_custom_call.1} parent=0
    #allocation2 [shape = 'u8[393216]{0}', space=vmem, size = 0x60000, scoped, tag = 'input window, operand 2, single buffered']
    #allocation3 [shape = 's32[1]{0}', space=sflag, size = 0x4, scoped, tag = 'scoped memory for tpu_custom_call.1']
    #allocation4 [shape = 's32[1]{0}', space=sflag, size = 0x4, scoped, tag = 'scoped memory for tpu_custom_call.1']
    #allocation5 [shape = 'u8[589824]{0}', space=vmem, size = 0x90000, scoped, tag = 'input window, operand 3, single buffered']
    #allocation6 [shape = 's32[1]{0}', space=sflag, size = 0x4, scoped, tag = 'scoped memory for tpu_custom_call.1']
    #allocation7 [shape = 'u8[4096]{0}', space=vmem, size = 0x1000, scoped, tag = 'output window, operand 0, single buffered']
    %13 = vsyncpa [#allocation3], 0
    %14 = vsyncpa [#allocation6], 0
    %15 = vsyncpa [#allocation4], 0
    // Predicated region
    $region2: #{tpu_custom_call.1} parent=1 // pred_check
      _
    $region3: #{tpu_custom_call.1} parent=1 // pred_check_branch
      %17 = sbr.rel (0) target = $region5
    $region4: #{tpu_custom_call.1} parent=1 // pred_region
      _
    $region5: #{tpu_custom_call.1} parent=1 // pred_fallthru
      _
    // Predicated region
    $region6: #{tpu_custom_call.1} parent=1 // pred_check
      _
    $region7: #{tpu_custom_call.1} parent=1 // pred_check_branch
      %19 = sbr.rel (0) target = $region9
    $region8: #{tpu_custom_call.1} parent=1 // pred_region
      _
    $region9: #{tpu_custom_call.1} parent=1 // pred_fallthru
      _
    // Predicated region
    $region10: #{tpu_custom_call.1} parent=1 // pred_check
      _
    $region11: #{tpu_custom_call.1} parent=1 // pred_check_branch
      %21 = sbr.rel (0) target = $region13
    $region12: #{tpu_custom_call.1} parent=1 // pred_region
      %s23 = ssub.s32 12288, 12288
      %24 = vsyncadd [#allocation3], %s23
      %s25 = sshll.u32 [#allocation2], 4
      %s26 = int_to_ptr.vmem [resolvable:$true] %s25
      %31 = dma.hbm_to_vmem [thread:$0]  %s2, 12288, %s26, [#allocation3], 384, 384, 24
    $region13: #{tpu_custom_call.1} parent=1 // pred_fallthru
      _
    // Predicated region
    $region14: #{tpu_custom_call.1} parent=1 // pred_check
      _
    $region15: #{tpu_custom_call.1} parent=1 // pred_check_branch
      %33 = sbr.rel (0) target = $region17
    $region16: #{tpu_custom_call.1} parent=1 // pred_region
      %s35 = ssub.s32 18432, 18432
      %36 = vsyncadd [#allocation6], %s35
      %s37 = sshll.u32 [#allocation5], 4
      %s38 = int_to_ptr.vmem [resolvable:$true] %s37
      %43 = dma.hbm_to_vmem [thread:$0]  %s3, 18432, %s38, [#allocation6], 384, 384, 24
    $region17: #{tpu_custom_call.1} parent=1 // pred_fallthru
      _
    // Predicated region
    $region18: #{tpu_custom_call.1} parent=1 // pred_check
      _
    $region19: #{tpu_custom_call.1} parent=1 // pred_check_branch
      %45 = sbr.rel (0) target = $region21
    $region20: #{tpu_custom_call.1} parent=1 // pred_region
      _
    $region21: #{tpu_custom_call.1} parent=1 // pred_fallthru
      _
    // Predicated region
    $region22: #{tpu_custom_call.1} parent=1 // pred_check
      _
    $region23: #{tpu_custom_call.1} parent=1 // pred_check_branch
      %47 = sbr.rel (0) target = $region25
    $region24: #{tpu_custom_call.1} parent=1 // pred_region
      _
    $region25: #{tpu_custom_call.1} parent=1 // pred_fallthru
      _
    // Predicated region
    $region26: #{tpu_custom_call.1} parent=1 // pred_check
      _
    $region27: #{tpu_custom_call.1} parent=1 // pred_check_branch
      %49 = sbr.rel (0) target = $region29
    $region28: #{tpu_custom_call.1} parent=1 // pred_region
      _
    $region29: #{tpu_custom_call.1} parent=1 // pred_fallthru
      _
    // Predicated region
    $region30: #{tpu_custom_call.1} parent=1 // pred_check
      _
    $region31: #{tpu_custom_call.1} parent=1 // pred_check_branch
      %51 = sbr.rel (0) target = $region33
    $region32: #{tpu_custom_call.1} parent=1 // pred_region
      _
    $region33: #{tpu_custom_call.1} parent=1 // pred_fallthru
      _
    // Predicated region
    $region34: #{tpu_custom_call.1} parent=1 // pred_check
      _
    $region35: #{tpu_custom_call.1} parent=1 // pred_check_branch
      %53 = sbr.rel (0) target = $region37
    $region36: #{tpu_custom_call.1} parent=1 // pred_region
      %54 = dma.done [#allocation3], 12288
    $region37: #{tpu_custom_call.1} parent=1 // pred_fallthru
      _
    // Predicated region
    $region38: #{tpu_custom_call.1} parent=1 // pred_check
      _
    $region39: #{tpu_custom_call.1} parent=1 // pred_check_branch
      %56 = sbr.rel (0) target = $region41
    $region40: #{tpu_custom_call.1} parent=1 // pred_region
      %57 = dma.done [#allocation6], 18432
    $region41: #{tpu_custom_call.1} parent=1 // pred_fallthru
      _
    %v58 = vld [vmem:[%s0] sm:$0xff]
    %v59 = vld [vmem:[%s0 + $0x8] sm:$0xff]
    %v60 = vld [vmem:[%s0 + $0x10] sm:$0xff]
    %v61 = vld [vmem:[%s0 + $0x18] sm:$0xff]
    %v62 = vld [vmem:[%s0 + $0x20] sm:$0xff]
    %v63 = vld [vmem:[%s0 + $0x28] sm:$0xff]
    %v64 = vld [vmem:[%s0 + $0x30] sm:$0xff]
    %v65 = vld [vmem:[%s0 + $0x38] sm:$0xff]
    %v66 = vld [vmem:[%s1] sm:$0xff]
    %v67 = vld [vmem:[%s1 + $0x8] sm:$0xff]
    %v68 = vld [vmem:[%s1 + $0x10] sm:$0xff]
    %v69 = vld [vmem:[%s1 + $0x18] sm:$0xff]
    %v70 = vld [vmem:[%s1 + $0x20] sm:$0xff]
    %v71 = vld [vmem:[%s1 + $0x28] sm:$0xff]
    %v72 = vld [vmem:[%s4] sm:$0x7]
    %v74 = vlaneseq
    %v75 = vshrl.u32 %v74, 7
    %v76 = vsub.s32 0, %v75
    %v77 = vrot.slane %v72, %v76
    %v78 = vlaneseq
    %v79 = vshrl.u32 %v78, 7
    %v80 = vsub.s32 1, %v79
    %v81 = vrot.slane %v72, %v80
    %v82 = vlaneseq
    %v83 = vshrl.u32 %v82, 7
    %v84 = vsub.s32 2, %v83
    %v85 = vrot.slane %v72, %v84
    %vm89 = vcmask 130048
    %v91 = vsel %vm89, %v58, 0
    %v94 = vsel %vm89, %v59, 0
    %v97 = vsel %vm89, %v60, 0
    %v100 = vsel %vm89, %v61, 0
    %v103 = vsel %vm89, %v62, 0
    %v106 = vsel %vm89, %v63, 0
    %v109 = vsel %vm89, %v64, 0
    %v112 = vsel %vm89, %v65, 0
    %114 = vmatprep.subr.mxu0 0.0
    %115 = vmatpush1.msra.mxu0 0.0
    %116 = vmatprep.subr.mxu0 0.0
    %117 = vmatpush1.msra.mxu0 0.0
    %118 = vmatprep.subr.mxu0 0.0
    %119 = vmatpush1.msra.mxu0 0.0
    %120 = vmatprep.subr.mxu0 0.0
    %121 = vmatpush1.msra.mxu0 0.0
    %122 = vmatprep.subr.mxu0 0.0
    %123 = vmatpush1.msra.mxu0 0.0
    %124 = vmatprep.subr.mxu0 0.0
    %125 = vmatpush1.msra.mxu0 0.0
    %126 = vmatprep.subr.mxu0 0.0
    %127 = vmatpush1.msra.mxu0 0.0
    %128 = vmatprep.subr.mxu0 0.0
    %129 = vmatpush1.msra.mxu0 0.0
    %130 = vmatprep.subr.mxu0 0.0
    %131 = vmatpush1.msra.mxu0 0.0
    %132 = vmatprep.subr.mxu0 0.0
    %133 = vmatpush1.msra.mxu0 0.0
    %134 = vmatprep.subr.mxu0 0.0
    %135 = vmatpush1.msra.mxu0 0.0
    %136 = vmatprep.subr.mxu0 0.0
    %137 = vmatpush1.msra.mxu0 0.0
    %138 = vmatprep.subr.mxu0 0.0
    %139 = vmatpush1.msra.mxu0 0.0
    %140 = vmatprep.subr.mxu0 0.0
    %141 = vmatpush1.msra.mxu0 0.0
    %142 = vmatprep.subr.mxu0 %v70
    %143 = vmatpush1.msra.mxu0 %v69
    %144 = vmatprep.subr.mxu0 %v67
    %145 = vmatpush1.msra.mxu0 %v66
    %146 = vmatprep.subr.mxu0 0.0
    %147 = vmatpush2.msra.mxu0 0.0
    %148 = vmatprep.subr.mxu0 0.0
    %149 = vmatpush2.msra.mxu0 0.0
    %150 = vmatprep.subr.mxu0 0.0
    %151 = vmatpush2.msra.mxu0 0.0
    %152 = vmatprep.subr.mxu0 0.0
    %153 = vmatpush2.msra.mxu0 0.0
    %154 = vmatprep.subr.mxu0 0.0
    %155 = vmatpush2.msra.mxu0 0.0
    %156 = vmatprep.subr.mxu0 0.0
    %157 = vmatpush2.msra.mxu0 0.0
    %158 = vmatprep.subr.mxu0 0.0
    %159 = vmatpush2.msra.mxu0 0.0
    %160 = vmatprep.subr.mxu0 0.0
    %161 = vmatpush2.msra.mxu0 0.0
    %162 = vmatprep.subr.mxu0 0.0
    %163 = vmatpush2.msra.mxu0 0.0
    %164 = vmatprep.subr.mxu0 0.0
    %165 = vmatpush2.msra.mxu0 0.0
    %166 = vmatprep.subr.mxu0 0.0
    %167 = vmatpush2.msra.mxu0 0.0
    %168 = vmatprep.subr.mxu0 0.0
    %169 = vmatpush2.msra.mxu0 0.0
    %170 = vmatprep.subr.mxu0 0.0
    %171 = vmatpush2.msra.mxu0 0.0
    %172 = vmatprep.subr.mxu0 0.0
    %173 = vmatpush2.msra.mxu0 0.0
    %174 = vmatprep.subr.mxu0 0.0
    %175 = vmatpush2.msra.mxu0 0.0
    %176 = vmatprep.subr.mxu0 0.0
    %177 = vmatpush2.msra.mxu0 0.0
    %178 = vmatprep.mubr.f32.mxu0 0.0
    %179 = vmatmul.mubr.f32.gmra.mxu0 %v91
    %v180 = vpop.f32.mrf.mxu0
    %v181 = vadd.f32 %v77, %v180
    %v182 = vpop.f32.mrf.mxu0
    %v183 = vadd.f32 %v81, %v182
    %184 = vmatprep.mubr.f32.mxu0 0.0
    %185 = vmatmul.mubr.f32.gmra.mxu0 %v94
    %v186 = vpop.f32.mrf.mxu0
    %v187 = vadd.f32 %v77, %v186
    %v188 = vpop.f32.mrf.mxu0
    %v189 = vadd.f32 %v81, %v188
    %190 = vmatprep.mubr.f32.mxu0 0.0
    %191 = vmatmul.mubr.f32.gmra.mxu0 %v97
    %v192 = vpop.f32.mrf.mxu0
    %v193 = vadd.f32 %v77, %v192
    %v194 = vpop.f32.mrf.mxu0
    %v195 = vadd.f32 %v81, %v194
    %196 = vmatprep.mubr.f32.mxu0 0.0
    %197 = vmatmul.mubr.f32.gmra.mxu0 %v100
    %v198 = vpop.f32.mrf.mxu0
    %v199 = vadd.f32 %v77, %v198
    %v200 = vpop.f32.mrf.mxu0
    %v201 = vadd.f32 %v81, %v200
    %202 = vmatprep.mubr.f32.mxu0 0.0
    %203 = vmatmul.mubr.f32.gmra.mxu0 %v103
    %v204 = vpop.f32.mrf.mxu0
    %v205 = vadd.f32 %v77, %v204
    %v206 = vpop.f32.mrf.mxu0
    %v207 = vadd.f32 %v81, %v206
    %208 = vmatprep.mubr.f32.mxu0 0.0
    %209 = vmatmul.mubr.f32.gmra.mxu0 %v106
    %v210 = vpop.f32.mrf.mxu0
    %v211 = vadd.f32 %v77, %v210
    %v212 = vpop.f32.mrf.mxu0
    %v213 = vadd.f32 %v81, %v212
    %214 = vmatprep.mubr.f32.mxu0 0.0
    %215 = vmatmul.mubr.f32.gmra.mxu0 %v109
    %v216 = vpop.f32.mrf.mxu0
    %v217 = vadd.f32 %v77, %v216
    %v218 = vpop.f32.mrf.mxu0
    %v219 = vadd.f32 %v81, %v218
    %220 = vmatprep.mubr.f32.mxu0 0.0
    %221 = vmatmul.mubr.f32.gmra.mxu0 %v112
    %v222 = vpop.f32.mrf.mxu0
    %v223 = vadd.f32 %v77, %v222
    %v224 = vpop.f32.mrf.mxu0
    %v225 = vadd.f32 %v81, %v224
    %226 = vdwg.mxu0
    %227 = vmatprep.subr.mxu0 0.0
    %228 = vmatpush1.msra.mxu0 0.0
    %229 = vmatprep.subr.mxu0 0.0
    %230 = vmatpush1.msra.mxu0 0.0
    %231 = vmatprep.subr.mxu0 0.0
    %232 = vmatpush1.msra.mxu0 0.0
    %233 = vmatprep.subr.mxu0 0.0
    %234 = vmatpush1.msra.mxu0 0.0
    %235 = vmatprep.subr.mxu0 0.0
    %236 = vmatpush1.msra.mxu0 0.0
    %237 = vmatprep.subr.mxu0 0.0
    %238 = vmatpush1.msra.mxu0 0.0
    %239 = vmatprep.subr.mxu0 0.0
    %240 = vmatpush1.msra.mxu0 0.0
    %241 = vmatprep.subr.mxu0 0.0
    %242 = vmatpush1.msra.mxu0 0.0
    %243 = vmatprep.subr.mxu0 0.0
    %244 = vmatpush1.msra.mxu0 0.0
    %245 = vmatprep.subr.mxu0 0.0
    %246 = vmatpush1.msra.mxu0 0.0
    %247 = vmatprep.subr.mxu0 0.0
    %248 = vmatpush1.msra.mxu0 0.0
    %249 = vmatprep.subr.mxu0 0.0
    %250 = vmatpush1.msra.mxu0 0.0
    %251 = vmatprep.subr.mxu0 0.0
    %252 = vmatpush1.msra.mxu0 0.0
    %253 = vmatprep.subr.mxu0 0.0
    %254 = vmatpush1.msra.mxu0 0.0
    %255 = vmatprep.subr.mxu0 0.0
    %256 = vmatpush1.msra.mxu0 %v71
    %257 = vmatprep.subr.mxu0 0.0
    %258 = vmatpush1.msra.mxu0 %v68
    %259 = vmatprep.subr.mxu0 0.0
    %260 = vmatpush2.msra.mxu0 0.0
    %261 = vmatprep.subr.mxu0 0.0
    %262 = vmatpush2.msra.mxu0 0.0
    %263 = vmatprep.subr.mxu0 0.0
    %264 = vmatpush2.msra.mxu0 0.0
    %265 = vmatprep.subr.mxu0 0.0
    %266 = vmatpush2.msra.mxu0 0.0
    %267 = vmatprep.subr.mxu0 0.0
    %268 = vmatpush2.msra.mxu0 0.0
    %269 = vmatprep.subr.mxu0 0.0
    %270 = vmatpush2.msra.mxu0 0.0
    %271 = vmatprep.subr.mxu0 0.0
    %272 = vmatpush2.msra.mxu0 0.0
    %273 = vmatprep.subr.mxu0 0.0
    %274 = vmatpush2.msra.mxu0 0.0
    %275 = vmatprep.subr.mxu0 0.0
    %276 = vmatpush2.msra.mxu0 0.0
    %277 = vmatprep.subr.mxu0 0.0
    %278 = vmatpush2.msra.mxu0 0.0
    %279 = vmatprep.subr.mxu0 0.0
    %280 = vmatpush2.msra.mxu0 0.0
    %281 = vmatprep.subr.mxu0 0.0
    %282 = vmatpush2.msra.mxu0 0.0
    %283 = vmatprep.subr.mxu0 0.0
    %284 = vmatpush2.msra.mxu0 0.0
    %285 = vmatprep.subr.mxu0 0.0
    %286 = vmatpush2.msra.mxu0 0.0
    %287 = vmatprep.subr.mxu0 0.0
    %288 = vmatpush2.msra.mxu0 0.0
    %289 = vmatprep.subr.mxu0 0.0
    %290 = vmatpush2.msra.mxu0 0.0
    %291 = vmatprep.mubr.f32.mxu0 0.0
    %292 = vmatmul.mubr.f32.gmra.mxu0 %v91
    %v293 = vpop.f32.mrf.mxu0
    %v294 = vadd.f32 %v85, %v293
    %v295 = vpop.f32.mrf.mxu0
    %296 = vmatprep.mubr.f32.mxu0 0.0
    %297 = vmatmul.mubr.f32.gmra.mxu0 %v94
    %v298 = vpop.f32.mrf.mxu0
    %v299 = vadd.f32 %v85, %v298
    %v300 = vpop.f32.mrf.mxu0
    %301 = vmatprep.mubr.f32.mxu0 0.0
    %302 = vmatmul.mubr.f32.gmra.mxu0 %v97
    %v303 = vpop.f32.mrf.mxu0
    %v304 = vadd.f32 %v85, %v303
    %v305 = vpop.f32.mrf.mxu0
    %306 = vmatprep.mubr.f32.mxu0 0.0
    %307 = vmatmul.mubr.f32.gmra.mxu0 %v100
    %v308 = vpop.f32.mrf.mxu0
    %v309 = vadd.f32 %v85, %v308
    %v310 = vpop.f32.mrf.mxu0
    %311 = vmatprep.mubr.f32.mxu0 0.0
    %312 = vmatmul.mubr.f32.gmra.mxu0 %v103
    %v313 = vpop.f32.mrf.mxu0
    %v314 = vadd.f32 %v85, %v313
    %v315 = vpop.f32.mrf.mxu0
    %316 = vmatprep.mubr.f32.mxu0 0.0
    %317 = vmatmul.mubr.f32.gmra.mxu0 %v106
    %v318 = vpop.f32.mrf.mxu0
    %v319 = vadd.f32 %v85, %v318
    %v320 = vpop.f32.mrf.mxu0
    %321 = vmatprep.mubr.f32.mxu0 0.0
    %322 = vmatmul.mubr.f32.gmra.mxu0 %v109
    %v323 = vpop.f32.mrf.mxu0
    %v324 = vadd.f32 %v85, %v323
    %v325 = vpop.f32.mrf.mxu0
    %326 = vmatprep.mubr.f32.mxu0 0.0
    %327 = vmatmul.mubr.f32.gmra.mxu0 %v112
    %v328 = vpop.f32.mrf.mxu0
    %v329 = vadd.f32 %v85, %v328
    %v330 = vpop.f32.mrf.mxu0
    %331 = vdwg.mxu0
    %v332 = vld [vmem:[#allocation5] sm:$0xff]
    %v333 = vld [vmem:[#allocation5 + $0x8] sm:$0xff]
    %v334 = vld [vmem:[#allocation5 + $0x10] sm:$0xff]
    %v335 = vld [vmem:[#allocation5 + $0x18] sm:$0xff]
    %v336 = vld [vmem:[#allocation5 + $0x20] sm:$0xff]
    %v337 = vld [vmem:[#allocation5 + $0x28] sm:$0xff]
    %v338 = vld [vmem:[#allocation5 + $0x30] sm:$0xff]
    %v339 = vld [vmem:[#allocation5 + $0x38] sm:$0xff]
    %v340 = vld [vmem:[#allocation5 + $0x40] sm:$0xff]
    %v341 = vld [vmem:[#allocation5 + $0x48] sm:$0xff]
    %v342 = vld [vmem:[#allocation5 + $0x50] sm:$0xff]
    %v343 = vld [vmem:[#allocation5 + $0x58] sm:$0xff]
    %v344 = vld [vmem:[#allocation5 + $0x60] sm:$0xff]
    %v345 = vld [vmem:[#allocation5 + $0x68] sm:$0xff]
    %v346 = vld [vmem:[#allocation5 + $0x70] sm:$0xff]
    %v347 = vld [vmem:[#allocation5 + $0x78] sm:$0xff]
    %v348 = vld [vmem:[#allocation5 + $0x80] sm:$0xff]
    %v349 = vld [vmem:[#allocation5 + $0x88] sm:$0xff]
    %v350 = vld [vmem:[#allocation5 + $0x90] sm:$0xff]
    %v351 = vld [vmem:[#allocation5 + $0x98] sm:$0xff]
    %v352 = vld [vmem:[#allocation5 + $0xa0] sm:$0xff]
    %v353 = vld [vmem:[#allocation5 + $0xa8] sm:$0xff]
    %v354 = vld [vmem:[#allocation5 + $0xb0] sm:$0xff]
    %v355 = vld [vmem:[#allocation5 + $0xb8] sm:$0xff]
    %v356 = vld [vmem:[#allocation5 + $0xc0] sm:$0xff]
    %v357 = vld [vmem:[#allocation5 + $0xc8] sm:$0xff]
    %v358 = vld [vmem:[#allocation5 + $0xd0] sm:$0xff]
    %v359 = vld [vmem:[#allocation5 + $0xd8] sm:$0xff]
    %v360 = vld [vmem:[#allocation5 + $0xe0] sm:$0xff]
    %v361 = vld [vmem:[#allocation5 + $0xe8] sm:$0xff]
    %v362 = vld [vmem:[#allocation5 + $0xf0] sm:$0xff]
    %v363 = vld [vmem:[#allocation5 + $0xf8] sm:$0xff]
    %v364 = vld [vmem:[#allocation5 + $0x100] sm:$0xff]
    %v365 = vld [vmem:[#allocation5 + $0x108] sm:$0xff]
    %v366 = vld [vmem:[#allocation5 + $0x110] sm:$0xff]
    %v367 = vld [vmem:[#allocation5 + $0x118] sm:$0xff]
    %v368 = vld [vmem:[#allocation5 + $0x120] sm:$0xff]
    %v369 = vld [vmem:[#allocation5 + $0x128] sm:$0xff]
    %v370 = vld [vmem:[#allocation5 + $0x130] sm:$0xff]
    %v371 = vld [vmem:[#allocation5 + $0x138] sm:$0xff]
    %v372 = vld [vmem:[#allocation5 + $0x140] sm:$0xff]
    %v373 = vld [vmem:[#allocation5 + $0x148] sm:$0xff]
    %v374 = vld [vmem:[#allocation5 + $0x150] sm:$0xff]
    %v375 = vld [vmem:[#allocation5 + $0x158] sm:$0xff]
    %v376 = vld [vmem:[#allocation5 + $0x160] sm:$0xff]
    %v377 = vld [vmem:[#allocation5 + $0x168] sm:$0xff]
    %v378 = vld [vmem:[#allocation5 + $0x170] sm:$0xff]
    %v379 = vld [vmem:[#allocation5 + $0x178] sm:$0xff]
    %s380 = scalar_lea.vmem [#allocation5], 384
    %v381 = vld [vmem:[%s380] sm:$0xff]
    %v382 = vld [vmem:[%s380 + $0x8] sm:$0xff]
    %v383 = vld [vmem:[%s380 + $0x10] sm:$0xff]
    %v384 = vld [vmem:[%s380 + $0x18] sm:$0xff]
    %v385 = vld [vmem:[%s380 + $0x20] sm:$0xff]
    %v386 = vld [vmem:[%s380 + $0x28] sm:$0xff]
    %v387 = vld [vmem:[%s380 + $0x30] sm:$0xff]
    %v388 = vld [vmem:[%s380 + $0x38] sm:$0xff]
    %v389 = vld [vmem:[%s380 + $0x40] sm:$0xff]
    %v390 = vld [vmem:[%s380 + $0x48] sm:$0xff]
    %v391 = vld [vmem:[%s380 + $0x50] sm:$0xff]
    %v392 = vld [vmem:[%s380 + $0x58] sm:$0xff]
    %v393 = vld [vmem:[%s380 + $0x60] sm:$0xff]
    %v394 = vld [vmem:[%s380 + $0x68] sm:$0xff]
    %v395 = vld [vmem:[%s380 + $0x70] sm:$0xff]
    %v396 = vld [vmem:[%s380 + $0x78] sm:$0xff]
    %v397 = vld [vmem:[%s380 + $0x80] sm:$0xff]
    %v398 = vld [vmem:[%s380 + $0x88] sm:$0xff]
    %v399 = vld [vmem:[%s380 + $0x90] sm:$0xff]
    %v400 = vld [vmem:[%s380 + $0x98] sm:$0xff]
    %v401 = vld [vmem:[%s380 + $0xa0] sm:$0xff]
    %v402 = vld [vmem:[%s380 + $0xa8] sm:$0xff]
    %v403 = vld [vmem:[%s380 + $0xb0] sm:$0xff]
    %v404 = vld [vmem:[%s380 + $0xb8] sm:$0xff]
    %v405 = vld [vmem:[%s380 + $0xc0] sm:$0xff]
    %v406 = vld [vmem:[%s380 + $0xc8] sm:$0xff]
    %v407 = vld [vmem:[%s380 + $0xd0] sm:$0xff]
    %v408 = vld [vmem:[%s380 + $0xd8] sm:$0xff]
    %v409 = vld [vmem:[%s380 + $0xe0] sm:$0xff]
    %v410 = vld [vmem:[%s380 + $0xe8] sm:$0xff]
    %v411 = vld [vmem:[%s380 + $0xf0] sm:$0xff]
    %v412 = vld [vmem:[%s380 + $0xf8] sm:$0xff]
    %v413 = vld [vmem:[%s380 + $0x100] sm:$0xff]
    %v414 = vld [vmem:[%s380 + $0x108] sm:$0xff]
    %v415 = vld [vmem:[%s380 + $0x110] sm:$0xff]
    %v416 = vld [vmem:[%s380 + $0x118] sm:$0xff]
    %v417 = vld [vmem:[%s380 + $0x120] sm:$0xff]
    %v418 = vld [vmem:[%s380 + $0x128] sm:$0xff]
    %v419 = vld [vmem:[%s380 + $0x130] sm:$0xff]
    %v420 = vld [vmem:[%s380 + $0x138] sm:$0xff]
    %v421 = vld [vmem:[%s380 + $0x140] sm:$0xff]
    %v422 = vld [vmem:[%s380 + $0x148] sm:$0xff]
    %v423 = vld [vmem:[%s380 + $0x150] sm:$0xff]
    %v424 = vld [vmem:[%s380 + $0x158] sm:$0xff]
    %v425 = vld [vmem:[%s380 + $0x160] sm:$0xff]
    %v426 = vld [vmem:[%s380 + $0x168] sm:$0xff]
    %v427 = vld [vmem:[%s380 + $0x170] sm:$0xff]
    %v428 = vld [vmem:[%s380 + $0x178] sm:$0xff]
    %s429 = scalar_lea.vmem [#allocation5], 768
    %v430 = vld [vmem:[%s429] sm:$0xff]
    %v431 = vld [vmem:[%s429 + $0x8] sm:$0xff]
    %v432 = vld [vmem:[%s429 + $0x10] sm:$0xff]
    %v433 = vld [vmem:[%s429 + $0x18] sm:$0xff]
    %v434 = vld [vmem:[%s429 + $0x20] sm:$0xff]
    %v435 = vld [vmem:[%s429 + $0x28] sm:$0xff]
    %v436 = vld [vmem:[%s429 + $0x30] sm:$0xff]
    %v437 = vld [vmem:[%s429 + $0x38] sm:$0xff]
    %v438 = vld [vmem:[%s429 + $0x40] sm:$0xff]
    %v439 = vld [vmem:[%s429 + $0x48] sm:$0xff]
    %v440 = vld [vmem:[%s429 + $0x50] sm:$0xff]
    %v441 = vld [vmem:[%s429 + $0x58] sm:$0xff]
    %v442 = vld [vmem:[%s429 + $0x60] sm:$0xff]
    %v443 = vld [vmem:[%s429 + $0x68] sm:$0xff]
    %v444 = vld [vmem:[%s429 + $0x70] sm:$0xff]
    %v445 = vld [vmem:[%s429 + $0x78] sm:$0xff]
    %v446 = vld [vmem:[%s429 + $0x80] sm:$0xff]
    %v447 = vld [vmem:[%s429 + $0x88] sm:$0xff]
    %v448 = vld [vmem:[%s429 + $0x90] sm:$0xff]
    %v449 = vld [vmem:[%s429 + $0x98] sm:$0xff]
    %v450 = vld [vmem:[%s429 + $0xa0] sm:$0xff]
    %v451 = vld [vmem:[%s429 + $0xa8] sm:$0xff]
    %v452 = vld [vmem:[%s429 + $0xb0] sm:$0xff]
    %v453 = vld [vmem:[%s429 + $0xb8] sm:$0xff]
    %v454 = vld [vmem:[%s429 + $0xc0] sm:$0xff]
    %v455 = vld [vmem:[%s429 + $0xc8] sm:$0xff]
    %v456 = vld [vmem:[%s429 + $0xd0] sm:$0xff]
    %v457 = vld [vmem:[%s429 + $0xd8] sm:$0xff]
    %v458 = vld [vmem:[%s429 + $0xe0] sm:$0xff]
    %v459 = vld [vmem:[%s429 + $0xe8] sm:$0xff]
    %v460 = vld [vmem:[%s429 + $0xf0] sm:$0xff]
    %v461 = vld [vmem:[%s429 + $0xf8] sm:$0xff]
    %v462 = vld [vmem:[%s429 + $0x100] sm:$0xff]
    %v463 = vld [vmem:[%s429 + $0x108] sm:$0xff]
    %v464 = vld [vmem:[%s429 + $0x110] sm:$0xff]
    %v465 = vld [vmem:[%s429 + $0x118] sm:$0xff]
    %v466 = vld [vmem:[%s429 + $0x120] sm:$0xff]
    %v467 = vld [vmem:[%s429 + $0x128] sm:$0xff]
    %v468 = vld [vmem:[%s429 + $0x130] sm:$0xff]
    %v469 = vld [vmem:[%s429 + $0x138] sm:$0xff]
    %v470 = vld [vmem:[%s429 + $0x140] sm:$0xff]
    %v471 = vld [vmem:[%s429 + $0x148] sm:$0xff]
    %v472 = vld [vmem:[%s429 + $0x150] sm:$0xff]
    %v473 = vld [vmem:[%s429 + $0x158] sm:$0xff]
    %v474 = vld [vmem:[%s429 + $0x160] sm:$0xff]
    %v475 = vld [vmem:[%s429 + $0x168] sm:$0xff]
    %v476 = vld [vmem:[%s429 + $0x170] sm:$0xff]
    %v477 = vld [vmem:[%s429 + $0x178] sm:$0xff]
    %v478 = vld [vmem:[#allocation2] sm:$0xff]
    %v479 = vld [vmem:[#allocation2 + $0x8] sm:$0xff]
    %v480 = vld [vmem:[#allocation2 + $0x10] sm:$0xff]
    %v481 = vld [vmem:[#allocation2 + $0x18] sm:$0xff]
    %v482 = vld [vmem:[#allocation2 + $0x20] sm:$0xff]
    %v483 = vld [vmem:[#allocation2 + $0x28] sm:$0xff]
    %v484 = vld [vmem:[#allocation2 + $0x30] sm:$0xff]
    %v485 = vld [vmem:[#allocation2 + $0x38] sm:$0xff]
    %v486 = vld [vmem:[#allocation2 + $0x40] sm:$0xff]
    %v487 = vld [vmem:[#allocation2 + $0x48] sm:$0xff]
    %v488 = vld [vmem:[#allocation2 + $0x50] sm:$0xff]
    %v489 = vld [vmem:[#allocation2 + $0x58] sm:$0xff]
    %v490 = vld [vmem:[#allocation2 + $0x60] sm:$0xff]
    %v491 = vld [vmem:[#allocation2 + $0x68] sm:$0xff]
    %v492 = vld [vmem:[#allocation2 + $0x70] sm:$0xff]
    %v493 = vld [vmem:[#allocation2 + $0x78] sm:$0xff]
    %v494 = vld [vmem:[#allocation2 + $0x80] sm:$0xff]
    %v495 = vld [vmem:[#allocation2 + $0x88] sm:$0xff]
    %v496 = vld [vmem:[#allocation2 + $0x90] sm:$0xff]
    %v497 = vld [vmem:[#allocation2 + $0x98] sm:$0xff]
    %v498 = vld [vmem:[#allocation2 + $0xa0] sm:$0xff]
    %v499 = vld [vmem:[#allocation2 + $0xa8] sm:$0xff]
    %v500 = vld [vmem:[#allocation2 + $0xb0] sm:$0xff]
    %v501 = vld [vmem:[#allocation2 + $0xb8] sm:$0xff]
    %v502 = vld [vmem:[#allocation2 + $0xc0] sm:$0xff]
    %v503 = vld [vmem:[#allocation2 + $0xc8] sm:$0xff]
    %v504 = vld [vmem:[#allocation2 + $0xd0] sm:$0xff]
    %v505 = vld [vmem:[#allocation2 + $0xd8] sm:$0xff]
    %v506 = vld [vmem:[#allocation2 + $0xe0] sm:$0xff]
    %v507 = vld [vmem:[#allocation2 + $0xe8] sm:$0xff]
    %v508 = vld [vmem:[#allocation2 + $0xf0] sm:$0xff]
    %v509 = vld [vmem:[#allocation2 + $0xf8] sm:$0xff]
    %v510 = vld [vmem:[#allocation2 + $0x100] sm:$0xff]
    %v511 = vld [vmem:[#allocation2 + $0x108] sm:$0xff]
    %v512 = vld [vmem:[#allocation2 + $0x110] sm:$0xff]
    %v513 = vld [vmem:[#allocation2 + $0x118] sm:$0xff]
    %v514 = vld [vmem:[#allocation2 + $0x120] sm:$0xff]
    %v515 = vld [vmem:[#allocation2 + $0x128] sm:$0xff]
    %v516 = vld [vmem:[#allocation2 + $0x130] sm:$0xff]
    %v517 = vld [vmem:[#allocation2 + $0x138] sm:$0xff]
    %v518 = vld [vmem:[#allocation2 + $0x140] sm:$0xff]
    %v519 = vld [vmem:[#allocation2 + $0x148] sm:$0xff]
    %v520 = vld [vmem:[#allocation2 + $0x150] sm:$0xff]
    %v521 = vld [vmem:[#allocation2 + $0x158] sm:$0xff]
    %v522 = vld [vmem:[#allocation2 + $0x160] sm:$0xff]
    %v523 = vld [vmem:[#allocation2 + $0x168] sm:$0xff]
    %v524 = vld [vmem:[#allocation2 + $0x170] sm:$0xff]
    %v525 = vld [vmem:[#allocation2 + $0x178] sm:$0xff]
    %s526 = scalar_lea.vmem [#allocation2], 384
    %v527 = vld [vmem:[%s526] sm:$0xff]
    %v528 = vld [vmem:[%s526 + $0x8] sm:$0xff]
    %v529 = vld [vmem:[%s526 + $0x10] sm:$0xff]
    %v530 = vld [vmem:[%s526 + $0x18] sm:$0xff]
    %v531 = vld [vmem:[%s526 + $0x20] sm:$0xff]
    %v532 = vld [vmem:[%s526 + $0x28] sm:$0xff]
    %v533 = vld [vmem:[%s526 + $0x30] sm:$0xff]
    %v534 = vld [vmem:[%s526 + $0x38] sm:$0xff]
    %v535 = vld [vmem:[%s526 + $0x40] sm:$0xff]
    %v536 = vld [vmem:[%s526 + $0x48] sm:$0xff]
    %v537 = vld [vmem:[%s526 + $0x50] sm:$0xff]
    %v538 = vld [vmem:[%s526 + $0x58] sm:$0xff]
    %v539 = vld [vmem:[%s526 + $0x60] sm:$0xff]
    %v540 = vld [vmem:[%s526 + $0x68] sm:$0xff]
    %v541 = vld [vmem:[%s526 + $0x70] sm:$0xff]
    %v542 = vld [vmem:[%s526 + $0x78] sm:$0xff]
    %v543 = vld [vmem:[%s526 + $0x80] sm:$0xff]
    %v544 = vld [vmem:[%s526 + $0x88] sm:$0xff]
    %v545 = vld [vmem:[%s526 + $0x90] sm:$0xff]
    %v546 = vld [vmem:[%s526 + $0x98] sm:$0xff]
    %v547 = vld [vmem:[%s526 + $0xa0] sm:$0xff]
    %v548 = vld [vmem:[%s526 + $0xa8] sm:$0xff]
    %v549 = vld [vmem:[%s526 + $0xb0] sm:$0xff]
    %v550 = vld [vmem:[%s526 + $0xb8] sm:$0xff]
    %v551 = vld [vmem:[%s526 + $0xc0] sm:$0xff]
    %v552 = vld [vmem:[%s526 + $0xc8] sm:$0xff]
    %v553 = vld [vmem:[%s526 + $0xd0] sm:$0xff]
    %v554 = vld [vmem:[%s526 + $0xd8] sm:$0xff]
    %v555 = vld [vmem:[%s526 + $0xe0] sm:$0xff]
    %v556 = vld [vmem:[%s526 + $0xe8] sm:$0xff]
    %v557 = vld [vmem:[%s526 + $0xf0] sm:$0xff]
    %v558 = vld [vmem:[%s526 + $0xf8] sm:$0xff]
    %v559 = vld [vmem:[%s526 + $0x100] sm:$0xff]
    %v560 = vld [vmem:[%s526 + $0x108] sm:$0xff]
    %v561 = vld [vmem:[%s526 + $0x110] sm:$0xff]
    %v562 = vld [vmem:[%s526 + $0x118] sm:$0xff]
    %v563 = vld [vmem:[%s526 + $0x120] sm:$0xff]
    %v564 = vld [vmem:[%s526 + $0x128] sm:$0xff]
    %v565 = vld [vmem:[%s526 + $0x130] sm:$0xff]
    %v566 = vld [vmem:[%s526 + $0x138] sm:$0xff]
    %v567 = vld [vmem:[%s526 + $0x140] sm:$0xff]
    %v568 = vld [vmem:[%s526 + $0x148] sm:$0xff]
    %v569 = vld [vmem:[%s526 + $0x150] sm:$0xff]
    %v570 = vld [vmem:[%s526 + $0x158] sm:$0xff]
    %v571 = vld [vmem:[%s526 + $0x160] sm:$0xff]
    %v572 = vld [vmem:[%s526 + $0x168] sm:$0xff]
    %v573 = vld [vmem:[%s526 + $0x170] sm:$0xff]
    %v574 = vld [vmem:[%s526 + $0x178] sm:$0xff]
    %s575 = scalar_lea.vmem %s4, 3
    %v576 = vld [vmem:[%s575] sm:$0x7]
    %v578 = vlaneseq
    %v579 = vshrl.u32 %v578, 7
    %v580 = vsub.s32 0, %v579
    %v581 = vrot.slane %v576, %v580
    %v582 = vlaneseq
    %v583 = vshrl.u32 %v582, 7
    %v584 = vsub.s32 1, %v583
    %v585 = vrot.slane %v576, %v584
    %v586 = vlaneseq
    %v587 = vshrl.u32 %v586, 7
    %v588 = vsub.s32 2, %v587
    %v589 = vrot.slane %v576, %v588
    %s593 = scalar_lea.vmem %s4, 6
    %v594 = vld [vmem:[%s593] sm:$0x7]
    %v596 = vlaneseq
    %v597 = vshrl.u32 %v596, 7
    %v598 = vsub.s32 0, %v597
    %v599 = vrot.slane %v594, %v598
    %v600 = vlaneseq
    %v601 = vshrl.u32 %v600, 7
    %v602 = vsub.s32 1, %v601
    %v603 = vrot.slane %v594, %v602
    %v604 = vlaneseq
    %v605 = vshrl.u32 %v604, 7
    %v606 = vsub.s32 2, %v605
    %v607 = vrot.slane %v594, %v606
    %v611 = vld [vmem:[%s5] sm:$0x7]
    %v613 = vlaneseq
    %v614 = vshrl.u32 %v613, 7
    %v615 = vsub.s32 0, %v614
    %v616 = vrot.slane %v611, %v615
    %v617 = vlaneseq
    %v618 = vshrl.u32 %v617, 7
    %v619 = vsub.s32 1, %v618
    %v620 = vrot.slane %v611, %v619
    %v621 = vlaneseq
    %v622 = vshrl.u32 %v621, 7
    %v623 = vsub.s32 2, %v622
    %v624 = vrot.slane %v611, %v623
    %s628 = scalar_lea.vmem %s5, 3
    %v629 = vld [vmem:[%s628] sm:$0x7]
    %v631 = vlaneseq
    %v632 = vshrl.u32 %v631, 7
    %v633 = vsub.s32 0, %v632
    %v634 = vrot.slane %v629, %v633
    %v635 = vlaneseq
    %v636 = vshrl.u32 %v635, 7
    %v637 = vsub.s32 1, %v636
    %v638 = vrot.slane %v629, %v637
    %v639 = vlaneseq
    %v640 = vshrl.u32 %v639, 7
    %v641 = vsub.s32 2, %v640
    %v642 = vrot.slane %v629, %v641
    %s646 = scalar_lea.vmem %s5, 6
    %v647 = vld [vmem:[%s646] sm:$0x7]
    %v649 = vlaneseq
    %v650 = vshrl.u32 %v649, 7
    %v651 = vsub.s32 0, %v650
    %v652 = vrot.slane %v647, %v651
    %v653 = vlaneseq
    %v654 = vshrl.u32 %v653, 7
    %v655 = vsub.s32 1, %v654
    %v656 = vrot.slane %v647, %v655
    %v657 = vlaneseq
    %v658 = vshrl.u32 %v657, 7
    %v659 = vsub.s32 2, %v658
    %v660 = vrot.slane %v647, %v659
    %664 = vmatprep.subr.mxu0 %v378
    %665 = vmatpush1.msra.mxu0 %v377
    %666 = vmatprep.subr.mxu0 %v375
    %667 = vmatpush1.msra.mxu0 %v374
    %668 = vmatprep.subr.mxu0 %v372
    %669 = vmatpush1.msra.mxu0 %v371
    %670 = vmatprep.subr.mxu0 %v369
    %671 = vmatpush1.msra.mxu0 %v368
    %672 = vmatprep.subr.mxu0 %v366
    %673 = vmatpush1.msra.mxu0 %v365
    %674 = vmatprep.subr.mxu0 %v363
    %675 = vmatpush1.msra.mxu0 %v362
    %676 = vmatprep.subr.mxu0 %v360
    %677 = vmatpush1.msra.mxu0 %v359
    %678 = vmatprep.subr.mxu0 %v357
    %679 = vmatpush1.msra.mxu0 %v356
    %680 = vmatprep.subr.mxu0 %v354
    %681 = vmatpush1.msra.mxu0 %v353
    %682 = vmatprep.subr.mxu0 %v351
    %683 = vmatpush1.msra.mxu0 %v350
    %684 = vmatprep.subr.mxu0 %v348
    %685 = vmatpush1.msra.mxu0 %v347
    %686 = vmatprep.subr.mxu0 %v345
    %687 = vmatpush1.msra.mxu0 %v344
    %688 = vmatprep.subr.mxu0 %v342
    %689 = vmatpush1.msra.mxu0 %v341
    %690 = vmatprep.subr.mxu0 %v339
    %691 = vmatpush1.msra.mxu0 %v338
    %692 = vmatprep.subr.mxu0 %v336
    %693 = vmatpush1.msra.mxu0 %v335
    %694 = vmatprep.subr.mxu0 %v333
    %695 = vmatpush1.msra.mxu0 %v332
    %696 = vmatprep.subr.mxu0 0.0
    %697 = vmatpush2.msra.mxu0 0.0
    %698 = vmatprep.subr.mxu0 0.0
    %699 = vmatpush2.msra.mxu0 0.0
    %700 = vmatprep.subr.mxu0 0.0
    %701 = vmatpush2.msra.mxu0 0.0
    %702 = vmatprep.subr.mxu0 0.0
    %703 = vmatpush2.msra.mxu0 0.0
    %704 = vmatprep.subr.mxu0 0.0
    %705 = vmatpush2.msra.mxu0 0.0
    %706 = vmatprep.subr.mxu0 0.0
    %707 = vmatpush2.msra.mxu0 0.0
    %708 = vmatprep.subr.mxu0 0.0
    %709 = vmatpush2.msra.mxu0 0.0
    %710 = vmatprep.subr.mxu0 0.0
    %711 = vmatpush2.msra.mxu0 0.0
    %712 = vmatprep.subr.mxu0 0.0
    %713 = vmatpush2.msra.mxu0 0.0
    %714 = vmatprep.subr.mxu0 0.0
    %715 = vmatpush2.msra.mxu0 0.0
    %716 = vmatprep.subr.mxu0 0.0
    %717 = vmatpush2.msra.mxu0 0.0
    %718 = vmatprep.subr.mxu0 0.0
    %719 = vmatpush2.msra.mxu0 0.0
    %720 = vmatprep.subr.mxu0 0.0
    %721 = vmatpush2.msra.mxu0 0.0
    %722 = vmatprep.subr.mxu0 0.0
    %723 = vmatpush2.msra.mxu0 0.0
    %724 = vmatprep.subr.mxu0 0.0
    %725 = vmatpush2.msra.mxu0 0.0
    %726 = vmatprep.subr.mxu0 0.0
    %727 = vmatpush2.msra.mxu0 0.0
    %728 = vmatprep.mubr.f32.mxu0 0.0
    %729 = vmatmul.mubr.f32.gmra.mxu0 0.0
    %v730 = vpop.f32.mrf.mxu0
    %v731 = vadd.f32 %v616, %v730
    %v732 = vpop.f32.mrf.mxu0
    %v733 = vadd.f32 %v620, %v732
    %734 = vdwg.mxu0
    %735 = vmatprep.subr.mxu0 0.0
    %736 = vmatpush1.msra.mxu0 %v379
    %737 = vmatprep.subr.mxu0 0.0
    %738 = vmatpush1.msra.mxu0 %v376
    %739 = vmatprep.subr.mxu0 0.0
    %740 = vmatpush1.msra.mxu0 %v373
    %741 = vmatprep.subr.mxu0 0.0
    %742 = vmatpush1.msra.mxu0 %v370
    %743 = vmatprep.subr.mxu0 0.0
    %744 = vmatpush1.msra.mxu0 %v367
    %745 = vmatprep.subr.mxu0 0.0
    %746 = vmatpush1.msra.mxu0 %v364
    %747 = vmatprep.subr.mxu0 0.0
    %748 = vmatpush1.msra.mxu0 %v361
    %749 = vmatprep.subr.mxu0 0.0
    %750 = vmatpush1.msra.mxu0 %v358
    %751 = vmatprep.subr.mxu0 0.0
    %752 = vmatpush1.msra.mxu0 %v355
    %753 = vmatprep.subr.mxu0 0.0
    %754 = vmatpush1.msra.mxu0 %v352
    %755 = vmatprep.subr.mxu0 0.0
    %756 = vmatpush1.msra.mxu0 %v349
    %757 = vmatprep.subr.mxu0 0.0
    %758 = vmatpush1.msra.mxu0 %v346
    %759 = vmatprep.subr.mxu0 0.0
    %760 = vmatpush1.msra.mxu0 %v343
    %761 = vmatprep.subr.mxu0 0.0
    %762 = vmatpush1.msra.mxu0 %v340
    %763 = vmatprep.subr.mxu0 0.0
    %764 = vmatpush1.msra.mxu0 %v337
    %765 = vmatprep.subr.mxu0 0.0
    %766 = vmatpush1.msra.mxu0 %v334
    %767 = vmatprep.subr.mxu0 0.0
    %768 = vmatpush2.msra.mxu0 0.0
    %769 = vmatprep.subr.mxu0 0.0
    %770 = vmatpush2.msra.mxu0 0.0
    %771 = vmatprep.subr.mxu0 0.0
    %772 = vmatpush2.msra.mxu0 0.0
    %773 = vmatprep.subr.mxu0 0.0
    %774 = vmatpush2.msra.mxu0 0.0
    %775 = vmatprep.subr.mxu0 0.0
    %776 = vmatpush2.msra.mxu0 0.0
    %777 = vmatprep.subr.mxu0 0.0
    %778 = vmatpush2.msra.mxu0 0.0
    %779 = vmatprep.subr.mxu0 0.0
    %780 = vmatpush2.msra.mxu0 0.0
    %781 = vmatprep.subr.mxu0 0.0
    %782 = vmatpush2.msra.mxu0 0.0
    %783 = vmatprep.subr.mxu0 0.0
    %784 = vmatpush2.msra.mxu0 0.0
    %785 = vmatprep.subr.mxu0 0.0
    %786 = vmatpush2.msra.mxu0 0.0
    %787 = vmatprep.subr.mxu0 0.0
    %788 = vmatpush2.msra.mxu0 0.0
    %789 = vmatprep.subr.mxu0 0.0
    %790 = vmatpush2.msra.mxu0 0.0
    %791 = vmatprep.subr.mxu0 0.0
    %792 = vmatpush2.msra.mxu0 0.0
    %793 = vmatprep.subr.mxu0 0.0
    %794 = vmatpush2.msra.mxu0 0.0
    %795 = vmatprep.subr.mxu0 0.0
    %796 = vmatpush2.msra.mxu0 0.0
    %797 = vmatprep.subr.mxu0 0.0
    %798 = vmatpush2.msra.mxu0 0.0
    %799 = vmatprep.mubr.f32.mxu0 0.0
    %800 = vmatmul.mubr.f32.gmra.mxu0 0.0
    %v801 = vpop.f32.mrf.mxu0
    %v802 = vadd.f32 %v624, %v801
    %v803 = vpop.f32.mrf.mxu0
    %804 = vdwg.mxu0
    %v805 = vadd.f32 %v181, %v731
    %v806 = vxor.u32 %v805, 2147483648
    %v807 = vmul.f32 %v806, 1.442695
    %v808 = vpow.pop %v807
    %v809 = vadd.f32 %v808, 1.0
    %v810 = vrcp.pop %v809
    %v811 = vmul.f32 1.0, %v810
    %v812 = vadd.f32 %v183, %v733
    %v813 = vxor.u32 %v812, 2147483648
    %v814 = vmul.f32 %v813, 1.442695
    %v815 = vpow.pop %v814
    %v816 = vadd.f32 %v815, 1.0
    %v817 = vrcp.pop %v816
    %v818 = vmul.f32 1.0, %v817
    %v819 = vmul.f32 %v811, %v802
    %v820 = vadd.f32 %v294, %v819
    %v821 = vtanh.pop %v820
    %v822 = vsub.f32 0.0, %v821
    %v823 = vmul.f32 %v818, %v822
    %v824 = vadd.f32 %v821, %v823
    %825 = vmatprep.subr.mxu0 %v378
    %826 = vmatpush1.msra.mxu0 %v377
    %827 = vmatprep.subr.mxu0 %v375
    %828 = vmatpush1.msra.mxu0 %v374
    %829 = vmatprep.subr.mxu0 %v372
    %830 = vmatpush1.msra.mxu0 %v371
    %831 = vmatprep.subr.mxu0 %v369
    %832 = vmatpush1.msra.mxu0 %v368
    %833 = vmatprep.subr.mxu0 %v366
    %834 = vmatpush1.msra.mxu0 %v365
    %835 = vmatprep.subr.mxu0 %v363
    %836 = vmatpush1.msra.mxu0 %v362
    %837 = vmatprep.subr.mxu0 %v360
    %838 = vmatpush1.msra.mxu0 %v359
    %839 = vmatprep.subr.mxu0 %v357
    %840 = vmatpush1.msra.mxu0 %v356
    %841 = vmatprep.subr.mxu0 %v354
    %842 = vmatpush1.msra.mxu0 %v353
    %843 = vmatprep.subr.mxu0 %v351
    %844 = vmatpush1.msra.mxu0 %v350
    %845 = vmatprep.subr.mxu0 %v348
    %846 = vmatpush1.msra.mxu0 %v347
    %847 = vmatprep.subr.mxu0 %v345
    %848 = vmatpush1.msra.mxu0 %v344
    %849 = vmatprep.subr.mxu0 %v342
    %850 = vmatpush1.msra.mxu0 %v341
    %851 = vmatprep.subr.mxu0 %v339
    %852 = vmatpush1.msra.mxu0 %v338
    %853 = vmatprep.subr.mxu0 %v336
    %854 = vmatpush1.msra.mxu0 %v335
    %855 = vmatprep.subr.mxu0 %v333
    %856 = vmatpush1.msra.mxu0 %v332
    %857 = vmatprep.subr.mxu0 0.0
    %858 = vmatpush2.msra.mxu0 0.0
    %859 = vmatprep.subr.mxu0 0.0
    %860 = vmatpush2.msra.mxu0 0.0
    %861 = vmatprep.subr.mxu0 0.0
    %862 = vmatpush2.msra.mxu0 0.0
    %863 = vmatprep.subr.mxu0 0.0
    %864 = vmatpush2.msra.mxu0 0.0
    %865 = vmatprep.subr.mxu0 0.0
    %866 = vmatpush2.msra.mxu0 0.0
    %867 = vmatprep.subr.mxu0 0.0
    %868 = vmatpush2.msra.mxu0 0.0
    %869 = vmatprep.subr.mxu0 0.0
    %870 = vmatpush2.msra.mxu0 0.0
    %871 = vmatprep.subr.mxu0 0.0
    %872 = vmatpush2.msra.mxu0 0.0
    %873 = vmatprep.subr.mxu0 0.0
    %874 = vmatpush2.msra.mxu0 0.0
    %875 = vmatprep.subr.mxu0 0.0
    %876 = vmatpush2.msra.mxu0 0.0
    %877 = vmatprep.subr.mxu0 0.0
    %878 = vmatpush2.msra.mxu0 0.0
    %879 = vmatprep.subr.mxu0 0.0
    %880 = vmatpush2.msra.mxu0 0.0
    %881 = vmatprep.subr.mxu0 0.0
    %882 = vmatpush2.msra.mxu0 0.0
    %883 = vmatprep.subr.mxu0 0.0
    %884 = vmatpush2.msra.mxu0 0.0
    %885 = vmatprep.subr.mxu0 0.0
    %886 = vmatpush2.msra.mxu0 0.0
    %887 = vmatprep.subr.mxu0 0.0
    %888 = vmatpush2.msra.mxu0 0.0
    %889 = vmatprep.mubr.f32.mxu0 0.0
    %890 = vmatmul.mubr.f32.gmra.mxu0 %v824
    %v891 = vpop.f32.mrf.mxu0
    %v892 = vadd.f32 %v616, %v891
    %v893 = vpop.f32.mrf.mxu0
    %v894 = vadd.f32 %v620, %v893
    %895 = vdwg.mxu0
    %896 = vmatprep.subr.mxu0 0.0
    %897 = vmatpush1.msra.mxu0 %v379
    %898 = vmatprep.subr.mxu0 0.0
    %899 = vmatpush1.msra.mxu0 %v376
    %900 = vmatprep.subr.mxu0 0.0
    %901 = vmatpush1.msra.mxu0 %v373
    %902 = vmatprep.subr.mxu0 0.0
    %903 = vmatpush1.msra.mxu0 %v370
    %904 = vmatprep.subr.mxu0 0.0
    %905 = vmatpush1.msra.mxu0 %v367
    %906 = vmatprep.subr.mxu0 0.0
    %907 = vmatpush1.msra.mxu0 %v364
    %908 = vmatprep.subr.mxu0 0.0
    %909 = vmatpush1.msra.mxu0 %v361
    %910 = vmatprep.subr.mxu0 0.0
    %911 = vmatpush1.msra.mxu0 %v358
    %912 = vmatprep.subr.mxu0 0.0
    %913 = vmatpush1.msra.mxu0 %v355
    %914 = vmatprep.subr.mxu0 0.0
    %915 = vmatpush1.msra.mxu0 %v352
    %916 = vmatprep.subr.mxu0 0.0
    %917 = vmatpush1.msra.mxu0 %v349
    %918 = vmatprep.subr.mxu0 0.0
    %919 = vmatpush1.msra.mxu0 %v346
    %920 = vmatprep.subr.mxu0 0.0
    %921 = vmatpush1.msra.mxu0 %v343
    %922 = vmatprep.subr.mxu0 0.0
    %923 = vmatpush1.msra.mxu0 %v340
    %924 = vmatprep.subr.mxu0 0.0
    %925 = vmatpush1.msra.mxu0 %v337
    %926 = vmatprep.subr.mxu0 0.0
    %927 = vmatpush1.msra.mxu0 %v334
    %928 = vmatprep.subr.mxu0 0.0
    %929 = vmatpush2.msra.mxu0 0.0
    %930 = vmatprep.subr.mxu0 0.0
    %931 = vmatpush2.msra.mxu0 0.0
    %932 = vmatprep.subr.mxu0 0.0
    %933 = vmatpush2.msra.mxu0 0.0
    %934 = vmatprep.subr.mxu0 0.0
    %935 = vmatpush2.msra.mxu0 0.0
    %936 = vmatprep.subr.mxu0 0.0
    %937 = vmatpush2.msra.mxu0 0.0
    %938 = vmatprep.subr.mxu0 0.0
    %939 = vmatpush2.msra.mxu0 0.0
    %940 = vmatprep.subr.mxu0 0.0
    %941 = vmatpush2.msra.mxu0 0.0
    %942 = vmatprep.subr.mxu0 0.0
    %943 = vmatpush2.msra.mxu0 0.0
    %944 = vmatprep.subr.mxu0 0.0
    %945 = vmatpush2.msra.mxu0 0.0
    %946 = vmatprep.subr.mxu0 0.0
    %947 = vmatpush2.msra.mxu0 0.0
    %948 = vmatprep.subr.mxu0 0.0
    %949 = vmatpush2.msra.mxu0 0.0
    %950 = vmatprep.subr.mxu0 0.0
    %951 = vmatpush2.msra.mxu0 0.0
    %952 = vmatprep.subr.mxu0 0.0
    %953 = vmatpush2.msra.mxu0 0.0
    %954 = vmatprep.subr.mxu0 0.0
    %955 = vmatpush2.msra.mxu0 0.0
    %956 = vmatprep.subr.mxu0 0.0
    %957 = vmatpush2.msra.mxu0 0.0
    %958 = vmatprep.subr.mxu0 0.0
    %959 = vmatpush2.msra.mxu0 0.0
    %960 = vmatprep.mubr.f32.mxu0 0.0
    %961 = vmatmul.mubr.f32.gmra.mxu0 %v824
    %v962 = vpop.f32.mrf.mxu0
    %v963 = vadd.f32 %v624, %v962
    %v964 = vpop.f32.mrf.mxu0
    %965 = vdwg.mxu0
    %v966 = vadd.f32 %v187, %v892
    %v967 = vxor.u32 %v966, 2147483648
    %v968 = vmul.f32 %v967, 1.442695
    %v969 = vpow.pop %v968
    %v970 = vadd.f32 %v969, 1.0
    %v971 = vrcp.pop %v970
    %v972 = vmul.f32 1.0, %v971
    %v973 = vadd.f32 %v189, %v894
    %v974 = vxor.u32 %v973, 2147483648
    %v975 = vmul.f32 %v974, 1.442695
    %v976 = vpow.pop %v975
    %v977 = vadd.f32 %v976, 1.0
    %v978 = vrcp.pop %v977
    %v979 = vmul.f32 1.0, %v978
    %v980 = vmul.f32 %v972, %v963
    %v981 = vadd.f32 %v299, %v980
    %v982 = vtanh.pop %v981
    %v983 = vsub.f32 %v824, %v982
    %v984 = vmul.f32 %v979, %v983
    %v985 = vadd.f32 %v982, %v984
    %986 = vmatprep.subr.mxu0 %v524
    %987 = vmatpush1.msra.mxu0 %v523
    %988 = vmatprep.subr.mxu0 %v521
    %989 = vmatpush1.msra.mxu0 %v520
    %990 = vmatprep.subr.mxu0 %v518
    %991 = vmatpush1.msra.mxu0 %v517
    %992 = vmatprep.subr.mxu0 %v515
    %993 = vmatpush1.msra.mxu0 %v514
    %994 = vmatprep.subr.mxu0 %v512
    %995 = vmatpush1.msra.mxu0 %v511
    %996 = vmatprep.subr.mxu0 %v509
    %997 = vmatpush1.msra.mxu0 %v508
    %998 = vmatprep.subr.mxu0 %v506
    %999 = vmatpush1.msra.mxu0 %v505
    %1000 = vmatprep.subr.mxu0 %v503
    %1001 = vmatpush1.msra.mxu0 %v502
    %1002 = vmatprep.subr.mxu0 %v500
    %1003 = vmatpush1.msra.mxu0 %v499
    %1004 = vmatprep.subr.mxu0 %v497
    %1005 = vmatpush1.msra.mxu0 %v496
    %1006 = vmatprep.subr.mxu0 %v494
    %1007 = vmatpush1.msra.mxu0 %v493
    %1008 = vmatprep.subr.mxu0 %v491
    %1009 = vmatpush1.msra.mxu0 %v490
    %1010 = vmatprep.subr.mxu0 %v488
    %1011 = vmatpush1.msra.mxu0 %v487
    %1012 = vmatprep.subr.mxu0 %v485
    %1013 = vmatpush1.msra.mxu0 %v484
    %1014 = vmatprep.subr.mxu0 %v482
    %1015 = vmatpush1.msra.mxu0 %v481
    %1016 = vmatprep.subr.mxu0 %v479
    %1017 = vmatpush1.msra.mxu0 %v478
    %1018 = vmatprep.subr.mxu0 0.0
    %1019 = vmatpush2.msra.mxu0 0.0
    %1020 = vmatprep.subr.mxu0 0.0
    %1021 = vmatpush2.msra.mxu0 0.0
    %1022 = vmatprep.subr.mxu0 0.0
    %1023 = vmatpush2.msra.mxu0 0.0
    %1024 = vmatprep.subr.mxu0 0.0
    %1025 = vmatpush2.msra.mxu0 0.0
    %1026 = vmatprep.subr.mxu0 0.0
    %1027 = vmatpush2.msra.mxu0 0.0
    %1028 = vmatprep.subr.mxu0 0.0
    %1029 = vmatpush2.msra.mxu0 0.0
    %1030 = vmatprep.subr.mxu0 0.0
    %1031 = vmatpush2.msra.mxu0 0.0
    %1032 = vmatprep.subr.mxu0 0.0
    %1033 = vmatpush2.msra.mxu0 0.0
    %1034 = vmatprep.subr.mxu0 0.0
    %1035 = vmatpush2.msra.mxu0 0.0
    %1036 = vmatprep.subr.mxu0 0.0
    %1037 = vmatpush2.msra.mxu0 0.0
    %1038 = vmatprep.subr.mxu0 0.0
    %1039 = vmatpush2.msra.mxu0 0.0
    %1040 = vmatprep.subr.mxu0 0.0
    %1041 = vmatpush2.msra.mxu0 0.0
    %1042 = vmatprep.subr.mxu0 0.0
    %1043 = vmatpush2.msra.mxu0 0.0
    %1044 = vmatprep.subr.mxu0 0.0
    %1045 = vmatpush2.msra.mxu0 0.0
    %1046 = vmatprep.subr.mxu0 0.0
    %1047 = vmatpush2.msra.mxu0 0.0
    %1048 = vmatprep.subr.mxu0 0.0
    %1049 = vmatpush2.msra.mxu0 0.0
    %1050 = vmatprep.mubr.f32.mxu0 0.0
    %1051 = vmatmul.mubr.f32.gmra.mxu0 %v824
    %v1052 = vpop.f32.mrf.mxu0
    %v1053 = vadd.f32 %v581, %v1052
    %v1054 = vpop.f32.mrf.mxu0
    %v1055 = vadd.f32 %v585, %v1054
    %1056 = vdwg.mxu0
    %1057 = vmatprep.subr.mxu0 0.0
    %1058 = vmatpush1.msra.mxu0 %v525
    %1059 = vmatprep.subr.mxu0 0.0
    %1060 = vmatpush1.msra.mxu0 %v522
    %1061 = vmatprep.subr.mxu0 0.0
    %1062 = vmatpush1.msra.mxu0 %v519
    %1063 = vmatprep.subr.mxu0 0.0
    %1064 = vmatpush1.msra.mxu0 %v516
    %1065 = vmatprep.subr.mxu0 0.0
    %1066 = vmatpush1.msra.mxu0 %v513
    %1067 = vmatprep.subr.mxu0 0.0
    %1068 = vmatpush1.msra.mxu0 %v510
    %1069 = vmatprep.subr.mxu0 0.0
    %1070 = vmatpush1.msra.mxu0 %v507
    %1071 = vmatprep.subr.mxu0 0.0
    %1072 = vmatpush1.msra.mxu0 %v504
    %1073 = vmatprep.subr.mxu0 0.0
    %1074 = vmatpush1.msra.mxu0 %v501
    %1075 = vmatprep.subr.mxu0 0.0
    %1076 = vmatpush1.msra.mxu0 %v498
    %1077 = vmatprep.subr.mxu0 0.0
    %1078 = vmatpush1.msra.mxu0 %v495
    %1079 = vmatprep.subr.mxu0 0.0
    %1080 = vmatpush1.msra.mxu0 %v492
    %1081 = vmatprep.subr.mxu0 0.0
    %1082 = vmatpush1.msra.mxu0 %v489
    %1083 = vmatprep.subr.mxu0 0.0
    %1084 = vmatpush1.msra.mxu0 %v486
    %1085 = vmatprep.subr.mxu0 0.0
    %1086 = vmatpush1.msra.mxu0 %v483
    %1087 = vmatprep.subr.mxu0 0.0
    %1088 = vmatpush1.msra.mxu0 %v480
    %1089 = vmatprep.subr.mxu0 0.0
    %1090 = vmatpush2.msra.mxu0 0.0
    %1091 = vmatprep.subr.mxu0 0.0
    %1092 = vmatpush2.msra.mxu0 0.0
    %1093 = vmatprep.subr.mxu0 0.0
    %1094 = vmatpush2.msra.mxu0 0.0
    %1095 = vmatprep.subr.mxu0 0.0
    %1096 = vmatpush2.msra.mxu0 0.0
    %1097 = vmatprep.subr.mxu0 0.0
    %1098 = vmatpush2.msra.mxu0 0.0
    %1099 = vmatprep.subr.mxu0 0.0
    %1100 = vmatpush2.msra.mxu0 0.0
    %1101 = vmatprep.subr.mxu0 0.0
    %1102 = vmatpush2.msra.mxu0 0.0
    %1103 = vmatprep.subr.mxu0 0.0
    %1104 = vmatpush2.msra.mxu0 0.0
    %1105 = vmatprep.subr.mxu0 0.0
    %1106 = vmatpush2.msra.mxu0 0.0
    %1107 = vmatprep.subr.mxu0 0.0
    %1108 = vmatpush2.msra.mxu0 0.0
    %1109 = vmatprep.subr.mxu0 0.0
    %1110 = vmatpush2.msra.mxu0 0.0
    %1111 = vmatprep.subr.mxu0 0.0
    %1112 = vmatpush2.msra.mxu0 0.0
    %1113 = vmatprep.subr.mxu0 0.0
    %1114 = vmatpush2.msra.mxu0 0.0
    %1115 = vmatprep.subr.mxu0 0.0
    %1116 = vmatpush2.msra.mxu0 0.0
    %1117 = vmatprep.subr.mxu0 0.0
    %1118 = vmatpush2.msra.mxu0 0.0
    %1119 = vmatprep.subr.mxu0 0.0
    %1120 = vmatpush2.msra.mxu0 0.0
    %1121 = vmatprep.mubr.f32.mxu0 0.0
    %1122 = vmatmul.mubr.f32.gmra.mxu0 %v824
    %v1123 = vpop.f32.mrf.mxu0
    %v1124 = vadd.f32 %v589, %v1123
    %v1125 = vpop.f32.mrf.mxu0
    %1126 = vdwg.mxu0
    %1127 = vmatprep.subr.mxu0 %v427
    %1128 = vmatpush1.msra.mxu0 %v426
    %1129 = vmatprep.subr.mxu0 %v424
    %1130 = vmatpush1.msra.mxu0 %v423
    %1131 = vmatprep.subr.mxu0 %v421
    %1132 = vmatpush1.msra.mxu0 %v420
    %1133 = vmatprep.subr.mxu0 %v418
    %1134 = vmatpush1.msra.mxu0 %v417
    %1135 = vmatprep.subr.mxu0 %v415
    %1136 = vmatpush1.msra.mxu0 %v414
    %1137 = vmatprep.subr.mxu0 %v412
    %1138 = vmatpush1.msra.mxu0 %v411
    %1139 = vmatprep.subr.mxu0 %v409
    %1140 = vmatpush1.msra.mxu0 %v408
    %1141 = vmatprep.subr.mxu0 %v406
    %1142 = vmatpush1.msra.mxu0 %v405
    %1143 = vmatprep.subr.mxu0 %v403
    %1144 = vmatpush1.msra.mxu0 %v402
    %1145 = vmatprep.subr.mxu0 %v400
    %1146 = vmatpush1.msra.mxu0 %v399
    %1147 = vmatprep.subr.mxu0 %v397
    %1148 = vmatpush1.msra.mxu0 %v396
    %1149 = vmatprep.subr.mxu0 %v394
    %1150 = vmatpush1.msra.mxu0 %v393
    %1151 = vmatprep.subr.mxu0 %v391
    %1152 = vmatpush1.msra.mxu0 %v390
    %1153 = vmatprep.subr.mxu0 %v388
    %1154 = vmatpush1.msra.mxu0 %v387
    %1155 = vmatprep.subr.mxu0 %v385
    %1156 = vmatpush1.msra.mxu0 %v384
    %1157 = vmatprep.subr.mxu0 %v382
    %1158 = vmatpush1.msra.mxu0 %v381
    %1159 = vmatprep.subr.mxu0 0.0
    %1160 = vmatpush2.msra.mxu0 0.0
    %1161 = vmatprep.subr.mxu0 0.0
    %1162 = vmatpush2.msra.mxu0 0.0
    %1163 = vmatprep.subr.mxu0 0.0
    %1164 = vmatpush2.msra.mxu0 0.0
    %1165 = vmatprep.subr.mxu0 0.0
    %1166 = vmatpush2.msra.mxu0 0.0
    %1167 = vmatprep.subr.mxu0 0.0
    %1168 = vmatpush2.msra.mxu0 0.0
    %1169 = vmatprep.subr.mxu0 0.0
    %1170 = vmatpush2.msra.mxu0 0.0
    %1171 = vmatprep.subr.mxu0 0.0
    %1172 = vmatpush2.msra.mxu0 0.0
    %1173 = vmatprep.subr.mxu0 0.0
    %1174 = vmatpush2.msra.mxu0 0.0
    %1175 = vmatprep.subr.mxu0 0.0
    %1176 = vmatpush2.msra.mxu0 0.0
    %1177 = vmatprep.subr.mxu0 0.0
    %1178 = vmatpush2.msra.mxu0 0.0
    %1179 = vmatprep.subr.mxu0 0.0
    %1180 = vmatpush2.msra.mxu0 0.0
    %1181 = vmatprep.subr.mxu0 0.0
    %1182 = vmatpush2.msra.mxu0 0.0
    %1183 = vmatprep.subr.mxu0 0.0
    %1184 = vmatpush2.msra.mxu0 0.0
    %1185 = vmatprep.subr.mxu0 0.0
    %1186 = vmatpush2.msra.mxu0 0.0
    %1187 = vmatprep.subr.mxu0 0.0
    %1188 = vmatpush2.msra.mxu0 0.0
    %1189 = vmatprep.subr.mxu0 0.0
    %1190 = vmatpush2.msra.mxu0 0.0
    %1191 = vmatprep.mubr.f32.mxu0 0.0
    %1192 = vmatmul.mubr.f32.gmra.mxu0 0.0
    %v1193 = vpop.f32.mrf.mxu0
    %v1194 = vadd.f32 %v634, %v1193
    %v1195 = vpop.f32.mrf.mxu0
    %v1196 = vadd.f32 %v638, %v1195
    %1197 = vdwg.mxu0
    %1198 = vmatprep.subr.mxu0 0.0
    %1199 = vmatpush1.msra.mxu0 %v428
    %1200 = vmatprep.subr.mxu0 0.0
    %1201 = vmatpush1.msra.mxu0 %v425
    %1202 = vmatprep.subr.mxu0 0.0
    %1203 = vmatpush1.msra.mxu0 %v422
    %1204 = vmatprep.subr.mxu0 0.0
    %1205 = vmatpush1.msra.mxu0 %v419
    %1206 = vmatprep.subr.mxu0 0.0
    %1207 = vmatpush1.msra.mxu0 %v416
    %1208 = vmatprep.subr.mxu0 0.0
    %1209 = vmatpush1.msra.mxu0 %v413
    %1210 = vmatprep.subr.mxu0 0.0
    %1211 = vmatpush1.msra.mxu0 %v410
    %1212 = vmatprep.subr.mxu0 0.0
    %1213 = vmatpush1.msra.mxu0 %v407
    %1214 = vmatprep.subr.mxu0 0.0
    %1215 = vmatpush1.msra.mxu0 %v404
    %1216 = vmatprep.subr.mxu0 0.0
    %1217 = vmatpush1.msra.mxu0 %v401
    %1218 = vmatprep.subr.mxu0 0.0
    %1219 = vmatpush1.msra.mxu0 %v398
    %1220 = vmatprep.subr.mxu0 0.0
    %1221 = vmatpush1.msra.mxu0 %v395
    %1222 = vmatprep.subr.mxu0 0.0
    %1223 = vmatpush1.msra.mxu0 %v392
    %1224 = vmatprep.subr.mxu0 0.0
    %1225 = vmatpush1.msra.mxu0 %v389
    %1226 = vmatprep.subr.mxu0 0.0
    %1227 = vmatpush1.msra.mxu0 %v386
    %1228 = vmatprep.subr.mxu0 0.0
    %1229 = vmatpush1.msra.mxu0 %v383
    %1230 = vmatprep.subr.mxu0 0.0
    %1231 = vmatpush2.msra.mxu0 0.0
    %1232 = vmatprep.subr.mxu0 0.0
    %1233 = vmatpush2.msra.mxu0 0.0
    %1234 = vmatprep.subr.mxu0 0.0
    %1235 = vmatpush2.msra.mxu0 0.0
    %1236 = vmatprep.subr.mxu0 0.0
    %1237 = vmatpush2.msra.mxu0 0.0
    %1238 = vmatprep.subr.mxu0 0.0
    %1239 = vmatpush2.msra.mxu0 0.0
    %1240 = vmatprep.subr.mxu0 0.0
    %1241 = vmatpush2.msra.mxu0 0.0
    %1242 = vmatprep.subr.mxu0 0.0
    %1243 = vmatpush2.msra.mxu0 0.0
    %1244 = vmatprep.subr.mxu0 0.0
    %1245 = vmatpush2.msra.mxu0 0.0
    %1246 = vmatprep.subr.mxu0 0.0
    %1247 = vmatpush2.msra.mxu0 0.0
    %1248 = vmatprep.subr.mxu0 0.0
    %1249 = vmatpush2.msra.mxu0 0.0
    %1250 = vmatprep.subr.mxu0 0.0
    %1251 = vmatpush2.msra.mxu0 0.0
    %1252 = vmatprep.subr.mxu0 0.0
    %1253 = vmatpush2.msra.mxu0 0.0
    %1254 = vmatprep.subr.mxu0 0.0
    %1255 = vmatpush2.msra.mxu0 0.0
    %1256 = vmatprep.subr.mxu0 0.0
    %1257 = vmatpush2.msra.mxu0 0.0
    %1258 = vmatprep.subr.mxu0 0.0
    %1259 = vmatpush2.msra.mxu0 0.0
    %1260 = vmatprep.subr.mxu0 0.0
    %1261 = vmatpush2.msra.mxu0 0.0
    %1262 = vmatprep.mubr.f32.mxu0 0.0
    %1263 = vmatmul.mubr.f32.gmra.mxu0 0.0
    %v1264 = vpop.f32.mrf.mxu0
    %v1265 = vadd.f32 %v642, %v1264
    %v1266 = vpop.f32.mrf.mxu0
    %1267 = vdwg.mxu0
    %v1268 = vadd.f32 %v1053, %v1194
    %v1269 = vxor.u32 %v1268, 2147483648
    %v1270 = vmul.f32 %v1269, 1.442695
    %v1271 = vpow.pop %v1270
    %v1272 = vadd.f32 %v1271, 1.0
    %v1273 = vrcp.pop %v1272
    %v1274 = vmul.f32 1.0, %v1273
    %v1275 = vadd.f32 %v1055, %v1196
    %v1276 = vxor.u32 %v1275, 2147483648
    %v1277 = vmul.f32 %v1276, 1.442695
    %v1278 = vpow.pop %v1277
    %v1279 = vadd.f32 %v1278, 1.0
    %v1280 = vrcp.pop %v1279
    %v1281 = vmul.f32 1.0, %v1280
    %v1282 = vmul.f32 %v1274, %v1265
    %v1283 = vadd.f32 %v1124, %v1282
    %v1284 = vtanh.pop %v1283
    %v1285 = vsub.f32 0.0, %v1284
    %v1286 = vmul.f32 %v1281, %v1285
    %v1287 = vadd.f32 %v1284, %v1286
    %1288 = vmatprep.subr.mxu0 %v378
    %1289 = vmatpush1.msra.mxu0 %v377
    %1290 = vmatprep.subr.mxu0 %v375
    %1291 = vmatpush1.msra.mxu0 %v374
    %1292 = vmatprep.subr.mxu0 %v372
    %1293 = vmatpush1.msra.mxu0 %v371
    %1294 = vmatprep.subr.mxu0 %v369
    %1295 = vmatpush1.msra.mxu0 %v368
    %1296 = vmatprep.subr.mxu0 %v366
    %1297 = vmatpush1.msra.mxu0 %v365
    %1298 = vmatprep.subr.mxu0 %v363
    %1299 = vmatpush1.msra.mxu0 %v362
    %1300 = vmatprep.subr.mxu0 %v360
    %1301 = vmatpush1.msra.mxu0 %v359
    %1302 = vmatprep.subr.mxu0 %v357
    %1303 = vmatpush1.msra.mxu0 %v356
    %1304 = vmatprep.subr.mxu0 %v354
    %1305 = vmatpush1.msra.mxu0 %v353
    %1306 = vmatprep.subr.mxu0 %v351
    %1307 = vmatpush1.msra.mxu0 %v350
    %1308 = vmatprep.subr.mxu0 %v348
    %1309 = vmatpush1.msra.mxu0 %v347
    %1310 = vmatprep.subr.mxu0 %v345
    %1311 = vmatpush1.msra.mxu0 %v344
    %1312 = vmatprep.subr.mxu0 %v342
    %1313 = vmatpush1.msra.mxu0 %v341
    %1314 = vmatprep.subr.mxu0 %v339
    %1315 = vmatpush1.msra.mxu0 %v338
    %1316 = vmatprep.subr.mxu0 %v336
    %1317 = vmatpush1.msra.mxu0 %v335
    %1318 = vmatprep.subr.mxu0 %v333
    %1319 = vmatpush1.msra.mxu0 %v332
    %1320 = vmatprep.subr.mxu0 0.0
    %1321 = vmatpush2.msra.mxu0 0.0
    %1322 = vmatprep.subr.mxu0 0.0
    %1323 = vmatpush2.msra.mxu0 0.0
    %1324 = vmatprep.subr.mxu0 0.0
    %1325 = vmatpush2.msra.mxu0 0.0
    %1326 = vmatprep.subr.mxu0 0.0
    %1327 = vmatpush2.msra.mxu0 0.0
    %1328 = vmatprep.subr.mxu0 0.0
    %1329 = vmatpush2.msra.mxu0 0.0
    %1330 = vmatprep.subr.mxu0 0.0
    %1331 = vmatpush2.msra.mxu0 0.0
    %1332 = vmatprep.subr.mxu0 0.0
    %1333 = vmatpush2.msra.mxu0 0.0
    %1334 = vmatprep.subr.mxu0 0.0
    %1335 = vmatpush2.msra.mxu0 0.0
    %1336 = vmatprep.subr.mxu0 0.0
    %1337 = vmatpush2.msra.mxu0 0.0
    %1338 = vmatprep.subr.mxu0 0.0
    %1339 = vmatpush2.msra.mxu0 0.0
    %1340 = vmatprep.subr.mxu0 0.0
    %1341 = vmatpush2.msra.mxu0 0.0
    %1342 = vmatprep.subr.mxu0 0.0
    %1343 = vmatpush2.msra.mxu0 0.0
    %1344 = vmatprep.subr.mxu0 0.0
    %1345 = vmatpush2.msra.mxu0 0.0
    %1346 = vmatprep.subr.mxu0 0.0
    %1347 = vmatpush2.msra.mxu0 0.0
    %1348 = vmatprep.subr.mxu0 0.0
    %1349 = vmatpush2.msra.mxu0 0.0
    %1350 = vmatprep.subr.mxu0 0.0
    %1351 = vmatpush2.msra.mxu0 0.0
    %1352 = vmatprep.mubr.f32.mxu0 0.0
    %1353 = vmatmul.mubr.f32.gmra.mxu0 %v985
    %v1354 = vpop.f32.mrf.mxu0
    %v1355 = vadd.f32 %v616, %v1354
    %v1356 = vpop.f32.mrf.mxu0
    %v1357 = vadd.f32 %v620, %v1356
    %1358 = vdwg.mxu0
    %1359 = vmatprep.subr.mxu0 0.0
    %1360 = vmatpush1.msra.mxu0 %v379
    %1361 = vmatprep.subr.mxu0 0.0
    %1362 = vmatpush1.msra.mxu0 %v376
    %1363 = vmatprep.subr.mxu0 0.0
    %1364 = vmatpush1.msra.mxu0 %v373
    %1365 = vmatprep.subr.mxu0 0.0
    %1366 = vmatpush1.msra.mxu0 %v370
    %1367 = vmatprep.subr.mxu0 0.0
    %1368 = vmatpush1.msra.mxu0 %v367
    %1369 = vmatprep.subr.mxu0 0.0
    %1370 = vmatpush1.msra.mxu0 %v364
    %1371 = vmatprep.subr.mxu0 0.0
    %1372 = vmatpush1.msra.mxu0 %v361
    %1373 = vmatprep.subr.mxu0 0.0
    %1374 = vmatpush1.msra.mxu0 %v358
    %1375 = vmatprep.subr.mxu0 0.0
    %1376 = vmatpush1.msra.mxu0 %v355
    %1377 = vmatprep.subr.mxu0 0.0
    %1378 = vmatpush1.msra.mxu0 %v352
    %1379 = vmatprep.subr.mxu0 0.0
    %1380 = vmatpush1.msra.mxu0 %v349
    %1381 = vmatprep.subr.mxu0 0.0
    %1382 = vmatpush1.msra.mxu0 %v346
    %1383 = vmatprep.subr.mxu0 0.0
    %1384 = vmatpush1.msra.mxu0 %v343
    %1385 = vmatprep.subr.mxu0 0.0
    %1386 = vmatpush1.msra.mxu0 %v340
    %1387 = vmatprep.subr.mxu0 0.0
    %1388 = vmatpush1.msra.mxu0 %v337
    %1389 = vmatprep.subr.mxu0 0.0
    %1390 = vmatpush1.msra.mxu0 %v334
    %1391 = vmatprep.subr.mxu0 0.0
    %1392 = vmatpush2.msra.mxu0 0.0
    %1393 = vmatprep.subr.mxu0 0.0
    %1394 = vmatpush2.msra.mxu0 0.0
    %1395 = vmatprep.subr.mxu0 0.0
    %1396 = vmatpush2.msra.mxu0 0.0
    %1397 = vmatprep.subr.mxu0 0.0
    %1398 = vmatpush2.msra.mxu0 0.0
    %1399 = vmatprep.subr.mxu0 0.0
    %1400 = vmatpush2.msra.mxu0 0.0
    %1401 = vmatprep.subr.mxu0 0.0
    %1402 = vmatpush2.msra.mxu0 0.0
    %1403 = vmatprep.subr.mxu0 0.0
    %1404 = vmatpush2.msra.mxu0 0.0
    %1405 = vmatprep.subr.mxu0 0.0
    %1406 = vmatpush2.msra.mxu0 0.0
    %1407 = vmatprep.subr.mxu0 0.0
    %1408 = vmatpush2.msra.mxu0 0.0
    %1409 = vmatprep.subr.mxu0 0.0
    %1410 = vmatpush2.msra.mxu0 0.0
    %1411 = vmatprep.subr.mxu0 0.0
    %1412 = vmatpush2.msra.mxu0 0.0
    %1413 = vmatprep.subr.mxu0 0.0
    %1414 = vmatpush2.msra.mxu0 0.0
    %1415 = vmatprep.subr.mxu0 0.0
    %1416 = vmatpush2.msra.mxu0 0.0
    %1417 = vmatprep.subr.mxu0 0.0
    %1418 = vmatpush2.msra.mxu0 0.0
    %1419 = vmatprep.subr.mxu0 0.0
    %1420 = vmatpush2.msra.mxu0 0.0
    %1421 = vmatprep.subr.mxu0 0.0
    %1422 = vmatpush2.msra.mxu0 0.0
    %1423 = vmatprep.mubr.f32.mxu0 0.0
    %1424 = vmatmul.mubr.f32.gmra.mxu0 %v985
    %v1425 = vpop.f32.mrf.mxu0
    %v1426 = vadd.f32 %v624, %v1425
    %v1427 = vpop.f32.mrf.mxu0
    %1428 = vdwg.mxu0
    %v1429 = vadd.f32 %v193, %v1355
    %v1430 = vxor.u32 %v1429, 2147483648
    %v1431 = vmul.f32 %v1430, 1.442695
    %v1432 = vpow.pop %v1431
    %v1433 = vadd.f32 %v1432, 1.0
    %v1434 = vrcp.pop %v1433
    %v1435 = vmul.f32 1.0, %v1434
    %v1436 = vadd.f32 %v195, %v1357
    %v1437 = vxor.u32 %v1436, 2147483648
    %v1438 = vmul.f32 %v1437, 1.442695
    %v1439 = vpow.pop %v1438
    %v1440 = vadd.f32 %v1439, 1.0
    %v1441 = vrcp.pop %v1440
    %v1442 = vmul.f32 1.0, %v1441
    %v1443 = vmul.f32 %v1435, %v1426
    %v1444 = vadd.f32 %v304, %v1443
    %v1445 = vtanh.pop %v1444
    %v1446 = vsub.f32 %v985, %v1445
    %v1447 = vmul.f32 %v1442, %v1446
    %v1448 = vadd.f32 %v1445, %v1447
    %1449 = vmatprep.subr.mxu0 %v524
    %1450 = vmatpush1.msra.mxu0 %v523
    %1451 = vmatprep.subr.mxu0 %v521
    %1452 = vmatpush1.msra.mxu0 %v520
    %1453 = vmatprep.subr.mxu0 %v518
    %1454 = vmatpush1.msra.mxu0 %v517
    %1455 = vmatprep.subr.mxu0 %v515
    %1456 = vmatpush1.msra.mxu0 %v514
    %1457 = vmatprep.subr.mxu0 %v512
    %1458 = vmatpush1.msra.mxu0 %v511
    %1459 = vmatprep.subr.mxu0 %v509
    %1460 = vmatpush1.msra.mxu0 %v508
    %1461 = vmatprep.subr.mxu0 %v506
    %1462 = vmatpush1.msra.mxu0 %v505
    %1463 = vmatprep.subr.mxu0 %v503
    %1464 = vmatpush1.msra.mxu0 %v502
    %1465 = vmatprep.subr.mxu0 %v500
    %1466 = vmatpush1.msra.mxu0 %v499
    %1467 = vmatprep.subr.mxu0 %v497
    %1468 = vmatpush1.msra.mxu0 %v496
    %1469 = vmatprep.subr.mxu0 %v494
    %1470 = vmatpush1.msra.mxu0 %v493
    %1471 = vmatprep.subr.mxu0 %v491
    %1472 = vmatpush1.msra.mxu0 %v490
    %1473 = vmatprep.subr.mxu0 %v488
    %1474 = vmatpush1.msra.mxu0 %v487
    %1475 = vmatprep.subr.mxu0 %v485
    %1476 = vmatpush1.msra.mxu0 %v484
    %1477 = vmatprep.subr.mxu0 %v482
    %1478 = vmatpush1.msra.mxu0 %v481
    %1479 = vmatprep.subr.mxu0 %v479
    %1480 = vmatpush1.msra.mxu0 %v478
    %1481 = vmatprep.subr.mxu0 0.0
    %1482 = vmatpush2.msra.mxu0 0.0
    %1483 = vmatprep.subr.mxu0 0.0
    %1484 = vmatpush2.msra.mxu0 0.0
    %1485 = vmatprep.subr.mxu0 0.0
    %1486 = vmatpush2.msra.mxu0 0.0
    %1487 = vmatprep.subr.mxu0 0.0
    %1488 = vmatpush2.msra.mxu0 0.0
    %1489 = vmatprep.subr.mxu0 0.0
    %1490 = vmatpush2.msra.mxu0 0.0
    %1491 = vmatprep.subr.mxu0 0.0
    %1492 = vmatpush2.msra.mxu0 0.0
    %1493 = vmatprep.subr.mxu0 0.0
    %1494 = vmatpush2.msra.mxu0 0.0
    %1495 = vmatprep.subr.mxu0 0.0
    %1496 = vmatpush2.msra.mxu0 0.0
    %1497 = vmatprep.subr.mxu0 0.0
    %1498 = vmatpush2.msra.mxu0 0.0
    %1499 = vmatprep.subr.mxu0 0.0
    %1500 = vmatpush2.msra.mxu0 0.0
    %1501 = vmatprep.subr.mxu0 0.0
    %1502 = vmatpush2.msra.mxu0 0.0
    %1503 = vmatprep.subr.mxu0 0.0
    %1504 = vmatpush2.msra.mxu0 0.0
    %1505 = vmatprep.subr.mxu0 0.0
    %1506 = vmatpush2.msra.mxu0 0.0
    %1507 = vmatprep.subr.mxu0 0.0
    %1508 = vmatpush2.msra.mxu0 0.0
    %1509 = vmatprep.subr.mxu0 0.0
    %1510 = vmatpush2.msra.mxu0 0.0
    %1511 = vmatprep.subr.mxu0 0.0
    %1512 = vmatpush2.msra.mxu0 0.0
    %1513 = vmatprep.mubr.f32.mxu0 0.0
    %1514 = vmatmul.mubr.f32.gmra.mxu0 %v985
    %v1515 = vpop.f32.mrf.mxu0
    %v1516 = vadd.f32 %v581, %v1515
    %v1517 = vpop.f32.mrf.mxu0
    %v1518 = vadd.f32 %v585, %v1517
    %1519 = vdwg.mxu0
    %1520 = vmatprep.subr.mxu0 0.0
    %1521 = vmatpush1.msra.mxu0 %v525
    %1522 = vmatprep.subr.mxu0 0.0
    %1523 = vmatpush1.msra.mxu0 %v522
    %1524 = vmatprep.subr.mxu0 0.0
    %1525 = vmatpush1.msra.mxu0 %v519
    %1526 = vmatprep.subr.mxu0 0.0
    %1527 = vmatpush1.msra.mxu0 %v516
    %1528 = vmatprep.subr.mxu0 0.0
    %1529 = vmatpush1.msra.mxu0 %v513
    %1530 = vmatprep.subr.mxu0 0.0
    %1531 = vmatpush1.msra.mxu0 %v510
    %1532 = vmatprep.subr.mxu0 0.0
    %1533 = vmatpush1.msra.mxu0 %v507
    %1534 = vmatprep.subr.mxu0 0.0
    %1535 = vmatpush1.msra.mxu0 %v504
    %1536 = vmatprep.subr.mxu0 0.0
    %1537 = vmatpush1.msra.mxu0 %v501
    %1538 = vmatprep.subr.mxu0 0.0
    %1539 = vmatpush1.msra.mxu0 %v498
    %1540 = vmatprep.subr.mxu0 0.0
    %1541 = vmatpush1.msra.mxu0 %v495
    %1542 = vmatprep.subr.mxu0 0.0
    %1543 = vmatpush1.msra.mxu0 %v492
    %1544 = vmatprep.subr.mxu0 0.0
    %1545 = vmatpush1.msra.mxu0 %v489
    %1546 = vmatprep.subr.mxu0 0.0
    %1547 = vmatpush1.msra.mxu0 %v486
    %1548 = vmatprep.subr.mxu0 0.0
    %1549 = vmatpush1.msra.mxu0 %v483
    %1550 = vmatprep.subr.mxu0 0.0
    %1551 = vmatpush1.msra.mxu0 %v480
    %1552 = vmatprep.subr.mxu0 0.0
    %1553 = vmatpush2.msra.mxu0 0.0
    %1554 = vmatprep.subr.mxu0 0.0
    %1555 = vmatpush2.msra.mxu0 0.0
    %1556 = vmatprep.subr.mxu0 0.0
    %1557 = vmatpush2.msra.mxu0 0.0
    %1558 = vmatprep.subr.mxu0 0.0
    %1559 = vmatpush2.msra.mxu0 0.0
    %1560 = vmatprep.subr.mxu0 0.0
    %1561 = vmatpush2.msra.mxu0 0.0
    %1562 = vmatprep.subr.mxu0 0.0
    %1563 = vmatpush2.msra.mxu0 0.0
    %1564 = vmatprep.subr.mxu0 0.0
    %1565 = vmatpush2.msra.mxu0 0.0
    %1566 = vmatprep.subr.mxu0 0.0
    %1567 = vmatpush2.msra.mxu0 0.0
    %1568 = vmatprep.subr.mxu0 0.0
    %1569 = vmatpush2.msra.mxu0 0.0
    %1570 = vmatprep.subr.mxu0 0.0
    %1571 = vmatpush2.msra.mxu0 0.0
    %1572 = vmatprep.subr.mxu0 0.0
    %1573 = vmatpush2.msra.mxu0 0.0
    %1574 = vmatprep.subr.mxu0 0.0
    %1575 = vmatpush2.msra.mxu0 0.0
    %1576 = vmatprep.subr.mxu0 0.0
    %1577 = vmatpush2.msra.mxu0 0.0
    %1578 = vmatprep.subr.mxu0 0.0
    %1579 = vmatpush2.msra.mxu0 0.0
    %1580 = vmatprep.subr.mxu0 0.0
    %1581 = vmatpush2.msra.mxu0 0.0
    %1582 = vmatprep.subr.mxu0 0.0
    %1583 = vmatpush2.msra.mxu0 0.0
    %1584 = vmatprep.mubr.f32.mxu0 0.0
    %1585 = vmatmul.mubr.f32.gmra.mxu0 %v985
    %v1586 = vpop.f32.mrf.mxu0
    %v1587 = vadd.f32 %v589, %v1586
    %v1588 = vpop.f32.mrf.mxu0
    %1589 = vdwg.mxu0
    %1590 = vmatprep.subr.mxu0 %v427
    %1591 = vmatpush1.msra.mxu0 %v426
    %1592 = vmatprep.subr.mxu0 %v424
    %1593 = vmatpush1.msra.mxu0 %v423
    %1594 = vmatprep.subr.mxu0 %v421
    %1595 = vmatpush1.msra.mxu0 %v420
    %1596 = vmatprep.subr.mxu0 %v418
    %1597 = vmatpush1.msra.mxu0 %v417
    %1598 = vmatprep.subr.mxu0 %v415
    %1599 = vmatpush1.msra.mxu0 %v414
    %1600 = vmatprep.subr.mxu0 %v412
    %1601 = vmatpush1.msra.mxu0 %v411
    %1602 = vmatprep.subr.mxu0 %v409
    %1603 = vmatpush1.msra.mxu0 %v408
    %1604 = vmatprep.subr.mxu0 %v406
    %1605 = vmatpush1.msra.mxu0 %v405
    %1606 = vmatprep.subr.mxu0 %v403
    %1607 = vmatpush1.msra.mxu0 %v402
    %1608 = vmatprep.subr.mxu0 %v400
    %1609 = vmatpush1.msra.mxu0 %v399
    %1610 = vmatprep.subr.mxu0 %v397
    %1611 = vmatpush1.msra.mxu0 %v396
    %1612 = vmatprep.subr.mxu0 %v394
    %1613 = vmatpush1.msra.mxu0 %v393
    %1614 = vmatprep.subr.mxu0 %v391
    %1615 = vmatpush1.msra.mxu0 %v390
    %1616 = vmatprep.subr.mxu0 %v388
    %1617 = vmatpush1.msra.mxu0 %v387
    %1618 = vmatprep.subr.mxu0 %v385
    %1619 = vmatpush1.msra.mxu0 %v384
    %1620 = vmatprep.subr.mxu0 %v382
    %1621 = vmatpush1.msra.mxu0 %v381
    %1622 = vmatprep.subr.mxu0 0.0
    %1623 = vmatpush2.msra.mxu0 0.0
    %1624 = vmatprep.subr.mxu0 0.0
    %1625 = vmatpush2.msra.mxu0 0.0
    %1626 = vmatprep.subr.mxu0 0.0
    %1627 = vmatpush2.msra.mxu0 0.0
    %1628 = vmatprep.subr.mxu0 0.0
    %1629 = vmatpush2.msra.mxu0 0.0
    %1630 = vmatprep.subr.mxu0 0.0
    %1631 = vmatpush2.msra.mxu0 0.0
    %1632 = vmatprep.subr.mxu0 0.0
    %1633 = vmatpush2.msra.mxu0 0.0
    %1634 = vmatprep.subr.mxu0 0.0
    %1635 = vmatpush2.msra.mxu0 0.0
    %1636 = vmatprep.subr.mxu0 0.0
    %1637 = vmatpush2.msra.mxu0 0.0
    %1638 = vmatprep.subr.mxu0 0.0
    %1639 = vmatpush2.msra.mxu0 0.0
    %1640 = vmatprep.subr.mxu0 0.0
    %1641 = vmatpush2.msra.mxu0 0.0
    %1642 = vmatprep.subr.mxu0 0.0
    %1643 = vmatpush2.msra.mxu0 0.0
    %1644 = vmatprep.subr.mxu0 0.0
    %1645 = vmatpush2.msra.mxu0 0.0
    %1646 = vmatprep.subr.mxu0 0.0
    %1647 = vmatpush2.msra.mxu0 0.0
    %1648 = vmatprep.subr.mxu0 0.0
    %1649 = vmatpush2.msra.mxu0 0.0
    %1650 = vmatprep.subr.mxu0 0.0
    %1651 = vmatpush2.msra.mxu0 0.0
    %1652 = vmatprep.subr.mxu0 0.0
    %1653 = vmatpush2.msra.mxu0 0.0
    %1654 = vmatprep.mubr.f32.mxu0 0.0
    %1655 = vmatmul.mubr.f32.gmra.mxu0 %v1287
    %v1656 = vpop.f32.mrf.mxu0
    %v1657 = vadd.f32 %v634, %v1656
    %v1658 = vpop.f32.mrf.mxu0
    %v1659 = vadd.f32 %v638, %v1658
    %1660 = vdwg.mxu0
    %1661 = vmatprep.subr.mxu0 0.0
    %1662 = vmatpush1.msra.mxu0 %v428
    %1663 = vmatprep.subr.mxu0 0.0
    %1664 = vmatpush1.msra.mxu0 %v425
    %1665 = vmatprep.subr.mxu0 0.0
    %1666 = vmatpush1.msra.mxu0 %v422
    %1667 = vmatprep.subr.mxu0 0.0
    %1668 = vmatpush1.msra.mxu0 %v419
    %1669 = vmatprep.subr.mxu0 0.0
    %1670 = vmatpush1.msra.mxu0 %v416
    %1671 = vmatprep.subr.mxu0 0.0
    %1672 = vmatpush1.msra.mxu0 %v413
    %1673 = vmatprep.subr.mxu0 0.0
    %1674 = vmatpush1.msra.mxu0 %v410
    %1675 = vmatprep.subr.mxu0 0.0
    %1676 = vmatpush1.msra.mxu0 %v407
    %1677 = vmatprep.subr.mxu0 0.0
    %1678 = vmatpush1.msra.mxu0 %v404
    %1679 = vmatprep.subr.mxu0 0.0
    %1680 = vmatpush1.msra.mxu0 %v401
    %1681 = vmatprep.subr.mxu0 0.0
    %1682 = vmatpush1.msra.mxu0 %v398
    %1683 = vmatprep.subr.mxu0 0.0
    %1684 = vmatpush1.msra.mxu0 %v395
    %1685 = vmatprep.subr.mxu0 0.0
    %1686 = vmatpush1.msra.mxu0 %v392
    %1687 = vmatprep.subr.mxu0 0.0
    %1688 = vmatpush1.msra.mxu0 %v389
    %1689 = vmatprep.subr.mxu0 0.0
    %1690 = vmatpush1.msra.mxu0 %v386
    %1691 = vmatprep.subr.mxu0 0.0
    %1692 = vmatpush1.msra.mxu0 %v383
    %1693 = vmatprep.subr.mxu0 0.0
    %1694 = vmatpush2.msra.mxu0 0.0
    %1695 = vmatprep.subr.mxu0 0.0
    %1696 = vmatpush2.msra.mxu0 0.0
    %1697 = vmatprep.subr.mxu0 0.0
    %1698 = vmatpush2.msra.mxu0 0.0
    %1699 = vmatprep.subr.mxu0 0.0
    %1700 = vmatpush2.msra.mxu0 0.0
    %1701 = vmatprep.subr.mxu0 0.0
    %1702 = vmatpush2.msra.mxu0 0.0
    %1703 = vmatprep.subr.mxu0 0.0
    %1704 = vmatpush2.msra.mxu0 0.0
    %1705 = vmatprep.subr.mxu0 0.0
    %1706 = vmatpush2.msra.mxu0 0.0
    %1707 = vmatprep.subr.mxu0 0.0
    %1708 = vmatpush2.msra.mxu0 0.0
    %1709 = vmatprep.subr.mxu0 0.0
    %1710 = vmatpush2.msra.mxu0 0.0
    %1711 = vmatprep.subr.mxu0 0.0
    %1712 = vmatpush2.msra.mxu0 0.0
    %1713 = vmatprep.subr.mxu0 0.0
    %1714 = vmatpush2.msra.mxu0 0.0
    %1715 = vmatprep.subr.mxu0 0.0
    %1716 = vmatpush2.msra.mxu0 0.0
    %1717 = vmatprep.subr.mxu0 0.0
    %1718 = vmatpush2.msra.mxu0 0.0
    %1719 = vmatprep.subr.mxu0 0.0
    %1720 = vmatpush2.msra.mxu0 0.0
    %1721 = vmatprep.subr.mxu0 0.0
    %1722 = vmatpush2.msra.mxu0 0.0
    %1723 = vmatprep.subr.mxu0 0.0
    %1724 = vmatpush2.msra.mxu0 0.0
    %1725 = vmatprep.mubr.f32.mxu0 0.0
    %1726 = vmatmul.mubr.f32.gmra.mxu0 %v1287
    %v1727 = vpop.f32.mrf.mxu0
    %v1728 = vadd.f32 %v642, %v1727
    %v1729 = vpop.f32.mrf.mxu0
    %1730 = vdwg.mxu0
    %v1731 = vadd.f32 %v1516, %v1657
    %v1732 = vxor.u32 %v1731, 2147483648
    %v1733 = vmul.f32 %v1732, 1.442695
    %v1734 = vpow.pop %v1733
    %v1735 = vadd.f32 %v1734, 1.0
    %v1736 = vrcp.pop %v1735
    %v1737 = vmul.f32 1.0, %v1736
    %v1738 = vadd.f32 %v1518, %v1659
    %v1739 = vxor.u32 %v1738, 2147483648
    %v1740 = vmul.f32 %v1739, 1.442695
    %v1741 = vpow.pop %v1740
    %v1742 = vadd.f32 %v1741, 1.0
    %v1743 = vrcp.pop %v1742
    %v1744 = vmul.f32 1.0, %v1743
    %v1745 = vmul.f32 %v1737, %v1728
    %v1746 = vadd.f32 %v1587, %v1745
    %v1747 = vtanh.pop %v1746
    %v1748 = vsub.f32 %v1287, %v1747
    %v1749 = vmul.f32 %v1744, %v1748
    %v1750 = vadd.f32 %v1747, %v1749
    %1751 = vmatprep.subr.mxu0 %v573
    %1752 = vmatpush1.msra.mxu0 %v572
    %1753 = vmatprep.subr.mxu0 %v570
    %1754 = vmatpush1.msra.mxu0 %v569
    %1755 = vmatprep.subr.mxu0 %v567
    %1756 = vmatpush1.msra.mxu0 %v566
    %1757 = vmatprep.subr.mxu0 %v564
    %1758 = vmatpush1.msra.mxu0 %v563
    %1759 = vmatprep.subr.mxu0 %v561
    %1760 = vmatpush1.msra.mxu0 %v560
    %1761 = vmatprep.subr.mxu0 %v558
    %1762 = vmatpush1.msra.mxu0 %v557
    %1763 = vmatprep.subr.mxu0 %v555
    %1764 = vmatpush1.msra.mxu0 %v554
    %1765 = vmatprep.subr.mxu0 %v552
    %1766 = vmatpush1.msra.mxu0 %v551
    %1767 = vmatprep.subr.mxu0 %v549
    %1768 = vmatpush1.msra.mxu0 %v548
    %1769 = vmatprep.subr.mxu0 %v546
    %1770 = vmatpush1.msra.mxu0 %v545
    %1771 = vmatprep.subr.mxu0 %v543
    %1772 = vmatpush1.msra.mxu0 %v542
    %1773 = vmatprep.subr.mxu0 %v540
    %1774 = vmatpush1.msra.mxu0 %v539
    %1775 = vmatprep.subr.mxu0 %v537
    %1776 = vmatpush1.msra.mxu0 %v536
    %1777 = vmatprep.subr.mxu0 %v534
    %1778 = vmatpush1.msra.mxu0 %v533
    %1779 = vmatprep.subr.mxu0 %v531
    %1780 = vmatpush1.msra.mxu0 %v530
    %1781 = vmatprep.subr.mxu0 %v528
    %1782 = vmatpush1.msra.mxu0 %v527
    %1783 = vmatprep.subr.mxu0 0.0
    %1784 = vmatpush2.msra.mxu0 0.0
    %1785 = vmatprep.subr.mxu0 0.0
    %1786 = vmatpush2.msra.mxu0 0.0
    %1787 = vmatprep.subr.mxu0 0.0
    %1788 = vmatpush2.msra.mxu0 0.0
    %1789 = vmatprep.subr.mxu0 0.0
    %1790 = vmatpush2.msra.mxu0 0.0
    %1791 = vmatprep.subr.mxu0 0.0
    %1792 = vmatpush2.msra.mxu0 0.0
    %1793 = vmatprep.subr.mxu0 0.0
    %1794 = vmatpush2.msra.mxu0 0.0
    %1795 = vmatprep.subr.mxu0 0.0
    %1796 = vmatpush2.msra.mxu0 0.0
    %1797 = vmatprep.subr.mxu0 0.0
    %1798 = vmatpush2.msra.mxu0 0.0
    %1799 = vmatprep.subr.mxu0 0.0
    %1800 = vmatpush2.msra.mxu0 0.0
    %1801 = vmatprep.subr.mxu0 0.0
    %1802 = vmatpush2.msra.mxu0 0.0
    %1803 = vmatprep.subr.mxu0 0.0
    %1804 = vmatpush2.msra.mxu0 0.0
    %1805 = vmatprep.subr.mxu0 0.0
    %1806 = vmatpush2.msra.mxu0 0.0
    %1807 = vmatprep.subr.mxu0 0.0
    %1808 = vmatpush2.msra.mxu0 0.0
    %1809 = vmatprep.subr.mxu0 0.0
    %1810 = vmatpush2.msra.mxu0 0.0
    %1811 = vmatprep.subr.mxu0 0.0
    %1812 = vmatpush2.msra.mxu0 0.0
    %1813 = vmatprep.subr.mxu0 0.0
    %1814 = vmatpush2.msra.mxu0 0.0
    %1815 = vmatprep.mubr.f32.mxu0 0.0
    %1816 = vmatmul.mubr.f32.gmra.mxu0 %v1287
    %v1817 = vpop.f32.mrf.mxu0
    %v1818 = vadd.f32 %v599, %v1817
    %v1819 = vpop.f32.mrf.mxu0
    %v1820 = vadd.f32 %v603, %v1819
    %1821 = vdwg.mxu0
    %1822 = vmatprep.subr.mxu0 0.0
    %1823 = vmatpush1.msra.mxu0 %v574
    %1824 = vmatprep.subr.mxu0 0.0
    %1825 = vmatpush1.msra.mxu0 %v571
    %1826 = vmatprep.subr.mxu0 0.0
    %1827 = vmatpush1.msra.mxu0 %v568
    %1828 = vmatprep.subr.mxu0 0.0
    %1829 = vmatpush1.msra.mxu0 %v565
    %1830 = vmatprep.subr.mxu0 0.0
    %1831 = vmatpush1.msra.mxu0 %v562
    %1832 = vmatprep.subr.mxu0 0.0
    %1833 = vmatpush1.msra.mxu0 %v559
    %1834 = vmatprep.subr.mxu0 0.0
    %1835 = vmatpush1.msra.mxu0 %v556
    %1836 = vmatprep.subr.mxu0 0.0
    %1837 = vmatpush1.msra.mxu0 %v553
    %1838 = vmatprep.subr.mxu0 0.0
    %1839 = vmatpush1.msra.mxu0 %v550
    %1840 = vmatprep.subr.mxu0 0.0
    %1841 = vmatpush1.msra.mxu0 %v547
    %1842 = vmatprep.subr.mxu0 0.0
    %1843 = vmatpush1.msra.mxu0 %v544
    %1844 = vmatprep.subr.mxu0 0.0
    %1845 = vmatpush1.msra.mxu0 %v541
    %1846 = vmatprep.subr.mxu0 0.0
    %1847 = vmatpush1.msra.mxu0 %v538
    %1848 = vmatprep.subr.mxu0 0.0
    %1849 = vmatpush1.msra.mxu0 %v535
    %1850 = vmatprep.subr.mxu0 0.0
    %1851 = vmatpush1.msra.mxu0 %v532
    %1852 = vmatprep.subr.mxu0 0.0
    %1853 = vmatpush1.msra.mxu0 %v529
    %1854 = vmatprep.subr.mxu0 0.0
    %1855 = vmatpush2.msra.mxu0 0.0
    %1856 = vmatprep.subr.mxu0 0.0
    %1857 = vmatpush2.msra.mxu0 0.0
    %1858 = vmatprep.subr.mxu0 0.0
    %1859 = vmatpush2.msra.mxu0 0.0
    %1860 = vmatprep.subr.mxu0 0.0
    %1861 = vmatpush2.msra.mxu0 0.0
    %1862 = vmatprep.subr.mxu0 0.0
    %1863 = vmatpush2.msra.mxu0 0.0
    %1864 = vmatprep.subr.mxu0 0.0
    %1865 = vmatpush2.msra.mxu0 0.0
    %1866 = vmatprep.subr.mxu0 0.0
    %1867 = vmatpush2.msra.mxu0 0.0
    %1868 = vmatprep.subr.mxu0 0.0
    %1869 = vmatpush2.msra.mxu0 0.0
    %1870 = vmatprep.subr.mxu0 0.0
    %1871 = vmatpush2.msra.mxu0 0.0
    %1872 = vmatprep.subr.mxu0 0.0
    %1873 = vmatpush2.msra.mxu0 0.0
    %1874 = vmatprep.subr.mxu0 0.0
    %1875 = vmatpush2.msra.mxu0 0.0
    %1876 = vmatprep.subr.mxu0 0.0
    %1877 = vmatpush2.msra.mxu0 0.0
    %1878 = vmatprep.subr.mxu0 0.0
    %1879 = vmatpush2.msra.mxu0 0.0
    %1880 = vmatprep.subr.mxu0 0.0
    %1881 = vmatpush2.msra.mxu0 0.0
    %1882 = vmatprep.subr.mxu0 0.0
    %1883 = vmatpush2.msra.mxu0 0.0
    %1884 = vmatprep.subr.mxu0 0.0
    %1885 = vmatpush2.msra.mxu0 0.0
    %1886 = vmatprep.mubr.f32.mxu0 0.0
    %1887 = vmatmul.mubr.f32.gmra.mxu0 %v1287
    %v1888 = vpop.f32.mrf.mxu0
    %v1889 = vadd.f32 %v607, %v1888
    %v1890 = vpop.f32.mrf.mxu0
    %1891 = vdwg.mxu0
    %1892 = vmatprep.subr.mxu0 %v476
    %1893 = vmatpush1.msra.mxu0 %v475
    %1894 = vmatprep.subr.mxu0 %v473
    %1895 = vmatpush1.msra.mxu0 %v472
    %1896 = vmatprep.subr.mxu0 %v470
    %1897 = vmatpush1.msra.mxu0 %v469
    %1898 = vmatprep.subr.mxu0 %v467
    %1899 = vmatpush1.msra.mxu0 %v466
    %1900 = vmatprep.subr.mxu0 %v464
    %1901 = vmatpush1.msra.mxu0 %v463
    %1902 = vmatprep.subr.mxu0 %v461
    %1903 = vmatpush1.msra.mxu0 %v460
    %1904 = vmatprep.subr.mxu0 %v458
    %1905 = vmatpush1.msra.mxu0 %v457
    %1906 = vmatprep.subr.mxu0 %v455
    %1907 = vmatpush1.msra.mxu0 %v454
    %1908 = vmatprep.subr.mxu0 %v452
    %1909 = vmatpush1.msra.mxu0 %v451
    %1910 = vmatprep.subr.mxu0 %v449
    %1911 = vmatpush1.msra.mxu0 %v448
    %1912 = vmatprep.subr.mxu0 %v446
    %1913 = vmatpush1.msra.mxu0 %v445
    %1914 = vmatprep.subr.mxu0 %v443
    %1915 = vmatpush1.msra.mxu0 %v442
    %1916 = vmatprep.subr.mxu0 %v440
    %1917 = vmatpush1.msra.mxu0 %v439
    %1918 = vmatprep.subr.mxu0 %v437
    %1919 = vmatpush1.msra.mxu0 %v436
    %1920 = vmatprep.subr.mxu0 %v434
    %1921 = vmatpush1.msra.mxu0 %v433
    %1922 = vmatprep.subr.mxu0 %v431
    %1923 = vmatpush1.msra.mxu0 %v430
    %1924 = vmatprep.subr.mxu0 0.0
    %1925 = vmatpush2.msra.mxu0 0.0
    %1926 = vmatprep.subr.mxu0 0.0
    %1927 = vmatpush2.msra.mxu0 0.0
    %1928 = vmatprep.subr.mxu0 0.0
    %1929 = vmatpush2.msra.mxu0 0.0
    %1930 = vmatprep.subr.mxu0 0.0
    %1931 = vmatpush2.msra.mxu0 0.0
    %1932 = vmatprep.subr.mxu0 0.0
    %1933 = vmatpush2.msra.mxu0 0.0
    %1934 = vmatprep.subr.mxu0 0.0
    %1935 = vmatpush2.msra.mxu0 0.0
    %1936 = vmatprep.subr.mxu0 0.0
    %1937 = vmatpush2.msra.mxu0 0.0
    %1938 = vmatprep.subr.mxu0 0.0
    %1939 = vmatpush2.msra.mxu0 0.0
    %1940 = vmatprep.subr.mxu0 0.0
    %1941 = vmatpush2.msra.mxu0 0.0
    %1942 = vmatprep.subr.mxu0 0.0
    %1943 = vmatpush2.msra.mxu0 0.0
    %1944 = vmatprep.subr.mxu0 0.0
    %1945 = vmatpush2.msra.mxu0 0.0
    %1946 = vmatprep.subr.mxu0 0.0
    %1947 = vmatpush2.msra.mxu0 0.0
    %1948 = vmatprep.subr.mxu0 0.0
    %1949 = vmatpush2.msra.mxu0 0.0
    %1950 = vmatprep.subr.mxu0 0.0
    %1951 = vmatpush2.msra.mxu0 0.0
    %1952 = vmatprep.subr.mxu0 0.0
    %1953 = vmatpush2.msra.mxu0 0.0
    %1954 = vmatprep.subr.mxu0 0.0
    %1955 = vmatpush2.msra.mxu0 0.0
    %1956 = vmatprep.mubr.f32.mxu0 0.0
    %1957 = vmatmul.mubr.f32.gmra.mxu0 0.0
    %v1958 = vpop.f32.mrf.mxu0
    %v1959 = vadd.f32 %v652, %v1958
    %v1960 = vpop.f32.mrf.mxu0
    %v1961 = vadd.f32 %v656, %v1960
    %1962 = vdwg.mxu0
    %1963 = vmatprep.subr.mxu0 0.0
    %1964 = vmatpush1.msra.mxu0 %v477
    %1965 = vmatprep.subr.mxu0 0.0
    %1966 = vmatpush1.msra.mxu0 %v474
    %1967 = vmatprep.subr.mxu0 0.0
    %1968 = vmatpush1.msra.mxu0 %v471
    %1969 = vmatprep.subr.mxu0 0.0
    %1970 = vmatpush1.msra.mxu0 %v468
    %1971 = vmatprep.subr.mxu0 0.0
    %1972 = vmatpush1.msra.mxu0 %v465
    %1973 = vmatprep.subr.mxu0 0.0
    %1974 = vmatpush1.msra.mxu0 %v462
    %1975 = vmatprep.subr.mxu0 0.0
    %1976 = vmatpush1.msra.mxu0 %v459
    %1977 = vmatprep.subr.mxu0 0.0
    %1978 = vmatpush1.msra.mxu0 %v456
    %1979 = vmatprep.subr.mxu0 0.0
    %1980 = vmatpush1.msra.mxu0 %v453
    %1981 = vmatprep.subr.mxu0 0.0
    %1982 = vmatpush1.msra.mxu0 %v450
    %1983 = vmatprep.subr.mxu0 0.0
    %1984 = vmatpush1.msra.mxu0 %v447
    %1985 = vmatprep.subr.mxu0 0.0
    %1986 = vmatpush1.msra.mxu0 %v444
    %1987 = vmatprep.subr.mxu0 0.0
    %1988 = vmatpush1.msra.mxu0 %v441
    %1989 = vmatprep.subr.mxu0 0.0
    %1990 = vmatpush1.msra.mxu0 %v438
    %1991 = vmatprep.subr.mxu0 0.0
    %1992 = vmatpush1.msra.mxu0 %v435
    %1993 = vmatprep.subr.mxu0 0.0
    %1994 = vmatpush1.msra.mxu0 %v432
    %1995 = vmatprep.subr.mxu0 0.0
    %1996 = vmatpush2.msra.mxu0 0.0
    %1997 = vmatprep.subr.mxu0 0.0
    %1998 = vmatpush2.msra.mxu0 0.0
    %1999 = vmatprep.subr.mxu0 0.0
    %2000 = vmatpush2.msra.mxu0 0.0
    %2001 = vmatprep.subr.mxu0 0.0
    %2002 = vmatpush2.msra.mxu0 0.0
    %2003 = vmatprep.subr.mxu0 0.0
    %2004 = vmatpush2.msra.mxu0 0.0
    %2005 = vmatprep.subr.mxu0 0.0
    %2006 = vmatpush2.msra.mxu0 0.0
    %2007 = vmatprep.subr.mxu0 0.0
    %2008 = vmatpush2.msra.mxu0 0.0
    %2009 = vmatprep.subr.mxu0 0.0
    %2010 = vmatpush2.msra.mxu0 0.0
    %2011 = vmatprep.subr.mxu0 0.0
    %2012 = vmatpush2.msra.mxu0 0.0
    %2013 = vmatprep.subr.mxu0 0.0
    %2014 = vmatpush2.msra.mxu0 0.0
    %2015 = vmatprep.subr.mxu0 0.0
    %2016 = vmatpush2.msra.mxu0 0.0
    %2017 = vmatprep.subr.mxu0 0.0
    %2018 = vmatpush2.msra.mxu0 0.0
    %2019 = vmatprep.subr.mxu0 0.0
    %2020 = vmatpush2.msra.mxu0 0.0
    %2021 = vmatprep.subr.mxu0 0.0
    %2022 = vmatpush2.msra.mxu0 0.0
    %2023 = vmatprep.subr.mxu0 0.0
    %2024 = vmatpush2.msra.mxu0 0.0
    %2025 = vmatprep.subr.mxu0 0.0
    %2026 = vmatpush2.msra.mxu0 0.0
    %2027 = vmatprep.mubr.f32.mxu0 0.0
    %2028 = vmatmul.mubr.f32.gmra.mxu0 0.0
    %v2029 = vpop.f32.mrf.mxu0
    %v2030 = vadd.f32 %v660, %v2029
    %v2031 = vpop.f32.mrf.mxu0
    %2032 = vdwg.mxu0
    %v2033 = vadd.f32 %v1818, %v1959
    %v2034 = vxor.u32 %v2033, 2147483648
    %v2035 = vmul.f32 %v2034, 1.442695
    %v2036 = vpow.pop %v2035
    %v2037 = vadd.f32 %v2036, 1.0
    %v2038 = vrcp.pop %v2037
    %v2039 = vmul.f32 1.0, %v2038
    %v2040 = vadd.f32 %v1820, %v1961
    %v2041 = vxor.u32 %v2040, 2147483648
    %v2042 = vmul.f32 %v2041, 1.442695
    %v2043 = vpow.pop %v2042
    %v2044 = vadd.f32 %v2043, 1.0
    %v2045 = vrcp.pop %v2044
    %v2046 = vmul.f32 1.0, %v2045
    %v2047 = vmul.f32 %v2039, %v2030
    %v2048 = vadd.f32 %v1889, %v2047
    %v2049 = vtanh.pop %v2048
    %v2050 = vsub.f32 0.0, %v2049
    %v2051 = vmul.f32 %v2046, %v2050
    %v2052 = vadd.f32 %v2049, %v2051
    %2053 = vmatprep.subr.mxu0 %v378
    %2054 = vmatpush1.msra.mxu0 %v377
    %2055 = vmatprep.subr.mxu0 %v375
    %2056 = vmatpush1.msra.mxu0 %v374
    %2057 = vmatprep.subr.mxu0 %v372
    %2058 = vmatpush1.msra.mxu0 %v371
    %2059 = vmatprep.subr.mxu0 %v369
    %2060 = vmatpush1.msra.mxu0 %v368
    %2061 = vmatprep.subr.mxu0 %v366
    %2062 = vmatpush1.msra.mxu0 %v365
    %2063 = vmatprep.subr.mxu0 %v363
    %2064 = vmatpush1.msra.mxu0 %v362
    %2065 = vmatprep.subr.mxu0 %v360
    %2066 = vmatpush1.msra.mxu0 %v359
    %2067 = vmatprep.subr.mxu0 %v357
    %2068 = vmatpush1.msra.mxu0 %v356
    %2069 = vmatprep.subr.mxu0 %v354
    %2070 = vmatpush1.msra.mxu0 %v353
    %2071 = vmatprep.subr.mxu0 %v351
    %2072 = vmatpush1.msra.mxu0 %v350
    %2073 = vmatprep.subr.mxu0 %v348
    %2074 = vmatpush1.msra.mxu0 %v347
    %2075 = vmatprep.subr.mxu0 %v345
    %2076 = vmatpush1.msra.mxu0 %v344
    %2077 = vmatprep.subr.mxu0 %v342
    %2078 = vmatpush1.msra.mxu0 %v341
    %2079 = vmatprep.subr.mxu0 %v339
    %2080 = vmatpush1.msra.mxu0 %v338
    %2081 = vmatprep.subr.mxu0 %v336
    %2082 = vmatpush1.msra.mxu0 %v335
    %2083 = vmatprep.subr.mxu0 %v333
    %2084 = vmatpush1.msra.mxu0 %v332
    %2085 = vmatprep.subr.mxu0 0.0
    %2086 = vmatpush2.msra.mxu0 0.0
    %2087 = vmatprep.subr.mxu0 0.0
    %2088 = vmatpush2.msra.mxu0 0.0
    %2089 = vmatprep.subr.mxu0 0.0
    %2090 = vmatpush2.msra.mxu0 0.0
    %2091 = vmatprep.subr.mxu0 0.0
    %2092 = vmatpush2.msra.mxu0 0.0
    %2093 = vmatprep.subr.mxu0 0.0
    %2094 = vmatpush2.msra.mxu0 0.0
    %2095 = vmatprep.subr.mxu0 0.0
    %2096 = vmatpush2.msra.mxu0 0.0
    %2097 = vmatprep.subr.mxu0 0.0
    %2098 = vmatpush2.msra.mxu0 0.0
    %2099 = vmatprep.subr.mxu0 0.0
    %2100 = vmatpush2.msra.mxu0 0.0
    %2101 = vmatprep.subr.mxu0 0.0
    %2102 = vmatpush2.msra.mxu0 0.0
    %2103 = vmatprep.subr.mxu0 0.0
    %2104 = vmatpush2.msra.mxu0 0.0
    %2105 = vmatprep.subr.mxu0 0.0
    %2106 = vmatpush2.msra.mxu0 0.0
    %2107 = vmatprep.subr.mxu0 0.0
    %2108 = vmatpush2.msra.mxu0 0.0
    %2109 = vmatprep.subr.mxu0 0.0
    %2110 = vmatpush2.msra.mxu0 0.0
    %2111 = vmatprep.subr.mxu0 0.0
    %2112 = vmatpush2.msra.mxu0 0.0
    %2113 = vmatprep.subr.mxu0 0.0
    %2114 = vmatpush2.msra.mxu0 0.0
    %2115 = vmatprep.subr.mxu0 0.0
    %2116 = vmatpush2.msra.mxu0 0.0
    %2117 = vmatprep.mubr.f32.mxu0 0.0
    %2118 = vmatmul.mubr.f32.gmra.mxu0 %v1448
    %v2119 = vpop.f32.mrf.mxu0
    %v2120 = vadd.f32 %v616, %v2119
    %v2121 = vpop.f32.mrf.mxu0
    %v2122 = vadd.f32 %v620, %v2121
    %2123 = vdwg.mxu0
    %2124 = vmatprep.subr.mxu0 0.0
    %2125 = vmatpush1.msra.mxu0 %v379
    %2126 = vmatprep.subr.mxu0 0.0
    %2127 = vmatpush1.msra.mxu0 %v376
    %2128 = vmatprep.subr.mxu0 0.0
    %2129 = vmatpush1.msra.mxu0 %v373
    %2130 = vmatprep.subr.mxu0 0.0
    %2131 = vmatpush1.msra.mxu0 %v370
    %2132 = vmatprep.subr.mxu0 0.0
    %2133 = vmatpush1.msra.mxu0 %v367
    %2134 = vmatprep.subr.mxu0 0.0
    %2135 = vmatpush1.msra.mxu0 %v364
    %2136 = vmatprep.subr.mxu0 0.0
    %2137 = vmatpush1.msra.mxu0 %v361
    %2138 = vmatprep.subr.mxu0 0.0
    %2139 = vmatpush1.msra.mxu0 %v358
    %2140 = vmatprep.subr.mxu0 0.0
    %2141 = vmatpush1.msra.mxu0 %v355
    %2142 = vmatprep.subr.mxu0 0.0
    %2143 = vmatpush1.msra.mxu0 %v352
    %2144 = vmatprep.subr.mxu0 0.0
    %2145 = vmatpush1.msra.mxu0 %v349
    %2146 = vmatprep.subr.mxu0 0.0
    %2147 = vmatpush1.msra.mxu0 %v346
    %2148 = vmatprep.subr.mxu0 0.0
    %2149 = vmatpush1.msra.mxu0 %v343
    %2150 = vmatprep.subr.mxu0 0.0
    %2151 = vmatpush1.msra.mxu0 %v340
    %2152 = vmatprep.subr.mxu0 0.0
    %2153 = vmatpush1.msra.mxu0 %v337
    %2154 = vmatprep.subr.mxu0 0.0
    %2155 = vmatpush1.msra.mxu0 %v334
    %2156 = vmatprep.subr.mxu0 0.0
    %2157 = vmatpush2.msra.mxu0 0.0
    %2158 = vmatprep.subr.mxu0 0.0
    %2159 = vmatpush2.msra.mxu0 0.0
    %2160 = vmatprep.subr.mxu0 0.0
    %2161 = vmatpush2.msra.mxu0 0.0
    %2162 = vmatprep.subr.mxu0 0.0
    %2163 = vmatpush2.msra.mxu0 0.0
    %2164 = vmatprep.subr.mxu0 0.0
    %2165 = vmatpush2.msra.mxu0 0.0
    %2166 = vmatprep.subr.mxu0 0.0
    %2167 = vmatpush2.msra.mxu0 0.0
    %2168 = vmatprep.subr.mxu0 0.0
    %2169 = vmatpush2.msra.mxu0 0.0
    %2170 = vmatprep.subr.mxu0 0.0
    %2171 = vmatpush2.msra.mxu0 0.0
    %2172 = vmatprep.subr.mxu0 0.0
    %2173 = vmatpush2.msra.mxu0 0.0
    %2174 = vmatprep.subr.mxu0 0.0
    %2175 = vmatpush2.msra.mxu0 0.0
    %2176 = vmatprep.subr.mxu0 0.0
    %2177 = vmatpush2.msra.mxu0 0.0
    %2178 = vmatprep.subr.mxu0 0.0
    %2179 = vmatpush2.msra.mxu0 0.0
    %2180 = vmatprep.subr.mxu0 0.0
    %2181 = vmatpush2.msra.mxu0 0.0
    %2182 = vmatprep.subr.mxu0 0.0
    %2183 = vmatpush2.msra.mxu0 0.0
    %2184 = vmatprep.subr.mxu0 0.0
    %2185 = vmatpush2.msra.mxu0 0.0
    %2186 = vmatprep.subr.mxu0 0.0
    %2187 = vmatpush2.msra.mxu0 0.0
    %2188 = vmatprep.mubr.f32.mxu0 0.0
    %2189 = vmatmul.mubr.f32.gmra.mxu0 %v1448
    %v2190 = vpop.f32.mrf.mxu0
    %v2191 = vadd.f32 %v624, %v2190
    %v2192 = vpop.f32.mrf.mxu0
    %2193 = vdwg.mxu0
    %v2194 = vadd.f32 %v199, %v2120
    %v2195 = vxor.u32 %v2194, 2147483648
    %v2196 = vmul.f32 %v2195, 1.442695
    %v2197 = vpow.pop %v2196
    %v2198 = vadd.f32 %v2197, 1.0
    %v2199 = vrcp.pop %v2198
    %v2200 = vmul.f32 1.0, %v2199
    %v2201 = vadd.f32 %v201, %v2122
    %v2202 = vxor.u32 %v2201, 2147483648
    %v2203 = vmul.f32 %v2202, 1.442695
    %v2204 = vpow.pop %v2203
    %v2205 = vadd.f32 %v2204, 1.0
    %v2206 = vrcp.pop %v2205
    %v2207 = vmul.f32 1.0, %v2206
    %v2208 = vmul.f32 %v2200, %v2191
    %v2209 = vadd.f32 %v309, %v2208
    %v2210 = vtanh.pop %v2209
    %v2211 = vsub.f32 %v1448, %v2210
    %v2212 = vmul.f32 %v2207, %v2211
    %v2213 = vadd.f32 %v2210, %v2212
    %2214 = vmatprep.subr.mxu0 %v524
    %2215 = vmatpush1.msra.mxu0 %v523
    %2216 = vmatprep.subr.mxu0 %v521
    %2217 = vmatpush1.msra.mxu0 %v520
    %2218 = vmatprep.subr.mxu0 %v518
    %2219 = vmatpush1.msra.mxu0 %v517
    %2220 = vmatprep.subr.mxu0 %v515
    %2221 = vmatpush1.msra.mxu0 %v514
    %2222 = vmatprep.subr.mxu0 %v512
    %2223 = vmatpush1.msra.mxu0 %v511
    %2224 = vmatprep.subr.mxu0 %v509
    %2225 = vmatpush1.msra.mxu0 %v508
    %2226 = vmatprep.subr.mxu0 %v506
    %2227 = vmatpush1.msra.mxu0 %v505
    %2228 = vmatprep.subr.mxu0 %v503
    %2229 = vmatpush1.msra.mxu0 %v502
    %2230 = vmatprep.subr.mxu0 %v500
    %2231 = vmatpush1.msra.mxu0 %v499
    %2232 = vmatprep.subr.mxu0 %v497
    %2233 = vmatpush1.msra.mxu0 %v496
    %2234 = vmatprep.subr.mxu0 %v494
    %2235 = vmatpush1.msra.mxu0 %v493
    %2236 = vmatprep.subr.mxu0 %v491
    %2237 = vmatpush1.msra.mxu0 %v490
    %2238 = vmatprep.subr.mxu0 %v488
    %2239 = vmatpush1.msra.mxu0 %v487
    %2240 = vmatprep.subr.mxu0 %v485
    %2241 = vmatpush1.msra.mxu0 %v484
    %2242 = vmatprep.subr.mxu0 %v482
    %2243 = vmatpush1.msra.mxu0 %v481
    %2244 = vmatprep.subr.mxu0 %v479
    %2245 = vmatpush1.msra.mxu0 %v478
    %2246 = vmatprep.subr.mxu0 0.0
    %2247 = vmatpush2.msra.mxu0 0.0
    %2248 = vmatprep.subr.mxu0 0.0
    %2249 = vmatpush2.msra.mxu0 0.0
    %2250 = vmatprep.subr.mxu0 0.0
    %2251 = vmatpush2.msra.mxu0 0.0
    %2252 = vmatprep.subr.mxu0 0.0
    %2253 = vmatpush2.msra.mxu0 0.0
    %2254 = vmatprep.subr.mxu0 0.0
    %2255 = vmatpush2.msra.mxu0 0.0
    %2256 = vmatprep.subr.mxu0 0.0
    %2257 = vmatpush2.msra.mxu0 0.0
    %2258 = vmatprep.subr.mxu0 0.0
    %2259 = vmatpush2.msra.mxu0 0.0
    %2260 = vmatprep.subr.mxu0 0.0
    %2261 = vmatpush2.msra.mxu0 0.0
    %2262 = vmatprep.subr.mxu0 0.0
    %2263 = vmatpush2.msra.mxu0 0.0
    %2264 = vmatprep.subr.mxu0 0.0
    %2265 = vmatpush2.msra.mxu0 0.0
    %2266 = vmatprep.subr.mxu0 0.0
    %2267 = vmatpush2.msra.mxu0 0.0
    %2268 = vmatprep.subr.mxu0 0.0
    %2269 = vmatpush2.msra.mxu0 0.0
    %2270 = vmatprep.subr.mxu0 0.0
    %2271 = vmatpush2.msra.mxu0 0.0
    %2272 = vmatprep.subr.mxu0 0.0
    %2273 = vmatpush2.msra.mxu0 0.0
    %2274 = vmatprep.subr.mxu0 0.0
    %2275 = vmatpush2.msra.mxu0 0.0
    %2276 = vmatprep.subr.mxu0 0.0
    %2277 = vmatpush2.msra.mxu0 0.0
    %2278 = vmatprep.mubr.f32.mxu0 0.0
    %2279 = vmatmul.mubr.f32.gmra.mxu0 %v1448
    %v2280 = vpop.f32.mrf.mxu0
    %v2281 = vadd.f32 %v581, %v2280
    %v2282 = vpop.f32.mrf.mxu0
    %v2283 = vadd.f32 %v585, %v2282
    %2284 = vdwg.mxu0
    %2285 = vmatprep.subr.mxu0 0.0
    %2286 = vmatpush1.msra.mxu0 %v525
    %2287 = vmatprep.subr.mxu0 0.0
    %2288 = vmatpush1.msra.mxu0 %v522
    %2289 = vmatprep.subr.mxu0 0.0
    %2290 = vmatpush1.msra.mxu0 %v519
    %2291 = vmatprep.subr.mxu0 0.0
    %2292 = vmatpush1.msra.mxu0 %v516
    %2293 = vmatprep.subr.mxu0 0.0
    %2294 = vmatpush1.msra.mxu0 %v513
    %2295 = vmatprep.subr.mxu0 0.0
    %2296 = vmatpush1.msra.mxu0 %v510
    %2297 = vmatprep.subr.mxu0 0.0
    %2298 = vmatpush1.msra.mxu0 %v507
    %2299 = vmatprep.subr.mxu0 0.0
    %2300 = vmatpush1.msra.mxu0 %v504
    %2301 = vmatprep.subr.mxu0 0.0
    %2302 = vmatpush1.msra.mxu0 %v501
    %2303 = vmatprep.subr.mxu0 0.0
    %2304 = vmatpush1.msra.mxu0 %v498
    %2305 = vmatprep.subr.mxu0 0.0
    %2306 = vmatpush1.msra.mxu0 %v495
    %2307 = vmatprep.subr.mxu0 0.0
    %2308 = vmatpush1.msra.mxu0 %v492
    %2309 = vmatprep.subr.mxu0 0.0
    %2310 = vmatpush1.msra.mxu0 %v489
    %2311 = vmatprep.subr.mxu0 0.0
    %2312 = vmatpush1.msra.mxu0 %v486
    %2313 = vmatprep.subr.mxu0 0.0
    %2314 = vmatpush1.msra.mxu0 %v483
    %2315 = vmatprep.subr.mxu0 0.0
    %2316 = vmatpush1.msra.mxu0 %v480
    %2317 = vmatprep.subr.mxu0 0.0
    %2318 = vmatpush2.msra.mxu0 0.0
    %2319 = vmatprep.subr.mxu0 0.0
    %2320 = vmatpush2.msra.mxu0 0.0
    %2321 = vmatprep.subr.mxu0 0.0
    %2322 = vmatpush2.msra.mxu0 0.0
    %2323 = vmatprep.subr.mxu0 0.0
    %2324 = vmatpush2.msra.mxu0 0.0
    %2325 = vmatprep.subr.mxu0 0.0
    %2326 = vmatpush2.msra.mxu0 0.0
    %2327 = vmatprep.subr.mxu0 0.0
    %2328 = vmatpush2.msra.mxu0 0.0
    %2329 = vmatprep.subr.mxu0 0.0
    %2330 = vmatpush2.msra.mxu0 0.0
    %2331 = vmatprep.subr.mxu0 0.0
    %2332 = vmatpush2.msra.mxu0 0.0
    %2333 = vmatprep.subr.mxu0 0.0
    %2334 = vmatpush2.msra.mxu0 0.0
    %2335 = vmatprep.subr.mxu0 0.0
    %2336 = vmatpush2.msra.mxu0 0.0
    %2337 = vmatprep.subr.mxu0 0.0
    %2338 = vmatpush2.msra.mxu0 0.0
    %2339 = vmatprep.subr.mxu0 0.0
    %2340 = vmatpush2.msra.mxu0 0.0
    %2341 = vmatprep.subr.mxu0 0.0
    %2342 = vmatpush2.msra.mxu0 0.0
    %2343 = vmatprep.subr.mxu0 0.0
    %2344 = vmatpush2.msra.mxu0 0.0
    %2345 = vmatprep.subr.mxu0 0.0
    %2346 = vmatpush2.msra.mxu0 0.0
    %2347 = vmatprep.subr.mxu0 0.0
    %2348 = vmatpush2.msra.mxu0 0.0
    %2349 = vmatprep.mubr.f32.mxu0 0.0
    %2350 = vmatmul.mubr.f32.gmra.mxu0 %v1448
    %v2351 = vpop.f32.mrf.mxu0
    %v2352 = vadd.f32 %v589, %v2351
    %v2353 = vpop.f32.mrf.mxu0
    %2354 = vdwg.mxu0
    %2355 = vmatprep.subr.mxu0 %v427
    %2356 = vmatpush1.msra.mxu0 %v426
    %2357 = vmatprep.subr.mxu0 %v424
    %2358 = vmatpush1.msra.mxu0 %v423
    %2359 = vmatprep.subr.mxu0 %v421
    %2360 = vmatpush1.msra.mxu0 %v420
    %2361 = vmatprep.subr.mxu0 %v418
    %2362 = vmatpush1.msra.mxu0 %v417
    %2363 = vmatprep.subr.mxu0 %v415
    %2364 = vmatpush1.msra.mxu0 %v414
    %2365 = vmatprep.subr.mxu0 %v412
    %2366 = vmatpush1.msra.mxu0 %v411
    %2367 = vmatprep.subr.mxu0 %v409
    %2368 = vmatpush1.msra.mxu0 %v408
    %2369 = vmatprep.subr.mxu0 %v406
    %2370 = vmatpush1.msra.mxu0 %v405
    %2371 = vmatprep.subr.mxu0 %v403
    %2372 = vmatpush1.msra.mxu0 %v402
    %2373 = vmatprep.subr.mxu0 %v400
    %2374 = vmatpush1.msra.mxu0 %v399
    %2375 = vmatprep.subr.mxu0 %v397
    %2376 = vmatpush1.msra.mxu0 %v396
    %2377 = vmatprep.subr.mxu0 %v394
    %2378 = vmatpush1.msra.mxu0 %v393
    %2379 = vmatprep.subr.mxu0 %v391
    %2380 = vmatpush1.msra.mxu0 %v390
    %2381 = vmatprep.subr.mxu0 %v388
    %2382 = vmatpush1.msra.mxu0 %v387
    %2383 = vmatprep.subr.mxu0 %v385
    %2384 = vmatpush1.msra.mxu0 %v384
    %2385 = vmatprep.subr.mxu0 %v382
    %2386 = vmatpush1.msra.mxu0 %v381
    %2387 = vmatprep.subr.mxu0 0.0
    %2388 = vmatpush2.msra.mxu0 0.0
    %2389 = vmatprep.subr.mxu0 0.0
    %2390 = vmatpush2.msra.mxu0 0.0
    %2391 = vmatprep.subr.mxu0 0.0
    %2392 = vmatpush2.msra.mxu0 0.0
    %2393 = vmatprep.subr.mxu0 0.0
    %2394 = vmatpush2.msra.mxu0 0.0
    %2395 = vmatprep.subr.mxu0 0.0
    %2396 = vmatpush2.msra.mxu0 0.0
    %2397 = vmatprep.subr.mxu0 0.0
    %2398 = vmatpush2.msra.mxu0 0.0
    %2399 = vmatprep.subr.mxu0 0.0
    %2400 = vmatpush2.msra.mxu0 0.0
    %2401 = vmatprep.subr.mxu0 0.0
    %2402 = vmatpush2.msra.mxu0 0.0
    %2403 = vmatprep.subr.mxu0 0.0
    %2404 = vmatpush2.msra.mxu0 0.0
    %2405 = vmatprep.subr.mxu0 0.0
    %2406 = vmatpush2.msra.mxu0 0.0
    %2407 = vmatprep.subr.mxu0 0.0
    %2408 = vmatpush2.msra.mxu0 0.0
    %2409 = vmatprep.subr.mxu0 0.0
    %2410 = vmatpush2.msra.mxu0 0.0
    %2411 = vmatprep.subr.mxu0 0.0
    %2412 = vmatpush2.msra.mxu0 0.0
    %2413 = vmatprep.subr.mxu0 0.0
    %2414 = vmatpush2.msra.mxu0 0.0
    %2415 = vmatprep.subr.mxu0 0.0
    %2416 = vmatpush2.msra.mxu0 0.0
    %2417 = vmatprep.subr.mxu0 0.0
    %2418 = vmatpush2.msra.mxu0 0.0
    %2419 = vmatprep.mubr.f32.mxu0 0.0
    %2420 = vmatmul.mubr.f32.gmra.mxu0 %v1750
    %v2421 = vpop.f32.mrf.mxu0
    %v2422 = vadd.f32 %v634, %v2421
    %v2423 = vpop.f32.mrf.mxu0
    %v2424 = vadd.f32 %v638, %v2423
    %2425 = vdwg.mxu0
    %2426 = vmatprep.subr.mxu0 0.0
    %2427 = vmatpush1.msra.mxu0 %v428
    %2428 = vmatprep.subr.mxu0 0.0
    %2429 = vmatpush1.msra.mxu0 %v425
    %2430 = vmatprep.subr.mxu0 0.0
    %2431 = vmatpush1.msra.mxu0 %v422
    %2432 = vmatprep.subr.mxu0 0.0
    %2433 = vmatpush1.msra.mxu0 %v419
    %2434 = vmatprep.subr.mxu0 0.0
    %2435 = vmatpush1.msra.mxu0 %v416
    %2436 = vmatprep.subr.mxu0 0.0
    %2437 = vmatpush1.msra.mxu0 %v413
    %2438 = vmatprep.subr.mxu0 0.0
    %2439 = vmatpush1.msra.mxu0 %v410
    %2440 = vmatprep.subr.mxu0 0.0
    %2441 = vmatpush1.msra.mxu0 %v407
    %2442 = vmatprep.subr.mxu0 0.0
    %2443 = vmatpush1.msra.mxu0 %v404
    %2444 = vmatprep.subr.mxu0 0.0
    %2445 = vmatpush1.msra.mxu0 %v401
    %2446 = vmatprep.subr.mxu0 0.0
    %2447 = vmatpush1.msra.mxu0 %v398
    %2448 = vmatprep.subr.mxu0 0.0
    %2449 = vmatpush1.msra.mxu0 %v395
    %2450 = vmatprep.subr.mxu0 0.0
    %2451 = vmatpush1.msra.mxu0 %v392
    %2452 = vmatprep.subr.mxu0 0.0
    %2453 = vmatpush1.msra.mxu0 %v389
    %2454 = vmatprep.subr.mxu0 0.0
    %2455 = vmatpush1.msra.mxu0 %v386
    %2456 = vmatprep.subr.mxu0 0.0
    %2457 = vmatpush1.msra.mxu0 %v383
    %2458 = vmatprep.subr.mxu0 0.0
    %2459 = vmatpush2.msra.mxu0 0.0
    %2460 = vmatprep.subr.mxu0 0.0
    %2461 = vmatpush2.msra.mxu0 0.0
    %2462 = vmatprep.subr.mxu0 0.0
    %2463 = vmatpush2.msra.mxu0 0.0
    %2464 = vmatprep.subr.mxu0 0.0
    %2465 = vmatpush2.msra.mxu0 0.0
    %2466 = vmatprep.subr.mxu0 0.0
    %2467 = vmatpush2.msra.mxu0 0.0
    %2468 = vmatprep.subr.mxu0 0.0
    %2469 = vmatpush2.msra.mxu0 0.0
    %2470 = vmatprep.subr.mxu0 0.0
    %2471 = vmatpush2.msra.mxu0 0.0
    %2472 = vmatprep.subr.mxu0 0.0
    %2473 = vmatpush2.msra.mxu0 0.0
    %2474 = vmatprep.subr.mxu0 0.0
    %2475 = vmatpush2.msra.mxu0 0.0
    %2476 = vmatprep.subr.mxu0 0.0
    %2477 = vmatpush2.msra.mxu0 0.0
    %2478 = vmatprep.subr.mxu0 0.0
    %2479 = vmatpush2.msra.mxu0 0.0
    %2480 = vmatprep.subr.mxu0 0.0
    %2481 = vmatpush2.msra.mxu0 0.0
    %2482 = vmatprep.subr.mxu0 0.0
    %2483 = vmatpush2.msra.mxu0 0.0
    %2484 = vmatprep.subr.mxu0 0.0
    %2485 = vmatpush2.msra.mxu0 0.0
    %2486 = vmatprep.subr.mxu0 0.0
    %2487 = vmatpush2.msra.mxu0 0.0
    %2488 = vmatprep.subr.mxu0 0.0
    %2489 = vmatpush2.msra.mxu0 0.0
    %2490 = vmatprep.mubr.f32.mxu0 0.0
    %2491 = vmatmul.mubr.f32.gmra.mxu0 %v1750
    %v2492 = vpop.f32.mrf.mxu0
    %v2493 = vadd.f32 %v642, %v2492
    %v2494 = vpop.f32.mrf.mxu0
    %2495 = vdwg.mxu0
    %v2496 = vadd.f32 %v2281, %v2422
    %v2497 = vxor.u32 %v2496, 2147483648
    %v2498 = vmul.f32 %v2497, 1.442695
    %v2499 = vpow.pop %v2498
    %v2500 = vadd.f32 %v2499, 1.0
    %v2501 = vrcp.pop %v2500
    %v2502 = vmul.f32 1.0, %v2501
    %v2503 = vadd.f32 %v2283, %v2424
    %v2504 = vxor.u32 %v2503, 2147483648
    %v2505 = vmul.f32 %v2504, 1.442695
    %v2506 = vpow.pop %v2505
    %v2507 = vadd.f32 %v2506, 1.0
    %v2508 = vrcp.pop %v2507
    %v2509 = vmul.f32 1.0, %v2508
    %v2510 = vmul.f32 %v2502, %v2493
    %v2511 = vadd.f32 %v2352, %v2510
    %v2512 = vtanh.pop %v2511
    %v2513 = vsub.f32 %v1750, %v2512
    %v2514 = vmul.f32 %v2509, %v2513
    %v2515 = vadd.f32 %v2512, %v2514
    %2516 = vmatprep.subr.mxu0 %v573
    %2517 = vmatpush1.msra.mxu0 %v572
    %2518 = vmatprep.subr.mxu0 %v570
    %2519 = vmatpush1.msra.mxu0 %v569
    %2520 = vmatprep.subr.mxu0 %v567
    %2521 = vmatpush1.msra.mxu0 %v566
    %2522 = vmatprep.subr.mxu0 %v564
    %2523 = vmatpush1.msra.mxu0 %v563
    %2524 = vmatprep.subr.mxu0 %v561
    %2525 = vmatpush1.msra.mxu0 %v560
    %2526 = vmatprep.subr.mxu0 %v558
    %2527 = vmatpush1.msra.mxu0 %v557
    %2528 = vmatprep.subr.mxu0 %v555
    %2529 = vmatpush1.msra.mxu0 %v554
    %2530 = vmatprep.subr.mxu0 %v552
    %2531 = vmatpush1.msra.mxu0 %v551
    %2532 = vmatprep.subr.mxu0 %v549
    %2533 = vmatpush1.msra.mxu0 %v548
    %2534 = vmatprep.subr.mxu0 %v546
    %2535 = vmatpush1.msra.mxu0 %v545
    %2536 = vmatprep.subr.mxu0 %v543
    %2537 = vmatpush1.msra.mxu0 %v542
    %2538 = vmatprep.subr.mxu0 %v540
    %2539 = vmatpush1.msra.mxu0 %v539
    %2540 = vmatprep.subr.mxu0 %v537
    %2541 = vmatpush1.msra.mxu0 %v536
    %2542 = vmatprep.subr.mxu0 %v534
    %2543 = vmatpush1.msra.mxu0 %v533
    %2544 = vmatprep.subr.mxu0 %v531
    %2545 = vmatpush1.msra.mxu0 %v530
    %2546 = vmatprep.subr.mxu0 %v528
    %2547 = vmatpush1.msra.mxu0 %v527
    %2548 = vmatprep.subr.mxu0 0.0
    %2549 = vmatpush2.msra.mxu0 0.0
    %2550 = vmatprep.subr.mxu0 0.0
    %2551 = vmatpush2.msra.mxu0 0.0
    %2552 = vmatprep.subr.mxu0 0.0
    %2553 = vmatpush2.msra.mxu0 0.0
    %2554 = vmatprep.subr.mxu0 0.0
    %2555 = vmatpush2.msra.mxu0 0.0
    %2556 = vmatprep.subr.mxu0 0.0
    %2557 = vmatpush2.msra.mxu0 0.0
    %2558 = vmatprep.subr.mxu0 0.0
    %2559 = vmatpush2.msra.mxu0 0.0
    %2560 = vmatprep.subr.mxu0 0.0
    %2561 = vmatpush2.msra.mxu0 0.0
    %2562 = vmatprep.subr.mxu0 0.0
    %2563 = vmatpush2.msra.mxu0 0.0
    %2564 = vmatprep.subr.mxu0 0.0
    %2565 = vmatpush2.msra.mxu0 0.0
    %2566 = vmatprep.subr.mxu0 0.0
    %2567 = vmatpush2.msra.mxu0 0.0
    %2568 = vmatprep.subr.mxu0 0.0
    %2569 = vmatpush2.msra.mxu0 0.0
    %2570 = vmatprep.subr.mxu0 0.0
    %2571 = vmatpush2.msra.mxu0 0.0
    %2572 = vmatprep.subr.mxu0 0.0
    %2573 = vmatpush2.msra.mxu0 0.0
    %2574 = vmatprep.subr.mxu0 0.0
    %2575 = vmatpush2.msra.mxu0 0.0
    %2576 = vmatprep.subr.mxu0 0.0
    %2577 = vmatpush2.msra.mxu0 0.0
    %2578 = vmatprep.subr.mxu0 0.0
    %2579 = vmatpush2.msra.mxu0 0.0
    %2580 = vmatprep.mubr.f32.mxu0 0.0
    %2581 = vmatmul.mubr.f32.gmra.mxu0 %v1750
    %v2582 = vpop.f32.mrf.mxu0
    %v2583 = vadd.f32 %v599, %v2582
    %v2584 = vpop.f32.mrf.mxu0
    %v2585 = vadd.f32 %v603, %v2584
    %2586 = vdwg.mxu0
    %2587 = vmatprep.subr.mxu0 0.0
    %2588 = vmatpush1.msra.mxu0 %v574
    %2589 = vmatprep.subr.mxu0 0.0
    %2590 = vmatpush1.msra.mxu0 %v571
    %2591 = vmatprep.subr.mxu0 0.0
    %2592 = vmatpush1.msra.mxu0 %v568
    %2593 = vmatprep.subr.mxu0 0.0
    %2594 = vmatpush1.msra.mxu0 %v565
    %2595 = vmatprep.subr.mxu0 0.0
    %2596 = vmatpush1.msra.mxu0 %v562
    %2597 = vmatprep.subr.mxu0 0.0
    %2598 = vmatpush1.msra.mxu0 %v559
    %2599 = vmatprep.subr.mxu0 0.0
    %2600 = vmatpush1.msra.mxu0 %v556
    %2601 = vmatprep.subr.mxu0 0.0
    %2602 = vmatpush1.msra.mxu0 %v553
    %2603 = vmatprep.subr.mxu0 0.0
    %2604 = vmatpush1.msra.mxu0 %v550
    %2605 = vmatprep.subr.mxu0 0.0
    %2606 = vmatpush1.msra.mxu0 %v547
    %2607 = vmatprep.subr.mxu0 0.0
    %2608 = vmatpush1.msra.mxu0 %v544
    %2609 = vmatprep.subr.mxu0 0.0
    %2610 = vmatpush1.msra.mxu0 %v541
    %2611 = vmatprep.subr.mxu0 0.0
    %2612 = vmatpush1.msra.mxu0 %v538
    %2613 = vmatprep.subr.mxu0 0.0
    %2614 = vmatpush1.msra.mxu0 %v535
    %2615 = vmatprep.subr.mxu0 0.0
    %2616 = vmatpush1.msra.mxu0 %v532
    %2617 = vmatprep.subr.mxu0 0.0
    %2618 = vmatpush1.msra.mxu0 %v529
    %2619 = vmatprep.subr.mxu0 0.0
    %2620 = vmatpush2.msra.mxu0 0.0
    %2621 = vmatprep.subr.mxu0 0.0
    %2622 = vmatpush2.msra.mxu0 0.0
    %2623 = vmatprep.subr.mxu0 0.0
    %2624 = vmatpush2.msra.mxu0 0.0
    %2625 = vmatprep.subr.mxu0 0.0
    %2626 = vmatpush2.msra.mxu0 0.0
    %2627 = vmatprep.subr.mxu0 0.0
    %2628 = vmatpush2.msra.mxu0 0.0
    %2629 = vmatprep.subr.mxu0 0.0
    %2630 = vmatpush2.msra.mxu0 0.0
    %2631 = vmatprep.subr.mxu0 0.0
    %2632 = vmatpush2.msra.mxu0 0.0
    %2633 = vmatprep.subr.mxu0 0.0
    %2634 = vmatpush2.msra.mxu0 0.0
    %2635 = vmatprep.subr.mxu0 0.0
    %2636 = vmatpush2.msra.mxu0 0.0
    %2637 = vmatprep.subr.mxu0 0.0
    %2638 = vmatpush2.msra.mxu0 0.0
    %2639 = vmatprep.subr.mxu0 0.0
    %2640 = vmatpush2.msra.mxu0 0.0
    %2641 = vmatprep.subr.mxu0 0.0
    %2642 = vmatpush2.msra.mxu0 0.0
    %2643 = vmatprep.subr.mxu0 0.0
    %2644 = vmatpush2.msra.mxu0 0.0
    %2645 = vmatprep.subr.mxu0 0.0
    %2646 = vmatpush2.msra.mxu0 0.0
    %2647 = vmatprep.subr.mxu0 0.0
    %2648 = vmatpush2.msra.mxu0 0.0
    %2649 = vmatprep.subr.mxu0 0.0
    %2650 = vmatpush2.msra.mxu0 0.0
    %2651 = vmatprep.mubr.f32.mxu0 0.0
    %2652 = vmatmul.mubr.f32.gmra.mxu0 %v1750
    %v2653 = vpop.f32.mrf.mxu0
    %v2654 = vadd.f32 %v607, %v2653
    %v2655 = vpop.f32.mrf.mxu0
    %2656 = vdwg.mxu0
    %2657 = vmatprep.subr.mxu0 %v476
    %2658 = vmatpush1.msra.mxu0 %v475
    %2659 = vmatprep.subr.mxu0 %v473
    %2660 = vmatpush1.msra.mxu0 %v472
    %2661 = vmatprep.subr.mxu0 %v470
    %2662 = vmatpush1.msra.mxu0 %v469
    %2663 = vmatprep.subr.mxu0 %v467
    %2664 = vmatpush1.msra.mxu0 %v466
    %2665 = vmatprep.subr.mxu0 %v464
    %2666 = vmatpush1.msra.mxu0 %v463
    %2667 = vmatprep.subr.mxu0 %v461
    %2668 = vmatpush1.msra.mxu0 %v460
    %2669 = vmatprep.subr.mxu0 %v458
    %2670 = vmatpush1.msra.mxu0 %v457
    %2671 = vmatprep.subr.mxu0 %v455
    %2672 = vmatpush1.msra.mxu0 %v454
    %2673 = vmatprep.subr.mxu0 %v452
    %2674 = vmatpush1.msra.mxu0 %v451
    %2675 = vmatprep.subr.mxu0 %v449
    %2676 = vmatpush1.msra.mxu0 %v448
    %2677 = vmatprep.subr.mxu0 %v446
    %2678 = vmatpush1.msra.mxu0 %v445
    %2679 = vmatprep.subr.mxu0 %v443
    %2680 = vmatpush1.msra.mxu0 %v442
    %2681 = vmatprep.subr.mxu0 %v440
    %2682 = vmatpush1.msra.mxu0 %v439
    %2683 = vmatprep.subr.mxu0 %v437
    %2684 = vmatpush1.msra.mxu0 %v436
    %2685 = vmatprep.subr.mxu0 %v434
    %2686 = vmatpush1.msra.mxu0 %v433
    %2687 = vmatprep.subr.mxu0 %v431
    %2688 = vmatpush1.msra.mxu0 %v430
    %2689 = vmatprep.subr.mxu0 0.0
    %2690 = vmatpush2.msra.mxu0 0.0
    %2691 = vmatprep.subr.mxu0 0.0
    %2692 = vmatpush2.msra.mxu0 0.0
    %2693 = vmatprep.subr.mxu0 0.0
    %2694 = vmatpush2.msra.mxu0 0.0
    %2695 = vmatprep.subr.mxu0 0.0
    %2696 = vmatpush2.msra.mxu0 0.0
    %2697 = vmatprep.subr.mxu0 0.0
    %2698 = vmatpush2.msra.mxu0 0.0
    %2699 = vmatprep.subr.mxu0 0.0
    %2700 = vmatpush2.msra.mxu0 0.0
    %2701 = vmatprep.subr.mxu0 0.0
    %2702 = vmatpush2.msra.mxu0 0.0
    %2703 = vmatprep.subr.mxu0 0.0
    %2704 = vmatpush2.msra.mxu0 0.0
    %2705 = vmatprep.subr.mxu0 0.0
    %2706 = vmatpush2.msra.mxu0 0.0
    %2707 = vmatprep.subr.mxu0 0.0
    %2708 = vmatpush2.msra.mxu0 0.0
    %2709 = vmatprep.subr.mxu0 0.0
    %2710 = vmatpush2.msra.mxu0 0.0
    %2711 = vmatprep.subr.mxu0 0.0
    %2712 = vmatpush2.msra.mxu0 0.0
    %2713 = vmatprep.subr.mxu0 0.0
    %2714 = vmatpush2.msra.mxu0 0.0
    %2715 = vmatprep.subr.mxu0 0.0
    %2716 = vmatpush2.msra.mxu0 0.0
    %2717 = vmatprep.subr.mxu0 0.0
    %2718 = vmatpush2.msra.mxu0 0.0
    %2719 = vmatprep.subr.mxu0 0.0
    %2720 = vmatpush2.msra.mxu0 0.0
    %2721 = vmatprep.mubr.f32.mxu0 0.0
    %2722 = vmatmul.mubr.f32.gmra.mxu0 %v2052
    %v2723 = vpop.f32.mrf.mxu0
    %v2724 = vadd.f32 %v652, %v2723
    %v2725 = vpop.f32.mrf.mxu0
    %v2726 = vadd.f32 %v656, %v2725
    %2727 = vdwg.mxu0
    %2728 = vmatprep.subr.mxu0 0.0
    %2729 = vmatpush1.msra.mxu0 %v477
    %2730 = vmatprep.subr.mxu0 0.0
    %2731 = vmatpush1.msra.mxu0 %v474
    %2732 = vmatprep.subr.mxu0 0.0
    %2733 = vmatpush1.msra.mxu0 %v471
    %2734 = vmatprep.subr.mxu0 0.0
    %2735 = vmatpush1.msra.mxu0 %v468
    %2736 = vmatprep.subr.mxu0 0.0
    %2737 = vmatpush1.msra.mxu0 %v465
    %2738 = vmatprep.subr.mxu0 0.0
    %2739 = vmatpush1.msra.mxu0 %v462
    %2740 = vmatprep.subr.mxu0 0.0
    %2741 = vmatpush1.msra.mxu0 %v459
    %2742 = vmatprep.subr.mxu0 0.0
    %2743 = vmatpush1.msra.mxu0 %v456
    %2744 = vmatprep.subr.mxu0 0.0
    %2745 = vmatpush1.msra.mxu0 %v453
    %2746 = vmatprep.subr.mxu0 0.0
    %2747 = vmatpush1.msra.mxu0 %v450
    %2748 = vmatprep.subr.mxu0 0.0
    %2749 = vmatpush1.msra.mxu0 %v447
    %2750 = vmatprep.subr.mxu0 0.0
    %2751 = vmatpush1.msra.mxu0 %v444
    %2752 = vmatprep.subr.mxu0 0.0
    %2753 = vmatpush1.msra.mxu0 %v441
    %2754 = vmatprep.subr.mxu0 0.0
    %2755 = vmatpush1.msra.mxu0 %v438
    %2756 = vmatprep.subr.mxu0 0.0
    %2757 = vmatpush1.msra.mxu0 %v435
    %2758 = vmatprep.subr.mxu0 0.0
    %2759 = vmatpush1.msra.mxu0 %v432
    %2760 = vmatprep.subr.mxu0 0.0
    %2761 = vmatpush2.msra.mxu0 0.0
    %2762 = vmatprep.subr.mxu0 0.0
    %2763 = vmatpush2.msra.mxu0 0.0
    %2764 = vmatprep.subr.mxu0 0.0
    %2765 = vmatpush2.msra.mxu0 0.0
    %2766 = vmatprep.subr.mxu0 0.0
    %2767 = vmatpush2.msra.mxu0 0.0
    %2768 = vmatprep.subr.mxu0 0.0
    %2769 = vmatpush2.msra.mxu0 0.0
    %2770 = vmatprep.subr.mxu0 0.0
    %2771 = vmatpush2.msra.mxu0 0.0
    %2772 = vmatprep.subr.mxu0 0.0
    %2773 = vmatpush2.msra.mxu0 0.0
    %2774 = vmatprep.subr.mxu0 0.0
    %2775 = vmatpush2.msra.mxu0 0.0
    %2776 = vmatprep.subr.mxu0 0.0
    %2777 = vmatpush2.msra.mxu0 0.0
    %2778 = vmatprep.subr.mxu0 0.0
    %2779 = vmatpush2.msra.mxu0 0.0
    %2780 = vmatprep.subr.mxu0 0.0
    %2781 = vmatpush2.msra.mxu0 0.0
    %2782 = vmatprep.subr.mxu0 0.0
    %2783 = vmatpush2.msra.mxu0 0.0
    %2784 = vmatprep.subr.mxu0 0.0
    %2785 = vmatpush2.msra.mxu0 0.0
    %2786 = vmatprep.subr.mxu0 0.0
    %2787 = vmatpush2.msra.mxu0 0.0
    %2788 = vmatprep.subr.mxu0 0.0
    %2789 = vmatpush2.msra.mxu0 0.0
    %2790 = vmatprep.subr.mxu0 0.0
    %2791 = vmatpush2.msra.mxu0 0.0
    %2792 = vmatprep.mubr.f32.mxu0 0.0
    %2793 = vmatmul.mubr.f32.gmra.mxu0 %v2052
    %v2794 = vpop.f32.mrf.mxu0
    %v2795 = vadd.f32 %v660, %v2794
    %v2796 = vpop.f32.mrf.mxu0
    %2797 = vdwg.mxu0
    %v2798 = vadd.f32 %v2583, %v2724
    %v2799 = vxor.u32 %v2798, 2147483648
    %v2800 = vmul.f32 %v2799, 1.442695
    %v2801 = vpow.pop %v2800
    %v2802 = vadd.f32 %v2801, 1.0
    %v2803 = vrcp.pop %v2802
    %v2804 = vmul.f32 1.0, %v2803
    %v2805 = vadd.f32 %v2585, %v2726
    %v2806 = vxor.u32 %v2805, 2147483648
    %v2807 = vmul.f32 %v2806, 1.442695
    %v2808 = vpow.pop %v2807
    %v2809 = vadd.f32 %v2808, 1.0
    %v2810 = vrcp.pop %v2809
    %v2811 = vmul.f32 1.0, %v2810
    %v2812 = vmul.f32 %v2804, %v2795
    %v2813 = vadd.f32 %v2654, %v2812
    %v2814 = vtanh.pop %v2813
    %v2815 = vsub.f32 %v2052, %v2814
    %v2816 = vmul.f32 %v2811, %v2815
    %v2817 = vadd.f32 %v2814, %v2816
    %2818 = vmatprep.subr.mxu0 %v378
    %2819 = vmatpush1.msra.mxu0 %v377
    %2820 = vmatprep.subr.mxu0 %v375
    %2821 = vmatpush1.msra.mxu0 %v374
    %2822 = vmatprep.subr.mxu0 %v372
    %2823 = vmatpush1.msra.mxu0 %v371
    %2824 = vmatprep.subr.mxu0 %v369
    %2825 = vmatpush1.msra.mxu0 %v368
    %2826 = vmatprep.subr.mxu0 %v366
    %2827 = vmatpush1.msra.mxu0 %v365
    %2828 = vmatprep.subr.mxu0 %v363
    %2829 = vmatpush1.msra.mxu0 %v362
    %2830 = vmatprep.subr.mxu0 %v360
    %2831 = vmatpush1.msra.mxu0 %v359
    %2832 = vmatprep.subr.mxu0 %v357
    %2833 = vmatpush1.msra.mxu0 %v356
    %2834 = vmatprep.subr.mxu0 %v354
    %2835 = vmatpush1.msra.mxu0 %v353
    %2836 = vmatprep.subr.mxu0 %v351
    %2837 = vmatpush1.msra.mxu0 %v350
    %2838 = vmatprep.subr.mxu0 %v348
    %2839 = vmatpush1.msra.mxu0 %v347
    %2840 = vmatprep.subr.mxu0 %v345
    %2841 = vmatpush1.msra.mxu0 %v344
    %2842 = vmatprep.subr.mxu0 %v342
    %2843 = vmatpush1.msra.mxu0 %v341
    %2844 = vmatprep.subr.mxu0 %v339
    %2845 = vmatpush1.msra.mxu0 %v338
    %2846 = vmatprep.subr.mxu0 %v336
    %2847 = vmatpush1.msra.mxu0 %v335
    %2848 = vmatprep.subr.mxu0 %v333
    %2849 = vmatpush1.msra.mxu0 %v332
    %2850 = vmatprep.subr.mxu0 0.0
    %2851 = vmatpush2.msra.mxu0 0.0
    %2852 = vmatprep.subr.mxu0 0.0
    %2853 = vmatpush2.msra.mxu0 0.0
    %2854 = vmatprep.subr.mxu0 0.0
    %2855 = vmatpush2.msra.mxu0 0.0
    %2856 = vmatprep.subr.mxu0 0.0
    %2857 = vmatpush2.msra.mxu0 0.0
    %2858 = vmatprep.subr.mxu0 0.0
    %2859 = vmatpush2.msra.mxu0 0.0
    %2860 = vmatprep.subr.mxu0 0.0
    %2861 = vmatpush2.msra.mxu0 0.0
    %2862 = vmatprep.subr.mxu0 0.0
    %2863 = vmatpush2.msra.mxu0 0.0
    %2864 = vmatprep.subr.mxu0 0.0
    %2865 = vmatpush2.msra.mxu0 0.0
    %2866 = vmatprep.subr.mxu0 0.0
    %2867 = vmatpush2.msra.mxu0 0.0
    %2868 = vmatprep.subr.mxu0 0.0
    %2869 = vmatpush2.msra.mxu0 0.0
    %2870 = vmatprep.subr.mxu0 0.0
    %2871 = vmatpush2.msra.mxu0 0.0
    %2872 = vmatprep.subr.mxu0 0.0
    %2873 = vmatpush2.msra.mxu0 0.0
    %2874 = vmatprep.subr.mxu0 0.0
    %2875 = vmatpush2.msra.mxu0 0.0
    %2876 = vmatprep.subr.mxu0 0.0
    %2877 = vmatpush2.msra.mxu0 0.0
    %2878 = vmatprep.subr.mxu0 0.0
    %2879 = vmatpush2.msra.mxu0 0.0
    %2880 = vmatprep.subr.mxu0 0.0
    %2881 = vmatpush2.msra.mxu0 0.0
    %2882 = vmatprep.mubr.f32.mxu0 0.0
    %2883 = vmatmul.mubr.f32.gmra.mxu0 %v2213
    %v2884 = vpop.f32.mrf.mxu0
    %v2885 = vadd.f32 %v616, %v2884
    %v2886 = vpop.f32.mrf.mxu0
    %v2887 = vadd.f32 %v620, %v2886
    %2888 = vdwg.mxu0
    %2889 = vmatprep.subr.mxu0 0.0
    %2890 = vmatpush1.msra.mxu0 %v379
    %2891 = vmatprep.subr.mxu0 0.0
    %2892 = vmatpush1.msra.mxu0 %v376
    %2893 = vmatprep.subr.mxu0 0.0
    %2894 = vmatpush1.msra.mxu0 %v373
    %2895 = vmatprep.subr.mxu0 0.0
    %2896 = vmatpush1.msra.mxu0 %v370
    %2897 = vmatprep.subr.mxu0 0.0
    %2898 = vmatpush1.msra.mxu0 %v367
    %2899 = vmatprep.subr.mxu0 0.0
    %2900 = vmatpush1.msra.mxu0 %v364
    %2901 = vmatprep.subr.mxu0 0.0
    %2902 = vmatpush1.msra.mxu0 %v361
    %2903 = vmatprep.subr.mxu0 0.0
    %2904 = vmatpush1.msra.mxu0 %v358
    %2905 = vmatprep.subr.mxu0 0.0
    %2906 = vmatpush1.msra.mxu0 %v355
    %2907 = vmatprep.subr.mxu0 0.0
    %2908 = vmatpush1.msra.mxu0 %v352
    %2909 = vmatprep.subr.mxu0 0.0
    %2910 = vmatpush1.msra.mxu0 %v349
    %2911 = vmatprep.subr.mxu0 0.0
    %2912 = vmatpush1.msra.mxu0 %v346
    %2913 = vmatprep.subr.mxu0 0.0
    %2914 = vmatpush1.msra.mxu0 %v343
    %2915 = vmatprep.subr.mxu0 0.0
    %2916 = vmatpush1.msra.mxu0 %v340
    %2917 = vmatprep.subr.mxu0 0.0
    %2918 = vmatpush1.msra.mxu0 %v337
    %2919 = vmatprep.subr.mxu0 0.0
    %2920 = vmatpush1.msra.mxu0 %v334
    %2921 = vmatprep.subr.mxu0 0.0
    %2922 = vmatpush2.msra.mxu0 0.0
    %2923 = vmatprep.subr.mxu0 0.0
    %2924 = vmatpush2.msra.mxu0 0.0
    %2925 = vmatprep.subr.mxu0 0.0
    %2926 = vmatpush2.msra.mxu0 0.0
    %2927 = vmatprep.subr.mxu0 0.0
    %2928 = vmatpush2.msra.mxu0 0.0
    %2929 = vmatprep.subr.mxu0 0.0
    %2930 = vmatpush2.msra.mxu0 0.0
    %2931 = vmatprep.subr.mxu0 0.0
    %2932 = vmatpush2.msra.mxu0 0.0
    %2933 = vmatprep.subr.mxu0 0.0
    %2934 = vmatpush2.msra.mxu0 0.0
    %2935 = vmatprep.subr.mxu0 0.0
    %2936 = vmatpush2.msra.mxu0 0.0
    %2937 = vmatprep.subr.mxu0 0.0
    %2938 = vmatpush2.msra.mxu0 0.0
    %2939 = vmatprep.subr.mxu0 0.0
    %2940 = vmatpush2.msra.mxu0 0.0
    %2941 = vmatprep.subr.mxu0 0.0
    %2942 = vmatpush2.msra.mxu0 0.0
    %2943 = vmatprep.subr.mxu0 0.0
    %2944 = vmatpush2.msra.mxu0 0.0
    %2945 = vmatprep.subr.mxu0 0.0
    %2946 = vmatpush2.msra.mxu0 0.0
    %2947 = vmatprep.subr.mxu0 0.0
    %2948 = vmatpush2.msra.mxu0 0.0
    %2949 = vmatprep.subr.mxu0 0.0
    %2950 = vmatpush2.msra.mxu0 0.0
    %2951 = vmatprep.subr.mxu0 0.0
    %2952 = vmatpush2.msra.mxu0 0.0
    %2953 = vmatprep.mubr.f32.mxu0 0.0
    %2954 = vmatmul.mubr.f32.gmra.mxu0 %v2213
    %v2955 = vpop.f32.mrf.mxu0
    %v2956 = vadd.f32 %v624, %v2955
    %v2957 = vpop.f32.mrf.mxu0
    %2958 = vdwg.mxu0
    %v2959 = vadd.f32 %v205, %v2885
    %v2960 = vxor.u32 %v2959, 2147483648
    %v2961 = vmul.f32 %v2960, 1.442695
    %v2962 = vpow.pop %v2961
    %v2963 = vadd.f32 %v2962, 1.0
    %v2964 = vrcp.pop %v2963
    %v2965 = vmul.f32 1.0, %v2964
    %v2966 = vadd.f32 %v207, %v2887
    %v2967 = vxor.u32 %v2966, 2147483648
    %v2968 = vmul.f32 %v2967, 1.442695
    %v2969 = vpow.pop %v2968
    %v2970 = vadd.f32 %v2969, 1.0
    %v2971 = vrcp.pop %v2970
    %v2972 = vmul.f32 1.0, %v2971
    %v2973 = vmul.f32 %v2965, %v2956
    %v2974 = vadd.f32 %v314, %v2973
    %v2975 = vtanh.pop %v2974
    %v2976 = vsub.f32 %v2213, %v2975
    %v2977 = vmul.f32 %v2972, %v2976
    %v2978 = vadd.f32 %v2975, %v2977
    %2979 = vmatprep.subr.mxu0 %v524
    %2980 = vmatpush1.msra.mxu0 %v523
    %2981 = vmatprep.subr.mxu0 %v521
    %2982 = vmatpush1.msra.mxu0 %v520
    %2983 = vmatprep.subr.mxu0 %v518
    %2984 = vmatpush1.msra.mxu0 %v517
    %2985 = vmatprep.subr.mxu0 %v515
    %2986 = vmatpush1.msra.mxu0 %v514
    %2987 = vmatprep.subr.mxu0 %v512
    %2988 = vmatpush1.msra.mxu0 %v511
    %2989 = vmatprep.subr.mxu0 %v509
    %2990 = vmatpush1.msra.mxu0 %v508
    %2991 = vmatprep.subr.mxu0 %v506
    %2992 = vmatpush1.msra.mxu0 %v505
    %2993 = vmatprep.subr.mxu0 %v503
    %2994 = vmatpush1.msra.mxu0 %v502
    %2995 = vmatprep.subr.mxu0 %v500
    %2996 = vmatpush1.msra.mxu0 %v499
    %2997 = vmatprep.subr.mxu0 %v497
    %2998 = vmatpush1.msra.mxu0 %v496
    %2999 = vmatprep.subr.mxu0 %v494
    %3000 = vmatpush1.msra.mxu0 %v493
    %3001 = vmatprep.subr.mxu0 %v491
    %3002 = vmatpush1.msra.mxu0 %v490
    %3003 = vmatprep.subr.mxu0 %v488
    %3004 = vmatpush1.msra.mxu0 %v487
    %3005 = vmatprep.subr.mxu0 %v485
    %3006 = vmatpush1.msra.mxu0 %v484
    %3007 = vmatprep.subr.mxu0 %v482
    %3008 = vmatpush1.msra.mxu0 %v481
    %3009 = vmatprep.subr.mxu0 %v479
    %3010 = vmatpush1.msra.mxu0 %v478
    %3011 = vmatprep.subr.mxu0 0.0
    %3012 = vmatpush2.msra.mxu0 0.0
    %3013 = vmatprep.subr.mxu0 0.0
    %3014 = vmatpush2.msra.mxu0 0.0
    %3015 = vmatprep.subr.mxu0 0.0
    %3016 = vmatpush2.msra.mxu0 0.0
    %3017 = vmatprep.subr.mxu0 0.0
    %3018 = vmatpush2.msra.mxu0 0.0
    %3019 = vmatprep.subr.mxu0 0.0
    %3020 = vmatpush2.msra.mxu0 0.0
    %3021 = vmatprep.subr.mxu0 0.0
    %3022 = vmatpush2.msra.mxu0 0.0
    %3023 = vmatprep.subr.mxu0 0.0
    %3024 = vmatpush2.msra.mxu0 0.0
    %3025 = vmatprep.subr.mxu0 0.0
    %3026 = vmatpush2.msra.mxu0 0.0
    %3027 = vmatprep.subr.mxu0 0.0
    %3028 = vmatpush2.msra.mxu0 0.0
    %3029 = vmatprep.subr.mxu0 0.0
    %3030 = vmatpush2.msra.mxu0 0.0
    %3031 = vmatprep.subr.mxu0 0.0
    %3032 = vmatpush2.msra.mxu0 0.0
    %3033 = vmatprep.subr.mxu0 0.0
    %3034 = vmatpush2.msra.mxu0 0.0
    %3035 = vmatprep.subr.mxu0 0.0
    %3036 = vmatpush2.msra.mxu0 0.0
    %3037 = vmatprep.subr.mxu0 0.0
    %3038 = vmatpush2.msra.mxu0 0.0
    %3039 = vmatprep.subr.mxu0 0.0
    %3040 = vmatpush2.msra.mxu0 0.0
    %3041 = vmatprep.subr.mxu0 0.0
    %3042 = vmatpush2.msra.mxu0 0.0
    %3043 = vmatprep.mubr.f32.mxu0 0.0
    %3044 = vmatmul.mubr.f32.gmra.mxu0 %v2213
    %v3045 = vpop.f32.mrf.mxu0
    %v3046 = vadd.f32 %v581, %v3045
    %v3047 = vpop.f32.mrf.mxu0
    %v3048 = vadd.f32 %v585, %v3047
    %3049 = vdwg.mxu0
    %3050 = vmatprep.subr.mxu0 0.0
    %3051 = vmatpush1.msra.mxu0 %v525
    %3052 = vmatprep.subr.mxu0 0.0
    %3053 = vmatpush1.msra.mxu0 %v522
    %3054 = vmatprep.subr.mxu0 0.0
    %3055 = vmatpush1.msra.mxu0 %v519
    %3056 = vmatprep.subr.mxu0 0.0
    %3057 = vmatpush1.msra.mxu0 %v516
    %3058 = vmatprep.subr.mxu0 0.0
    %3059 = vmatpush1.msra.mxu0 %v513
    %3060 = vmatprep.subr.mxu0 0.0
    %3061 = vmatpush1.msra.mxu0 %v510
    %3062 = vmatprep.subr.mxu0 0.0
    %3063 = vmatpush1.msra.mxu0 %v507
    %3064 = vmatprep.subr.mxu0 0.0
    %3065 = vmatpush1.msra.mxu0 %v504
    %3066 = vmatprep.subr.mxu0 0.0
    %3067 = vmatpush1.msra.mxu0 %v501
    %3068 = vmatprep.subr.mxu0 0.0
    %3069 = vmatpush1.msra.mxu0 %v498
    %3070 = vmatprep.subr.mxu0 0.0
    %3071 = vmatpush1.msra.mxu0 %v495
    %3072 = vmatprep.subr.mxu0 0.0
    %3073 = vmatpush1.msra.mxu0 %v492
    %3074 = vmatprep.subr.mxu0 0.0
    %3075 = vmatpush1.msra.mxu0 %v489
    %3076 = vmatprep.subr.mxu0 0.0
    %3077 = vmatpush1.msra.mxu0 %v486
    %3078 = vmatprep.subr.mxu0 0.0
    %3079 = vmatpush1.msra.mxu0 %v483
    %3080 = vmatprep.subr.mxu0 0.0
    %3081 = vmatpush1.msra.mxu0 %v480
    %3082 = vmatprep.subr.mxu0 0.0
    %3083 = vmatpush2.msra.mxu0 0.0
    %3084 = vmatprep.subr.mxu0 0.0
    %3085 = vmatpush2.msra.mxu0 0.0
    %3086 = vmatprep.subr.mxu0 0.0
    %3087 = vmatpush2.msra.mxu0 0.0
    %3088 = vmatprep.subr.mxu0 0.0
    %3089 = vmatpush2.msra.mxu0 0.0
    %3090 = vmatprep.subr.mxu0 0.0
    %3091 = vmatpush2.msra.mxu0 0.0
    %3092 = vmatprep.subr.mxu0 0.0
    %3093 = vmatpush2.msra.mxu0 0.0
    %3094 = vmatprep.subr.mxu0 0.0
    %3095 = vmatpush2.msra.mxu0 0.0
    %3096 = vmatprep.subr.mxu0 0.0
    %3097 = vmatpush2.msra.mxu0 0.0
    %3098 = vmatprep.subr.mxu0 0.0
    %3099 = vmatpush2.msra.mxu0 0.0
    %3100 = vmatprep.subr.mxu0 0.0
    %3101 = vmatpush2.msra.mxu0 0.0
    %3102 = vmatprep.subr.mxu0 0.0
    %3103 = vmatpush2.msra.mxu0 0.0
    %3104 = vmatprep.subr.mxu0 0.0
    %3105 = vmatpush2.msra.mxu0 0.0
    %3106 = vmatprep.subr.mxu0 0.0
    %3107 = vmatpush2.msra.mxu0 0.0
    %3108 = vmatprep.subr.mxu0 0.0
    %3109 = vmatpush2.msra.mxu0 0.0
    %3110 = vmatprep.subr.mxu0 0.0
    %3111 = vmatpush2.msra.mxu0 0.0
    %3112 = vmatprep.subr.mxu0 0.0
    %3113 = vmatpush2.msra.mxu0 0.0
    %3114 = vmatprep.mubr.f32.mxu0 0.0
    %3115 = vmatmul.mubr.f32.gmra.mxu0 %v2213
    %v3116 = vpop.f32.mrf.mxu0
    %v3117 = vadd.f32 %v589, %v3116
    %v3118 = vpop.f32.mrf.mxu0
    %3119 = vdwg.mxu0
    %3120 = vmatprep.subr.mxu0 %v427
    %3121 = vmatpush1.msra.mxu0 %v426
    %3122 = vmatprep.subr.mxu0 %v424
    %3123 = vmatpush1.msra.mxu0 %v423
    %3124 = vmatprep.subr.mxu0 %v421
    %3125 = vmatpush1.msra.mxu0 %v420
    %3126 = vmatprep.subr.mxu0 %v418
    %3127 = vmatpush1.msra.mxu0 %v417
    %3128 = vmatprep.subr.mxu0 %v415
    %3129 = vmatpush1.msra.mxu0 %v414
    %3130 = vmatprep.subr.mxu0 %v412
    %3131 = vmatpush1.msra.mxu0 %v411
    %3132 = vmatprep.subr.mxu0 %v409
    %3133 = vmatpush1.msra.mxu0 %v408
    %3134 = vmatprep.subr.mxu0 %v406
    %3135 = vmatpush1.msra.mxu0 %v405
    %3136 = vmatprep.subr.mxu0 %v403
    %3137 = vmatpush1.msra.mxu0 %v402
    %3138 = vmatprep.subr.mxu0 %v400
    %3139 = vmatpush1.msra.mxu0 %v399
    %3140 = vmatprep.subr.mxu0 %v397
    %3141 = vmatpush1.msra.mxu0 %v396
    %3142 = vmatprep.subr.mxu0 %v394
    %3143 = vmatpush1.msra.mxu0 %v393
    %3144 = vmatprep.subr.mxu0 %v391
    %3145 = vmatpush1.msra.mxu0 %v390
    %3146 = vmatprep.subr.mxu0 %v388
    %3147 = vmatpush1.msra.mxu0 %v387
    %3148 = vmatprep.subr.mxu0 %v385
    %3149 = vmatpush1.msra.mxu0 %v384
    %3150 = vmatprep.subr.mxu0 %v382
    %3151 = vmatpush1.msra.mxu0 %v381
    %3152 = vmatprep.subr.mxu0 0.0
    %3153 = vmatpush2.msra.mxu0 0.0
    %3154 = vmatprep.subr.mxu0 0.0
    %3155 = vmatpush2.msra.mxu0 0.0
    %3156 = vmatprep.subr.mxu0 0.0
    %3157 = vmatpush2.msra.mxu0 0.0
    %3158 = vmatprep.subr.mxu0 0.0
    %3159 = vmatpush2.msra.mxu0 0.0
    %3160 = vmatprep.subr.mxu0 0.0
    %3161 = vmatpush2.msra.mxu0 0.0
    %3162 = vmatprep.subr.mxu0 0.0
    %3163 = vmatpush2.msra.mxu0 0.0
    %3164 = vmatprep.subr.mxu0 0.0
    %3165 = vmatpush2.msra.mxu0 0.0
    %3166 = vmatprep.subr.mxu0 0.0
    %3167 = vmatpush2.msra.mxu0 0.0
    %3168 = vmatprep.subr.mxu0 0.0
    %3169 = vmatpush2.msra.mxu0 0.0
    %3170 = vmatprep.subr.mxu0 0.0
    %3171 = vmatpush2.msra.mxu0 0.0
    %3172 = vmatprep.subr.mxu0 0.0
    %3173 = vmatpush2.msra.mxu0 0.0
    %3174 = vmatprep.subr.mxu0 0.0
    %3175 = vmatpush2.msra.mxu0 0.0
    %3176 = vmatprep.subr.mxu0 0.0
    %3177 = vmatpush2.msra.mxu0 0.0
    %3178 = vmatprep.subr.mxu0 0.0
    %3179 = vmatpush2.msra.mxu0 0.0
    %3180 = vmatprep.subr.mxu0 0.0
    %3181 = vmatpush2.msra.mxu0 0.0
    %3182 = vmatprep.subr.mxu0 0.0
    %3183 = vmatpush2.msra.mxu0 0.0
    %3184 = vmatprep.mubr.f32.mxu0 0.0
    %3185 = vmatmul.mubr.f32.gmra.mxu0 %v2515
    %v3186 = vpop.f32.mrf.mxu0
    %v3187 = vadd.f32 %v634, %v3186
    %v3188 = vpop.f32.mrf.mxu0
    %v3189 = vadd.f32 %v638, %v3188
    %3190 = vdwg.mxu0
    %3191 = vmatprep.subr.mxu0 0.0
    %3192 = vmatpush1.msra.mxu0 %v428
    %3193 = vmatprep.subr.mxu0 0.0
    %3194 = vmatpush1.msra.mxu0 %v425
    %3195 = vmatprep.subr.mxu0 0.0
    %3196 = vmatpush1.msra.mxu0 %v422
    %3197 = vmatprep.subr.mxu0 0.0
    %3198 = vmatpush1.msra.mxu0 %v419
    %3199 = vmatprep.subr.mxu0 0.0
    %3200 = vmatpush1.msra.mxu0 %v416
    %3201 = vmatprep.subr.mxu0 0.0
    %3202 = vmatpush1.msra.mxu0 %v413
    %3203 = vmatprep.subr.mxu0 0.0
    %3204 = vmatpush1.msra.mxu0 %v410
    %3205 = vmatprep.subr.mxu0 0.0
    %3206 = vmatpush1.msra.mxu0 %v407
    %3207 = vmatprep.subr.mxu0 0.0
    %3208 = vmatpush1.msra.mxu0 %v404
    %3209 = vmatprep.subr.mxu0 0.0
    %3210 = vmatpush1.msra.mxu0 %v401
    %3211 = vmatprep.subr.mxu0 0.0
    %3212 = vmatpush1.msra.mxu0 %v398
    %3213 = vmatprep.subr.mxu0 0.0
    %3214 = vmatpush1.msra.mxu0 %v395
    %3215 = vmatprep.subr.mxu0 0.0
    %3216 = vmatpush1.msra.mxu0 %v392
    %3217 = vmatprep.subr.mxu0 0.0
    %3218 = vmatpush1.msra.mxu0 %v389
    %3219 = vmatprep.subr.mxu0 0.0
    %3220 = vmatpush1.msra.mxu0 %v386
    %3221 = vmatprep.subr.mxu0 0.0
    %3222 = vmatpush1.msra.mxu0 %v383
    %3223 = vmatprep.subr.mxu0 0.0
    %3224 = vmatpush2.msra.mxu0 0.0
    %3225 = vmatprep.subr.mxu0 0.0
    %3226 = vmatpush2.msra.mxu0 0.0
    %3227 = vmatprep.subr.mxu0 0.0
    %3228 = vmatpush2.msra.mxu0 0.0
    %3229 = vmatprep.subr.mxu0 0.0
    %3230 = vmatpush2.msra.mxu0 0.0
    %3231 = vmatprep.subr.mxu0 0.0
    %3232 = vmatpush2.msra.mxu0 0.0
    %3233 = vmatprep.subr.mxu0 0.0
    %3234 = vmatpush2.msra.mxu0 0.0
    %3235 = vmatprep.subr.mxu0 0.0
    %3236 = vmatpush2.msra.mxu0 0.0
    %3237 = vmatprep.subr.mxu0 0.0
    %3238 = vmatpush2.msra.mxu0 0.0
    %3239 = vmatprep.subr.mxu0 0.0
    %3240 = vmatpush2.msra.mxu0 0.0
    %3241 = vmatprep.subr.mxu0 0.0
    %3242 = vmatpush2.msra.mxu0 0.0
    %3243 = vmatprep.subr.mxu0 0.0
    %3244 = vmatpush2.msra.mxu0 0.0
    %3245 = vmatprep.subr.mxu0 0.0
    %3246 = vmatpush2.msra.mxu0 0.0
    %3247 = vmatprep.subr.mxu0 0.0
    %3248 = vmatpush2.msra.mxu0 0.0
    %3249 = vmatprep.subr.mxu0 0.0
    %3250 = vmatpush2.msra.mxu0 0.0
    %3251 = vmatprep.subr.mxu0 0.0
    %3252 = vmatpush2.msra.mxu0 0.0
    %3253 = vmatprep.subr.mxu0 0.0
    %3254 = vmatpush2.msra.mxu0 0.0
    %3255 = vmatprep.mubr.f32.mxu0 0.0
    %3256 = vmatmul.mubr.f32.gmra.mxu0 %v2515
    %v3257 = vpop.f32.mrf.mxu0
    %v3258 = vadd.f32 %v642, %v3257
    %v3259 = vpop.f32.mrf.mxu0
    %3260 = vdwg.mxu0
    %v3261 = vadd.f32 %v3046, %v3187
    %v3262 = vxor.u32 %v3261, 2147483648
    %v3263 = vmul.f32 %v3262, 1.442695
    %v3264 = vpow.pop %v3263
    %v3265 = vadd.f32 %v3264, 1.0
    %v3266 = vrcp.pop %v3265
    %v3267 = vmul.f32 1.0, %v3266
    %v3268 = vadd.f32 %v3048, %v3189
    %v3269 = vxor.u32 %v3268, 2147483648
    %v3270 = vmul.f32 %v3269, 1.442695
    %v3271 = vpow.pop %v3270
    %v3272 = vadd.f32 %v3271, 1.0
    %v3273 = vrcp.pop %v3272
    %v3274 = vmul.f32 1.0, %v3273
    %v3275 = vmul.f32 %v3267, %v3258
    %v3276 = vadd.f32 %v3117, %v3275
    %v3277 = vtanh.pop %v3276
    %v3278 = vsub.f32 %v2515, %v3277
    %v3279 = vmul.f32 %v3274, %v3278
    %v3280 = vadd.f32 %v3277, %v3279
    %3281 = vmatprep.subr.mxu0 %v573
    %3282 = vmatpush1.msra.mxu0 %v572
    %3283 = vmatprep.subr.mxu0 %v570
    %3284 = vmatpush1.msra.mxu0 %v569
    %3285 = vmatprep.subr.mxu0 %v567
    %3286 = vmatpush1.msra.mxu0 %v566
    %3287 = vmatprep.subr.mxu0 %v564
    %3288 = vmatpush1.msra.mxu0 %v563
    %3289 = vmatprep.subr.mxu0 %v561
    %3290 = vmatpush1.msra.mxu0 %v560
    %3291 = vmatprep.subr.mxu0 %v558
    %3292 = vmatpush1.msra.mxu0 %v557
    %3293 = vmatprep.subr.mxu0 %v555
    %3294 = vmatpush1.msra.mxu0 %v554
    %3295 = vmatprep.subr.mxu0 %v552
    %3296 = vmatpush1.msra.mxu0 %v551
    %3297 = vmatprep.subr.mxu0 %v549
    %3298 = vmatpush1.msra.mxu0 %v548
    %3299 = vmatprep.subr.mxu0 %v546
    %3300 = vmatpush1.msra.mxu0 %v545
    %3301 = vmatprep.subr.mxu0 %v543
    %3302 = vmatpush1.msra.mxu0 %v542
    %3303 = vmatprep.subr.mxu0 %v540
    %3304 = vmatpush1.msra.mxu0 %v539
    %3305 = vmatprep.subr.mxu0 %v537
    %3306 = vmatpush1.msra.mxu0 %v536
    %3307 = vmatprep.subr.mxu0 %v534
    %3308 = vmatpush1.msra.mxu0 %v533
    %3309 = vmatprep.subr.mxu0 %v531
    %3310 = vmatpush1.msra.mxu0 %v530
    %3311 = vmatprep.subr.mxu0 %v528
    %3312 = vmatpush1.msra.mxu0 %v527
    %3313 = vmatprep.subr.mxu0 0.0
    %3314 = vmatpush2.msra.mxu0 0.0
    %3315 = vmatprep.subr.mxu0 0.0
    %3316 = vmatpush2.msra.mxu0 0.0
    %3317 = vmatprep.subr.mxu0 0.0
    %3318 = vmatpush2.msra.mxu0 0.0
    %3319 = vmatprep.subr.mxu0 0.0
    %3320 = vmatpush2.msra.mxu0 0.0
    %3321 = vmatprep.subr.mxu0 0.0
    %3322 = vmatpush2.msra.mxu0 0.0
    %3323 = vmatprep.subr.mxu0 0.0
    %3324 = vmatpush2.msra.mxu0 0.0
    %3325 = vmatprep.subr.mxu0 0.0
    %3326 = vmatpush2.msra.mxu0 0.0
    %3327 = vmatprep.subr.mxu0 0.0
    %3328 = vmatpush2.msra.mxu0 0.0
    %3329 = vmatprep.subr.mxu0 0.0
    %3330 = vmatpush2.msra.mxu0 0.0
    %3331 = vmatprep.subr.mxu0 0.0
    %3332 = vmatpush2.msra.mxu0 0.0
    %3333 = vmatprep.subr.mxu0 0.0
    %3334 = vmatpush2.msra.mxu0 0.0
    %3335 = vmatprep.subr.mxu0 0.0
    %3336 = vmatpush2.msra.mxu0 0.0
    %3337 = vmatprep.subr.mxu0 0.0
    %3338 = vmatpush2.msra.mxu0 0.0
    %3339 = vmatprep.subr.mxu0 0.0
    %3340 = vmatpush2.msra.mxu0 0.0
    %3341 = vmatprep.subr.mxu0 0.0
    %3342 = vmatpush2.msra.mxu0 0.0
    %3343 = vmatprep.subr.mxu0 0.0
    %3344 = vmatpush2.msra.mxu0 0.0
    %3345 = vmatprep.mubr.f32.mxu0 0.0
    %3346 = vmatmul.mubr.f32.gmra.mxu0 %v2515
    %v3347 = vpop.f32.mrf.mxu0
    %v3348 = vadd.f32 %v599, %v3347
    %v3349 = vpop.f32.mrf.mxu0
    %v3350 = vadd.f32 %v603, %v3349
    %3351 = vdwg.mxu0
    %3352 = vmatprep.subr.mxu0 0.0
    %3353 = vmatpush1.msra.mxu0 %v574
    %3354 = vmatprep.subr.mxu0 0.0
    %3355 = vmatpush1.msra.mxu0 %v571
    %3356 = vmatprep.subr.mxu0 0.0
    %3357 = vmatpush1.msra.mxu0 %v568
    %3358 = vmatprep.subr.mxu0 0.0
    %3359 = vmatpush1.msra.mxu0 %v565
    %3360 = vmatprep.subr.mxu0 0.0
    %3361 = vmatpush1.msra.mxu0 %v562
    %3362 = vmatprep.subr.mxu0 0.0
    %3363 = vmatpush1.msra.mxu0 %v559
    %3364 = vmatprep.subr.mxu0 0.0
    %3365 = vmatpush1.msra.mxu0 %v556
    %3366 = vmatprep.subr.mxu0 0.0
    %3367 = vmatpush1.msra.mxu0 %v553
    %3368 = vmatprep.subr.mxu0 0.0
    %3369 = vmatpush1.msra.mxu0 %v550
    %3370 = vmatprep.subr.mxu0 0.0
    %3371 = vmatpush1.msra.mxu0 %v547
    %3372 = vmatprep.subr.mxu0 0.0
    %3373 = vmatpush1.msra.mxu0 %v544
    %3374 = vmatprep.subr.mxu0 0.0
    %3375 = vmatpush1.msra.mxu0 %v541
    %3376 = vmatprep.subr.mxu0 0.0
    %3377 = vmatpush1.msra.mxu0 %v538
    %3378 = vmatprep.subr.mxu0 0.0
    %3379 = vmatpush1.msra.mxu0 %v535
    %3380 = vmatprep.subr.mxu0 0.0
    %3381 = vmatpush1.msra.mxu0 %v532
    %3382 = vmatprep.subr.mxu0 0.0
    %3383 = vmatpush1.msra.mxu0 %v529
    %3384 = vmatprep.subr.mxu0 0.0
    %3385 = vmatpush2.msra.mxu0 0.0
    %3386 = vmatprep.subr.mxu0 0.0
    %3387 = vmatpush2.msra.mxu0 0.0
    %3388 = vmatprep.subr.mxu0 0.0
    %3389 = vmatpush2.msra.mxu0 0.0
    %3390 = vmatprep.subr.mxu0 0.0
    %3391 = vmatpush2.msra.mxu0 0.0
    %3392 = vmatprep.subr.mxu0 0.0
    %3393 = vmatpush2.msra.mxu0 0.0
    %3394 = vmatprep.subr.mxu0 0.0
    %3395 = vmatpush2.msra.mxu0 0.0
    %3396 = vmatprep.subr.mxu0 0.0
    %3397 = vmatpush2.msra.mxu0 0.0
    %3398 = vmatprep.subr.mxu0 0.0
    %3399 = vmatpush2.msra.mxu0 0.0
    %3400 = vmatprep.subr.mxu0 0.0
    %3401 = vmatpush2.msra.mxu0 0.0
    %3402 = vmatprep.subr.mxu0 0.0
    %3403 = vmatpush2.msra.mxu0 0.0
    %3404 = vmatprep.subr.mxu0 0.0
    %3405 = vmatpush2.msra.mxu0 0.0
    %3406 = vmatprep.subr.mxu0 0.0
    %3407 = vmatpush2.msra.mxu0 0.0
    %3408 = vmatprep.subr.mxu0 0.0
    %3409 = vmatpush2.msra.mxu0 0.0
    %3410 = vmatprep.subr.mxu0 0.0
    %3411 = vmatpush2.msra.mxu0 0.0
    %3412 = vmatprep.subr.mxu0 0.0
    %3413 = vmatpush2.msra.mxu0 0.0
    %3414 = vmatprep.subr.mxu0 0.0
    %3415 = vmatpush2.msra.mxu0 0.0
    %3416 = vmatprep.mubr.f32.mxu0 0.0
    %3417 = vmatmul.mubr.f32.gmra.mxu0 %v2515
    %v3418 = vpop.f32.mrf.mxu0
    %v3419 = vadd.f32 %v607, %v3418
    %v3420 = vpop.f32.mrf.mxu0
    %3421 = vdwg.mxu0
    %3422 = vmatprep.subr.mxu0 %v476
    %3423 = vmatpush1.msra.mxu0 %v475
    %3424 = vmatprep.subr.mxu0 %v473
    %3425 = vmatpush1.msra.mxu0 %v472
    %3426 = vmatprep.subr.mxu0 %v470
    %3427 = vmatpush1.msra.mxu0 %v469
    %3428 = vmatprep.subr.mxu0 %v467
    %3429 = vmatpush1.msra.mxu0 %v466
    %3430 = vmatprep.subr.mxu0 %v464
    %3431 = vmatpush1.msra.mxu0 %v463
    %3432 = vmatprep.subr.mxu0 %v461
    %3433 = vmatpush1.msra.mxu0 %v460
    %3434 = vmatprep.subr.mxu0 %v458
    %3435 = vmatpush1.msra.mxu0 %v457
    %3436 = vmatprep.subr.mxu0 %v455
    %3437 = vmatpush1.msra.mxu0 %v454
    %3438 = vmatprep.subr.mxu0 %v452
    %3439 = vmatpush1.msra.mxu0 %v451
    %3440 = vmatprep.subr.mxu0 %v449
    %3441 = vmatpush1.msra.mxu0 %v448
    %3442 = vmatprep.subr.mxu0 %v446
    %3443 = vmatpush1.msra.mxu0 %v445
    %3444 = vmatprep.subr.mxu0 %v443
    %3445 = vmatpush1.msra.mxu0 %v442
    %3446 = vmatprep.subr.mxu0 %v440
    %3447 = vmatpush1.msra.mxu0 %v439
    %3448 = vmatprep.subr.mxu0 %v437
    %3449 = vmatpush1.msra.mxu0 %v436
    %3450 = vmatprep.subr.mxu0 %v434
    %3451 = vmatpush1.msra.mxu0 %v433
    %3452 = vmatprep.subr.mxu0 %v431
    %3453 = vmatpush1.msra.mxu0 %v430
    %3454 = vmatprep.subr.mxu0 0.0
    %3455 = vmatpush2.msra.mxu0 0.0
    %3456 = vmatprep.subr.mxu0 0.0
    %3457 = vmatpush2.msra.mxu0 0.0
    %3458 = vmatprep.subr.mxu0 0.0
    %3459 = vmatpush2.msra.mxu0 0.0
    %3460 = vmatprep.subr.mxu0 0.0
    %3461 = vmatpush2.msra.mxu0 0.0
    %3462 = vmatprep.subr.mxu0 0.0
    %3463 = vmatpush2.msra.mxu0 0.0
    %3464 = vmatprep.subr.mxu0 0.0
    %3465 = vmatpush2.msra.mxu0 0.0
    %3466 = vmatprep.subr.mxu0 0.0
    %3467 = vmatpush2.msra.mxu0 0.0
    %3468 = vmatprep.subr.mxu0 0.0
    %3469 = vmatpush2.msra.mxu0 0.0
    %3470 = vmatprep.subr.mxu0 0.0
    %3471 = vmatpush2.msra.mxu0 0.0
    %3472 = vmatprep.subr.mxu0 0.0
    %3473 = vmatpush2.msra.mxu0 0.0
    %3474 = vmatprep.subr.mxu0 0.0
    %3475 = vmatpush2.msra.mxu0 0.0
    %3476 = vmatprep.subr.mxu0 0.0
    %3477 = vmatpush2.msra.mxu0 0.0
    %3478 = vmatprep.subr.mxu0 0.0
    %3479 = vmatpush2.msra.mxu0 0.0
    %3480 = vmatprep.subr.mxu0 0.0
    %3481 = vmatpush2.msra.mxu0 0.0
    %3482 = vmatprep.subr.mxu0 0.0
    %3483 = vmatpush2.msra.mxu0 0.0
    %3484 = vmatprep.subr.mxu0 0.0
    %3485 = vmatpush2.msra.mxu0 0.0
    %3486 = vmatprep.mubr.f32.mxu0 0.0
    %3487 = vmatmul.mubr.f32.gmra.mxu0 %v2817
    %v3488 = vpop.f32.mrf.mxu0
    %v3489 = vadd.f32 %v652, %v3488
    %v3490 = vpop.f32.mrf.mxu0
    %v3491 = vadd.f32 %v656, %v3490
    %3492 = vdwg.mxu0
    %3493 = vmatprep.subr.mxu0 0.0
    %3494 = vmatpush1.msra.mxu0 %v477
    %3495 = vmatprep.subr.mxu0 0.0
    %3496 = vmatpush1.msra.mxu0 %v474
    %3497 = vmatprep.subr.mxu0 0.0
    %3498 = vmatpush1.msra.mxu0 %v471
    %3499 = vmatprep.subr.mxu0 0.0
    %3500 = vmatpush1.msra.mxu0 %v468
    %3501 = vmatprep.subr.mxu0 0.0
    %3502 = vmatpush1.msra.mxu0 %v465
    %3503 = vmatprep.subr.mxu0 0.0
    %3504 = vmatpush1.msra.mxu0 %v462
    %3505 = vmatprep.subr.mxu0 0.0
    %3506 = vmatpush1.msra.mxu0 %v459
    %3507 = vmatprep.subr.mxu0 0.0
    %3508 = vmatpush1.msra.mxu0 %v456
    %3509 = vmatprep.subr.mxu0 0.0
    %3510 = vmatpush1.msra.mxu0 %v453
    %3511 = vmatprep.subr.mxu0 0.0
    %3512 = vmatpush1.msra.mxu0 %v450
    %3513 = vmatprep.subr.mxu0 0.0
    %3514 = vmatpush1.msra.mxu0 %v447
    %3515 = vmatprep.subr.mxu0 0.0
    %3516 = vmatpush1.msra.mxu0 %v444
    %3517 = vmatprep.subr.mxu0 0.0
    %3518 = vmatpush1.msra.mxu0 %v441
    %3519 = vmatprep.subr.mxu0 0.0
    %3520 = vmatpush1.msra.mxu0 %v438
    %3521 = vmatprep.subr.mxu0 0.0
    %3522 = vmatpush1.msra.mxu0 %v435
    %3523 = vmatprep.subr.mxu0 0.0
    %3524 = vmatpush1.msra.mxu0 %v432
    %3525 = vmatprep.subr.mxu0 0.0
    %3526 = vmatpush2.msra.mxu0 0.0
    %3527 = vmatprep.subr.mxu0 0.0
    %3528 = vmatpush2.msra.mxu0 0.0
    %3529 = vmatprep.subr.mxu0 0.0
    %3530 = vmatpush2.msra.mxu0 0.0
    %3531 = vmatprep.subr.mxu0 0.0
    %3532 = vmatpush2.msra.mxu0 0.0
    %3533 = vmatprep.subr.mxu0 0.0
    %3534 = vmatpush2.msra.mxu0 0.0
    %3535 = vmatprep.subr.mxu0 0.0
    %3536 = vmatpush2.msra.mxu0 0.0
    %3537 = vmatprep.subr.mxu0 0.0
    %3538 = vmatpush2.msra.mxu0 0.0
    %3539 = vmatprep.subr.mxu0 0.0
    %3540 = vmatpush2.msra.mxu0 0.0
    %3541 = vmatprep.subr.mxu0 0.0
    %3542 = vmatpush2.msra.mxu0 0.0
    %3543 = vmatprep.subr.mxu0 0.0
    %3544 = vmatpush2.msra.mxu0 0.0
    %3545 = vmatprep.subr.mxu0 0.0
    %3546 = vmatpush2.msra.mxu0 0.0
    %3547 = vmatprep.subr.mxu0 0.0
    %3548 = vmatpush2.msra.mxu0 0.0
    %3549 = vmatprep.subr.mxu0 0.0
    %3550 = vmatpush2.msra.mxu0 0.0
    %3551 = vmatprep.subr.mxu0 0.0
    %3552 = vmatpush2.msra.mxu0 0.0
    %3553 = vmatprep.subr.mxu0 0.0
    %3554 = vmatpush2.msra.mxu0 0.0
    %3555 = vmatprep.subr.mxu0 0.0
    %3556 = vmatpush2.msra.mxu0 0.0
    %3557 = vmatprep.mubr.f32.mxu0 0.0
    %3558 = vmatmul.mubr.f32.gmra.mxu0 %v2817
    %v3559 = vpop.f32.mrf.mxu0
    %v3560 = vadd.f32 %v660, %v3559
    %v3561 = vpop.f32.mrf.mxu0
    %3562 = vdwg.mxu0
    %v3563 = vadd.f32 %v3348, %v3489
    %v3564 = vxor.u32 %v3563, 2147483648
    %v3565 = vmul.f32 %v3564, 1.442695
    %v3566 = vpow.pop %v3565
    %v3567 = vadd.f32 %v3566, 1.0
    %v3568 = vrcp.pop %v3567
    %v3569 = vmul.f32 1.0, %v3568
    %v3570 = vadd.f32 %v3350, %v3491
    %v3571 = vxor.u32 %v3570, 2147483648
    %v3572 = vmul.f32 %v3571, 1.442695
    %v3573 = vpow.pop %v3572
    %v3574 = vadd.f32 %v3573, 1.0
    %v3575 = vrcp.pop %v3574
    %v3576 = vmul.f32 1.0, %v3575
    %v3577 = vmul.f32 %v3569, %v3560
    %v3578 = vadd.f32 %v3419, %v3577
    %v3579 = vtanh.pop %v3578
    %v3580 = vsub.f32 %v2817, %v3579
    %v3581 = vmul.f32 %v3576, %v3580
    %v3582 = vadd.f32 %v3579, %v3581
    %3583 = vmatprep.subr.mxu0 %v378
    %3584 = vmatpush1.msra.mxu0 %v377
    %3585 = vmatprep.subr.mxu0 %v375
    %3586 = vmatpush1.msra.mxu0 %v374
    %3587 = vmatprep.subr.mxu0 %v372
    %3588 = vmatpush1.msra.mxu0 %v371
    %3589 = vmatprep.subr.mxu0 %v369
    %3590 = vmatpush1.msra.mxu0 %v368
    %3591 = vmatprep.subr.mxu0 %v366
    %3592 = vmatpush1.msra.mxu0 %v365
    %3593 = vmatprep.subr.mxu0 %v363
    %3594 = vmatpush1.msra.mxu0 %v362
    %3595 = vmatprep.subr.mxu0 %v360
    %3596 = vmatpush1.msra.mxu0 %v359
    %3597 = vmatprep.subr.mxu0 %v357
    %3598 = vmatpush1.msra.mxu0 %v356
    %3599 = vmatprep.subr.mxu0 %v354
    %3600 = vmatpush1.msra.mxu0 %v353
    %3601 = vmatprep.subr.mxu0 %v351
    %3602 = vmatpush1.msra.mxu0 %v350
    %3603 = vmatprep.subr.mxu0 %v348
    %3604 = vmatpush1.msra.mxu0 %v347
    %3605 = vmatprep.subr.mxu0 %v345
    %3606 = vmatpush1.msra.mxu0 %v344
    %3607 = vmatprep.subr.mxu0 %v342
    %3608 = vmatpush1.msra.mxu0 %v341
    %3609 = vmatprep.subr.mxu0 %v339
    %3610 = vmatpush1.msra.mxu0 %v338
    %3611 = vmatprep.subr.mxu0 %v336
    %3612 = vmatpush1.msra.mxu0 %v335
    %3613 = vmatprep.subr.mxu0 %v333
    %3614 = vmatpush1.msra.mxu0 %v332
    %3615 = vmatprep.subr.mxu0 0.0
    %3616 = vmatpush2.msra.mxu0 0.0
    %3617 = vmatprep.subr.mxu0 0.0
    %3618 = vmatpush2.msra.mxu0 0.0
    %3619 = vmatprep.subr.mxu0 0.0
    %3620 = vmatpush2.msra.mxu0 0.0
    %3621 = vmatprep.subr.mxu0 0.0
    %3622 = vmatpush2.msra.mxu0 0.0
    %3623 = vmatprep.subr.mxu0 0.0
    %3624 = vmatpush2.msra.mxu0 0.0
    %3625 = vmatprep.subr.mxu0 0.0
    %3626 = vmatpush2.msra.mxu0 0.0
    %3627 = vmatprep.subr.mxu0 0.0
    %3628 = vmatpush2.msra.mxu0 0.0
    %3629 = vmatprep.subr.mxu0 0.0
    %3630 = vmatpush2.msra.mxu0 0.0
    %3631 = vmatprep.subr.mxu0 0.0
    %3632 = vmatpush2.msra.mxu0 0.0
    %3633 = vmatprep.subr.mxu0 0.0
    %3634 = vmatpush2.msra.mxu0 0.0
    %3635 = vmatprep.subr.mxu0 0.0
    %3636 = vmatpush2.msra.mxu0 0.0
    %3637 = vmatprep.subr.mxu0 0.0
    %3638 = vmatpush2.msra.mxu0 0.0
    %3639 = vmatprep.subr.mxu0 0.0
    %3640 = vmatpush2.msra.mxu0 0.0
    %3641 = vmatprep.subr.mxu0 0.0
    %3642 = vmatpush2.msra.mxu0 0.0
    %3643 = vmatprep.subr.mxu0 0.0
    %3644 = vmatpush2.msra.mxu0 0.0
    %3645 = vmatprep.subr.mxu0 0.0
    %3646 = vmatpush2.msra.mxu0 0.0
    %3647 = vmatprep.mubr.f32.mxu0 0.0
    %3648 = vmatmul.mubr.f32.gmra.mxu0 %v2978
    %v3649 = vpop.f32.mrf.mxu0
    %v3650 = vadd.f32 %v616, %v3649
    %v3651 = vpop.f32.mrf.mxu0
    %v3652 = vadd.f32 %v620, %v3651
    %3653 = vdwg.mxu0
    %3654 = vmatprep.subr.mxu0 0.0
    %3655 = vmatpush1.msra.mxu0 %v379
    %3656 = vmatprep.subr.mxu0 0.0
    %3657 = vmatpush1.msra.mxu0 %v376
    %3658 = vmatprep.subr.mxu0 0.0
    %3659 = vmatpush1.msra.mxu0 %v373
    %3660 = vmatprep.subr.mxu0 0.0
    %3661 = vmatpush1.msra.mxu0 %v370
    %3662 = vmatprep.subr.mxu0 0.0
    %3663 = vmatpush1.msra.mxu0 %v367
    %3664 = vmatprep.subr.mxu0 0.0
    %3665 = vmatpush1.msra.mxu0 %v364
    %3666 = vmatprep.subr.mxu0 0.0
    %3667 = vmatpush1.msra.mxu0 %v361
    %3668 = vmatprep.subr.mxu0 0.0
    %3669 = vmatpush1.msra.mxu0 %v358
    %3670 = vmatprep.subr.mxu0 0.0
    %3671 = vmatpush1.msra.mxu0 %v355
    %3672 = vmatprep.subr.mxu0 0.0
    %3673 = vmatpush1.msra.mxu0 %v352
    %3674 = vmatprep.subr.mxu0 0.0
    %3675 = vmatpush1.msra.mxu0 %v349
    %3676 = vmatprep.subr.mxu0 0.0
    %3677 = vmatpush1.msra.mxu0 %v346
    %3678 = vmatprep.subr.mxu0 0.0
    %3679 = vmatpush1.msra.mxu0 %v343
    %3680 = vmatprep.subr.mxu0 0.0
    %3681 = vmatpush1.msra.mxu0 %v340
    %3682 = vmatprep.subr.mxu0 0.0
    %3683 = vmatpush1.msra.mxu0 %v337
    %3684 = vmatprep.subr.mxu0 0.0
    %3685 = vmatpush1.msra.mxu0 %v334
    %3686 = vmatprep.subr.mxu0 0.0
    %3687 = vmatpush2.msra.mxu0 0.0
    %3688 = vmatprep.subr.mxu0 0.0
    %3689 = vmatpush2.msra.mxu0 0.0
    %3690 = vmatprep.subr.mxu0 0.0
    %3691 = vmatpush2.msra.mxu0 0.0
    %3692 = vmatprep.subr.mxu0 0.0
    %3693 = vmatpush2.msra.mxu0 0.0
    %3694 = vmatprep.subr.mxu0 0.0
    %3695 = vmatpush2.msra.mxu0 0.0
    %3696 = vmatprep.subr.mxu0 0.0
    %3697 = vmatpush2.msra.mxu0 0.0
    %3698 = vmatprep.subr.mxu0 0.0
    %3699 = vmatpush2.msra.mxu0 0.0
    %3700 = vmatprep.subr.mxu0 0.0
    %3701 = vmatpush2.msra.mxu0 0.0
    %3702 = vmatprep.subr.mxu0 0.0
    %3703 = vmatpush2.msra.mxu0 0.0
    %3704 = vmatprep.subr.mxu0 0.0
    %3705 = vmatpush2.msra.mxu0 0.0
    %3706 = vmatprep.subr.mxu0 0.0
    %3707 = vmatpush2.msra.mxu0 0.0
    %3708 = vmatprep.subr.mxu0 0.0
    %3709 = vmatpush2.msra.mxu0 0.0
    %3710 = vmatprep.subr.mxu0 0.0
    %3711 = vmatpush2.msra.mxu0 0.0
    %3712 = vmatprep.subr.mxu0 0.0
    %3713 = vmatpush2.msra.mxu0 0.0
    %3714 = vmatprep.subr.mxu0 0.0
    %3715 = vmatpush2.msra.mxu0 0.0
    %3716 = vmatprep.subr.mxu0 0.0
    %3717 = vmatpush2.msra.mxu0 0.0
    %3718 = vmatprep.mubr.f32.mxu0 0.0
    %3719 = vmatmul.mubr.f32.gmra.mxu0 %v2978
    %v3720 = vpop.f32.mrf.mxu0
    %v3721 = vadd.f32 %v624, %v3720
    %v3722 = vpop.f32.mrf.mxu0
    %3723 = vdwg.mxu0
    %v3724 = vadd.f32 %v211, %v3650
    %v3725 = vxor.u32 %v3724, 2147483648
    %v3726 = vmul.f32 %v3725, 1.442695
    %v3727 = vpow.pop %v3726
    %v3728 = vadd.f32 %v3727, 1.0
    %v3729 = vrcp.pop %v3728
    %v3730 = vmul.f32 1.0, %v3729
    %v3731 = vadd.f32 %v213, %v3652
    %v3732 = vxor.u32 %v3731, 2147483648
    %v3733 = vmul.f32 %v3732, 1.442695
    %v3734 = vpow.pop %v3733
    %v3735 = vadd.f32 %v3734, 1.0
    %v3736 = vrcp.pop %v3735
    %v3737 = vmul.f32 1.0, %v3736
    %v3738 = vmul.f32 %v3730, %v3721
    %v3739 = vadd.f32 %v319, %v3738
    %v3740 = vtanh.pop %v3739
    %v3741 = vsub.f32 %v2978, %v3740
    %v3742 = vmul.f32 %v3737, %v3741
    %v3743 = vadd.f32 %v3740, %v3742
    %3744 = vmatprep.subr.mxu0 %v524
    %3745 = vmatpush1.msra.mxu0 %v523
    %3746 = vmatprep.subr.mxu0 %v521
    %3747 = vmatpush1.msra.mxu0 %v520
    %3748 = vmatprep.subr.mxu0 %v518
    %3749 = vmatpush1.msra.mxu0 %v517
    %3750 = vmatprep.subr.mxu0 %v515
    %3751 = vmatpush1.msra.mxu0 %v514
    %3752 = vmatprep.subr.mxu0 %v512
    %3753 = vmatpush1.msra.mxu0 %v511
    %3754 = vmatprep.subr.mxu0 %v509
    %3755 = vmatpush1.msra.mxu0 %v508
    %3756 = vmatprep.subr.mxu0 %v506
    %3757 = vmatpush1.msra.mxu0 %v505
    %3758 = vmatprep.subr.mxu0 %v503
    %3759 = vmatpush1.msra.mxu0 %v502
    %3760 = vmatprep.subr.mxu0 %v500
    %3761 = vmatpush1.msra.mxu0 %v499
    %3762 = vmatprep.subr.mxu0 %v497
    %3763 = vmatpush1.msra.mxu0 %v496
    %3764 = vmatprep.subr.mxu0 %v494
    %3765 = vmatpush1.msra.mxu0 %v493
    %3766 = vmatprep.subr.mxu0 %v491
    %3767 = vmatpush1.msra.mxu0 %v490
    %3768 = vmatprep.subr.mxu0 %v488
    %3769 = vmatpush1.msra.mxu0 %v487
    %3770 = vmatprep.subr.mxu0 %v485
    %3771 = vmatpush1.msra.mxu0 %v484
    %3772 = vmatprep.subr.mxu0 %v482
    %3773 = vmatpush1.msra.mxu0 %v481
    %3774 = vmatprep.subr.mxu0 %v479
    %3775 = vmatpush1.msra.mxu0 %v478
    %3776 = vmatprep.subr.mxu0 0.0
    %3777 = vmatpush2.msra.mxu0 0.0
    %3778 = vmatprep.subr.mxu0 0.0
    %3779 = vmatpush2.msra.mxu0 0.0
    %3780 = vmatprep.subr.mxu0 0.0
    %3781 = vmatpush2.msra.mxu0 0.0
    %3782 = vmatprep.subr.mxu0 0.0
    %3783 = vmatpush2.msra.mxu0 0.0
    %3784 = vmatprep.subr.mxu0 0.0
    %3785 = vmatpush2.msra.mxu0 0.0
    %3786 = vmatprep.subr.mxu0 0.0
    %3787 = vmatpush2.msra.mxu0 0.0
    %3788 = vmatprep.subr.mxu0 0.0
    %3789 = vmatpush2.msra.mxu0 0.0
    %3790 = vmatprep.subr.mxu0 0.0
    %3791 = vmatpush2.msra.mxu0 0.0
    %3792 = vmatprep.subr.mxu0 0.0
    %3793 = vmatpush2.msra.mxu0 0.0
    %3794 = vmatprep.subr.mxu0 0.0
    %3795 = vmatpush2.msra.mxu0 0.0
    %3796 = vmatprep.subr.mxu0 0.0
    %3797 = vmatpush2.msra.mxu0 0.0
    %3798 = vmatprep.subr.mxu0 0.0
    %3799 = vmatpush2.msra.mxu0 0.0
    %3800 = vmatprep.subr.mxu0 0.0
    %3801 = vmatpush2.msra.mxu0 0.0
    %3802 = vmatprep.subr.mxu0 0.0
    %3803 = vmatpush2.msra.mxu0 0.0
    %3804 = vmatprep.subr.mxu0 0.0
    %3805 = vmatpush2.msra.mxu0 0.0
    %3806 = vmatprep.subr.mxu0 0.0
    %3807 = vmatpush2.msra.mxu0 0.0
    %3808 = vmatprep.mubr.f32.mxu0 0.0
    %3809 = vmatmul.mubr.f32.gmra.mxu0 %v2978
    %v3810 = vpop.f32.mrf.mxu0
    %v3811 = vadd.f32 %v581, %v3810
    %v3812 = vpop.f32.mrf.mxu0
    %v3813 = vadd.f32 %v585, %v3812
    %3814 = vdwg.mxu0
    %3815 = vmatprep.subr.mxu0 0.0
    %3816 = vmatpush1.msra.mxu0 %v525
    %3817 = vmatprep.subr.mxu0 0.0
    %3818 = vmatpush1.msra.mxu0 %v522
    %3819 = vmatprep.subr.mxu0 0.0
    %3820 = vmatpush1.msra.mxu0 %v519
    %3821 = vmatprep.subr.mxu0 0.0
    %3822 = vmatpush1.msra.mxu0 %v516
    %3823 = vmatprep.subr.mxu0 0.0
    %3824 = vmatpush1.msra.mxu0 %v513
    %3825 = vmatprep.subr.mxu0 0.0
    %3826 = vmatpush1.msra.mxu0 %v510
    %3827 = vmatprep.subr.mxu0 0.0
    %3828 = vmatpush1.msra.mxu0 %v507
    %3829 = vmatprep.subr.mxu0 0.0
    %3830 = vmatpush1.msra.mxu0 %v504
    %3831 = vmatprep.subr.mxu0 0.0
    %3832 = vmatpush1.msra.mxu0 %v501
    %3833 = vmatprep.subr.mxu0 0.0
    %3834 = vmatpush1.msra.mxu0 %v498
    %3835 = vmatprep.subr.mxu0 0.0
    %3836 = vmatpush1.msra.mxu0 %v495
    %3837 = vmatprep.subr.mxu0 0.0
    %3838 = vmatpush1.msra.mxu0 %v492
    %3839 = vmatprep.subr.mxu0 0.0
    %3840 = vmatpush1.msra.mxu0 %v489
    %3841 = vmatprep.subr.mxu0 0.0
    %3842 = vmatpush1.msra.mxu0 %v486
    %3843 = vmatprep.subr.mxu0 0.0
    %3844 = vmatpush1.msra.mxu0 %v483
    %3845 = vmatprep.subr.mxu0 0.0
    %3846 = vmatpush1.msra.mxu0 %v480
    %3847 = vmatprep.subr.mxu0 0.0
    %3848 = vmatpush2.msra.mxu0 0.0
    %3849 = vmatprep.subr.mxu0 0.0
    %3850 = vmatpush2.msra.mxu0 0.0
    %3851 = vmatprep.subr.mxu0 0.0
    %3852 = vmatpush2.msra.mxu0 0.0
    %3853 = vmatprep.subr.mxu0 0.0
    %3854 = vmatpush2.msra.mxu0 0.0
    %3855 = vmatprep.subr.mxu0 0.0
    %3856 = vmatpush2.msra.mxu0 0.0
    %3857 = vmatprep.subr.mxu0 0.0
    %3858 = vmatpush2.msra.mxu0 0.0
    %3859 = vmatprep.subr.mxu0 0.0
    %3860 = vmatpush2.msra.mxu0 0.0
    %3861 = vmatprep.subr.mxu0 0.0
    %3862 = vmatpush2.msra.mxu0 0.0
    %3863 = vmatprep.subr.mxu0 0.0
    %3864 = vmatpush2.msra.mxu0 0.0
    %3865 = vmatprep.subr.mxu0 0.0
    %3866 = vmatpush2.msra.mxu0 0.0
    %3867 = vmatprep.subr.mxu0 0.0
    %3868 = vmatpush2.msra.mxu0 0.0
    %3869 = vmatprep.subr.mxu0 0.0
    %3870 = vmatpush2.msra.mxu0 0.0
    %3871 = vmatprep.subr.mxu0 0.0
    %3872 = vmatpush2.msra.mxu0 0.0
    %3873 = vmatprep.subr.mxu0 0.0
    %3874 = vmatpush2.msra.mxu0 0.0
    %3875 = vmatprep.subr.mxu0 0.0
    %3876 = vmatpush2.msra.mxu0 0.0
    %3877 = vmatprep.subr.mxu0 0.0
    %3878 = vmatpush2.msra.mxu0 0.0
    %3879 = vmatprep.mubr.f32.mxu0 0.0
    %3880 = vmatmul.mubr.f32.gmra.mxu0 %v2978
    %v3881 = vpop.f32.mrf.mxu0
    %v3882 = vadd.f32 %v589, %v3881
    %v3883 = vpop.f32.mrf.mxu0
    %3884 = vdwg.mxu0
    %3885 = vmatprep.subr.mxu0 %v427
    %3886 = vmatpush1.msra.mxu0 %v426
    %3887 = vmatprep.subr.mxu0 %v424
    %3888 = vmatpush1.msra.mxu0 %v423
    %3889 = vmatprep.subr.mxu0 %v421
    %3890 = vmatpush1.msra.mxu0 %v420
    %3891 = vmatprep.subr.mxu0 %v418
    %3892 = vmatpush1.msra.mxu0 %v417
    %3893 = vmatprep.subr.mxu0 %v415
    %3894 = vmatpush1.msra.mxu0 %v414
    %3895 = vmatprep.subr.mxu0 %v412
    %3896 = vmatpush1.msra.mxu0 %v411
    %3897 = vmatprep.subr.mxu0 %v409
    %3898 = vmatpush1.msra.mxu0 %v408
    %3899 = vmatprep.subr.mxu0 %v406
    %3900 = vmatpush1.msra.mxu0 %v405
    %3901 = vmatprep.subr.mxu0 %v403
    %3902 = vmatpush1.msra.mxu0 %v402
    %3903 = vmatprep.subr.mxu0 %v400
    %3904 = vmatpush1.msra.mxu0 %v399
    %3905 = vmatprep.subr.mxu0 %v397
    %3906 = vmatpush1.msra.mxu0 %v396
    %3907 = vmatprep.subr.mxu0 %v394
    %3908 = vmatpush1.msra.mxu0 %v393
    %3909 = vmatprep.subr.mxu0 %v391
    %3910 = vmatpush1.msra.mxu0 %v390
    %3911 = vmatprep.subr.mxu0 %v388
    %3912 = vmatpush1.msra.mxu0 %v387
    %3913 = vmatprep.subr.mxu0 %v385
    %3914 = vmatpush1.msra.mxu0 %v384
    %3915 = vmatprep.subr.mxu0 %v382
    %3916 = vmatpush1.msra.mxu0 %v381
    %3917 = vmatprep.subr.mxu0 0.0
    %3918 = vmatpush2.msra.mxu0 0.0
    %3919 = vmatprep.subr.mxu0 0.0
    %3920 = vmatpush2.msra.mxu0 0.0
    %3921 = vmatprep.subr.mxu0 0.0
    %3922 = vmatpush2.msra.mxu0 0.0
    %3923 = vmatprep.subr.mxu0 0.0
    %3924 = vmatpush2.msra.mxu0 0.0
    %3925 = vmatprep.subr.mxu0 0.0
    %3926 = vmatpush2.msra.mxu0 0.0
    %3927 = vmatprep.subr.mxu0 0.0
    %3928 = vmatpush2.msra.mxu0 0.0
    %3929 = vmatprep.subr.mxu0 0.0
    %3930 = vmatpush2.msra.mxu0 0.0
    %3931 = vmatprep.subr.mxu0 0.0
    %3932 = vmatpush2.msra.mxu0 0.0
    %3933 = vmatprep.subr.mxu0 0.0
    %3934 = vmatpush2.msra.mxu0 0.0
    %3935 = vmatprep.subr.mxu0 0.0
    %3936 = vmatpush2.msra.mxu0 0.0
    %3937 = vmatprep.subr.mxu0 0.0
    %3938 = vmatpush2.msra.mxu0 0.0
    %3939 = vmatprep.subr.mxu0 0.0
    %3940 = vmatpush2.msra.mxu0 0.0
    %3941 = vmatprep.subr.mxu0 0.0
    %3942 = vmatpush2.msra.mxu0 0.0
    %3943 = vmatprep.subr.mxu0 0.0
    %3944 = vmatpush2.msra.mxu0 0.0
    %3945 = vmatprep.subr.mxu0 0.0
    %3946 = vmatpush2.msra.mxu0 0.0
    %3947 = vmatprep.subr.mxu0 0.0
    %3948 = vmatpush2.msra.mxu0 0.0
    %3949 = vmatprep.mubr.f32.mxu0 0.0
    %3950 = vmatmul.mubr.f32.gmra.mxu0 %v3280
    %v3951 = vpop.f32.mrf.mxu0
    %v3952 = vadd.f32 %v634, %v3951
    %v3953 = vpop.f32.mrf.mxu0
    %v3954 = vadd.f32 %v638, %v3953
    %3955 = vdwg.mxu0
    %3956 = vmatprep.subr.mxu0 0.0
    %3957 = vmatpush1.msra.mxu0 %v428
    %3958 = vmatprep.subr.mxu0 0.0
    %3959 = vmatpush1.msra.mxu0 %v425
    %3960 = vmatprep.subr.mxu0 0.0
    %3961 = vmatpush1.msra.mxu0 %v422
    %3962 = vmatprep.subr.mxu0 0.0
    %3963 = vmatpush1.msra.mxu0 %v419
    %3964 = vmatprep.subr.mxu0 0.0
    %3965 = vmatpush1.msra.mxu0 %v416
    %3966 = vmatprep.subr.mxu0 0.0
    %3967 = vmatpush1.msra.mxu0 %v413
    %3968 = vmatprep.subr.mxu0 0.0
    %3969 = vmatpush1.msra.mxu0 %v410
    %3970 = vmatprep.subr.mxu0 0.0
    %3971 = vmatpush1.msra.mxu0 %v407
    %3972 = vmatprep.subr.mxu0 0.0
    %3973 = vmatpush1.msra.mxu0 %v404
    %3974 = vmatprep.subr.mxu0 0.0
    %3975 = vmatpush1.msra.mxu0 %v401
    %3976 = vmatprep.subr.mxu0 0.0
    %3977 = vmatpush1.msra.mxu0 %v398
    %3978 = vmatprep.subr.mxu0 0.0
    %3979 = vmatpush1.msra.mxu0 %v395
    %3980 = vmatprep.subr.mxu0 0.0
    %3981 = vmatpush1.msra.mxu0 %v392
    %3982 = vmatprep.subr.mxu0 0.0
    %3983 = vmatpush1.msra.mxu0 %v389
    %3984 = vmatprep.subr.mxu0 0.0
    %3985 = vmatpush1.msra.mxu0 %v386
    %3986 = vmatprep.subr.mxu0 0.0
    %3987 = vmatpush1.msra.mxu0 %v383
    %3988 = vmatprep.subr.mxu0 0.0
    %3989 = vmatpush2.msra.mxu0 0.0
    %3990 = vmatprep.subr.mxu0 0.0
    %3991 = vmatpush2.msra.mxu0 0.0
    %3992 = vmatprep.subr.mxu0 0.0
    %3993 = vmatpush2.msra.mxu0 0.0
    %3994 = vmatprep.subr.mxu0 0.0
    %3995 = vmatpush2.msra.mxu0 0.0
    %3996 = vmatprep.subr.mxu0 0.0
    %3997 = vmatpush2.msra.mxu0 0.0
    %3998 = vmatprep.subr.mxu0 0.0
    %3999 = vmatpush2.msra.mxu0 0.0
    %4000 = vmatprep.subr.mxu0 0.0
    %4001 = vmatpush2.msra.mxu0 0.0
    %4002 = vmatprep.subr.mxu0 0.0
    %4003 = vmatpush2.msra.mxu0 0.0
    %4004 = vmatprep.subr.mxu0 0.0
    %4005 = vmatpush2.msra.mxu0 0.0
    %4006 = vmatprep.subr.mxu0 0.0
    %4007 = vmatpush2.msra.mxu0 0.0
    %4008 = vmatprep.subr.mxu0 0.0
    %4009 = vmatpush2.msra.mxu0 0.0
    %4010 = vmatprep.subr.mxu0 0.0
    %4011 = vmatpush2.msra.mxu0 0.0
    %4012 = vmatprep.subr.mxu0 0.0
    %4013 = vmatpush2.msra.mxu0 0.0
    %4014 = vmatprep.subr.mxu0 0.0
    %4015 = vmatpush2.msra.mxu0 0.0
    %4016 = vmatprep.subr.mxu0 0.0
    %4017 = vmatpush2.msra.mxu0 0.0
    %4018 = vmatprep.subr.mxu0 0.0
    %4019 = vmatpush2.msra.mxu0 0.0
    %4020 = vmatprep.mubr.f32.mxu0 0.0
    %4021 = vmatmul.mubr.f32.gmra.mxu0 %v3280
    %v4022 = vpop.f32.mrf.mxu0
    %v4023 = vadd.f32 %v642, %v4022
    %v4024 = vpop.f32.mrf.mxu0
    %4025 = vdwg.mxu0
    %v4026 = vadd.f32 %v3811, %v3952
    %v4027 = vxor.u32 %v4026, 2147483648
    %v4028 = vmul.f32 %v4027, 1.442695
    %v4029 = vpow.pop %v4028
    %v4030 = vadd.f32 %v4029, 1.0
    %v4031 = vrcp.pop %v4030
    %v4032 = vmul.f32 1.0, %v4031
    %v4033 = vadd.f32 %v3813, %v3954
    %v4034 = vxor.u32 %v4033, 2147483648
    %v4035 = vmul.f32 %v4034, 1.442695
    %v4036 = vpow.pop %v4035
    %v4037 = vadd.f32 %v4036, 1.0
    %v4038 = vrcp.pop %v4037
    %v4039 = vmul.f32 1.0, %v4038
    %v4040 = vmul.f32 %v4032, %v4023
    %v4041 = vadd.f32 %v3882, %v4040
    %v4042 = vtanh.pop %v4041
    %v4043 = vsub.f32 %v3280, %v4042
    %v4044 = vmul.f32 %v4039, %v4043
    %v4045 = vadd.f32 %v4042, %v4044
    %4046 = vmatprep.subr.mxu0 %v573
    %4047 = vmatpush1.msra.mxu0 %v572
    %4048 = vmatprep.subr.mxu0 %v570
    %4049 = vmatpush1.msra.mxu0 %v569
    %4050 = vmatprep.subr.mxu0 %v567
    %4051 = vmatpush1.msra.mxu0 %v566
    %4052 = vmatprep.subr.mxu0 %v564
    %4053 = vmatpush1.msra.mxu0 %v563
    %4054 = vmatprep.subr.mxu0 %v561
    %4055 = vmatpush1.msra.mxu0 %v560
    %4056 = vmatprep.subr.mxu0 %v558
    %4057 = vmatpush1.msra.mxu0 %v557
    %4058 = vmatprep.subr.mxu0 %v555
    %4059 = vmatpush1.msra.mxu0 %v554
    %4060 = vmatprep.subr.mxu0 %v552
    %4061 = vmatpush1.msra.mxu0 %v551
    %4062 = vmatprep.subr.mxu0 %v549
    %4063 = vmatpush1.msra.mxu0 %v548
    %4064 = vmatprep.subr.mxu0 %v546
    %4065 = vmatpush1.msra.mxu0 %v545
    %4066 = vmatprep.subr.mxu0 %v543
    %4067 = vmatpush1.msra.mxu0 %v542
    %4068 = vmatprep.subr.mxu0 %v540
    %4069 = vmatpush1.msra.mxu0 %v539
    %4070 = vmatprep.subr.mxu0 %v537
    %4071 = vmatpush1.msra.mxu0 %v536
    %4072 = vmatprep.subr.mxu0 %v534
    %4073 = vmatpush1.msra.mxu0 %v533
    %4074 = vmatprep.subr.mxu0 %v531
    %4075 = vmatpush1.msra.mxu0 %v530
    %4076 = vmatprep.subr.mxu0 %v528
    %4077 = vmatpush1.msra.mxu0 %v527
    %4078 = vmatprep.subr.mxu0 0.0
    %4079 = vmatpush2.msra.mxu0 0.0
    %4080 = vmatprep.subr.mxu0 0.0
    %4081 = vmatpush2.msra.mxu0 0.0
    %4082 = vmatprep.subr.mxu0 0.0
    %4083 = vmatpush2.msra.mxu0 0.0
    %4084 = vmatprep.subr.mxu0 0.0
    %4085 = vmatpush2.msra.mxu0 0.0
    %4086 = vmatprep.subr.mxu0 0.0
    %4087 = vmatpush2.msra.mxu0 0.0
    %4088 = vmatprep.subr.mxu0 0.0
    %4089 = vmatpush2.msra.mxu0 0.0
    %4090 = vmatprep.subr.mxu0 0.0
    %4091 = vmatpush2.msra.mxu0 0.0
    %4092 = vmatprep.subr.mxu0 0.0
    %4093 = vmatpush2.msra.mxu0 0.0
    %4094 = vmatprep.subr.mxu0 0.0
    %4095 = vmatpush2.msra.mxu0 0.0
    %4096 = vmatprep.subr.mxu0 0.0
    %4097 = vmatpush2.msra.mxu0 0.0
    %4098 = vmatprep.subr.mxu0 0.0
    %4099 = vmatpush2.msra.mxu0 0.0
    %4100 = vmatprep.subr.mxu0 0.0
    %4101 = vmatpush2.msra.mxu0 0.0
    %4102 = vmatprep.subr.mxu0 0.0
    %4103 = vmatpush2.msra.mxu0 0.0
    %4104 = vmatprep.subr.mxu0 0.0
    %4105 = vmatpush2.msra.mxu0 0.0
    %4106 = vmatprep.subr.mxu0 0.0
    %4107 = vmatpush2.msra.mxu0 0.0
    %4108 = vmatprep.subr.mxu0 0.0
    %4109 = vmatpush2.msra.mxu0 0.0
    %4110 = vmatprep.mubr.f32.mxu0 0.0
    %4111 = vmatmul.mubr.f32.gmra.mxu0 %v3280
    %v4112 = vpop.f32.mrf.mxu0
    %v4113 = vadd.f32 %v599, %v4112
    %v4114 = vpop.f32.mrf.mxu0
    %v4115 = vadd.f32 %v603, %v4114
    %4116 = vdwg.mxu0
    %4117 = vmatprep.subr.mxu0 0.0
    %4118 = vmatpush1.msra.mxu0 %v574
    %4119 = vmatprep.subr.mxu0 0.0
    %4120 = vmatpush1.msra.mxu0 %v571
    %4121 = vmatprep.subr.mxu0 0.0
    %4122 = vmatpush1.msra.mxu0 %v568
    %4123 = vmatprep.subr.mxu0 0.0
    %4124 = vmatpush1.msra.mxu0 %v565
    %4125 = vmatprep.subr.mxu0 0.0
    %4126 = vmatpush1.msra.mxu0 %v562
    %4127 = vmatprep.subr.mxu0 0.0
    %4128 = vmatpush1.msra.mxu0 %v559
    %4129 = vmatprep.subr.mxu0 0.0
    %4130 = vmatpush1.msra.mxu0 %v556
    %4131 = vmatprep.subr.mxu0 0.0
    %4132 = vmatpush1.msra.mxu0 %v553
    %4133 = vmatprep.subr.mxu0 0.0
    %4134 = vmatpush1.msra.mxu0 %v550
    %4135 = vmatprep.subr.mxu0 0.0
    %4136 = vmatpush1.msra.mxu0 %v547
    %4137 = vmatprep.subr.mxu0 0.0
    %4138 = vmatpush1.msra.mxu0 %v544
    %4139 = vmatprep.subr.mxu0 0.0
    %4140 = vmatpush1.msra.mxu0 %v541
    %4141 = vmatprep.subr.mxu0 0.0
    %4142 = vmatpush1.msra.mxu0 %v538
    %4143 = vmatprep.subr.mxu0 0.0
    %4144 = vmatpush1.msra.mxu0 %v535
    %4145 = vmatprep.subr.mxu0 0.0
    %4146 = vmatpush1.msra.mxu0 %v532
    %4147 = vmatprep.subr.mxu0 0.0
    %4148 = vmatpush1.msra.mxu0 %v529
    %4149 = vmatprep.subr.mxu0 0.0
    %4150 = vmatpush2.msra.mxu0 0.0
    %4151 = vmatprep.subr.mxu0 0.0
    %4152 = vmatpush2.msra.mxu0 0.0
    %4153 = vmatprep.subr.mxu0 0.0
    %4154 = vmatpush2.msra.mxu0 0.0
    %4155 = vmatprep.subr.mxu0 0.0
    %4156 = vmatpush2.msra.mxu0 0.0
    %4157 = vmatprep.subr.mxu0 0.0
    %4158 = vmatpush2.msra.mxu0 0.0
    %4159 = vmatprep.subr.mxu0 0.0
    %4160 = vmatpush2.msra.mxu0 0.0
    %4161 = vmatprep.subr.mxu0 0.0
    %4162 = vmatpush2.msra.mxu0 0.0
    %4163 = vmatprep.subr.mxu0 0.0
    %4164 = vmatpush2.msra.mxu0 0.0
    %4165 = vmatprep.subr.mxu0 0.0
    %4166 = vmatpush2.msra.mxu0 0.0
    %4167 = vmatprep.subr.mxu0 0.0
    %4168 = vmatpush2.msra.mxu0 0.0
    %4169 = vmatprep.subr.mxu0 0.0
    %4170 = vmatpush2.msra.mxu0 0.0
    %4171 = vmatprep.subr.mxu0 0.0
    %4172 = vmatpush2.msra.mxu0 0.0
    %4173 = vmatprep.subr.mxu0 0.0
    %4174 = vmatpush2.msra.mxu0 0.0
    %4175 = vmatprep.subr.mxu0 0.0
    %4176 = vmatpush2.msra.mxu0 0.0
    %4177 = vmatprep.subr.mxu0 0.0
    %4178 = vmatpush2.msra.mxu0 0.0
    %4179 = vmatprep.subr.mxu0 0.0
    %4180 = vmatpush2.msra.mxu0 0.0
    %4181 = vmatprep.mubr.f32.mxu0 0.0
    %4182 = vmatmul.mubr.f32.gmra.mxu0 %v3280
    %v4183 = vpop.f32.mrf.mxu0
    %v4184 = vadd.f32 %v607, %v4183
    %v4185 = vpop.f32.mrf.mxu0
    %4186 = vdwg.mxu0
    %4187 = vmatprep.subr.mxu0 %v476
    %4188 = vmatpush1.msra.mxu0 %v475
    %4189 = vmatprep.subr.mxu0 %v473
    %4190 = vmatpush1.msra.mxu0 %v472
    %4191 = vmatprep.subr.mxu0 %v470
    %4192 = vmatpush1.msra.mxu0 %v469
    %4193 = vmatprep.subr.mxu0 %v467
    %4194 = vmatpush1.msra.mxu0 %v466
    %4195 = vmatprep.subr.mxu0 %v464
    %4196 = vmatpush1.msra.mxu0 %v463
    %4197 = vmatprep.subr.mxu0 %v461
    %4198 = vmatpush1.msra.mxu0 %v460
    %4199 = vmatprep.subr.mxu0 %v458
    %4200 = vmatpush1.msra.mxu0 %v457
    %4201 = vmatprep.subr.mxu0 %v455
    %4202 = vmatpush1.msra.mxu0 %v454
    %4203 = vmatprep.subr.mxu0 %v452
    %4204 = vmatpush1.msra.mxu0 %v451
    %4205 = vmatprep.subr.mxu0 %v449
    %4206 = vmatpush1.msra.mxu0 %v448
    %4207 = vmatprep.subr.mxu0 %v446
    %4208 = vmatpush1.msra.mxu0 %v445
    %4209 = vmatprep.subr.mxu0 %v443
    %4210 = vmatpush1.msra.mxu0 %v442
    %4211 = vmatprep.subr.mxu0 %v440
    %4212 = vmatpush1.msra.mxu0 %v439
    %4213 = vmatprep.subr.mxu0 %v437
    %4214 = vmatpush1.msra.mxu0 %v436
    %4215 = vmatprep.subr.mxu0 %v434
    %4216 = vmatpush1.msra.mxu0 %v433
    %4217 = vmatprep.subr.mxu0 %v431
    %4218 = vmatpush1.msra.mxu0 %v430
    %4219 = vmatprep.subr.mxu0 0.0
    %4220 = vmatpush2.msra.mxu0 0.0
    %4221 = vmatprep.subr.mxu0 0.0
    %4222 = vmatpush2.msra.mxu0 0.0
    %4223 = vmatprep.subr.mxu0 0.0
    %4224 = vmatpush2.msra.mxu0 0.0
    %4225 = vmatprep.subr.mxu0 0.0
    %4226 = vmatpush2.msra.mxu0 0.0
    %4227 = vmatprep.subr.mxu0 0.0
    %4228 = vmatpush2.msra.mxu0 0.0
    %4229 = vmatprep.subr.mxu0 0.0
    %4230 = vmatpush2.msra.mxu0 0.0
    %4231 = vmatprep.subr.mxu0 0.0
    %4232 = vmatpush2.msra.mxu0 0.0
    %4233 = vmatprep.subr.mxu0 0.0
    %4234 = vmatpush2.msra.mxu0 0.0
    %4235 = vmatprep.subr.mxu0 0.0
    %4236 = vmatpush2.msra.mxu0 0.0
    %4237 = vmatprep.subr.mxu0 0.0
    %4238 = vmatpush2.msra.mxu0 0.0
    %4239 = vmatprep.subr.mxu0 0.0
    %4240 = vmatpush2.msra.mxu0 0.0
    %4241 = vmatprep.subr.mxu0 0.0
    %4242 = vmatpush2.msra.mxu0 0.0
    %4243 = vmatprep.subr.mxu0 0.0
    %4244 = vmatpush2.msra.mxu0 0.0
    %4245 = vmatprep.subr.mxu0 0.0
    %4246 = vmatpush2.msra.mxu0 0.0
    %4247 = vmatprep.subr.mxu0 0.0
    %4248 = vmatpush2.msra.mxu0 0.0
    %4249 = vmatprep.subr.mxu0 0.0
    %4250 = vmatpush2.msra.mxu0 0.0
    %4251 = vmatprep.mubr.f32.mxu0 0.0
    %4252 = vmatmul.mubr.f32.gmra.mxu0 %v3582
    %v4253 = vpop.f32.mrf.mxu0
    %v4254 = vadd.f32 %v652, %v4253
    %v4255 = vpop.f32.mrf.mxu0
    %v4256 = vadd.f32 %v656, %v4255
    %4257 = vdwg.mxu0
    %4258 = vmatprep.subr.mxu0 0.0
    %4259 = vmatpush1.msra.mxu0 %v477
    %4260 = vmatprep.subr.mxu0 0.0
    %4261 = vmatpush1.msra.mxu0 %v474
    %4262 = vmatprep.subr.mxu0 0.0
    %4263 = vmatpush1.msra.mxu0 %v471
    %4264 = vmatprep.subr.mxu0 0.0
    %4265 = vmatpush1.msra.mxu0 %v468
    %4266 = vmatprep.subr.mxu0 0.0
    %4267 = vmatpush1.msra.mxu0 %v465
    %4268 = vmatprep.subr.mxu0 0.0
    %4269 = vmatpush1.msra.mxu0 %v462
    %4270 = vmatprep.subr.mxu0 0.0
    %4271 = vmatpush1.msra.mxu0 %v459
    %4272 = vmatprep.subr.mxu0 0.0
    %4273 = vmatpush1.msra.mxu0 %v456
    %4274 = vmatprep.subr.mxu0 0.0
    %4275 = vmatpush1.msra.mxu0 %v453
    %4276 = vmatprep.subr.mxu0 0.0
    %4277 = vmatpush1.msra.mxu0 %v450
    %4278 = vmatprep.subr.mxu0 0.0
    %4279 = vmatpush1.msra.mxu0 %v447
    %4280 = vmatprep.subr.mxu0 0.0
    %4281 = vmatpush1.msra.mxu0 %v444
    %4282 = vmatprep.subr.mxu0 0.0
    %4283 = vmatpush1.msra.mxu0 %v441
    %4284 = vmatprep.subr.mxu0 0.0
    %4285 = vmatpush1.msra.mxu0 %v438
    %4286 = vmatprep.subr.mxu0 0.0
    %4287 = vmatpush1.msra.mxu0 %v435
    %4288 = vmatprep.subr.mxu0 0.0
    %4289 = vmatpush1.msra.mxu0 %v432
    %4290 = vmatprep.subr.mxu0 0.0
    %4291 = vmatpush2.msra.mxu0 0.0
    %4292 = vmatprep.subr.mxu0 0.0
    %4293 = vmatpush2.msra.mxu0 0.0
    %4294 = vmatprep.subr.mxu0 0.0
    %4295 = vmatpush2.msra.mxu0 0.0
    %4296 = vmatprep.subr.mxu0 0.0
    %4297 = vmatpush2.msra.mxu0 0.0
    %4298 = vmatprep.subr.mxu0 0.0
    %4299 = vmatpush2.msra.mxu0 0.0
    %4300 = vmatprep.subr.mxu0 0.0
    %4301 = vmatpush2.msra.mxu0 0.0
    %4302 = vmatprep.subr.mxu0 0.0
    %4303 = vmatpush2.msra.mxu0 0.0
    %4304 = vmatprep.subr.mxu0 0.0
    %4305 = vmatpush2.msra.mxu0 0.0
    %4306 = vmatprep.subr.mxu0 0.0
    %4307 = vmatpush2.msra.mxu0 0.0
    %4308 = vmatprep.subr.mxu0 0.0
    %4309 = vmatpush2.msra.mxu0 0.0
    %4310 = vmatprep.subr.mxu0 0.0
    %4311 = vmatpush2.msra.mxu0 0.0
    %4312 = vmatprep.subr.mxu0 0.0
    %4313 = vmatpush2.msra.mxu0 0.0
    %4314 = vmatprep.subr.mxu0 0.0
    %4315 = vmatpush2.msra.mxu0 0.0
    %4316 = vmatprep.subr.mxu0 0.0
    %4317 = vmatpush2.msra.mxu0 0.0
    %4318 = vmatprep.subr.mxu0 0.0
    %4319 = vmatpush2.msra.mxu0 0.0
    %4320 = vmatprep.subr.mxu0 0.0
    %4321 = vmatpush2.msra.mxu0 0.0
    %4322 = vmatprep.mubr.f32.mxu0 0.0
    %4323 = vmatmul.mubr.f32.gmra.mxu0 %v3582
    %v4324 = vpop.f32.mrf.mxu0
    %v4325 = vadd.f32 %v660, %v4324
    %v4326 = vpop.f32.mrf.mxu0
    %4327 = vdwg.mxu0
    %v4328 = vadd.f32 %v4113, %v4254
    %v4329 = vxor.u32 %v4328, 2147483648
    %v4330 = vmul.f32 %v4329, 1.442695
    %v4331 = vpow.pop %v4330
    %v4332 = vadd.f32 %v4331, 1.0
    %v4333 = vrcp.pop %v4332
    %v4334 = vmul.f32 1.0, %v4333
    %v4335 = vadd.f32 %v4115, %v4256
    %v4336 = vxor.u32 %v4335, 2147483648
    %v4337 = vmul.f32 %v4336, 1.442695
    %v4338 = vpow.pop %v4337
    %v4339 = vadd.f32 %v4338, 1.0
    %v4340 = vrcp.pop %v4339
    %v4341 = vmul.f32 1.0, %v4340
    %v4342 = vmul.f32 %v4334, %v4325
    %v4343 = vadd.f32 %v4184, %v4342
    %v4344 = vtanh.pop %v4343
    %v4345 = vsub.f32 %v3582, %v4344
    %v4346 = vmul.f32 %v4341, %v4345
    %v4347 = vadd.f32 %v4344, %v4346
    %4348 = vmatprep.subr.mxu0 %v378
    %4349 = vmatpush1.msra.mxu0 %v377
    %4350 = vmatprep.subr.mxu0 %v375
    %4351 = vmatpush1.msra.mxu0 %v374
    %4352 = vmatprep.subr.mxu0 %v372
    %4353 = vmatpush1.msra.mxu0 %v371
    %4354 = vmatprep.subr.mxu0 %v369
    %4355 = vmatpush1.msra.mxu0 %v368
    %4356 = vmatprep.subr.mxu0 %v366
    %4357 = vmatpush1.msra.mxu0 %v365
    %4358 = vmatprep.subr.mxu0 %v363
    %4359 = vmatpush1.msra.mxu0 %v362
    %4360 = vmatprep.subr.mxu0 %v360
    %4361 = vmatpush1.msra.mxu0 %v359
    %4362 = vmatprep.subr.mxu0 %v357
    %4363 = vmatpush1.msra.mxu0 %v356
    %4364 = vmatprep.subr.mxu0 %v354
    %4365 = vmatpush1.msra.mxu0 %v353
    %4366 = vmatprep.subr.mxu0 %v351
    %4367 = vmatpush1.msra.mxu0 %v350
    %4368 = vmatprep.subr.mxu0 %v348
    %4369 = vmatpush1.msra.mxu0 %v347
    %4370 = vmatprep.subr.mxu0 %v345
    %4371 = vmatpush1.msra.mxu0 %v344
    %4372 = vmatprep.subr.mxu0 %v342
    %4373 = vmatpush1.msra.mxu0 %v341
    %4374 = vmatprep.subr.mxu0 %v339
    %4375 = vmatpush1.msra.mxu0 %v338
    %4376 = vmatprep.subr.mxu0 %v336
    %4377 = vmatpush1.msra.mxu0 %v335
    %4378 = vmatprep.subr.mxu0 %v333
    %4379 = vmatpush1.msra.mxu0 %v332
    %4380 = vmatprep.subr.mxu0 0.0
    %4381 = vmatpush2.msra.mxu0 0.0
    %4382 = vmatprep.subr.mxu0 0.0
    %4383 = vmatpush2.msra.mxu0 0.0
    %4384 = vmatprep.subr.mxu0 0.0
    %4385 = vmatpush2.msra.mxu0 0.0
    %4386 = vmatprep.subr.mxu0 0.0
    %4387 = vmatpush2.msra.mxu0 0.0
    %4388 = vmatprep.subr.mxu0 0.0
    %4389 = vmatpush2.msra.mxu0 0.0
    %4390 = vmatprep.subr.mxu0 0.0
    %4391 = vmatpush2.msra.mxu0 0.0
    %4392 = vmatprep.subr.mxu0 0.0
    %4393 = vmatpush2.msra.mxu0 0.0
    %4394 = vmatprep.subr.mxu0 0.0
    %4395 = vmatpush2.msra.mxu0 0.0
    %4396 = vmatprep.subr.mxu0 0.0
    %4397 = vmatpush2.msra.mxu0 0.0
    %4398 = vmatprep.subr.mxu0 0.0
    %4399 = vmatpush2.msra.mxu0 0.0
    %4400 = vmatprep.subr.mxu0 0.0
    %4401 = vmatpush2.msra.mxu0 0.0
    %4402 = vmatprep.subr.mxu0 0.0
    %4403 = vmatpush2.msra.mxu0 0.0
    %4404 = vmatprep.subr.mxu0 0.0
    %4405 = vmatpush2.msra.mxu0 0.0
    %4406 = vmatprep.subr.mxu0 0.0
    %4407 = vmatpush2.msra.mxu0 0.0
    %4408 = vmatprep.subr.mxu0 0.0
    %4409 = vmatpush2.msra.mxu0 0.0
    %4410 = vmatprep.subr.mxu0 0.0
    %4411 = vmatpush2.msra.mxu0 0.0
    %4412 = vmatprep.mubr.f32.mxu0 0.0
    %4413 = vmatmul.mubr.f32.gmra.mxu0 %v3743
    %v4414 = vpop.f32.mrf.mxu0
    %v4415 = vadd.f32 %v616, %v4414
    %v4416 = vpop.f32.mrf.mxu0
    %v4417 = vadd.f32 %v620, %v4416
    %4418 = vdwg.mxu0
    %4419 = vmatprep.subr.mxu0 0.0
    %4420 = vmatpush1.msra.mxu0 %v379
    %4421 = vmatprep.subr.mxu0 0.0
    %4422 = vmatpush1.msra.mxu0 %v376
    %4423 = vmatprep.subr.mxu0 0.0
    %4424 = vmatpush1.msra.mxu0 %v373
    %4425 = vmatprep.subr.mxu0 0.0
    %4426 = vmatpush1.msra.mxu0 %v370
    %4427 = vmatprep.subr.mxu0 0.0
    %4428 = vmatpush1.msra.mxu0 %v367
    %4429 = vmatprep.subr.mxu0 0.0
    %4430 = vmatpush1.msra.mxu0 %v364
    %4431 = vmatprep.subr.mxu0 0.0
    %4432 = vmatpush1.msra.mxu0 %v361
    %4433 = vmatprep.subr.mxu0 0.0
    %4434 = vmatpush1.msra.mxu0 %v358
    %4435 = vmatprep.subr.mxu0 0.0
    %4436 = vmatpush1.msra.mxu0 %v355
    %4437 = vmatprep.subr.mxu0 0.0
    %4438 = vmatpush1.msra.mxu0 %v352
    %4439 = vmatprep.subr.mxu0 0.0
    %4440 = vmatpush1.msra.mxu0 %v349
    %4441 = vmatprep.subr.mxu0 0.0
    %4442 = vmatpush1.msra.mxu0 %v346
    %4443 = vmatprep.subr.mxu0 0.0
    %4444 = vmatpush1.msra.mxu0 %v343
    %4445 = vmatprep.subr.mxu0 0.0
    %4446 = vmatpush1.msra.mxu0 %v340
    %4447 = vmatprep.subr.mxu0 0.0
    %4448 = vmatpush1.msra.mxu0 %v337
    %4449 = vmatprep.subr.mxu0 0.0
    %4450 = vmatpush1.msra.mxu0 %v334
    %4451 = vmatprep.subr.mxu0 0.0
    %4452 = vmatpush2.msra.mxu0 0.0
    %4453 = vmatprep.subr.mxu0 0.0
    %4454 = vmatpush2.msra.mxu0 0.0
    %4455 = vmatprep.subr.mxu0 0.0
    %4456 = vmatpush2.msra.mxu0 0.0
    %4457 = vmatprep.subr.mxu0 0.0
    %4458 = vmatpush2.msra.mxu0 0.0
    %4459 = vmatprep.subr.mxu0 0.0
    %4460 = vmatpush2.msra.mxu0 0.0
    %4461 = vmatprep.subr.mxu0 0.0
    %4462 = vmatpush2.msra.mxu0 0.0
    %4463 = vmatprep.subr.mxu0 0.0
    %4464 = vmatpush2.msra.mxu0 0.0
    %4465 = vmatprep.subr.mxu0 0.0
    %4466 = vmatpush2.msra.mxu0 0.0
    %4467 = vmatprep.subr.mxu0 0.0
    %4468 = vmatpush2.msra.mxu0 0.0
    %4469 = vmatprep.subr.mxu0 0.0
    %4470 = vmatpush2.msra.mxu0 0.0
    %4471 = vmatprep.subr.mxu0 0.0
    %4472 = vmatpush2.msra.mxu0 0.0
    %4473 = vmatprep.subr.mxu0 0.0
    %4474 = vmatpush2.msra.mxu0 0.0
    %4475 = vmatprep.subr.mxu0 0.0
    %4476 = vmatpush2.msra.mxu0 0.0
    %4477 = vmatprep.subr.mxu0 0.0
    %4478 = vmatpush2.msra.mxu0 0.0
    %4479 = vmatprep.subr.mxu0 0.0
    %4480 = vmatpush2.msra.mxu0 0.0
    %4481 = vmatprep.subr.mxu0 0.0
    %4482 = vmatpush2.msra.mxu0 0.0
    %4483 = vmatprep.mubr.f32.mxu0 0.0
    %4484 = vmatmul.mubr.f32.gmra.mxu0 %v3743
    %v4485 = vpop.f32.mrf.mxu0
    %v4486 = vadd.f32 %v624, %v4485
    %v4487 = vpop.f32.mrf.mxu0
    %4488 = vdwg.mxu0
    %v4489 = vadd.f32 %v217, %v4415
    %v4490 = vxor.u32 %v4489, 2147483648
    %v4491 = vmul.f32 %v4490, 1.442695
    %v4492 = vpow.pop %v4491
    %v4493 = vadd.f32 %v4492, 1.0
    %v4494 = vrcp.pop %v4493
    %v4495 = vmul.f32 1.0, %v4494
    %v4496 = vadd.f32 %v219, %v4417
    %v4497 = vxor.u32 %v4496, 2147483648
    %v4498 = vmul.f32 %v4497, 1.442695
    %v4499 = vpow.pop %v4498
    %v4500 = vadd.f32 %v4499, 1.0
    %v4501 = vrcp.pop %v4500
    %v4502 = vmul.f32 1.0, %v4501
    %v4503 = vmul.f32 %v4495, %v4486
    %v4504 = vadd.f32 %v324, %v4503
    %v4505 = vtanh.pop %v4504
    %v4506 = vsub.f32 %v3743, %v4505
    %v4507 = vmul.f32 %v4502, %v4506
    %v4508 = vadd.f32 %v4505, %v4507
    %4509 = vmatprep.subr.mxu0 %v524
    %4510 = vmatpush1.msra.mxu0 %v523
    %4511 = vmatprep.subr.mxu0 %v521
    %4512 = vmatpush1.msra.mxu0 %v520
    %4513 = vmatprep.subr.mxu0 %v518
    %4514 = vmatpush1.msra.mxu0 %v517
    %4515 = vmatprep.subr.mxu0 %v515
    %4516 = vmatpush1.msra.mxu0 %v514
    %4517 = vmatprep.subr.mxu0 %v512
    %4518 = vmatpush1.msra.mxu0 %v511
    %4519 = vmatprep.subr.mxu0 %v509
    %4520 = vmatpush1.msra.mxu0 %v508
    %4521 = vmatprep.subr.mxu0 %v506
    %4522 = vmatpush1.msra.mxu0 %v505
    %4523 = vmatprep.subr.mxu0 %v503
    %4524 = vmatpush1.msra.mxu0 %v502
    %4525 = vmatprep.subr.mxu0 %v500
    %4526 = vmatpush1.msra.mxu0 %v499
    %4527 = vmatprep.subr.mxu0 %v497
    %4528 = vmatpush1.msra.mxu0 %v496
    %4529 = vmatprep.subr.mxu0 %v494
    %4530 = vmatpush1.msra.mxu0 %v493
    %4531 = vmatprep.subr.mxu0 %v491
    %4532 = vmatpush1.msra.mxu0 %v490
    %4533 = vmatprep.subr.mxu0 %v488
    %4534 = vmatpush1.msra.mxu0 %v487
    %4535 = vmatprep.subr.mxu0 %v485
    %4536 = vmatpush1.msra.mxu0 %v484
    %4537 = vmatprep.subr.mxu0 %v482
    %4538 = vmatpush1.msra.mxu0 %v481
    %4539 = vmatprep.subr.mxu0 %v479
    %4540 = vmatpush1.msra.mxu0 %v478
    %4541 = vmatprep.subr.mxu0 0.0
    %4542 = vmatpush2.msra.mxu0 0.0
    %4543 = vmatprep.subr.mxu0 0.0
    %4544 = vmatpush2.msra.mxu0 0.0
    %4545 = vmatprep.subr.mxu0 0.0
    %4546 = vmatpush2.msra.mxu0 0.0
    %4547 = vmatprep.subr.mxu0 0.0
    %4548 = vmatpush2.msra.mxu0 0.0
    %4549 = vmatprep.subr.mxu0 0.0
    %4550 = vmatpush2.msra.mxu0 0.0
    %4551 = vmatprep.subr.mxu0 0.0
    %4552 = vmatpush2.msra.mxu0 0.0
    %4553 = vmatprep.subr.mxu0 0.0
    %4554 = vmatpush2.msra.mxu0 0.0
    %4555 = vmatprep.subr.mxu0 0.0
    %4556 = vmatpush2.msra.mxu0 0.0
    %4557 = vmatprep.subr.mxu0 0.0
    %4558 = vmatpush2.msra.mxu0 0.0
    %4559 = vmatprep.subr.mxu0 0.0
    %4560 = vmatpush2.msra.mxu0 0.0
    %4561 = vmatprep.subr.mxu0 0.0
    %4562 = vmatpush2.msra.mxu0 0.0
    %4563 = vmatprep.subr.mxu0 0.0
    %4564 = vmatpush2.msra.mxu0 0.0
    %4565 = vmatprep.subr.mxu0 0.0
    %4566 = vmatpush2.msra.mxu0 0.0
    %4567 = vmatprep.subr.mxu0 0.0
    %4568 = vmatpush2.msra.mxu0 0.0
    %4569 = vmatprep.subr.mxu0 0.0
    %4570 = vmatpush2.msra.mxu0 0.0
    %4571 = vmatprep.subr.mxu0 0.0
    %4572 = vmatpush2.msra.mxu0 0.0
    %4573 = vmatprep.mubr.f32.mxu0 0.0
    %4574 = vmatmul.mubr.f32.gmra.mxu0 %v3743
    %v4575 = vpop.f32.mrf.mxu0
    %v4576 = vadd.f32 %v581, %v4575
    %v4577 = vpop.f32.mrf.mxu0
    %v4578 = vadd.f32 %v585, %v4577
    %4579 = vdwg.mxu0
    %4580 = vmatprep.subr.mxu0 0.0
    %4581 = vmatpush1.msra.mxu0 %v525
    %4582 = vmatprep.subr.mxu0 0.0
    %4583 = vmatpush1.msra.mxu0 %v522
    %4584 = vmatprep.subr.mxu0 0.0
    %4585 = vmatpush1.msra.mxu0 %v519
    %4586 = vmatprep.subr.mxu0 0.0
    %4587 = vmatpush1.msra.mxu0 %v516
    %4588 = vmatprep.subr.mxu0 0.0
    %4589 = vmatpush1.msra.mxu0 %v513
    %4590 = vmatprep.subr.mxu0 0.0
    %4591 = vmatpush1.msra.mxu0 %v510
    %4592 = vmatprep.subr.mxu0 0.0
    %4593 = vmatpush1.msra.mxu0 %v507
    %4594 = vmatprep.subr.mxu0 0.0
    %4595 = vmatpush1.msra.mxu0 %v504
    %4596 = vmatprep.subr.mxu0 0.0
    %4597 = vmatpush1.msra.mxu0 %v501
    %4598 = vmatprep.subr.mxu0 0.0
    %4599 = vmatpush1.msra.mxu0 %v498
    %4600 = vmatprep.subr.mxu0 0.0
    %4601 = vmatpush1.msra.mxu0 %v495
    %4602 = vmatprep.subr.mxu0 0.0
    %4603 = vmatpush1.msra.mxu0 %v492
    %4604 = vmatprep.subr.mxu0 0.0
    %4605 = vmatpush1.msra.mxu0 %v489
    %4606 = vmatprep.subr.mxu0 0.0
    %4607 = vmatpush1.msra.mxu0 %v486
    %4608 = vmatprep.subr.mxu0 0.0
    %4609 = vmatpush1.msra.mxu0 %v483
    %4610 = vmatprep.subr.mxu0 0.0
    %4611 = vmatpush1.msra.mxu0 %v480
    %4612 = vmatprep.subr.mxu0 0.0
    %4613 = vmatpush2.msra.mxu0 0.0
    %4614 = vmatprep.subr.mxu0 0.0
    %4615 = vmatpush2.msra.mxu0 0.0
    %4616 = vmatprep.subr.mxu0 0.0
    %4617 = vmatpush2.msra.mxu0 0.0
    %4618 = vmatprep.subr.mxu0 0.0
    %4619 = vmatpush2.msra.mxu0 0.0
    %4620 = vmatprep.subr.mxu0 0.0
    %4621 = vmatpush2.msra.mxu0 0.0
    %4622 = vmatprep.subr.mxu0 0.0
    %4623 = vmatpush2.msra.mxu0 0.0
    %4624 = vmatprep.subr.mxu0 0.0
    %4625 = vmatpush2.msra.mxu0 0.0
    %4626 = vmatprep.subr.mxu0 0.0
    %4627 = vmatpush2.msra.mxu0 0.0
    %4628 = vmatprep.subr.mxu0 0.0
    %4629 = vmatpush2.msra.mxu0 0.0
    %4630 = vmatprep.subr.mxu0 0.0
    %4631 = vmatpush2.msra.mxu0 0.0
    %4632 = vmatprep.subr.mxu0 0.0
    %4633 = vmatpush2.msra.mxu0 0.0
    %4634 = vmatprep.subr.mxu0 0.0
    %4635 = vmatpush2.msra.mxu0 0.0
    %4636 = vmatprep.subr.mxu0 0.0
    %4637 = vmatpush2.msra.mxu0 0.0
    %4638 = vmatprep.subr.mxu0 0.0
    %4639 = vmatpush2.msra.mxu0 0.0
    %4640 = vmatprep.subr.mxu0 0.0
    %4641 = vmatpush2.msra.mxu0 0.0
    %4642 = vmatprep.subr.mxu0 0.0
    %4643 = vmatpush2.msra.mxu0 0.0
    %4644 = vmatprep.mubr.f32.mxu0 0.0
    %4645 = vmatmul.mubr.f32.gmra.mxu0 %v3743
    %v4646 = vpop.f32.mrf.mxu0
    %v4647 = vadd.f32 %v589, %v4646
    %v4648 = vpop.f32.mrf.mxu0
    %4649 = vdwg.mxu0
    %4650 = vmatprep.subr.mxu0 %v427
    %4651 = vmatpush1.msra.mxu0 %v426
    %4652 = vmatprep.subr.mxu0 %v424
    %4653 = vmatpush1.msra.mxu0 %v423
    %4654 = vmatprep.subr.mxu0 %v421
    %4655 = vmatpush1.msra.mxu0 %v420
    %4656 = vmatprep.subr.mxu0 %v418
    %4657 = vmatpush1.msra.mxu0 %v417
    %4658 = vmatprep.subr.mxu0 %v415
    %4659 = vmatpush1.msra.mxu0 %v414
    %4660 = vmatprep.subr.mxu0 %v412
    %4661 = vmatpush1.msra.mxu0 %v411
    %4662 = vmatprep.subr.mxu0 %v409
    %4663 = vmatpush1.msra.mxu0 %v408
    %4664 = vmatprep.subr.mxu0 %v406
    %4665 = vmatpush1.msra.mxu0 %v405
    %4666 = vmatprep.subr.mxu0 %v403
    %4667 = vmatpush1.msra.mxu0 %v402
    %4668 = vmatprep.subr.mxu0 %v400
    %4669 = vmatpush1.msra.mxu0 %v399
    %4670 = vmatprep.subr.mxu0 %v397
    %4671 = vmatpush1.msra.mxu0 %v396
    %4672 = vmatprep.subr.mxu0 %v394
    %4673 = vmatpush1.msra.mxu0 %v393
    %4674 = vmatprep.subr.mxu0 %v391
    %4675 = vmatpush1.msra.mxu0 %v390
    %4676 = vmatprep.subr.mxu0 %v388
    %4677 = vmatpush1.msra.mxu0 %v387
    %4678 = vmatprep.subr.mxu0 %v385
    %4679 = vmatpush1.msra.mxu0 %v384
    %4680 = vmatprep.subr.mxu0 %v382
    %4681 = vmatpush1.msra.mxu0 %v381
    %4682 = vmatprep.subr.mxu0 0.0
    %4683 = vmatpush2.msra.mxu0 0.0
    %4684 = vmatprep.subr.mxu0 0.0
    %4685 = vmatpush2.msra.mxu0 0.0
    %4686 = vmatprep.subr.mxu0 0.0
    %4687 = vmatpush2.msra.mxu0 0.0
    %4688 = vmatprep.subr.mxu0 0.0
    %4689 = vmatpush2.msra.mxu0 0.0
    %4690 = vmatprep.subr.mxu0 0.0
    %4691 = vmatpush2.msra.mxu0 0.0
    %4692 = vmatprep.subr.mxu0 0.0
    %4693 = vmatpush2.msra.mxu0 0.0
    %4694 = vmatprep.subr.mxu0 0.0
    %4695 = vmatpush2.msra.mxu0 0.0
    %4696 = vmatprep.subr.mxu0 0.0
    %4697 = vmatpush2.msra.mxu0 0.0
    %4698 = vmatprep.subr.mxu0 0.0
    %4699 = vmatpush2.msra.mxu0 0.0
    %4700 = vmatprep.subr.mxu0 0.0
    %4701 = vmatpush2.msra.mxu0 0.0
    %4702 = vmatprep.subr.mxu0 0.0
    %4703 = vmatpush2.msra.mxu0 0.0
    %4704 = vmatprep.subr.mxu0 0.0
    %4705 = vmatpush2.msra.mxu0 0.0
    %4706 = vmatprep.subr.mxu0 0.0
    %4707 = vmatpush2.msra.mxu0 0.0
    %4708 = vmatprep.subr.mxu0 0.0
    %4709 = vmatpush2.msra.mxu0 0.0
    %4710 = vmatprep.subr.mxu0 0.0
    %4711 = vmatpush2.msra.mxu0 0.0
    %4712 = vmatprep.subr.mxu0 0.0
    %4713 = vmatpush2.msra.mxu0 0.0
    %4714 = vmatprep.mubr.f32.mxu0 0.0
    %4715 = vmatmul.mubr.f32.gmra.mxu0 %v4045
    %v4716 = vpop.f32.mrf.mxu0
    %v4717 = vadd.f32 %v634, %v4716
    %v4718 = vpop.f32.mrf.mxu0
    %v4719 = vadd.f32 %v638, %v4718
    %4720 = vdwg.mxu0
    %4721 = vmatprep.subr.mxu0 0.0
    %4722 = vmatpush1.msra.mxu0 %v428
    %4723 = vmatprep.subr.mxu0 0.0
    %4724 = vmatpush1.msra.mxu0 %v425
    %4725 = vmatprep.subr.mxu0 0.0
    %4726 = vmatpush1.msra.mxu0 %v422
    %4727 = vmatprep.subr.mxu0 0.0
    %4728 = vmatpush1.msra.mxu0 %v419
    %4729 = vmatprep.subr.mxu0 0.0
    %4730 = vmatpush1.msra.mxu0 %v416
    %4731 = vmatprep.subr.mxu0 0.0
    %4732 = vmatpush1.msra.mxu0 %v413
    %4733 = vmatprep.subr.mxu0 0.0
    %4734 = vmatpush1.msra.mxu0 %v410
    %4735 = vmatprep.subr.mxu0 0.0
    %4736 = vmatpush1.msra.mxu0 %v407
    %4737 = vmatprep.subr.mxu0 0.0
    %4738 = vmatpush1.msra.mxu0 %v404
    %4739 = vmatprep.subr.mxu0 0.0
    %4740 = vmatpush1.msra.mxu0 %v401
    %4741 = vmatprep.subr.mxu0 0.0
    %4742 = vmatpush1.msra.mxu0 %v398
    %4743 = vmatprep.subr.mxu0 0.0
    %4744 = vmatpush1.msra.mxu0 %v395
    %4745 = vmatprep.subr.mxu0 0.0
    %4746 = vmatpush1.msra.mxu0 %v392
    %4747 = vmatprep.subr.mxu0 0.0
    %4748 = vmatpush1.msra.mxu0 %v389
    %4749 = vmatprep.subr.mxu0 0.0
    %4750 = vmatpush1.msra.mxu0 %v386
    %4751 = vmatprep.subr.mxu0 0.0
    %4752 = vmatpush1.msra.mxu0 %v383
    %4753 = vmatprep.subr.mxu0 0.0
    %4754 = vmatpush2.msra.mxu0 0.0
    %4755 = vmatprep.subr.mxu0 0.0
    %4756 = vmatpush2.msra.mxu0 0.0
    %4757 = vmatprep.subr.mxu0 0.0
    %4758 = vmatpush2.msra.mxu0 0.0
    %4759 = vmatprep.subr.mxu0 0.0
    %4760 = vmatpush2.msra.mxu0 0.0
    %4761 = vmatprep.subr.mxu0 0.0
    %4762 = vmatpush2.msra.mxu0 0.0
    %4763 = vmatprep.subr.mxu0 0.0
    %4764 = vmatpush2.msra.mxu0 0.0
    %4765 = vmatprep.subr.mxu0 0.0
    %4766 = vmatpush2.msra.mxu0 0.0
    %4767 = vmatprep.subr.mxu0 0.0
    %4768 = vmatpush2.msra.mxu0 0.0
    %4769 = vmatprep.subr.mxu0 0.0
    %4770 = vmatpush2.msra.mxu0 0.0
    %4771 = vmatprep.subr.mxu0 0.0
    %4772 = vmatpush2.msra.mxu0 0.0
    %4773 = vmatprep.subr.mxu0 0.0
    %4774 = vmatpush2.msra.mxu0 0.0
    %4775 = vmatprep.subr.mxu0 0.0
    %4776 = vmatpush2.msra.mxu0 0.0
    %4777 = vmatprep.subr.mxu0 0.0
    %4778 = vmatpush2.msra.mxu0 0.0
    %4779 = vmatprep.subr.mxu0 0.0
    %4780 = vmatpush2.msra.mxu0 0.0
    %4781 = vmatprep.subr.mxu0 0.0
    %4782 = vmatpush2.msra.mxu0 0.0
    %4783 = vmatprep.subr.mxu0 0.0
    %4784 = vmatpush2.msra.mxu0 0.0
    %4785 = vmatprep.mubr.f32.mxu0 0.0
    %4786 = vmatmul.mubr.f32.gmra.mxu0 %v4045
    %v4787 = vpop.f32.mrf.mxu0
    %v4788 = vadd.f32 %v642, %v4787
    %v4789 = vpop.f32.mrf.mxu0
    %4790 = vdwg.mxu0
    %v4791 = vadd.f32 %v4576, %v4717
    %v4792 = vxor.u32 %v4791, 2147483648
    %v4793 = vmul.f32 %v4792, 1.442695
    %v4794 = vpow.pop %v4793
    %v4795 = vadd.f32 %v4794, 1.0
    %v4796 = vrcp.pop %v4795
    %v4797 = vmul.f32 1.0, %v4796
    %v4798 = vadd.f32 %v4578, %v4719
    %v4799 = vxor.u32 %v4798, 2147483648
    %v4800 = vmul.f32 %v4799, 1.442695
    %v4801 = vpow.pop %v4800
    %v4802 = vadd.f32 %v4801, 1.0
    %v4803 = vrcp.pop %v4802
    %v4804 = vmul.f32 1.0, %v4803
    %v4805 = vmul.f32 %v4797, %v4788
    %v4806 = vadd.f32 %v4647, %v4805
    %v4807 = vtanh.pop %v4806
    %v4808 = vsub.f32 %v4045, %v4807
    %v4809 = vmul.f32 %v4804, %v4808
    %v4810 = vadd.f32 %v4807, %v4809
    %4811 = vmatprep.subr.mxu0 %v573
    %4812 = vmatpush1.msra.mxu0 %v572
    %4813 = vmatprep.subr.mxu0 %v570
    %4814 = vmatpush1.msra.mxu0 %v569
    %4815 = vmatprep.subr.mxu0 %v567
    %4816 = vmatpush1.msra.mxu0 %v566
    %4817 = vmatprep.subr.mxu0 %v564
    %4818 = vmatpush1.msra.mxu0 %v563
    %4819 = vmatprep.subr.mxu0 %v561
    %4820 = vmatpush1.msra.mxu0 %v560
    %4821 = vmatprep.subr.mxu0 %v558
    %4822 = vmatpush1.msra.mxu0 %v557
    %4823 = vmatprep.subr.mxu0 %v555
    %4824 = vmatpush1.msra.mxu0 %v554
    %4825 = vmatprep.subr.mxu0 %v552
    %4826 = vmatpush1.msra.mxu0 %v551
    %4827 = vmatprep.subr.mxu0 %v549
    %4828 = vmatpush1.msra.mxu0 %v548
    %4829 = vmatprep.subr.mxu0 %v546
    %4830 = vmatpush1.msra.mxu0 %v545
    %4831 = vmatprep.subr.mxu0 %v543
    %4832 = vmatpush1.msra.mxu0 %v542
    %4833 = vmatprep.subr.mxu0 %v540
    %4834 = vmatpush1.msra.mxu0 %v539
    %4835 = vmatprep.subr.mxu0 %v537
    %4836 = vmatpush1.msra.mxu0 %v536
    %4837 = vmatprep.subr.mxu0 %v534
    %4838 = vmatpush1.msra.mxu0 %v533
    %4839 = vmatprep.subr.mxu0 %v531
    %4840 = vmatpush1.msra.mxu0 %v530
    %4841 = vmatprep.subr.mxu0 %v528
    %4842 = vmatpush1.msra.mxu0 %v527
    %4843 = vmatprep.subr.mxu0 0.0
    %4844 = vmatpush2.msra.mxu0 0.0
    %4845 = vmatprep.subr.mxu0 0.0
    %4846 = vmatpush2.msra.mxu0 0.0
    %4847 = vmatprep.subr.mxu0 0.0
    %4848 = vmatpush2.msra.mxu0 0.0
    %4849 = vmatprep.subr.mxu0 0.0
    %4850 = vmatpush2.msra.mxu0 0.0
    %4851 = vmatprep.subr.mxu0 0.0
    %4852 = vmatpush2.msra.mxu0 0.0
    %4853 = vmatprep.subr.mxu0 0.0
    %4854 = vmatpush2.msra.mxu0 0.0
    %4855 = vmatprep.subr.mxu0 0.0
    %4856 = vmatpush2.msra.mxu0 0.0
    %4857 = vmatprep.subr.mxu0 0.0
    %4858 = vmatpush2.msra.mxu0 0.0
    %4859 = vmatprep.subr.mxu0 0.0
    %4860 = vmatpush2.msra.mxu0 0.0
    %4861 = vmatprep.subr.mxu0 0.0
    %4862 = vmatpush2.msra.mxu0 0.0
    %4863 = vmatprep.subr.mxu0 0.0
    %4864 = vmatpush2.msra.mxu0 0.0
    %4865 = vmatprep.subr.mxu0 0.0
    %4866 = vmatpush2.msra.mxu0 0.0
    %4867 = vmatprep.subr.mxu0 0.0
    %4868 = vmatpush2.msra.mxu0 0.0
    %4869 = vmatprep.subr.mxu0 0.0
    %4870 = vmatpush2.msra.mxu0 0.0
    %4871 = vmatprep.subr.mxu0 0.0
    %4872 = vmatpush2.msra.mxu0 0.0
    %4873 = vmatprep.subr.mxu0 0.0
    %4874 = vmatpush2.msra.mxu0 0.0
    %4875 = vmatprep.mubr.f32.mxu0 0.0
    %4876 = vmatmul.mubr.f32.gmra.mxu0 %v4045
    %v4877 = vpop.f32.mrf.mxu0
    %v4878 = vadd.f32 %v599, %v4877
    %v4879 = vpop.f32.mrf.mxu0
    %v4880 = vadd.f32 %v603, %v4879
    %4881 = vdwg.mxu0
    %4882 = vmatprep.subr.mxu0 0.0
    %4883 = vmatpush1.msra.mxu0 %v574
    %4884 = vmatprep.subr.mxu0 0.0
    %4885 = vmatpush1.msra.mxu0 %v571
    %4886 = vmatprep.subr.mxu0 0.0
    %4887 = vmatpush1.msra.mxu0 %v568
    %4888 = vmatprep.subr.mxu0 0.0
    %4889 = vmatpush1.msra.mxu0 %v565
    %4890 = vmatprep.subr.mxu0 0.0
    %4891 = vmatpush1.msra.mxu0 %v562
    %4892 = vmatprep.subr.mxu0 0.0
    %4893 = vmatpush1.msra.mxu0 %v559
    %4894 = vmatprep.subr.mxu0 0.0
    %4895 = vmatpush1.msra.mxu0 %v556
    %4896 = vmatprep.subr.mxu0 0.0
    %4897 = vmatpush1.msra.mxu0 %v553
    %4898 = vmatprep.subr.mxu0 0.0
    %4899 = vmatpush1.msra.mxu0 %v550
    %4900 = vmatprep.subr.mxu0 0.0
    %4901 = vmatpush1.msra.mxu0 %v547
    %4902 = vmatprep.subr.mxu0 0.0
    %4903 = vmatpush1.msra.mxu0 %v544
    %4904 = vmatprep.subr.mxu0 0.0
    %4905 = vmatpush1.msra.mxu0 %v541
    %4906 = vmatprep.subr.mxu0 0.0
    %4907 = vmatpush1.msra.mxu0 %v538
    %4908 = vmatprep.subr.mxu0 0.0
    %4909 = vmatpush1.msra.mxu0 %v535
    %4910 = vmatprep.subr.mxu0 0.0
    %4911 = vmatpush1.msra.mxu0 %v532
    %4912 = vmatprep.subr.mxu0 0.0
    %4913 = vmatpush1.msra.mxu0 %v529
    %4914 = vmatprep.subr.mxu0 0.0
    %4915 = vmatpush2.msra.mxu0 0.0
    %4916 = vmatprep.subr.mxu0 0.0
    %4917 = vmatpush2.msra.mxu0 0.0
    %4918 = vmatprep.subr.mxu0 0.0
    %4919 = vmatpush2.msra.mxu0 0.0
    %4920 = vmatprep.subr.mxu0 0.0
    %4921 = vmatpush2.msra.mxu0 0.0
    %4922 = vmatprep.subr.mxu0 0.0
    %4923 = vmatpush2.msra.mxu0 0.0
    %4924 = vmatprep.subr.mxu0 0.0
    %4925 = vmatpush2.msra.mxu0 0.0
    %4926 = vmatprep.subr.mxu0 0.0
    %4927 = vmatpush2.msra.mxu0 0.0
    %4928 = vmatprep.subr.mxu0 0.0
    %4929 = vmatpush2.msra.mxu0 0.0
    %4930 = vmatprep.subr.mxu0 0.0
    %4931 = vmatpush2.msra.mxu0 0.0
    %4932 = vmatprep.subr.mxu0 0.0
    %4933 = vmatpush2.msra.mxu0 0.0
    %4934 = vmatprep.subr.mxu0 0.0
    %4935 = vmatpush2.msra.mxu0 0.0
    %4936 = vmatprep.subr.mxu0 0.0
    %4937 = vmatpush2.msra.mxu0 0.0
    %4938 = vmatprep.subr.mxu0 0.0
    %4939 = vmatpush2.msra.mxu0 0.0
    %4940 = vmatprep.subr.mxu0 0.0
    %4941 = vmatpush2.msra.mxu0 0.0
    %4942 = vmatprep.subr.mxu0 0.0
    %4943 = vmatpush2.msra.mxu0 0.0
    %4944 = vmatprep.subr.mxu0 0.0
    %4945 = vmatpush2.msra.mxu0 0.0
    %4946 = vmatprep.mubr.f32.mxu0 0.0
    %4947 = vmatmul.mubr.f32.gmra.mxu0 %v4045
    %v4948 = vpop.f32.mrf.mxu0
    %v4949 = vadd.f32 %v607, %v4948
    %v4950 = vpop.f32.mrf.mxu0
    %4951 = vdwg.mxu0
    %4952 = vmatprep.subr.mxu0 %v476
    %4953 = vmatpush1.msra.mxu0 %v475
    %4954 = vmatprep.subr.mxu0 %v473
    %4955 = vmatpush1.msra.mxu0 %v472
    %4956 = vmatprep.subr.mxu0 %v470
    %4957 = vmatpush1.msra.mxu0 %v469
    %4958 = vmatprep.subr.mxu0 %v467
    %4959 = vmatpush1.msra.mxu0 %v466
    %4960 = vmatprep.subr.mxu0 %v464
    %4961 = vmatpush1.msra.mxu0 %v463
    %4962 = vmatprep.subr.mxu0 %v461
    %4963 = vmatpush1.msra.mxu0 %v460
    %4964 = vmatprep.subr.mxu0 %v458
    %4965 = vmatpush1.msra.mxu0 %v457
    %4966 = vmatprep.subr.mxu0 %v455
    %4967 = vmatpush1.msra.mxu0 %v454
    %4968 = vmatprep.subr.mxu0 %v452
    %4969 = vmatpush1.msra.mxu0 %v451
    %4970 = vmatprep.subr.mxu0 %v449
    %4971 = vmatpush1.msra.mxu0 %v448
    %4972 = vmatprep.subr.mxu0 %v446
    %4973 = vmatpush1.msra.mxu0 %v445
    %4974 = vmatprep.subr.mxu0 %v443
    %4975 = vmatpush1.msra.mxu0 %v442
    %4976 = vmatprep.subr.mxu0 %v440
    %4977 = vmatpush1.msra.mxu0 %v439
    %4978 = vmatprep.subr.mxu0 %v437
    %4979 = vmatpush1.msra.mxu0 %v436
    %4980 = vmatprep.subr.mxu0 %v434
    %4981 = vmatpush1.msra.mxu0 %v433
    %4982 = vmatprep.subr.mxu0 %v431
    %4983 = vmatpush1.msra.mxu0 %v430
    %4984 = vmatprep.subr.mxu0 0.0
    %4985 = vmatpush2.msra.mxu0 0.0
    %4986 = vmatprep.subr.mxu0 0.0
    %4987 = vmatpush2.msra.mxu0 0.0
    %4988 = vmatprep.subr.mxu0 0.0
    %4989 = vmatpush2.msra.mxu0 0.0
    %4990 = vmatprep.subr.mxu0 0.0
    %4991 = vmatpush2.msra.mxu0 0.0
    %4992 = vmatprep.subr.mxu0 0.0
    %4993 = vmatpush2.msra.mxu0 0.0
    %4994 = vmatprep.subr.mxu0 0.0
    %4995 = vmatpush2.msra.mxu0 0.0
    %4996 = vmatprep.subr.mxu0 0.0
    %4997 = vmatpush2.msra.mxu0 0.0
    %4998 = vmatprep.subr.mxu0 0.0
    %4999 = vmatpush2.msra.mxu0 0.0
    %5000 = vmatprep.subr.mxu0 0.0
    %5001 = vmatpush2.msra.mxu0 0.0
    %5002 = vmatprep.subr.mxu0 0.0
    %5003 = vmatpush2.msra.mxu0 0.0
    %5004 = vmatprep.subr.mxu0 0.0
    %5005 = vmatpush2.msra.mxu0 0.0
    %5006 = vmatprep.subr.mxu0 0.0
    %5007 = vmatpush2.msra.mxu0 0.0
    %5008 = vmatprep.subr.mxu0 0.0
    %5009 = vmatpush2.msra.mxu0 0.0
    %5010 = vmatprep.subr.mxu0 0.0
    %5011 = vmatpush2.msra.mxu0 0.0
    %5012 = vmatprep.subr.mxu0 0.0
    %5013 = vmatpush2.msra.mxu0 0.0
    %5014 = vmatprep.subr.mxu0 0.0
    %5015 = vmatpush2.msra.mxu0 0.0
    %5016 = vmatprep.mubr.f32.mxu0 0.0
    %5017 = vmatmul.mubr.f32.gmra.mxu0 %v4347
    %v5018 = vpop.f32.mrf.mxu0
    %v5019 = vadd.f32 %v652, %v5018
    %v5020 = vpop.f32.mrf.mxu0
    %v5021 = vadd.f32 %v656, %v5020
    %5022 = vdwg.mxu0
    %5023 = vmatprep.subr.mxu0 0.0
    %5024 = vmatpush1.msra.mxu0 %v477
    %5025 = vmatprep.subr.mxu0 0.0
    %5026 = vmatpush1.msra.mxu0 %v474
    %5027 = vmatprep.subr.mxu0 0.0
    %5028 = vmatpush1.msra.mxu0 %v471
    %5029 = vmatprep.subr.mxu0 0.0
    %5030 = vmatpush1.msra.mxu0 %v468
    %5031 = vmatprep.subr.mxu0 0.0
    %5032 = vmatpush1.msra.mxu0 %v465
    %5033 = vmatprep.subr.mxu0 0.0
    %5034 = vmatpush1.msra.mxu0 %v462
    %5035 = vmatprep.subr.mxu0 0.0
    %5036 = vmatpush1.msra.mxu0 %v459
    %5037 = vmatprep.subr.mxu0 0.0
    %5038 = vmatpush1.msra.mxu0 %v456
    %5039 = vmatprep.subr.mxu0 0.0
    %5040 = vmatpush1.msra.mxu0 %v453
    %5041 = vmatprep.subr.mxu0 0.0
    %5042 = vmatpush1.msra.mxu0 %v450
    %5043 = vmatprep.subr.mxu0 0.0
    %5044 = vmatpush1.msra.mxu0 %v447
    %5045 = vmatprep.subr.mxu0 0.0
    %5046 = vmatpush1.msra.mxu0 %v444
    %5047 = vmatprep.subr.mxu0 0.0
    %5048 = vmatpush1.msra.mxu0 %v441
    %5049 = vmatprep.subr.mxu0 0.0
    %5050 = vmatpush1.msra.mxu0 %v438
    %5051 = vmatprep.subr.mxu0 0.0
    %5052 = vmatpush1.msra.mxu0 %v435
    %5053 = vmatprep.subr.mxu0 0.0
    %5054 = vmatpush1.msra.mxu0 %v432
    %5055 = vmatprep.subr.mxu0 0.0
    %5056 = vmatpush2.msra.mxu0 0.0
    %5057 = vmatprep.subr.mxu0 0.0
    %5058 = vmatpush2.msra.mxu0 0.0
    %5059 = vmatprep.subr.mxu0 0.0
    %5060 = vmatpush2.msra.mxu0 0.0
    %5061 = vmatprep.subr.mxu0 0.0
    %5062 = vmatpush2.msra.mxu0 0.0
    %5063 = vmatprep.subr.mxu0 0.0
    %5064 = vmatpush2.msra.mxu0 0.0
    %5065 = vmatprep.subr.mxu0 0.0
    %5066 = vmatpush2.msra.mxu0 0.0
    %5067 = vmatprep.subr.mxu0 0.0
    %5068 = vmatpush2.msra.mxu0 0.0
    %5069 = vmatprep.subr.mxu0 0.0
    %5070 = vmatpush2.msra.mxu0 0.0
    %5071 = vmatprep.subr.mxu0 0.0
    %5072 = vmatpush2.msra.mxu0 0.0
    %5073 = vmatprep.subr.mxu0 0.0
    %5074 = vmatpush2.msra.mxu0 0.0
    %5075 = vmatprep.subr.mxu0 0.0
    %5076 = vmatpush2.msra.mxu0 0.0
    %5077 = vmatprep.subr.mxu0 0.0
    %5078 = vmatpush2.msra.mxu0 0.0
    %5079 = vmatprep.subr.mxu0 0.0
    %5080 = vmatpush2.msra.mxu0 0.0
    %5081 = vmatprep.subr.mxu0 0.0
    %5082 = vmatpush2.msra.mxu0 0.0
    %5083 = vmatprep.subr.mxu0 0.0
    %5084 = vmatpush2.msra.mxu0 0.0
    %5085 = vmatprep.subr.mxu0 0.0
    %5086 = vmatpush2.msra.mxu0 0.0
    %5087 = vmatprep.mubr.f32.mxu0 0.0
    %5088 = vmatmul.mubr.f32.gmra.mxu0 %v4347
    %v5089 = vpop.f32.mrf.mxu0
    %v5090 = vadd.f32 %v660, %v5089
    %v5091 = vpop.f32.mrf.mxu0
    %5092 = vdwg.mxu0
    %v5093 = vadd.f32 %v4878, %v5019
    %v5094 = vxor.u32 %v5093, 2147483648
    %v5095 = vmul.f32 %v5094, 1.442695
    %v5096 = vpow.pop %v5095
    %v5097 = vadd.f32 %v5096, 1.0
    %v5098 = vrcp.pop %v5097
    %v5099 = vmul.f32 1.0, %v5098
    %v5100 = vadd.f32 %v4880, %v5021
    %v5101 = vxor.u32 %v5100, 2147483648
    %v5102 = vmul.f32 %v5101, 1.442695
    %v5103 = vpow.pop %v5102
    %v5104 = vadd.f32 %v5103, 1.0
    %v5105 = vrcp.pop %v5104
    %v5106 = vmul.f32 1.0, %v5105
    %v5107 = vmul.f32 %v5099, %v5090
    %v5108 = vadd.f32 %v4949, %v5107
    %v5109 = vtanh.pop %v5108
    %v5110 = vsub.f32 %v4347, %v5109
    %v5111 = vmul.f32 %v5106, %v5110
    %v5112 = vadd.f32 %v5109, %v5111
    %5113 = vmatprep.subr.mxu0 %v378
    %5114 = vmatpush1.msra.mxu0 %v377
    %5115 = vmatprep.subr.mxu0 %v375
    %5116 = vmatpush1.msra.mxu0 %v374
    %5117 = vmatprep.subr.mxu0 %v372
    %5118 = vmatpush1.msra.mxu0 %v371
    %5119 = vmatprep.subr.mxu0 %v369
    %5120 = vmatpush1.msra.mxu0 %v368
    %5121 = vmatprep.subr.mxu0 %v366
    %5122 = vmatpush1.msra.mxu0 %v365
    %5123 = vmatprep.subr.mxu0 %v363
    %5124 = vmatpush1.msra.mxu0 %v362
    %5125 = vmatprep.subr.mxu0 %v360
    %5126 = vmatpush1.msra.mxu0 %v359
    %5127 = vmatprep.subr.mxu0 %v357
    %5128 = vmatpush1.msra.mxu0 %v356
    %5129 = vmatprep.subr.mxu0 %v354
    %5130 = vmatpush1.msra.mxu0 %v353
    %5131 = vmatprep.subr.mxu0 %v351
    %5132 = vmatpush1.msra.mxu0 %v350
    %5133 = vmatprep.subr.mxu0 %v348
    %5134 = vmatpush1.msra.mxu0 %v347
    %5135 = vmatprep.subr.mxu0 %v345
    %5136 = vmatpush1.msra.mxu0 %v344
    %5137 = vmatprep.subr.mxu0 %v342
    %5138 = vmatpush1.msra.mxu0 %v341
    %5139 = vmatprep.subr.mxu0 %v339
    %5140 = vmatpush1.msra.mxu0 %v338
    %5141 = vmatprep.subr.mxu0 %v336
    %5142 = vmatpush1.msra.mxu0 %v335
    %5143 = vmatprep.subr.mxu0 %v333
    %5144 = vmatpush1.msra.mxu0 %v332
    %5145 = vmatprep.subr.mxu0 0.0
    %5146 = vmatpush2.msra.mxu0 0.0
    %5147 = vmatprep.subr.mxu0 0.0
    %5148 = vmatpush2.msra.mxu0 0.0
    %5149 = vmatprep.subr.mxu0 0.0
    %5150 = vmatpush2.msra.mxu0 0.0
    %5151 = vmatprep.subr.mxu0 0.0
    %5152 = vmatpush2.msra.mxu0 0.0
    %5153 = vmatprep.subr.mxu0 0.0
    %5154 = vmatpush2.msra.mxu0 0.0
    %5155 = vmatprep.subr.mxu0 0.0
    %5156 = vmatpush2.msra.mxu0 0.0
    %5157 = vmatprep.subr.mxu0 0.0
    %5158 = vmatpush2.msra.mxu0 0.0
    %5159 = vmatprep.subr.mxu0 0.0
    %5160 = vmatpush2.msra.mxu0 0.0
    %5161 = vmatprep.subr.mxu0 0.0
    %5162 = vmatpush2.msra.mxu0 0.0
    %5163 = vmatprep.subr.mxu0 0.0
    %5164 = vmatpush2.msra.mxu0 0.0
    %5165 = vmatprep.subr.mxu0 0.0
    %5166 = vmatpush2.msra.mxu0 0.0
    %5167 = vmatprep.subr.mxu0 0.0
    %5168 = vmatpush2.msra.mxu0 0.0
    %5169 = vmatprep.subr.mxu0 0.0
    %5170 = vmatpush2.msra.mxu0 0.0
    %5171 = vmatprep.subr.mxu0 0.0
    %5172 = vmatpush2.msra.mxu0 0.0
    %5173 = vmatprep.subr.mxu0 0.0
    %5174 = vmatpush2.msra.mxu0 0.0
    %5175 = vmatprep.subr.mxu0 0.0
    %5176 = vmatpush2.msra.mxu0 0.0
    %5177 = vmatprep.mubr.f32.mxu0 0.0
    %5178 = vmatmul.mubr.f32.gmra.mxu0 %v4508
    %v5179 = vpop.f32.mrf.mxu0
    %v5180 = vadd.f32 %v616, %v5179
    %v5181 = vpop.f32.mrf.mxu0
    %v5182 = vadd.f32 %v620, %v5181
    %5183 = vdwg.mxu0
    %5184 = vmatprep.subr.mxu0 0.0
    %5185 = vmatpush1.msra.mxu0 %v379
    %5186 = vmatprep.subr.mxu0 0.0
    %5187 = vmatpush1.msra.mxu0 %v376
    %5188 = vmatprep.subr.mxu0 0.0
    %5189 = vmatpush1.msra.mxu0 %v373
    %5190 = vmatprep.subr.mxu0 0.0
    %5191 = vmatpush1.msra.mxu0 %v370
    %5192 = vmatprep.subr.mxu0 0.0
    %5193 = vmatpush1.msra.mxu0 %v367
    %5194 = vmatprep.subr.mxu0 0.0
    %5195 = vmatpush1.msra.mxu0 %v364
    %5196 = vmatprep.subr.mxu0 0.0
    %5197 = vmatpush1.msra.mxu0 %v361
    %5198 = vmatprep.subr.mxu0 0.0
    %5199 = vmatpush1.msra.mxu0 %v358
    %5200 = vmatprep.subr.mxu0 0.0
    %5201 = vmatpush1.msra.mxu0 %v355
    %5202 = vmatprep.subr.mxu0 0.0
    %5203 = vmatpush1.msra.mxu0 %v352
    %5204 = vmatprep.subr.mxu0 0.0
    %5205 = vmatpush1.msra.mxu0 %v349
    %5206 = vmatprep.subr.mxu0 0.0
    %5207 = vmatpush1.msra.mxu0 %v346
    %5208 = vmatprep.subr.mxu0 0.0
    %5209 = vmatpush1.msra.mxu0 %v343
    %5210 = vmatprep.subr.mxu0 0.0
    %5211 = vmatpush1.msra.mxu0 %v340
    %5212 = vmatprep.subr.mxu0 0.0
    %5213 = vmatpush1.msra.mxu0 %v337
    %5214 = vmatprep.subr.mxu0 0.0
    %5215 = vmatpush1.msra.mxu0 %v334
    %5216 = vmatprep.subr.mxu0 0.0
    %5217 = vmatpush2.msra.mxu0 0.0
    %5218 = vmatprep.subr.mxu0 0.0
    %5219 = vmatpush2.msra.mxu0 0.0
    %5220 = vmatprep.subr.mxu0 0.0
    %5221 = vmatpush2.msra.mxu0 0.0
    %5222 = vmatprep.subr.mxu0 0.0
    %5223 = vmatpush2.msra.mxu0 0.0
    %5224 = vmatprep.subr.mxu0 0.0
    %5225 = vmatpush2.msra.mxu0 0.0
    %5226 = vmatprep.subr.mxu0 0.0
    %5227 = vmatpush2.msra.mxu0 0.0
    %5228 = vmatprep.subr.mxu0 0.0
    %5229 = vmatpush2.msra.mxu0 0.0
    %5230 = vmatprep.subr.mxu0 0.0
    %5231 = vmatpush2.msra.mxu0 0.0
    %5232 = vmatprep.subr.mxu0 0.0
    %5233 = vmatpush2.msra.mxu0 0.0
    %5234 = vmatprep.subr.mxu0 0.0
    %5235 = vmatpush2.msra.mxu0 0.0
    %5236 = vmatprep.subr.mxu0 0.0
    %5237 = vmatpush2.msra.mxu0 0.0
    %5238 = vmatprep.subr.mxu0 0.0
    %5239 = vmatpush2.msra.mxu0 0.0
    %5240 = vmatprep.subr.mxu0 0.0
    %5241 = vmatpush2.msra.mxu0 0.0
    %5242 = vmatprep.subr.mxu0 0.0
    %5243 = vmatpush2.msra.mxu0 0.0
    %5244 = vmatprep.subr.mxu0 0.0
    %5245 = vmatpush2.msra.mxu0 0.0
    %5246 = vmatprep.subr.mxu0 0.0
    %5247 = vmatpush2.msra.mxu0 0.0
    %5248 = vmatprep.mubr.f32.mxu0 0.0
    %5249 = vmatmul.mubr.f32.gmra.mxu0 %v4508
    %v5250 = vpop.f32.mrf.mxu0
    %v5251 = vadd.f32 %v624, %v5250
    %v5252 = vpop.f32.mrf.mxu0
    %5253 = vdwg.mxu0
    %v5254 = vadd.f32 %v223, %v5180
    %v5255 = vxor.u32 %v5254, 2147483648
    %v5256 = vmul.f32 %v5255, 1.442695
    %v5257 = vpow.pop %v5256
    %v5258 = vadd.f32 %v5257, 1.0
    %v5259 = vrcp.pop %v5258
    %v5260 = vmul.f32 1.0, %v5259
    %v5261 = vadd.f32 %v225, %v5182
    %v5262 = vxor.u32 %v5261, 2147483648
    %v5263 = vmul.f32 %v5262, 1.442695
    %v5264 = vpow.pop %v5263
    %v5265 = vadd.f32 %v5264, 1.0
    %v5266 = vrcp.pop %v5265
    %v5267 = vmul.f32 1.0, %v5266
    %v5268 = vmul.f32 %v5260, %v5251
    %v5269 = vadd.f32 %v329, %v5268
    %v5270 = vtanh.pop %v5269
    %v5271 = vsub.f32 %v4508, %v5270
    %v5272 = vmul.f32 %v5267, %v5271
    %v5273 = vadd.f32 %v5270, %v5272
    %5274 = vmatprep.subr.mxu0 %v524
    %5275 = vmatpush1.msra.mxu0 %v523
    %5276 = vmatprep.subr.mxu0 %v521
    %5277 = vmatpush1.msra.mxu0 %v520
    %5278 = vmatprep.subr.mxu0 %v518
    %5279 = vmatpush1.msra.mxu0 %v517
    %5280 = vmatprep.subr.mxu0 %v515
    %5281 = vmatpush1.msra.mxu0 %v514
    %5282 = vmatprep.subr.mxu0 %v512
    %5283 = vmatpush1.msra.mxu0 %v511
    %5284 = vmatprep.subr.mxu0 %v509
    %5285 = vmatpush1.msra.mxu0 %v508
    %5286 = vmatprep.subr.mxu0 %v506
    %5287 = vmatpush1.msra.mxu0 %v505
    %5288 = vmatprep.subr.mxu0 %v503
    %5289 = vmatpush1.msra.mxu0 %v502
    %5290 = vmatprep.subr.mxu0 %v500
    %5291 = vmatpush1.msra.mxu0 %v499
    %5292 = vmatprep.subr.mxu0 %v497
    %5293 = vmatpush1.msra.mxu0 %v496
    %5294 = vmatprep.subr.mxu0 %v494
    %5295 = vmatpush1.msra.mxu0 %v493
    %5296 = vmatprep.subr.mxu0 %v491
    %5297 = vmatpush1.msra.mxu0 %v490
    %5298 = vmatprep.subr.mxu0 %v488
    %5299 = vmatpush1.msra.mxu0 %v487
    %5300 = vmatprep.subr.mxu0 %v485
    %5301 = vmatpush1.msra.mxu0 %v484
    %5302 = vmatprep.subr.mxu0 %v482
    %5303 = vmatpush1.msra.mxu0 %v481
    %5304 = vmatprep.subr.mxu0 %v479
    %5305 = vmatpush1.msra.mxu0 %v478
    %5306 = vmatprep.subr.mxu0 0.0
    %5307 = vmatpush2.msra.mxu0 0.0
    %5308 = vmatprep.subr.mxu0 0.0
    %5309 = vmatpush2.msra.mxu0 0.0
    %5310 = vmatprep.subr.mxu0 0.0
    %5311 = vmatpush2.msra.mxu0 0.0
    %5312 = vmatprep.subr.mxu0 0.0
    %5313 = vmatpush2.msra.mxu0 0.0
    %5314 = vmatprep.subr.mxu0 0.0
    %5315 = vmatpush2.msra.mxu0 0.0
    %5316 = vmatprep.subr.mxu0 0.0
    %5317 = vmatpush2.msra.mxu0 0.0
    %5318 = vmatprep.subr.mxu0 0.0
    %5319 = vmatpush2.msra.mxu0 0.0
    %5320 = vmatprep.subr.mxu0 0.0
    %5321 = vmatpush2.msra.mxu0 0.0
    %5322 = vmatprep.subr.mxu0 0.0
    %5323 = vmatpush2.msra.mxu0 0.0
    %5324 = vmatprep.subr.mxu0 0.0
    %5325 = vmatpush2.msra.mxu0 0.0
    %5326 = vmatprep.subr.mxu0 0.0
    %5327 = vmatpush2.msra.mxu0 0.0
    %5328 = vmatprep.subr.mxu0 0.0
    %5329 = vmatpush2.msra.mxu0 0.0
    %5330 = vmatprep.subr.mxu0 0.0
    %5331 = vmatpush2.msra.mxu0 0.0
    %5332 = vmatprep.subr.mxu0 0.0
    %5333 = vmatpush2.msra.mxu0 0.0
    %5334 = vmatprep.subr.mxu0 0.0
    %5335 = vmatpush2.msra.mxu0 0.0
    %5336 = vmatprep.subr.mxu0 0.0
    %5337 = vmatpush2.msra.mxu0 0.0
    %5338 = vmatprep.mubr.f32.mxu0 0.0
    %5339 = vmatmul.mubr.f32.gmra.mxu0 %v4508
    %v5340 = vpop.f32.mrf.mxu0
    %v5341 = vadd.f32 %v581, %v5340
    %v5342 = vpop.f32.mrf.mxu0
    %v5343 = vadd.f32 %v585, %v5342
    %5344 = vdwg.mxu0
    %5345 = vmatprep.subr.mxu0 0.0
    %5346 = vmatpush1.msra.mxu0 %v525
    %5347 = vmatprep.subr.mxu0 0.0
    %5348 = vmatpush1.msra.mxu0 %v522
    %5349 = vmatprep.subr.mxu0 0.0
    %5350 = vmatpush1.msra.mxu0 %v519
    %5351 = vmatprep.subr.mxu0 0.0
    %5352 = vmatpush1.msra.mxu0 %v516
    %5353 = vmatprep.subr.mxu0 0.0
    %5354 = vmatpush1.msra.mxu0 %v513
    %5355 = vmatprep.subr.mxu0 0.0
    %5356 = vmatpush1.msra.mxu0 %v510
    %5357 = vmatprep.subr.mxu0 0.0
    %5358 = vmatpush1.msra.mxu0 %v507
    %5359 = vmatprep.subr.mxu0 0.0
    %5360 = vmatpush1.msra.mxu0 %v504
    %5361 = vmatprep.subr.mxu0 0.0
    %5362 = vmatpush1.msra.mxu0 %v501
    %5363 = vmatprep.subr.mxu0 0.0
    %5364 = vmatpush1.msra.mxu0 %v498
    %5365 = vmatprep.subr.mxu0 0.0
    %5366 = vmatpush1.msra.mxu0 %v495
    %5367 = vmatprep.subr.mxu0 0.0
    %5368 = vmatpush1.msra.mxu0 %v492
    %5369 = vmatprep.subr.mxu0 0.0
    %5370 = vmatpush1.msra.mxu0 %v489
    %5371 = vmatprep.subr.mxu0 0.0
    %5372 = vmatpush1.msra.mxu0 %v486
    %5373 = vmatprep.subr.mxu0 0.0
    %5374 = vmatpush1.msra.mxu0 %v483
    %5375 = vmatprep.subr.mxu0 0.0
    %5376 = vmatpush1.msra.mxu0 %v480
    %5377 = vmatprep.subr.mxu0 0.0
    %5378 = vmatpush2.msra.mxu0 0.0
    %5379 = vmatprep.subr.mxu0 0.0
    %5380 = vmatpush2.msra.mxu0 0.0
    %5381 = vmatprep.subr.mxu0 0.0
    %5382 = vmatpush2.msra.mxu0 0.0
    %5383 = vmatprep.subr.mxu0 0.0
    %5384 = vmatpush2.msra.mxu0 0.0
    %5385 = vmatprep.subr.mxu0 0.0
    %5386 = vmatpush2.msra.mxu0 0.0
    %5387 = vmatprep.subr.mxu0 0.0
    %5388 = vmatpush2.msra.mxu0 0.0
    %5389 = vmatprep.subr.mxu0 0.0
    %5390 = vmatpush2.msra.mxu0 0.0
    %5391 = vmatprep.subr.mxu0 0.0
    %5392 = vmatpush2.msra.mxu0 0.0
    %5393 = vmatprep.subr.mxu0 0.0
    %5394 = vmatpush2.msra.mxu0 0.0
    %5395 = vmatprep.subr.mxu0 0.0
    %5396 = vmatpush2.msra.mxu0 0.0
    %5397 = vmatprep.subr.mxu0 0.0
    %5398 = vmatpush2.msra.mxu0 0.0
    %5399 = vmatprep.subr.mxu0 0.0
    %5400 = vmatpush2.msra.mxu0 0.0
    %5401 = vmatprep.subr.mxu0 0.0
    %5402 = vmatpush2.msra.mxu0 0.0
    %5403 = vmatprep.subr.mxu0 0.0
    %5404 = vmatpush2.msra.mxu0 0.0
    %5405 = vmatprep.subr.mxu0 0.0
    %5406 = vmatpush2.msra.mxu0 0.0
    %5407 = vmatprep.subr.mxu0 0.0
    %5408 = vmatpush2.msra.mxu0 0.0
    %5409 = vmatprep.mubr.f32.mxu0 0.0
    %5410 = vmatmul.mubr.f32.gmra.mxu0 %v4508
    %v5411 = vpop.f32.mrf.mxu0
    %v5412 = vadd.f32 %v589, %v5411
    %v5413 = vpop.f32.mrf.mxu0
    %5414 = vdwg.mxu0
    %5415 = vmatprep.subr.mxu0 %v427
    %5416 = vmatpush1.msra.mxu0 %v426
    %5417 = vmatprep.subr.mxu0 %v424
    %5418 = vmatpush1.msra.mxu0 %v423
    %5419 = vmatprep.subr.mxu0 %v421
    %5420 = vmatpush1.msra.mxu0 %v420
    %5421 = vmatprep.subr.mxu0 %v418
    %5422 = vmatpush1.msra.mxu0 %v417
    %5423 = vmatprep.subr.mxu0 %v415
    %5424 = vmatpush1.msra.mxu0 %v414
    %5425 = vmatprep.subr.mxu0 %v412
    %5426 = vmatpush1.msra.mxu0 %v411
    %5427 = vmatprep.subr.mxu0 %v409
    %5428 = vmatpush1.msra.mxu0 %v408
    %5429 = vmatprep.subr.mxu0 %v406
    %5430 = vmatpush1.msra.mxu0 %v405
    %5431 = vmatprep.subr.mxu0 %v403
    %5432 = vmatpush1.msra.mxu0 %v402
    %5433 = vmatprep.subr.mxu0 %v400
    %5434 = vmatpush1.msra.mxu0 %v399
    %5435 = vmatprep.subr.mxu0 %v397
    %5436 = vmatpush1.msra.mxu0 %v396
    %5437 = vmatprep.subr.mxu0 %v394
    %5438 = vmatpush1.msra.mxu0 %v393
    %5439 = vmatprep.subr.mxu0 %v391
    %5440 = vmatpush1.msra.mxu0 %v390
    %5441 = vmatprep.subr.mxu0 %v388
    %5442 = vmatpush1.msra.mxu0 %v387
    %5443 = vmatprep.subr.mxu0 %v385
    %5444 = vmatpush1.msra.mxu0 %v384
    %5445 = vmatprep.subr.mxu0 %v382
    %5446 = vmatpush1.msra.mxu0 %v381
    %5447 = vmatprep.subr.mxu0 0.0
    %5448 = vmatpush2.msra.mxu0 0.0
    %5449 = vmatprep.subr.mxu0 0.0
    %5450 = vmatpush2.msra.mxu0 0.0
    %5451 = vmatprep.subr.mxu0 0.0
    %5452 = vmatpush2.msra.mxu0 0.0
    %5453 = vmatprep.subr.mxu0 0.0
    %5454 = vmatpush2.msra.mxu0 0.0
    %5455 = vmatprep.subr.mxu0 0.0
    %5456 = vmatpush2.msra.mxu0 0.0
    %5457 = vmatprep.subr.mxu0 0.0
    %5458 = vmatpush2.msra.mxu0 0.0
    %5459 = vmatprep.subr.mxu0 0.0
    %5460 = vmatpush2.msra.mxu0 0.0
    %5461 = vmatprep.subr.mxu0 0.0
    %5462 = vmatpush2.msra.mxu0 0.0
    %5463 = vmatprep.subr.mxu0 0.0
    %5464 = vmatpush2.msra.mxu0 0.0
    %5465 = vmatprep.subr.mxu0 0.0
    %5466 = vmatpush2.msra.mxu0 0.0
    %5467 = vmatprep.subr.mxu0 0.0
    %5468 = vmatpush2.msra.mxu0 0.0
    %5469 = vmatprep.subr.mxu0 0.0
    %5470 = vmatpush2.msra.mxu0 0.0
    %5471 = vmatprep.subr.mxu0 0.0
    %5472 = vmatpush2.msra.mxu0 0.0
    %5473 = vmatprep.subr.mxu0 0.0
    %5474 = vmatpush2.msra.mxu0 0.0
    %5475 = vmatprep.subr.mxu0 0.0
    %5476 = vmatpush2.msra.mxu0 0.0
    %5477 = vmatprep.subr.mxu0 0.0
    %5478 = vmatpush2.msra.mxu0 0.0
    %5479 = vmatprep.mubr.f32.mxu0 0.0
    %5480 = vmatmul.mubr.f32.gmra.mxu0 %v4810
    %v5481 = vpop.f32.mrf.mxu0
    %v5482 = vadd.f32 %v634, %v5481
    %v5483 = vpop.f32.mrf.mxu0
    %v5484 = vadd.f32 %v638, %v5483
    %5485 = vdwg.mxu0
    %5486 = vmatprep.subr.mxu0 0.0
    %5487 = vmatpush1.msra.mxu0 %v428
    %5488 = vmatprep.subr.mxu0 0.0
    %5489 = vmatpush1.msra.mxu0 %v425
    %5490 = vmatprep.subr.mxu0 0.0
    %5491 = vmatpush1.msra.mxu0 %v422
    %5492 = vmatprep.subr.mxu0 0.0
    %5493 = vmatpush1.msra.mxu0 %v419
    %5494 = vmatprep.subr.mxu0 0.0
    %5495 = vmatpush1.msra.mxu0 %v416
    %5496 = vmatprep.subr.mxu0 0.0
    %5497 = vmatpush1.msra.mxu0 %v413
    %5498 = vmatprep.subr.mxu0 0.0
    %5499 = vmatpush1.msra.mxu0 %v410
    %5500 = vmatprep.subr.mxu0 0.0
    %5501 = vmatpush1.msra.mxu0 %v407
    %5502 = vmatprep.subr.mxu0 0.0
    %5503 = vmatpush1.msra.mxu0 %v404
    %5504 = vmatprep.subr.mxu0 0.0
    %5505 = vmatpush1.msra.mxu0 %v401
    %5506 = vmatprep.subr.mxu0 0.0
    %5507 = vmatpush1.msra.mxu0 %v398
    %5508 = vmatprep.subr.mxu0 0.0
    %5509 = vmatpush1.msra.mxu0 %v395
    %5510 = vmatprep.subr.mxu0 0.0
    %5511 = vmatpush1.msra.mxu0 %v392
    %5512 = vmatprep.subr.mxu0 0.0
    %5513 = vmatpush1.msra.mxu0 %v389
    %5514 = vmatprep.subr.mxu0 0.0
    %5515 = vmatpush1.msra.mxu0 %v386
    %5516 = vmatprep.subr.mxu0 0.0
    %5517 = vmatpush1.msra.mxu0 %v383
    %5518 = vmatprep.subr.mxu0 0.0
    %5519 = vmatpush2.msra.mxu0 0.0
    %5520 = vmatprep.subr.mxu0 0.0
    %5521 = vmatpush2.msra.mxu0 0.0
    %5522 = vmatprep.subr.mxu0 0.0
    %5523 = vmatpush2.msra.mxu0 0.0
    %5524 = vmatprep.subr.mxu0 0.0
    %5525 = vmatpush2.msra.mxu0 0.0
    %5526 = vmatprep.subr.mxu0 0.0
    %5527 = vmatpush2.msra.mxu0 0.0
    %5528 = vmatprep.subr.mxu0 0.0
    %5529 = vmatpush2.msra.mxu0 0.0
    %5530 = vmatprep.subr.mxu0 0.0
    %5531 = vmatpush2.msra.mxu0 0.0
    %5532 = vmatprep.subr.mxu0 0.0
    %5533 = vmatpush2.msra.mxu0 0.0
    %5534 = vmatprep.subr.mxu0 0.0
    %5535 = vmatpush2.msra.mxu0 0.0
    %5536 = vmatprep.subr.mxu0 0.0
    %5537 = vmatpush2.msra.mxu0 0.0
    %5538 = vmatprep.subr.mxu0 0.0
    %5539 = vmatpush2.msra.mxu0 0.0
    %5540 = vmatprep.subr.mxu0 0.0
    %5541 = vmatpush2.msra.mxu0 0.0
    %5542 = vmatprep.subr.mxu0 0.0
    %5543 = vmatpush2.msra.mxu0 0.0
    %5544 = vmatprep.subr.mxu0 0.0
    %5545 = vmatpush2.msra.mxu0 0.0
    %5546 = vmatprep.subr.mxu0 0.0
    %5547 = vmatpush2.msra.mxu0 0.0
    %5548 = vmatprep.subr.mxu0 0.0
    %5549 = vmatpush2.msra.mxu0 0.0
    %5550 = vmatprep.mubr.f32.mxu0 0.0
    %5551 = vmatmul.mubr.f32.gmra.mxu0 %v4810
    %v5552 = vpop.f32.mrf.mxu0
    %v5553 = vadd.f32 %v642, %v5552
    %v5554 = vpop.f32.mrf.mxu0
    %5555 = vdwg.mxu0
    %v5556 = vadd.f32 %v5341, %v5482
    %v5557 = vxor.u32 %v5556, 2147483648
    %v5558 = vmul.f32 %v5557, 1.442695
    %v5559 = vpow.pop %v5558
    %v5560 = vadd.f32 %v5559, 1.0
    %v5561 = vrcp.pop %v5560
    %v5562 = vmul.f32 1.0, %v5561
    %v5563 = vadd.f32 %v5343, %v5484
    %v5564 = vxor.u32 %v5563, 2147483648
    %v5565 = vmul.f32 %v5564, 1.442695
    %v5566 = vpow.pop %v5565
    %v5567 = vadd.f32 %v5566, 1.0
    %v5568 = vrcp.pop %v5567
    %v5569 = vmul.f32 1.0, %v5568
    %v5570 = vmul.f32 %v5562, %v5553
    %v5571 = vadd.f32 %v5412, %v5570
    %v5572 = vtanh.pop %v5571
    %v5573 = vsub.f32 %v4810, %v5572
    %v5574 = vmul.f32 %v5569, %v5573
    %v5575 = vadd.f32 %v5572, %v5574
    %5576 = vmatprep.subr.mxu0 %v573
    %5577 = vmatpush1.msra.mxu0 %v572
    %5578 = vmatprep.subr.mxu0 %v570
    %5579 = vmatpush1.msra.mxu0 %v569
    %5580 = vmatprep.subr.mxu0 %v567
    %5581 = vmatpush1.msra.mxu0 %v566
    %5582 = vmatprep.subr.mxu0 %v564
    %5583 = vmatpush1.msra.mxu0 %v563
    %5584 = vmatprep.subr.mxu0 %v561
    %5585 = vmatpush1.msra.mxu0 %v560
    %5586 = vmatprep.subr.mxu0 %v558
    %5587 = vmatpush1.msra.mxu0 %v557
    %5588 = vmatprep.subr.mxu0 %v555
    %5589 = vmatpush1.msra.mxu0 %v554
    %5590 = vmatprep.subr.mxu0 %v552
    %5591 = vmatpush1.msra.mxu0 %v551
    %5592 = vmatprep.subr.mxu0 %v549
    %5593 = vmatpush1.msra.mxu0 %v548
    %5594 = vmatprep.subr.mxu0 %v546
    %5595 = vmatpush1.msra.mxu0 %v545
    %5596 = vmatprep.subr.mxu0 %v543
    %5597 = vmatpush1.msra.mxu0 %v542
    %5598 = vmatprep.subr.mxu0 %v540
    %5599 = vmatpush1.msra.mxu0 %v539
    %5600 = vmatprep.subr.mxu0 %v537
    %5601 = vmatpush1.msra.mxu0 %v536
    %5602 = vmatprep.subr.mxu0 %v534
    %5603 = vmatpush1.msra.mxu0 %v533
    %5604 = vmatprep.subr.mxu0 %v531
    %5605 = vmatpush1.msra.mxu0 %v530
    %5606 = vmatprep.subr.mxu0 %v528
    %5607 = vmatpush1.msra.mxu0 %v527
    %5608 = vmatprep.subr.mxu0 0.0
    %5609 = vmatpush2.msra.mxu0 0.0
    %5610 = vmatprep.subr.mxu0 0.0
    %5611 = vmatpush2.msra.mxu0 0.0
    %5612 = vmatprep.subr.mxu0 0.0
    %5613 = vmatpush2.msra.mxu0 0.0
    %5614 = vmatprep.subr.mxu0 0.0
    %5615 = vmatpush2.msra.mxu0 0.0
    %5616 = vmatprep.subr.mxu0 0.0
    %5617 = vmatpush2.msra.mxu0 0.0
    %5618 = vmatprep.subr.mxu0 0.0
    %5619 = vmatpush2.msra.mxu0 0.0
    %5620 = vmatprep.subr.mxu0 0.0
    %5621 = vmatpush2.msra.mxu0 0.0
    %5622 = vmatprep.subr.mxu0 0.0
    %5623 = vmatpush2.msra.mxu0 0.0
    %5624 = vmatprep.subr.mxu0 0.0
    %5625 = vmatpush2.msra.mxu0 0.0
    %5626 = vmatprep.subr.mxu0 0.0
    %5627 = vmatpush2.msra.mxu0 0.0
    %5628 = vmatprep.subr.mxu0 0.0
    %5629 = vmatpush2.msra.mxu0 0.0
    %5630 = vmatprep.subr.mxu0 0.0
    %5631 = vmatpush2.msra.mxu0 0.0
    %5632 = vmatprep.subr.mxu0 0.0
    %5633 = vmatpush2.msra.mxu0 0.0
    %5634 = vmatprep.subr.mxu0 0.0
    %5635 = vmatpush2.msra.mxu0 0.0
    %5636 = vmatprep.subr.mxu0 0.0
    %5637 = vmatpush2.msra.mxu0 0.0
    %5638 = vmatprep.subr.mxu0 0.0
    %5639 = vmatpush2.msra.mxu0 0.0
    %5640 = vmatprep.mubr.f32.mxu0 0.0
    %5641 = vmatmul.mubr.f32.gmra.mxu0 %v4810
    %v5642 = vpop.f32.mrf.mxu0
    %v5643 = vadd.f32 %v599, %v5642
    %v5644 = vpop.f32.mrf.mxu0
    %v5645 = vadd.f32 %v603, %v5644
    %5646 = vdwg.mxu0
    %5647 = vmatprep.subr.mxu0 0.0
    %5648 = vmatpush1.msra.mxu0 %v574
    %5649 = vmatprep.subr.mxu0 0.0
    %5650 = vmatpush1.msra.mxu0 %v571
    %5651 = vmatprep.subr.mxu0 0.0
    %5652 = vmatpush1.msra.mxu0 %v568
    %5653 = vmatprep.subr.mxu0 0.0
    %5654 = vmatpush1.msra.mxu0 %v565
    %5655 = vmatprep.subr.mxu0 0.0
    %5656 = vmatpush1.msra.mxu0 %v562
    %5657 = vmatprep.subr.mxu0 0.0
    %5658 = vmatpush1.msra.mxu0 %v559
    %5659 = vmatprep.subr.mxu0 0.0
    %5660 = vmatpush1.msra.mxu0 %v556
    %5661 = vmatprep.subr.mxu0 0.0
    %5662 = vmatpush1.msra.mxu0 %v553
    %5663 = vmatprep.subr.mxu0 0.0
    %5664 = vmatpush1.msra.mxu0 %v550
    %5665 = vmatprep.subr.mxu0 0.0
    %5666 = vmatpush1.msra.mxu0 %v547
    %5667 = vmatprep.subr.mxu0 0.0
    %5668 = vmatpush1.msra.mxu0 %v544
    %5669 = vmatprep.subr.mxu0 0.0
    %5670 = vmatpush1.msra.mxu0 %v541
    %5671 = vmatprep.subr.mxu0 0.0
    %5672 = vmatpush1.msra.mxu0 %v538
    %5673 = vmatprep.subr.mxu0 0.0
    %5674 = vmatpush1.msra.mxu0 %v535
    %5675 = vmatprep.subr.mxu0 0.0
    %5676 = vmatpush1.msra.mxu0 %v532
    %5677 = vmatprep.subr.mxu0 0.0
    %5678 = vmatpush1.msra.mxu0 %v529
    %5679 = vmatprep.subr.mxu0 0.0
    %5680 = vmatpush2.msra.mxu0 0.0
    %5681 = vmatprep.subr.mxu0 0.0
    %5682 = vmatpush2.msra.mxu0 0.0
    %5683 = vmatprep.subr.mxu0 0.0
    %5684 = vmatpush2.msra.mxu0 0.0
    %5685 = vmatprep.subr.mxu0 0.0
    %5686 = vmatpush2.msra.mxu0 0.0
    %5687 = vmatprep.subr.mxu0 0.0
    %5688 = vmatpush2.msra.mxu0 0.0
    %5689 = vmatprep.subr.mxu0 0.0
    %5690 = vmatpush2.msra.mxu0 0.0
    %5691 = vmatprep.subr.mxu0 0.0
    %5692 = vmatpush2.msra.mxu0 0.0
    %5693 = vmatprep.subr.mxu0 0.0
    %5694 = vmatpush2.msra.mxu0 0.0
    %5695 = vmatprep.subr.mxu0 0.0
    %5696 = vmatpush2.msra.mxu0 0.0
    %5697 = vmatprep.subr.mxu0 0.0
    %5698 = vmatpush2.msra.mxu0 0.0
    %5699 = vmatprep.subr.mxu0 0.0
    %5700 = vmatpush2.msra.mxu0 0.0
    %5701 = vmatprep.subr.mxu0 0.0
    %5702 = vmatpush2.msra.mxu0 0.0
    %5703 = vmatprep.subr.mxu0 0.0
    %5704 = vmatpush2.msra.mxu0 0.0
    %5705 = vmatprep.subr.mxu0 0.0
    %5706 = vmatpush2.msra.mxu0 0.0
    %5707 = vmatprep.subr.mxu0 0.0
    %5708 = vmatpush2.msra.mxu0 0.0
    %5709 = vmatprep.subr.mxu0 0.0
    %5710 = vmatpush2.msra.mxu0 0.0
    %5711 = vmatprep.mubr.f32.mxu0 0.0
    %5712 = vmatmul.mubr.f32.gmra.mxu0 %v4810
    %v5713 = vpop.f32.mrf.mxu0
    %v5714 = vadd.f32 %v607, %v5713
    %v5715 = vpop.f32.mrf.mxu0
    %5716 = vdwg.mxu0
    %5717 = vmatprep.subr.mxu0 %v476
    %5718 = vmatpush1.msra.mxu0 %v475
    %5719 = vmatprep.subr.mxu0 %v473
    %5720 = vmatpush1.msra.mxu0 %v472
    %5721 = vmatprep.subr.mxu0 %v470
    %5722 = vmatpush1.msra.mxu0 %v469
    %5723 = vmatprep.subr.mxu0 %v467
    %5724 = vmatpush1.msra.mxu0 %v466
    %5725 = vmatprep.subr.mxu0 %v464
    %5726 = vmatpush1.msra.mxu0 %v463
    %5727 = vmatprep.subr.mxu0 %v461
    %5728 = vmatpush1.msra.mxu0 %v460
    %5729 = vmatprep.subr.mxu0 %v458
    %5730 = vmatpush1.msra.mxu0 %v457
    %5731 = vmatprep.subr.mxu0 %v455
    %5732 = vmatpush1.msra.mxu0 %v454
    %5733 = vmatprep.subr.mxu0 %v452
    %5734 = vmatpush1.msra.mxu0 %v451
    %5735 = vmatprep.subr.mxu0 %v449
    %5736 = vmatpush1.msra.mxu0 %v448
    %5737 = vmatprep.subr.mxu0 %v446
    %5738 = vmatpush1.msra.mxu0 %v445
    %5739 = vmatprep.subr.mxu0 %v443
    %5740 = vmatpush1.msra.mxu0 %v442
    %5741 = vmatprep.subr.mxu0 %v440
    %5742 = vmatpush1.msra.mxu0 %v439
    %5743 = vmatprep.subr.mxu0 %v437
    %5744 = vmatpush1.msra.mxu0 %v436
    %5745 = vmatprep.subr.mxu0 %v434
    %5746 = vmatpush1.msra.mxu0 %v433
    %5747 = vmatprep.subr.mxu0 %v431
    %5748 = vmatpush1.msra.mxu0 %v430
    %5749 = vmatprep.subr.mxu0 0.0
    %5750 = vmatpush2.msra.mxu0 0.0
    %5751 = vmatprep.subr.mxu0 0.0
    %5752 = vmatpush2.msra.mxu0 0.0
    %5753 = vmatprep.subr.mxu0 0.0
    %5754 = vmatpush2.msra.mxu0 0.0
    %5755 = vmatprep.subr.mxu0 0.0
    %5756 = vmatpush2.msra.mxu0 0.0
    %5757 = vmatprep.subr.mxu0 0.0
    %5758 = vmatpush2.msra.mxu0 0.0
    %5759 = vmatprep.subr.mxu0 0.0
    %5760 = vmatpush2.msra.mxu0 0.0
    %5761 = vmatprep.subr.mxu0 0.0
    %5762 = vmatpush2.msra.mxu0 0.0
    %5763 = vmatprep.subr.mxu0 0.0
    %5764 = vmatpush2.msra.mxu0 0.0
    %5765 = vmatprep.subr.mxu0 0.0
    %5766 = vmatpush2.msra.mxu0 0.0
    %5767 = vmatprep.subr.mxu0 0.0
    %5768 = vmatpush2.msra.mxu0 0.0
    %5769 = vmatprep.subr.mxu0 0.0
    %5770 = vmatpush2.msra.mxu0 0.0
    %5771 = vmatprep.subr.mxu0 0.0
    %5772 = vmatpush2.msra.mxu0 0.0
    %5773 = vmatprep.subr.mxu0 0.0
    %5774 = vmatpush2.msra.mxu0 0.0
    %5775 = vmatprep.subr.mxu0 0.0
    %5776 = vmatpush2.msra.mxu0 0.0
    %5777 = vmatprep.subr.mxu0 0.0
    %5778 = vmatpush2.msra.mxu0 0.0
    %5779 = vmatprep.subr.mxu0 0.0
    %5780 = vmatpush2.msra.mxu0 0.0
    %5781 = vmatprep.mubr.f32.mxu0 0.0
    %5782 = vmatmul.mubr.f32.gmra.mxu0 %v5112
    %v5783 = vpop.f32.mrf.mxu0
    %v5784 = vadd.f32 %v652, %v5783
    %v5785 = vpop.f32.mrf.mxu0
    %v5786 = vadd.f32 %v656, %v5785
    %5787 = vdwg.mxu0
    %5788 = vmatprep.subr.mxu0 0.0
    %5789 = vmatpush1.msra.mxu0 %v477
    %5790 = vmatprep.subr.mxu0 0.0
    %5791 = vmatpush1.msra.mxu0 %v474
    %5792 = vmatprep.subr.mxu0 0.0
    %5793 = vmatpush1.msra.mxu0 %v471
    %5794 = vmatprep.subr.mxu0 0.0
    %5795 = vmatpush1.msra.mxu0 %v468
    %5796 = vmatprep.subr.mxu0 0.0
    %5797 = vmatpush1.msra.mxu0 %v465
    %5798 = vmatprep.subr.mxu0 0.0
    %5799 = vmatpush1.msra.mxu0 %v462
    %5800 = vmatprep.subr.mxu0 0.0
    %5801 = vmatpush1.msra.mxu0 %v459
    %5802 = vmatprep.subr.mxu0 0.0
    %5803 = vmatpush1.msra.mxu0 %v456
    %5804 = vmatprep.subr.mxu0 0.0
    %5805 = vmatpush1.msra.mxu0 %v453
    %5806 = vmatprep.subr.mxu0 0.0
    %5807 = vmatpush1.msra.mxu0 %v450
    %5808 = vmatprep.subr.mxu0 0.0
    %5809 = vmatpush1.msra.mxu0 %v447
    %5810 = vmatprep.subr.mxu0 0.0
    %5811 = vmatpush1.msra.mxu0 %v444
    %5812 = vmatprep.subr.mxu0 0.0
    %5813 = vmatpush1.msra.mxu0 %v441
    %5814 = vmatprep.subr.mxu0 0.0
    %5815 = vmatpush1.msra.mxu0 %v438
    %5816 = vmatprep.subr.mxu0 0.0
    %5817 = vmatpush1.msra.mxu0 %v435
    %5818 = vmatprep.subr.mxu0 0.0
    %5819 = vmatpush1.msra.mxu0 %v432
    %5820 = vmatprep.subr.mxu0 0.0
    %5821 = vmatpush2.msra.mxu0 0.0
    %5822 = vmatprep.subr.mxu0 0.0
    %5823 = vmatpush2.msra.mxu0 0.0
    %5824 = vmatprep.subr.mxu0 0.0
    %5825 = vmatpush2.msra.mxu0 0.0
    %5826 = vmatprep.subr.mxu0 0.0
    %5827 = vmatpush2.msra.mxu0 0.0
    %5828 = vmatprep.subr.mxu0 0.0
    %5829 = vmatpush2.msra.mxu0 0.0
    %5830 = vmatprep.subr.mxu0 0.0
    %5831 = vmatpush2.msra.mxu0 0.0
    %5832 = vmatprep.subr.mxu0 0.0
    %5833 = vmatpush2.msra.mxu0 0.0
    %5834 = vmatprep.subr.mxu0 0.0
    %5835 = vmatpush2.msra.mxu0 0.0
    %5836 = vmatprep.subr.mxu0 0.0
    %5837 = vmatpush2.msra.mxu0 0.0
    %5838 = vmatprep.subr.mxu0 0.0
    %5839 = vmatpush2.msra.mxu0 0.0
    %5840 = vmatprep.subr.mxu0 0.0
    %5841 = vmatpush2.msra.mxu0 0.0
    %5842 = vmatprep.subr.mxu0 0.0
    %5843 = vmatpush2.msra.mxu0 0.0
    %5844 = vmatprep.subr.mxu0 0.0
    %5845 = vmatpush2.msra.mxu0 0.0
    %5846 = vmatprep.subr.mxu0 0.0
    %5847 = vmatpush2.msra.mxu0 0.0
    %5848 = vmatprep.subr.mxu0 0.0
    %5849 = vmatpush2.msra.mxu0 0.0
    %5850 = vmatprep.subr.mxu0 0.0
    %5851 = vmatpush2.msra.mxu0 0.0
    %5852 = vmatprep.mubr.f32.mxu0 0.0
    %5853 = vmatmul.mubr.f32.gmra.mxu0 %v5112
    %v5854 = vpop.f32.mrf.mxu0
    %v5855 = vadd.f32 %v660, %v5854
    %v5856 = vpop.f32.mrf.mxu0
    %5857 = vdwg.mxu0
    %v5858 = vadd.f32 %v5643, %v5784
    %v5859 = vxor.u32 %v5858, 2147483648
    %v5860 = vmul.f32 %v5859, 1.442695
    %v5861 = vpow.pop %v5860
    %v5862 = vadd.f32 %v5861, 1.0
    %v5863 = vrcp.pop %v5862
    %v5864 = vmul.f32 1.0, %v5863
    %v5865 = vadd.f32 %v5645, %v5786
    %v5866 = vxor.u32 %v5865, 2147483648
    %v5867 = vmul.f32 %v5866, 1.442695
    %v5868 = vpow.pop %v5867
    %v5869 = vadd.f32 %v5868, 1.0
    %v5870 = vrcp.pop %v5869
    %v5871 = vmul.f32 1.0, %v5870
    %v5872 = vmul.f32 %v5864, %v5855
    %v5873 = vadd.f32 %v5714, %v5872
    %v5874 = vtanh.pop %v5873
    %v5875 = vsub.f32 %v5112, %v5874
    %v5876 = vmul.f32 %v5871, %v5875
    %v5877 = vadd.f32 %v5874, %v5876
    %5878 = vmatprep.subr.mxu0 %v524
    %5879 = vmatpush1.msra.mxu0 %v523
    %5880 = vmatprep.subr.mxu0 %v521
    %5881 = vmatpush1.msra.mxu0 %v520
    %5882 = vmatprep.subr.mxu0 %v518
    %5883 = vmatpush1.msra.mxu0 %v517
    %5884 = vmatprep.subr.mxu0 %v515
    %5885 = vmatpush1.msra.mxu0 %v514
    %5886 = vmatprep.subr.mxu0 %v512
    %5887 = vmatpush1.msra.mxu0 %v511
    %5888 = vmatprep.subr.mxu0 %v509
    %5889 = vmatpush1.msra.mxu0 %v508
    %5890 = vmatprep.subr.mxu0 %v506
    %5891 = vmatpush1.msra.mxu0 %v505
    %5892 = vmatprep.subr.mxu0 %v503
    %5893 = vmatpush1.msra.mxu0 %v502
    %5894 = vmatprep.subr.mxu0 %v500
    %5895 = vmatpush1.msra.mxu0 %v499
    %5896 = vmatprep.subr.mxu0 %v497
    %5897 = vmatpush1.msra.mxu0 %v496
    %5898 = vmatprep.subr.mxu0 %v494
    %5899 = vmatpush1.msra.mxu0 %v493
    %5900 = vmatprep.subr.mxu0 %v491
    %5901 = vmatpush1.msra.mxu0 %v490
    %5902 = vmatprep.subr.mxu0 %v488
    %5903 = vmatpush1.msra.mxu0 %v487
    %5904 = vmatprep.subr.mxu0 %v485
    %5905 = vmatpush1.msra.mxu0 %v484
    %5906 = vmatprep.subr.mxu0 %v482
    %5907 = vmatpush1.msra.mxu0 %v481
    %5908 = vmatprep.subr.mxu0 %v479
    %5909 = vmatpush1.msra.mxu0 %v478
    %5910 = vmatprep.subr.mxu0 0.0
    %5911 = vmatpush2.msra.mxu0 0.0
    %5912 = vmatprep.subr.mxu0 0.0
    %5913 = vmatpush2.msra.mxu0 0.0
    %5914 = vmatprep.subr.mxu0 0.0
    %5915 = vmatpush2.msra.mxu0 0.0
    %5916 = vmatprep.subr.mxu0 0.0
    %5917 = vmatpush2.msra.mxu0 0.0
    %5918 = vmatprep.subr.mxu0 0.0
    %5919 = vmatpush2.msra.mxu0 0.0
    %5920 = vmatprep.subr.mxu0 0.0
    %5921 = vmatpush2.msra.mxu0 0.0
    %5922 = vmatprep.subr.mxu0 0.0
    %5923 = vmatpush2.msra.mxu0 0.0
    %5924 = vmatprep.subr.mxu0 0.0
    %5925 = vmatpush2.msra.mxu0 0.0
    %5926 = vmatprep.subr.mxu0 0.0
    %5927 = vmatpush2.msra.mxu0 0.0
    %5928 = vmatprep.subr.mxu0 0.0
    %5929 = vmatpush2.msra.mxu0 0.0
    %5930 = vmatprep.subr.mxu0 0.0
    %5931 = vmatpush2.msra.mxu0 0.0
    %5932 = vmatprep.subr.mxu0 0.0
    %5933 = vmatpush2.msra.mxu0 0.0
    %5934 = vmatprep.subr.mxu0 0.0
    %5935 = vmatpush2.msra.mxu0 0.0
    %5936 = vmatprep.subr.mxu0 0.0
    %5937 = vmatpush2.msra.mxu0 0.0
    %5938 = vmatprep.subr.mxu0 0.0
    %5939 = vmatpush2.msra.mxu0 0.0
    %5940 = vmatprep.subr.mxu0 0.0
    %5941 = vmatpush2.msra.mxu0 0.0
    %5942 = vmatprep.mubr.f32.mxu0 0.0
    %5943 = vmatmul.mubr.f32.gmra.mxu0 %v5273
    %v5944 = vpop.f32.mrf.mxu0
    %v5945 = vadd.f32 %v581, %v5944
    %v5946 = vpop.f32.mrf.mxu0
    %v5947 = vadd.f32 %v585, %v5946
    %5948 = vdwg.mxu0
    %5949 = vmatprep.subr.mxu0 0.0
    %5950 = vmatpush1.msra.mxu0 %v525
    %5951 = vmatprep.subr.mxu0 0.0
    %5952 = vmatpush1.msra.mxu0 %v522
    %5953 = vmatprep.subr.mxu0 0.0
    %5954 = vmatpush1.msra.mxu0 %v519
    %5955 = vmatprep.subr.mxu0 0.0
    %5956 = vmatpush1.msra.mxu0 %v516
    %5957 = vmatprep.subr.mxu0 0.0
    %5958 = vmatpush1.msra.mxu0 %v513
    %5959 = vmatprep.subr.mxu0 0.0
    %5960 = vmatpush1.msra.mxu0 %v510
    %5961 = vmatprep.subr.mxu0 0.0
    %5962 = vmatpush1.msra.mxu0 %v507
    %5963 = vmatprep.subr.mxu0 0.0
    %5964 = vmatpush1.msra.mxu0 %v504
    %5965 = vmatprep.subr.mxu0 0.0
    %5966 = vmatpush1.msra.mxu0 %v501
    %5967 = vmatprep.subr.mxu0 0.0
    %5968 = vmatpush1.msra.mxu0 %v498
    %5969 = vmatprep.subr.mxu0 0.0
    %5970 = vmatpush1.msra.mxu0 %v495
    %5971 = vmatprep.subr.mxu0 0.0
    %5972 = vmatpush1.msra.mxu0 %v492
    %5973 = vmatprep.subr.mxu0 0.0
    %5974 = vmatpush1.msra.mxu0 %v489
    %5975 = vmatprep.subr.mxu0 0.0
    %5976 = vmatpush1.msra.mxu0 %v486
    %5977 = vmatprep.subr.mxu0 0.0
    %5978 = vmatpush1.msra.mxu0 %v483
    %5979 = vmatprep.subr.mxu0 0.0
    %5980 = vmatpush1.msra.mxu0 %v480
    %5981 = vmatprep.subr.mxu0 0.0
    %5982 = vmatpush2.msra.mxu0 0.0
    %5983 = vmatprep.subr.mxu0 0.0
    %5984 = vmatpush2.msra.mxu0 0.0
    %5985 = vmatprep.subr.mxu0 0.0
    %5986 = vmatpush2.msra.mxu0 0.0
    %5987 = vmatprep.subr.mxu0 0.0
    %5988 = vmatpush2.msra.mxu0 0.0
    %5989 = vmatprep.subr.mxu0 0.0
    %5990 = vmatpush2.msra.mxu0 0.0
    %5991 = vmatprep.subr.mxu0 0.0
    %5992 = vmatpush2.msra.mxu0 0.0
    %5993 = vmatprep.subr.mxu0 0.0
    %5994 = vmatpush2.msra.mxu0 0.0
    %5995 = vmatprep.subr.mxu0 0.0
    %5996 = vmatpush2.msra.mxu0 0.0
    %5997 = vmatprep.subr.mxu0 0.0
    %5998 = vmatpush2.msra.mxu0 0.0
    %5999 = vmatprep.subr.mxu0 0.0
    %6000 = vmatpush2.msra.mxu0 0.0
    %6001 = vmatprep.subr.mxu0 0.0
    %6002 = vmatpush2.msra.mxu0 0.0
    %6003 = vmatprep.subr.mxu0 0.0
    %6004 = vmatpush2.msra.mxu0 0.0
    %6005 = vmatprep.subr.mxu0 0.0
    %6006 = vmatpush2.msra.mxu0 0.0
    %6007 = vmatprep.subr.mxu0 0.0
    %6008 = vmatpush2.msra.mxu0 0.0
    %6009 = vmatprep.subr.mxu0 0.0
    %6010 = vmatpush2.msra.mxu0 0.0
    %6011 = vmatprep.subr.mxu0 0.0
    %6012 = vmatpush2.msra.mxu0 0.0
    %6013 = vmatprep.mubr.f32.mxu0 0.0
    %6014 = vmatmul.mubr.f32.gmra.mxu0 %v5273
    %v6015 = vpop.f32.mrf.mxu0
    %v6016 = vadd.f32 %v589, %v6015
    %v6017 = vpop.f32.mrf.mxu0
    %6018 = vdwg.mxu0
    %6019 = vmatprep.subr.mxu0 %v427
    %6020 = vmatpush1.msra.mxu0 %v426
    %6021 = vmatprep.subr.mxu0 %v424
    %6022 = vmatpush1.msra.mxu0 %v423
    %6023 = vmatprep.subr.mxu0 %v421
    %6024 = vmatpush1.msra.mxu0 %v420
    %6025 = vmatprep.subr.mxu0 %v418
    %6026 = vmatpush1.msra.mxu0 %v417
    %6027 = vmatprep.subr.mxu0 %v415
    %6028 = vmatpush1.msra.mxu0 %v414
    %6029 = vmatprep.subr.mxu0 %v412
    %6030 = vmatpush1.msra.mxu0 %v411
    %6031 = vmatprep.subr.mxu0 %v409
    %6032 = vmatpush1.msra.mxu0 %v408
    %6033 = vmatprep.subr.mxu0 %v406
    %6034 = vmatpush1.msra.mxu0 %v405
    %6035 = vmatprep.subr.mxu0 %v403
    %6036 = vmatpush1.msra.mxu0 %v402
    %6037 = vmatprep.subr.mxu0 %v400
    %6038 = vmatpush1.msra.mxu0 %v399
    %6039 = vmatprep.subr.mxu0 %v397
    %6040 = vmatpush1.msra.mxu0 %v396
    %6041 = vmatprep.subr.mxu0 %v394
    %6042 = vmatpush1.msra.mxu0 %v393
    %6043 = vmatprep.subr.mxu0 %v391
    %6044 = vmatpush1.msra.mxu0 %v390
    %6045 = vmatprep.subr.mxu0 %v388
    %6046 = vmatpush1.msra.mxu0 %v387
    %6047 = vmatprep.subr.mxu0 %v385
    %6048 = vmatpush1.msra.mxu0 %v384
    %6049 = vmatprep.subr.mxu0 %v382
    %6050 = vmatpush1.msra.mxu0 %v381
    %6051 = vmatprep.subr.mxu0 0.0
    %6052 = vmatpush2.msra.mxu0 0.0
    %6053 = vmatprep.subr.mxu0 0.0
    %6054 = vmatpush2.msra.mxu0 0.0
    %6055 = vmatprep.subr.mxu0 0.0
    %6056 = vmatpush2.msra.mxu0 0.0
    %6057 = vmatprep.subr.mxu0 0.0
    %6058 = vmatpush2.msra.mxu0 0.0
    %6059 = vmatprep.subr.mxu0 0.0
    %6060 = vmatpush2.msra.mxu0 0.0
    %6061 = vmatprep.subr.mxu0 0.0
    %6062 = vmatpush2.msra.mxu0 0.0
    %6063 = vmatprep.subr.mxu0 0.0
    %6064 = vmatpush2.msra.mxu0 0.0
    %6065 = vmatprep.subr.mxu0 0.0
    %6066 = vmatpush2.msra.mxu0 0.0
    %6067 = vmatprep.subr.mxu0 0.0
    %6068 = vmatpush2.msra.mxu0 0.0
    %6069 = vmatprep.subr.mxu0 0.0
    %6070 = vmatpush2.msra.mxu0 0.0
    %6071 = vmatprep.subr.mxu0 0.0
    %6072 = vmatpush2.msra.mxu0 0.0
    %6073 = vmatprep.subr.mxu0 0.0
    %6074 = vmatpush2.msra.mxu0 0.0
    %6075 = vmatprep.subr.mxu0 0.0
    %6076 = vmatpush2.msra.mxu0 0.0
    %6077 = vmatprep.subr.mxu0 0.0
    %6078 = vmatpush2.msra.mxu0 0.0
    %6079 = vmatprep.subr.mxu0 0.0
    %6080 = vmatpush2.msra.mxu0 0.0
    %6081 = vmatprep.subr.mxu0 0.0
    %6082 = vmatpush2.msra.mxu0 0.0
    %6083 = vmatprep.mubr.f32.mxu0 0.0
    %6084 = vmatmul.mubr.f32.gmra.mxu0 %v5575
    %v6085 = vpop.f32.mrf.mxu0
    %v6086 = vadd.f32 %v634, %v6085
    %v6087 = vpop.f32.mrf.mxu0
    %v6088 = vadd.f32 %v638, %v6087
    %6089 = vdwg.mxu0
    %6090 = vmatprep.subr.mxu0 0.0
    %6091 = vmatpush1.msra.mxu0 %v428
    %6092 = vmatprep.subr.mxu0 0.0
    %6093 = vmatpush1.msra.mxu0 %v425
    %6094 = vmatprep.subr.mxu0 0.0
    %6095 = vmatpush1.msra.mxu0 %v422
    %6096 = vmatprep.subr.mxu0 0.0
    %6097 = vmatpush1.msra.mxu0 %v419
    %6098 = vmatprep.subr.mxu0 0.0
    %6099 = vmatpush1.msra.mxu0 %v416
    %6100 = vmatprep.subr.mxu0 0.0
    %6101 = vmatpush1.msra.mxu0 %v413
    %6102 = vmatprep.subr.mxu0 0.0
    %6103 = vmatpush1.msra.mxu0 %v410
    %6104 = vmatprep.subr.mxu0 0.0
    %6105 = vmatpush1.msra.mxu0 %v407
    %6106 = vmatprep.subr.mxu0 0.0
    %6107 = vmatpush1.msra.mxu0 %v404
    %6108 = vmatprep.subr.mxu0 0.0
    %6109 = vmatpush1.msra.mxu0 %v401
    %6110 = vmatprep.subr.mxu0 0.0
    %6111 = vmatpush1.msra.mxu0 %v398
    %6112 = vmatprep.subr.mxu0 0.0
    %6113 = vmatpush1.msra.mxu0 %v395
    %6114 = vmatprep.subr.mxu0 0.0
    %6115 = vmatpush1.msra.mxu0 %v392
    %6116 = vmatprep.subr.mxu0 0.0
    %6117 = vmatpush1.msra.mxu0 %v389
    %6118 = vmatprep.subr.mxu0 0.0
    %6119 = vmatpush1.msra.mxu0 %v386
    %6120 = vmatprep.subr.mxu0 0.0
    %6121 = vmatpush1.msra.mxu0 %v383
    %6122 = vmatprep.subr.mxu0 0.0
    %6123 = vmatpush2.msra.mxu0 0.0
    %6124 = vmatprep.subr.mxu0 0.0
    %6125 = vmatpush2.msra.mxu0 0.0
    %6126 = vmatprep.subr.mxu0 0.0
    %6127 = vmatpush2.msra.mxu0 0.0
    %6128 = vmatprep.subr.mxu0 0.0
    %6129 = vmatpush2.msra.mxu0 0.0
    %6130 = vmatprep.subr.mxu0 0.0
    %6131 = vmatpush2.msra.mxu0 0.0
    %6132 = vmatprep.subr.mxu0 0.0
    %6133 = vmatpush2.msra.mxu0 0.0
    %6134 = vmatprep.subr.mxu0 0.0
    %6135 = vmatpush2.msra.mxu0 0.0
    %6136 = vmatprep.subr.mxu0 0.0
    %6137 = vmatpush2.msra.mxu0 0.0
    %6138 = vmatprep.subr.mxu0 0.0
    %6139 = vmatpush2.msra.mxu0 0.0
    %6140 = vmatprep.subr.mxu0 0.0
    %6141 = vmatpush2.msra.mxu0 0.0
    %6142 = vmatprep.subr.mxu0 0.0
    %6143 = vmatpush2.msra.mxu0 0.0
    %6144 = vmatprep.subr.mxu0 0.0
    %6145 = vmatpush2.msra.mxu0 0.0
    %6146 = vmatprep.subr.mxu0 0.0
    %6147 = vmatpush2.msra.mxu0 0.0
    %6148 = vmatprep.subr.mxu0 0.0
    %6149 = vmatpush2.msra.mxu0 0.0
    %6150 = vmatprep.subr.mxu0 0.0
    %6151 = vmatpush2.msra.mxu0 0.0
    %6152 = vmatprep.subr.mxu0 0.0
    %6153 = vmatpush2.msra.mxu0 0.0
    %6154 = vmatprep.mubr.f32.mxu0 0.0
    %6155 = vmatmul.mubr.f32.gmra.mxu0 %v5575
    %v6156 = vpop.f32.mrf.mxu0
    %v6157 = vadd.f32 %v642, %v6156
    %v6158 = vpop.f32.mrf.mxu0
    %6159 = vdwg.mxu0
    %v6160 = vadd.f32 %v5945, %v6086
    %v6161 = vxor.u32 %v6160, 2147483648
    %v6162 = vmul.f32 %v6161, 1.442695
    %v6163 = vpow.pop %v6162
    %v6164 = vadd.f32 %v6163, 1.0
    %v6165 = vrcp.pop %v6164
    %v6166 = vmul.f32 1.0, %v6165
    %v6167 = vadd.f32 %v5947, %v6088
    %v6168 = vxor.u32 %v6167, 2147483648
    %v6169 = vmul.f32 %v6168, 1.442695
    %v6170 = vpow.pop %v6169
    %v6171 = vadd.f32 %v6170, 1.0
    %v6172 = vrcp.pop %v6171
    %v6173 = vmul.f32 1.0, %v6172
    %v6174 = vmul.f32 %v6166, %v6157
    %v6175 = vadd.f32 %v6016, %v6174
    %v6176 = vtanh.pop %v6175
    %v6177 = vsub.f32 %v5575, %v6176
    %v6178 = vmul.f32 %v6173, %v6177
    %v6179 = vadd.f32 %v6176, %v6178
    %6180 = vmatprep.subr.mxu0 %v573
    %6181 = vmatpush1.msra.mxu0 %v572
    %6182 = vmatprep.subr.mxu0 %v570
    %6183 = vmatpush1.msra.mxu0 %v569
    %6184 = vmatprep.subr.mxu0 %v567
    %6185 = vmatpush1.msra.mxu0 %v566
    %6186 = vmatprep.subr.mxu0 %v564
    %6187 = vmatpush1.msra.mxu0 %v563
    %6188 = vmatprep.subr.mxu0 %v561
    %6189 = vmatpush1.msra.mxu0 %v560
    %6190 = vmatprep.subr.mxu0 %v558
    %6191 = vmatpush1.msra.mxu0 %v557
    %6192 = vmatprep.subr.mxu0 %v555
    %6193 = vmatpush1.msra.mxu0 %v554
    %6194 = vmatprep.subr.mxu0 %v552
    %6195 = vmatpush1.msra.mxu0 %v551
    %6196 = vmatprep.subr.mxu0 %v549
    %6197 = vmatpush1.msra.mxu0 %v548
    %6198 = vmatprep.subr.mxu0 %v546
    %6199 = vmatpush1.msra.mxu0 %v545
    %6200 = vmatprep.subr.mxu0 %v543
    %6201 = vmatpush1.msra.mxu0 %v542
    %6202 = vmatprep.subr.mxu0 %v540
    %6203 = vmatpush1.msra.mxu0 %v539
    %6204 = vmatprep.subr.mxu0 %v537
    %6205 = vmatpush1.msra.mxu0 %v536
    %6206 = vmatprep.subr.mxu0 %v534
    %6207 = vmatpush1.msra.mxu0 %v533
    %6208 = vmatprep.subr.mxu0 %v531
    %6209 = vmatpush1.msra.mxu0 %v530
    %6210 = vmatprep.subr.mxu0 %v528
    %6211 = vmatpush1.msra.mxu0 %v527
    %6212 = vmatprep.subr.mxu0 0.0
    %6213 = vmatpush2.msra.mxu0 0.0
    %6214 = vmatprep.subr.mxu0 0.0
    %6215 = vmatpush2.msra.mxu0 0.0
    %6216 = vmatprep.subr.mxu0 0.0
    %6217 = vmatpush2.msra.mxu0 0.0
    %6218 = vmatprep.subr.mxu0 0.0
    %6219 = vmatpush2.msra.mxu0 0.0
    %6220 = vmatprep.subr.mxu0 0.0
    %6221 = vmatpush2.msra.mxu0 0.0
    %6222 = vmatprep.subr.mxu0 0.0
    %6223 = vmatpush2.msra.mxu0 0.0
    %6224 = vmatprep.subr.mxu0 0.0
    %6225 = vmatpush2.msra.mxu0 0.0
    %6226 = vmatprep.subr.mxu0 0.0
    %6227 = vmatpush2.msra.mxu0 0.0
    %6228 = vmatprep.subr.mxu0 0.0
    %6229 = vmatpush2.msra.mxu0 0.0
    %6230 = vmatprep.subr.mxu0 0.0
    %6231 = vmatpush2.msra.mxu0 0.0
    %6232 = vmatprep.subr.mxu0 0.0
    %6233 = vmatpush2.msra.mxu0 0.0
    %6234 = vmatprep.subr.mxu0 0.0
    %6235 = vmatpush2.msra.mxu0 0.0
    %6236 = vmatprep.subr.mxu0 0.0
    %6237 = vmatpush2.msra.mxu0 0.0
    %6238 = vmatprep.subr.mxu0 0.0
    %6239 = vmatpush2.msra.mxu0 0.0
    %6240 = vmatprep.subr.mxu0 0.0
    %6241 = vmatpush2.msra.mxu0 0.0
    %6242 = vmatprep.subr.mxu0 0.0
    %6243 = vmatpush2.msra.mxu0 0.0
    %6244 = vmatprep.mubr.f32.mxu0 0.0
    %6245 = vmatmul.mubr.f32.gmra.mxu0 %v5575
    %v6246 = vpop.f32.mrf.mxu0
    %v6247 = vadd.f32 %v599, %v6246
    %v6248 = vpop.f32.mrf.mxu0
    %v6249 = vadd.f32 %v603, %v6248
    %6250 = vdwg.mxu0
    %6251 = vmatprep.subr.mxu0 0.0
    %6252 = vmatpush1.msra.mxu0 %v574
    %6253 = vmatprep.subr.mxu0 0.0
    %6254 = vmatpush1.msra.mxu0 %v571
    %6255 = vmatprep.subr.mxu0 0.0
    %6256 = vmatpush1.msra.mxu0 %v568
    %6257 = vmatprep.subr.mxu0 0.0
    %6258 = vmatpush1.msra.mxu0 %v565
    %6259 = vmatprep.subr.mxu0 0.0
    %6260 = vmatpush1.msra.mxu0 %v562
    %6261 = vmatprep.subr.mxu0 0.0
    %6262 = vmatpush1.msra.mxu0 %v559
    %6263 = vmatprep.subr.mxu0 0.0
    %6264 = vmatpush1.msra.mxu0 %v556
    %6265 = vmatprep.subr.mxu0 0.0
    %6266 = vmatpush1.msra.mxu0 %v553
    %6267 = vmatprep.subr.mxu0 0.0
    %6268 = vmatpush1.msra.mxu0 %v550
    %6269 = vmatprep.subr.mxu0 0.0
    %6270 = vmatpush1.msra.mxu0 %v547
    %6271 = vmatprep.subr.mxu0 0.0
    %6272 = vmatpush1.msra.mxu0 %v544
    %6273 = vmatprep.subr.mxu0 0.0
    %6274 = vmatpush1.msra.mxu0 %v541
    %6275 = vmatprep.subr.mxu0 0.0
    %6276 = vmatpush1.msra.mxu0 %v538
    %6277 = vmatprep.subr.mxu0 0.0
    %6278 = vmatpush1.msra.mxu0 %v535
    %6279 = vmatprep.subr.mxu0 0.0
    %6280 = vmatpush1.msra.mxu0 %v532
    %6281 = vmatprep.subr.mxu0 0.0
    %6282 = vmatpush1.msra.mxu0 %v529
    %6283 = vmatprep.subr.mxu0 0.0
    %6284 = vmatpush2.msra.mxu0 0.0
    %6285 = vmatprep.subr.mxu0 0.0
    %6286 = vmatpush2.msra.mxu0 0.0
    %6287 = vmatprep.subr.mxu0 0.0
    %6288 = vmatpush2.msra.mxu0 0.0
    %6289 = vmatprep.subr.mxu0 0.0
    %6290 = vmatpush2.msra.mxu0 0.0
    %6291 = vmatprep.subr.mxu0 0.0
    %6292 = vmatpush2.msra.mxu0 0.0
    %6293 = vmatprep.subr.mxu0 0.0
    %6294 = vmatpush2.msra.mxu0 0.0
    %6295 = vmatprep.subr.mxu0 0.0
    %6296 = vmatpush2.msra.mxu0 0.0
    %6297 = vmatprep.subr.mxu0 0.0
    %6298 = vmatpush2.msra.mxu0 0.0
    %6299 = vmatprep.subr.mxu0 0.0
    %6300 = vmatpush2.msra.mxu0 0.0
    %6301 = vmatprep.subr.mxu0 0.0
    %6302 = vmatpush2.msra.mxu0 0.0
    %6303 = vmatprep.subr.mxu0 0.0
    %6304 = vmatpush2.msra.mxu0 0.0
    %6305 = vmatprep.subr.mxu0 0.0
    %6306 = vmatpush2.msra.mxu0 0.0
    %6307 = vmatprep.subr.mxu0 0.0
    %6308 = vmatpush2.msra.mxu0 0.0
    %6309 = vmatprep.subr.mxu0 0.0
    %6310 = vmatpush2.msra.mxu0 0.0
    %6311 = vmatprep.subr.mxu0 0.0
    %6312 = vmatpush2.msra.mxu0 0.0
    %6313 = vmatprep.subr.mxu0 0.0
    %6314 = vmatpush2.msra.mxu0 0.0
    %6315 = vmatprep.mubr.f32.mxu0 0.0
    %6316 = vmatmul.mubr.f32.gmra.mxu0 %v5575
    %v6317 = vpop.f32.mrf.mxu0
    %v6318 = vadd.f32 %v607, %v6317
    %v6319 = vpop.f32.mrf.mxu0
    %6320 = vdwg.mxu0
    %6321 = vmatprep.subr.mxu0 %v476
    %6322 = vmatpush1.msra.mxu0 %v475
    %6323 = vmatprep.subr.mxu0 %v473
    %6324 = vmatpush1.msra.mxu0 %v472
    %6325 = vmatprep.subr.mxu0 %v470
    %6326 = vmatpush1.msra.mxu0 %v469
    %6327 = vmatprep.subr.mxu0 %v467
    %6328 = vmatpush1.msra.mxu0 %v466
    %6329 = vmatprep.subr.mxu0 %v464
    %6330 = vmatpush1.msra.mxu0 %v463
    %6331 = vmatprep.subr.mxu0 %v461
    %6332 = vmatpush1.msra.mxu0 %v460
    %6333 = vmatprep.subr.mxu0 %v458
    %6334 = vmatpush1.msra.mxu0 %v457
    %6335 = vmatprep.subr.mxu0 %v455
    %6336 = vmatpush1.msra.mxu0 %v454
    %6337 = vmatprep.subr.mxu0 %v452
    %6338 = vmatpush1.msra.mxu0 %v451
    %6339 = vmatprep.subr.mxu0 %v449
    %6340 = vmatpush1.msra.mxu0 %v448
    %6341 = vmatprep.subr.mxu0 %v446
    %6342 = vmatpush1.msra.mxu0 %v445
    %6343 = vmatprep.subr.mxu0 %v443
    %6344 = vmatpush1.msra.mxu0 %v442
    %6345 = vmatprep.subr.mxu0 %v440
    %6346 = vmatpush1.msra.mxu0 %v439
    %6347 = vmatprep.subr.mxu0 %v437
    %6348 = vmatpush1.msra.mxu0 %v436
    %6349 = vmatprep.subr.mxu0 %v434
    %6350 = vmatpush1.msra.mxu0 %v433
    %6351 = vmatprep.subr.mxu0 %v431
    %6352 = vmatpush1.msra.mxu0 %v430
    %6353 = vmatprep.subr.mxu0 0.0
    %6354 = vmatpush2.msra.mxu0 0.0
    %6355 = vmatprep.subr.mxu0 0.0
    %6356 = vmatpush2.msra.mxu0 0.0
    %6357 = vmatprep.subr.mxu0 0.0
    %6358 = vmatpush2.msra.mxu0 0.0
    %6359 = vmatprep.subr.mxu0 0.0
    %6360 = vmatpush2.msra.mxu0 0.0
    %6361 = vmatprep.subr.mxu0 0.0
    %6362 = vmatpush2.msra.mxu0 0.0
    %6363 = vmatprep.subr.mxu0 0.0
    %6364 = vmatpush2.msra.mxu0 0.0
    %6365 = vmatprep.subr.mxu0 0.0
    %6366 = vmatpush2.msra.mxu0 0.0
    %6367 = vmatprep.subr.mxu0 0.0
    %6368 = vmatpush2.msra.mxu0 0.0
    %6369 = vmatprep.subr.mxu0 0.0
    %6370 = vmatpush2.msra.mxu0 0.0
    %6371 = vmatprep.subr.mxu0 0.0
    %6372 = vmatpush2.msra.mxu0 0.0
    %6373 = vmatprep.subr.mxu0 0.0
    %6374 = vmatpush2.msra.mxu0 0.0
    %6375 = vmatprep.subr.mxu0 0.0
    %6376 = vmatpush2.msra.mxu0 0.0
    %6377 = vmatprep.subr.mxu0 0.0
    %6378 = vmatpush2.msra.mxu0 0.0
    %6379 = vmatprep.subr.mxu0 0.0
    %6380 = vmatpush2.msra.mxu0 0.0
    %6381 = vmatprep.subr.mxu0 0.0
    %6382 = vmatpush2.msra.mxu0 0.0
    %6383 = vmatprep.subr.mxu0 0.0
    %6384 = vmatpush2.msra.mxu0 0.0
    %6385 = vmatprep.mubr.f32.mxu0 0.0
    %6386 = vmatmul.mubr.f32.gmra.mxu0 %v5877
    %v6387 = vpop.f32.mrf.mxu0
    %v6388 = vadd.f32 %v652, %v6387
    %v6389 = vpop.f32.mrf.mxu0
    %v6390 = vadd.f32 %v656, %v6389
    %6391 = vdwg.mxu0
    %6392 = vmatprep.subr.mxu0 0.0
    %6393 = vmatpush1.msra.mxu0 %v477
    %6394 = vmatprep.subr.mxu0 0.0
    %6395 = vmatpush1.msra.mxu0 %v474
    %6396 = vmatprep.subr.mxu0 0.0
    %6397 = vmatpush1.msra.mxu0 %v471
    %6398 = vmatprep.subr.mxu0 0.0
    %6399 = vmatpush1.msra.mxu0 %v468
    %6400 = vmatprep.subr.mxu0 0.0
    %6401 = vmatpush1.msra.mxu0 %v465
    %6402 = vmatprep.subr.mxu0 0.0
    %6403 = vmatpush1.msra.mxu0 %v462
    %6404 = vmatprep.subr.mxu0 0.0
    %6405 = vmatpush1.msra.mxu0 %v459
    %6406 = vmatprep.subr.mxu0 0.0
    %6407 = vmatpush1.msra.mxu0 %v456
    %6408 = vmatprep.subr.mxu0 0.0
    %6409 = vmatpush1.msra.mxu0 %v453
    %6410 = vmatprep.subr.mxu0 0.0
    %6411 = vmatpush1.msra.mxu0 %v450
    %6412 = vmatprep.subr.mxu0 0.0
    %6413 = vmatpush1.msra.mxu0 %v447
    %6414 = vmatprep.subr.mxu0 0.0
    %6415 = vmatpush1.msra.mxu0 %v444
    %6416 = vmatprep.subr.mxu0 0.0
    %6417 = vmatpush1.msra.mxu0 %v441
    %6418 = vmatprep.subr.mxu0 0.0
    %6419 = vmatpush1.msra.mxu0 %v438
    %6420 = vmatprep.subr.mxu0 0.0
    %6421 = vmatpush1.msra.mxu0 %v435
    %6422 = vmatprep.subr.mxu0 0.0
    %6423 = vmatpush1.msra.mxu0 %v432
    %6424 = vmatprep.subr.mxu0 0.0
    %6425 = vmatpush2.msra.mxu0 0.0
    %6426 = vmatprep.subr.mxu0 0.0
    %6427 = vmatpush2.msra.mxu0 0.0
    %6428 = vmatprep.subr.mxu0 0.0
    %6429 = vmatpush2.msra.mxu0 0.0
    %6430 = vmatprep.subr.mxu0 0.0
    %6431 = vmatpush2.msra.mxu0 0.0
    %6432 = vmatprep.subr.mxu0 0.0
    %6433 = vmatpush2.msra.mxu0 0.0
    %6434 = vmatprep.subr.mxu0 0.0
    %6435 = vmatpush2.msra.mxu0 0.0
    %6436 = vmatprep.subr.mxu0 0.0
    %6437 = vmatpush2.msra.mxu0 0.0
    %6438 = vmatprep.subr.mxu0 0.0
    %6439 = vmatpush2.msra.mxu0 0.0
    %6440 = vmatprep.subr.mxu0 0.0
    %6441 = vmatpush2.msra.mxu0 0.0
    %6442 = vmatprep.subr.mxu0 0.0
    %6443 = vmatpush2.msra.mxu0 0.0
    %6444 = vmatprep.subr.mxu0 0.0
    %6445 = vmatpush2.msra.mxu0 0.0
    %6446 = vmatprep.subr.mxu0 0.0
    %6447 = vmatpush2.msra.mxu0 0.0
    %6448 = vmatprep.subr.mxu0 0.0
    %6449 = vmatpush2.msra.mxu0 0.0
    %6450 = vmatprep.subr.mxu0 0.0
    %6451 = vmatpush2.msra.mxu0 0.0
    %6452 = vmatprep.subr.mxu0 0.0
    %6453 = vmatpush2.msra.mxu0 0.0
    %6454 = vmatprep.subr.mxu0 0.0
    %6455 = vmatpush2.msra.mxu0 0.0
    %6456 = vmatprep.mubr.f32.mxu0 0.0
    %6457 = vmatmul.mubr.f32.gmra.mxu0 %v5877
    %v6458 = vpop.f32.mrf.mxu0
    %v6459 = vadd.f32 %v660, %v6458
    %v6460 = vpop.f32.mrf.mxu0
    %6461 = vdwg.mxu0
    %v6462 = vadd.f32 %v6247, %v6388
    %v6463 = vxor.u32 %v6462, 2147483648
    %v6464 = vmul.f32 %v6463, 1.442695
    %v6465 = vpow.pop %v6464
    %v6466 = vadd.f32 %v6465, 1.0
    %v6467 = vrcp.pop %v6466
    %v6468 = vmul.f32 1.0, %v6467
    %v6469 = vadd.f32 %v6249, %v6390
    %v6470 = vxor.u32 %v6469, 2147483648
    %v6471 = vmul.f32 %v6470, 1.442695
    %v6472 = vpow.pop %v6471
    %v6473 = vadd.f32 %v6472, 1.0
    %v6474 = vrcp.pop %v6473
    %v6475 = vmul.f32 1.0, %v6474
    %v6476 = vmul.f32 %v6468, %v6459
    %v6477 = vadd.f32 %v6318, %v6476
    %v6478 = vtanh.pop %v6477
    %v6479 = vsub.f32 %v5877, %v6478
    %v6480 = vmul.f32 %v6475, %v6479
    %v6481 = vadd.f32 %v6478, %v6480
    %6482 = vmatprep.subr.mxu0 %v573
    %6483 = vmatpush1.msra.mxu0 %v572
    %6484 = vmatprep.subr.mxu0 %v570
    %6485 = vmatpush1.msra.mxu0 %v569
    %6486 = vmatprep.subr.mxu0 %v567
    %6487 = vmatpush1.msra.mxu0 %v566
    %6488 = vmatprep.subr.mxu0 %v564
    %6489 = vmatpush1.msra.mxu0 %v563
    %6490 = vmatprep.subr.mxu0 %v561
    %6491 = vmatpush1.msra.mxu0 %v560
    %6492 = vmatprep.subr.mxu0 %v558
    %6493 = vmatpush1.msra.mxu0 %v557
    %6494 = vmatprep.subr.mxu0 %v555
    %6495 = vmatpush1.msra.mxu0 %v554
    %6496 = vmatprep.subr.mxu0 %v552
    %6497 = vmatpush1.msra.mxu0 %v551
    %6498 = vmatprep.subr.mxu0 %v549
    %6499 = vmatpush1.msra.mxu0 %v548
    %6500 = vmatprep.subr.mxu0 %v546
    %6501 = vmatpush1.msra.mxu0 %v545
    %6502 = vmatprep.subr.mxu0 %v543
    %6503 = vmatpush1.msra.mxu0 %v542
    %6504 = vmatprep.subr.mxu0 %v540
    %6505 = vmatpush1.msra.mxu0 %v539
    %6506 = vmatprep.subr.mxu0 %v537
    %6507 = vmatpush1.msra.mxu0 %v536
    %6508 = vmatprep.subr.mxu0 %v534
    %6509 = vmatpush1.msra.mxu0 %v533
    %6510 = vmatprep.subr.mxu0 %v531
    %6511 = vmatpush1.msra.mxu0 %v530
    %6512 = vmatprep.subr.mxu0 %v528
    %6513 = vmatpush1.msra.mxu0 %v527
    %6514 = vmatprep.subr.mxu0 0.0
    %6515 = vmatpush2.msra.mxu0 0.0
    %6516 = vmatprep.subr.mxu0 0.0
    %6517 = vmatpush2.msra.mxu0 0.0
    %6518 = vmatprep.subr.mxu0 0.0
    %6519 = vmatpush2.msra.mxu0 0.0
    %6520 = vmatprep.subr.mxu0 0.0
    %6521 = vmatpush2.msra.mxu0 0.0
    %6522 = vmatprep.subr.mxu0 0.0
    %6523 = vmatpush2.msra.mxu0 0.0
    %6524 = vmatprep.subr.mxu0 0.0
    %6525 = vmatpush2.msra.mxu0 0.0
    %6526 = vmatprep.subr.mxu0 0.0
    %6527 = vmatpush2.msra.mxu0 0.0
    %6528 = vmatprep.subr.mxu0 0.0
    %6529 = vmatpush2.msra.mxu0 0.0
    %6530 = vmatprep.subr.mxu0 0.0
    %6531 = vmatpush2.msra.mxu0 0.0
    %6532 = vmatprep.subr.mxu0 0.0
    %6533 = vmatpush2.msra.mxu0 0.0
    %6534 = vmatprep.subr.mxu0 0.0
    %6535 = vmatpush2.msra.mxu0 0.0
    %6536 = vmatprep.subr.mxu0 0.0
    %6537 = vmatpush2.msra.mxu0 0.0
    %6538 = vmatprep.subr.mxu0 0.0
    %6539 = vmatpush2.msra.mxu0 0.0
    %6540 = vmatprep.subr.mxu0 0.0
    %6541 = vmatpush2.msra.mxu0 0.0
    %6542 = vmatprep.subr.mxu0 0.0
    %6543 = vmatpush2.msra.mxu0 0.0
    %6544 = vmatprep.subr.mxu0 0.0
    %6545 = vmatpush2.msra.mxu0 0.0
    %6546 = vmatprep.mubr.f32.mxu0 0.0
    %6547 = vmatmul.mubr.f32.gmra.mxu0 %v6179
    %v6548 = vpop.f32.mrf.mxu0
    %v6549 = vadd.f32 %v599, %v6548
    %v6550 = vpop.f32.mrf.mxu0
    %v6551 = vadd.f32 %v603, %v6550
    %6552 = vdwg.mxu0
    %6553 = vmatprep.subr.mxu0 0.0
    %6554 = vmatpush1.msra.mxu0 %v574
    %6555 = vmatprep.subr.mxu0 0.0
    %6556 = vmatpush1.msra.mxu0 %v571
    %6557 = vmatprep.subr.mxu0 0.0
    %6558 = vmatpush1.msra.mxu0 %v568
    %6559 = vmatprep.subr.mxu0 0.0
    %6560 = vmatpush1.msra.mxu0 %v565
    %6561 = vmatprep.subr.mxu0 0.0
    %6562 = vmatpush1.msra.mxu0 %v562
    %6563 = vmatprep.subr.mxu0 0.0
    %6564 = vmatpush1.msra.mxu0 %v559
    %6565 = vmatprep.subr.mxu0 0.0
    %6566 = vmatpush1.msra.mxu0 %v556
    %6567 = vmatprep.subr.mxu0 0.0
    %6568 = vmatpush1.msra.mxu0 %v553
    %6569 = vmatprep.subr.mxu0 0.0
    %6570 = vmatpush1.msra.mxu0 %v550
    %6571 = vmatprep.subr.mxu0 0.0
    %6572 = vmatpush1.msra.mxu0 %v547
    %6573 = vmatprep.subr.mxu0 0.0
    %6574 = vmatpush1.msra.mxu0 %v544
    %6575 = vmatprep.subr.mxu0 0.0
    %6576 = vmatpush1.msra.mxu0 %v541
    %6577 = vmatprep.subr.mxu0 0.0
    %6578 = vmatpush1.msra.mxu0 %v538
    %6579 = vmatprep.subr.mxu0 0.0
    %6580 = vmatpush1.msra.mxu0 %v535
    %6581 = vmatprep.subr.mxu0 0.0
    %6582 = vmatpush1.msra.mxu0 %v532
    %6583 = vmatprep.subr.mxu0 0.0
    %6584 = vmatpush1.msra.mxu0 %v529
    %6585 = vmatprep.subr.mxu0 0.0
    %6586 = vmatpush2.msra.mxu0 0.0
    %6587 = vmatprep.subr.mxu0 0.0
    %6588 = vmatpush2.msra.mxu0 0.0
    %6589 = vmatprep.subr.mxu0 0.0
    %6590 = vmatpush2.msra.mxu0 0.0
    %6591 = vmatprep.subr.mxu0 0.0
    %6592 = vmatpush2.msra.mxu0 0.0
    %6593 = vmatprep.subr.mxu0 0.0
    %6594 = vmatpush2.msra.mxu0 0.0
    %6595 = vmatprep.subr.mxu0 0.0
    %6596 = vmatpush2.msra.mxu0 0.0
    %6597 = vmatprep.subr.mxu0 0.0
    %6598 = vmatpush2.msra.mxu0 0.0
    %6599 = vmatprep.subr.mxu0 0.0
    %6600 = vmatpush2.msra.mxu0 0.0
    %6601 = vmatprep.subr.mxu0 0.0
    %6602 = vmatpush2.msra.mxu0 0.0
    %6603 = vmatprep.subr.mxu0 0.0
    %6604 = vmatpush2.msra.mxu0 0.0
    %6605 = vmatprep.subr.mxu0 0.0
    %6606 = vmatpush2.msra.mxu0 0.0
    %6607 = vmatprep.subr.mxu0 0.0
    %6608 = vmatpush2.msra.mxu0 0.0
    %6609 = vmatprep.subr.mxu0 0.0
    %6610 = vmatpush2.msra.mxu0 0.0
    %6611 = vmatprep.subr.mxu0 0.0
    %6612 = vmatpush2.msra.mxu0 0.0
    %6613 = vmatprep.subr.mxu0 0.0
    %6614 = vmatpush2.msra.mxu0 0.0
    %6615 = vmatprep.subr.mxu0 0.0
    %6616 = vmatpush2.msra.mxu0 0.0
    %6617 = vmatprep.mubr.f32.mxu0 0.0
    %6618 = vmatmul.mubr.f32.gmra.mxu0 %v6179
    %v6619 = vpop.f32.mrf.mxu0
    %v6620 = vadd.f32 %v607, %v6619
    %v6621 = vpop.f32.mrf.mxu0
    %6622 = vdwg.mxu0
    %6623 = vmatprep.subr.mxu0 %v476
    %6624 = vmatpush1.msra.mxu0 %v475
    %6625 = vmatprep.subr.mxu0 %v473
    %6626 = vmatpush1.msra.mxu0 %v472
    %6627 = vmatprep.subr.mxu0 %v470
    %6628 = vmatpush1.msra.mxu0 %v469
    %6629 = vmatprep.subr.mxu0 %v467
    %6630 = vmatpush1.msra.mxu0 %v466
    %6631 = vmatprep.subr.mxu0 %v464
    %6632 = vmatpush1.msra.mxu0 %v463
    %6633 = vmatprep.subr.mxu0 %v461
    %6634 = vmatpush1.msra.mxu0 %v460
    %6635 = vmatprep.subr.mxu0 %v458
    %6636 = vmatpush1.msra.mxu0 %v457
    %6637 = vmatprep.subr.mxu0 %v455
    %6638 = vmatpush1.msra.mxu0 %v454
    %6639 = vmatprep.subr.mxu0 %v452
    %6640 = vmatpush1.msra.mxu0 %v451
    %6641 = vmatprep.subr.mxu0 %v449
    %6642 = vmatpush1.msra.mxu0 %v448
    %6643 = vmatprep.subr.mxu0 %v446
    %6644 = vmatpush1.msra.mxu0 %v445
    %6645 = vmatprep.subr.mxu0 %v443
    %6646 = vmatpush1.msra.mxu0 %v442
    %6647 = vmatprep.subr.mxu0 %v440
    %6648 = vmatpush1.msra.mxu0 %v439
    %6649 = vmatprep.subr.mxu0 %v437
    %6650 = vmatpush1.msra.mxu0 %v436
    %6651 = vmatprep.subr.mxu0 %v434
    %6652 = vmatpush1.msra.mxu0 %v433
    %6653 = vmatprep.subr.mxu0 %v431
    %6654 = vmatpush1.msra.mxu0 %v430
    %6655 = vmatprep.subr.mxu0 0.0
    %6656 = vmatpush2.msra.mxu0 0.0
    %6657 = vmatprep.subr.mxu0 0.0
    %6658 = vmatpush2.msra.mxu0 0.0
    %6659 = vmatprep.subr.mxu0 0.0
    %6660 = vmatpush2.msra.mxu0 0.0
    %6661 = vmatprep.subr.mxu0 0.0
    %6662 = vmatpush2.msra.mxu0 0.0
    %6663 = vmatprep.subr.mxu0 0.0
    %6664 = vmatpush2.msra.mxu0 0.0
    %6665 = vmatprep.subr.mxu0 0.0
    %6666 = vmatpush2.msra.mxu0 0.0
    %6667 = vmatprep.subr.mxu0 0.0
    %6668 = vmatpush2.msra.mxu0 0.0
    %6669 = vmatprep.subr.mxu0 0.0
    %6670 = vmatpush2.msra.mxu0 0.0
    %6671 = vmatprep.subr.mxu0 0.0
    %6672 = vmatpush2.msra.mxu0 0.0
    %6673 = vmatprep.subr.mxu0 0.0
    %6674 = vmatpush2.msra.mxu0 0.0
    %6675 = vmatprep.subr.mxu0 0.0
    %6676 = vmatpush2.msra.mxu0 0.0
    %6677 = vmatprep.subr.mxu0 0.0
    %6678 = vmatpush2.msra.mxu0 0.0
    %6679 = vmatprep.subr.mxu0 0.0
    %6680 = vmatpush2.msra.mxu0 0.0
    %6681 = vmatprep.subr.mxu0 0.0
    %6682 = vmatpush2.msra.mxu0 0.0
    %6683 = vmatprep.subr.mxu0 0.0
    %6684 = vmatpush2.msra.mxu0 0.0
    %6685 = vmatprep.subr.mxu0 0.0
    %6686 = vmatpush2.msra.mxu0 0.0
    %6687 = vmatprep.mubr.f32.mxu0 0.0
    %6688 = vmatmul.mubr.f32.gmra.mxu0 %v6481
    %v6689 = vpop.f32.mrf.mxu0
    %v6690 = vadd.f32 %v652, %v6689
    %v6691 = vpop.f32.mrf.mxu0
    %v6692 = vadd.f32 %v656, %v6691
    %6693 = vdwg.mxu0
    %6694 = vmatprep.subr.mxu0 0.0
    %6695 = vmatpush1.msra.mxu0 %v477
    %6696 = vmatprep.subr.mxu0 0.0
    %6697 = vmatpush1.msra.mxu0 %v474
    %6698 = vmatprep.subr.mxu0 0.0
    %6699 = vmatpush1.msra.mxu0 %v471
    %6700 = vmatprep.subr.mxu0 0.0
    %6701 = vmatpush1.msra.mxu0 %v468
    %6702 = vmatprep.subr.mxu0 0.0
    %6703 = vmatpush1.msra.mxu0 %v465
    %6704 = vmatprep.subr.mxu0 0.0
    %6705 = vmatpush1.msra.mxu0 %v462
    %6706 = vmatprep.subr.mxu0 0.0
    %6707 = vmatpush1.msra.mxu0 %v459
    %6708 = vmatprep.subr.mxu0 0.0
    %6709 = vmatpush1.msra.mxu0 %v456
    %6710 = vmatprep.subr.mxu0 0.0
    %6711 = vmatpush1.msra.mxu0 %v453
    %6712 = vmatprep.subr.mxu0 0.0
    %6713 = vmatpush1.msra.mxu0 %v450
    %6714 = vmatprep.subr.mxu0 0.0
    %6715 = vmatpush1.msra.mxu0 %v447
    %6716 = vmatprep.subr.mxu0 0.0
    %6717 = vmatpush1.msra.mxu0 %v444
    %6718 = vmatprep.subr.mxu0 0.0
    %6719 = vmatpush1.msra.mxu0 %v441
    %6720 = vmatprep.subr.mxu0 0.0
    %6721 = vmatpush1.msra.mxu0 %v438
    %6722 = vmatprep.subr.mxu0 0.0
    %6723 = vmatpush1.msra.mxu0 %v435
    %6724 = vmatprep.subr.mxu0 0.0
    %6725 = vmatpush1.msra.mxu0 %v432
    %6726 = vmatprep.subr.mxu0 0.0
    %6727 = vmatpush2.msra.mxu0 0.0
    %6728 = vmatprep.subr.mxu0 0.0
    %6729 = vmatpush2.msra.mxu0 0.0
    %6730 = vmatprep.subr.mxu0 0.0
    %6731 = vmatpush2.msra.mxu0 0.0
    %6732 = vmatprep.subr.mxu0 0.0
    %6733 = vmatpush2.msra.mxu0 0.0
    %6734 = vmatprep.subr.mxu0 0.0
    %6735 = vmatpush2.msra.mxu0 0.0
    %6736 = vmatprep.subr.mxu0 0.0
    %6737 = vmatpush2.msra.mxu0 0.0
    %6738 = vmatprep.subr.mxu0 0.0
    %6739 = vmatpush2.msra.mxu0 0.0
    %6740 = vmatprep.subr.mxu0 0.0
    %6741 = vmatpush2.msra.mxu0 0.0
    %6742 = vmatprep.subr.mxu0 0.0
    %6743 = vmatpush2.msra.mxu0 0.0
    %6744 = vmatprep.subr.mxu0 0.0
    %6745 = vmatpush2.msra.mxu0 0.0
    %6746 = vmatprep.subr.mxu0 0.0
    %6747 = vmatpush2.msra.mxu0 0.0
    %6748 = vmatprep.subr.mxu0 0.0
    %6749 = vmatpush2.msra.mxu0 0.0
    %6750 = vmatprep.subr.mxu0 0.0
    %6751 = vmatpush2.msra.mxu0 0.0
    %6752 = vmatprep.subr.mxu0 0.0
    %6753 = vmatpush2.msra.mxu0 0.0
    %6754 = vmatprep.subr.mxu0 0.0
    %6755 = vmatpush2.msra.mxu0 0.0
    %6756 = vmatprep.subr.mxu0 0.0
    %6757 = vmatpush2.msra.mxu0 0.0
    %6758 = vmatprep.mubr.f32.mxu0 0.0
    %6759 = vmatmul.mubr.f32.gmra.mxu0 %v6481
    %v6760 = vpop.f32.mrf.mxu0
    %v6761 = vadd.f32 %v660, %v6760
    %v6762 = vpop.f32.mrf.mxu0
    %6763 = vdwg.mxu0
    %v6764 = vadd.f32 %v6549, %v6690
    %v6765 = vxor.u32 %v6764, 2147483648
    %v6766 = vmul.f32 %v6765, 1.442695
    %v6767 = vpow.pop %v6766
    %v6768 = vadd.f32 %v6767, 1.0
    %v6769 = vrcp.pop %v6768
    %v6770 = vmul.f32 1.0, %v6769
    %v6771 = vadd.f32 %v6551, %v6692
    %v6772 = vxor.u32 %v6771, 2147483648
    %v6773 = vmul.f32 %v6772, 1.442695
    %v6774 = vpow.pop %v6773
    %v6775 = vadd.f32 %v6774, 1.0
    %v6776 = vrcp.pop %v6775
    %v6777 = vmul.f32 1.0, %v6776
    %v6778 = vmul.f32 %v6770, %v6761
    %v6779 = vadd.f32 %v6620, %v6778
    %v6780 = vtanh.pop %v6779
    %v6781 = vsub.f32 %v6481, %v6780
    %v6782 = vmul.f32 %v6777, %v6781
    %v6783 = vadd.f32 %v6780, %v6782
    %v6784 = vld [vmem:[%s6] sm:$0xff]
    %v6785 = vld [vmem:[%s6 + $0x8] sm:$0xff]
    %v6786 = vld [vmem:[%s6 + $0x10] sm:$0xff]
    %v6787 = vld [vmem:[%s6 + $0x18] sm:$0xff]
    %v6788 = vld [vmem:[%s6 + $0x20] sm:$0xff]
    %v6789 = vld [vmem:[%s6 + $0x28] sm:$0xff]
    %v6790 = vld [vmem:[%s6 + $0x30] sm:$0xff]
    %v6791 = vld [vmem:[%s6 + $0x38] sm:$0xff]
    %v6792 = vld [vmem:[%s6 + $0x40] sm:$0xff]
    %v6793 = vld [vmem:[%s6 + $0x48] sm:$0xff]
    %v6794 = vld [vmem:[%s6 + $0x50] sm:$0xff]
    %v6795 = vld [vmem:[%s6 + $0x58] sm:$0xff]
    %v6796 = vld [vmem:[%s6 + $0x60] sm:$0xff]
    %v6797 = vld [vmem:[%s6 + $0x68] sm:$0xff]
    %v6798 = vld [vmem:[%s6 + $0x70] sm:$0xff]
    %v6799 = vld [vmem:[%s6 + $0x78] sm:$0xff]
    %v6800 = vld [vmem:[%s7] sm:$0x1]
    %v6802 = vlaneseq
    %v6803 = vshrl.u32 %v6802, 7
    %v6804 = vsub.s32 0, %v6803
    %v6805 = vrot.slane %v6800, %v6804
    %6807 = vmatprep.subr.mxu0 0.0
    %6808 = vmatpush1.msra.mxu0 %v6799
    %6809 = vmatprep.subr.mxu0 0.0
    %6810 = vmatpush1.msra.mxu0 %v6798
    %6811 = vmatprep.subr.mxu0 0.0
    %6812 = vmatpush1.msra.mxu0 %v6797
    %6813 = vmatprep.subr.mxu0 0.0
    %6814 = vmatpush1.msra.mxu0 %v6796
    %6815 = vmatprep.subr.mxu0 0.0
    %6816 = vmatpush1.msra.mxu0 %v6795
    %6817 = vmatprep.subr.mxu0 0.0
    %6818 = vmatpush1.msra.mxu0 %v6794
    %6819 = vmatprep.subr.mxu0 0.0
    %6820 = vmatpush1.msra.mxu0 %v6793
    %6821 = vmatprep.subr.mxu0 0.0
    %6822 = vmatpush1.msra.mxu0 %v6792
    %6823 = vmatprep.subr.mxu0 0.0
    %6824 = vmatpush1.msra.mxu0 %v6791
    %6825 = vmatprep.subr.mxu0 0.0
    %6826 = vmatpush1.msra.mxu0 %v6790
    %6827 = vmatprep.subr.mxu0 0.0
    %6828 = vmatpush1.msra.mxu0 %v6789
    %6829 = vmatprep.subr.mxu0 0.0
    %6830 = vmatpush1.msra.mxu0 %v6788
    %6831 = vmatprep.subr.mxu0 0.0
    %6832 = vmatpush1.msra.mxu0 %v6787
    %6833 = vmatprep.subr.mxu0 0.0
    %6834 = vmatpush1.msra.mxu0 %v6786
    %6835 = vmatprep.subr.mxu0 0.0
    %6836 = vmatpush1.msra.mxu0 %v6785
    %6837 = vmatprep.subr.mxu0 0.0
    %6838 = vmatpush1.msra.mxu0 %v6784
    %6839 = vmatprep.subr.mxu0 0.0
    %6840 = vmatpush2.msra.mxu0 0.0
    %6841 = vmatprep.subr.mxu0 0.0
    %6842 = vmatpush2.msra.mxu0 0.0
    %6843 = vmatprep.subr.mxu0 0.0
    %6844 = vmatpush2.msra.mxu0 0.0
    %6845 = vmatprep.subr.mxu0 0.0
    %6846 = vmatpush2.msra.mxu0 0.0
    %6847 = vmatprep.subr.mxu0 0.0
    %6848 = vmatpush2.msra.mxu0 0.0
    %6849 = vmatprep.subr.mxu0 0.0
    %6850 = vmatpush2.msra.mxu0 0.0
    %6851 = vmatprep.subr.mxu0 0.0
    %6852 = vmatpush2.msra.mxu0 0.0
    %6853 = vmatprep.subr.mxu0 0.0
    %6854 = vmatpush2.msra.mxu0 0.0
    %6855 = vmatprep.subr.mxu0 0.0
    %6856 = vmatpush2.msra.mxu0 0.0
    %6857 = vmatprep.subr.mxu0 0.0
    %6858 = vmatpush2.msra.mxu0 0.0
    %6859 = vmatprep.subr.mxu0 0.0
    %6860 = vmatpush2.msra.mxu0 0.0
    %6861 = vmatprep.subr.mxu0 0.0
    %6862 = vmatpush2.msra.mxu0 0.0
    %6863 = vmatprep.subr.mxu0 0.0
    %6864 = vmatpush2.msra.mxu0 0.0
    %6865 = vmatprep.subr.mxu0 0.0
    %6866 = vmatpush2.msra.mxu0 0.0
    %6867 = vmatprep.subr.mxu0 0.0
    %6868 = vmatpush2.msra.mxu0 0.0
    %6869 = vmatprep.subr.mxu0 0.0
    %6870 = vmatpush2.msra.mxu0 0.0
    %6871 = vmatprep.mubr.f32.mxu0 0.0
    %6872 = vmatmul.mubr.f32.gmra.mxu0 %v6783
    %v6873 = vpop.f32.mrf.mxu0
    %v6874 = vadd.f32 %v6805, %v6873
    %v6875 = vpop.f32.mrf.mxu0
    %6876 = vdwg.mxu0
    %vm6877 = vcmask 64512
    %6878 = vst.msk [vmem:[#allocation7] sm:$0xff] %vm6877, %v6874
    // Predicated region
    $region42: #{tpu_custom_call.1} parent=1 // pred_check
      _
    $region43: #{tpu_custom_call.1} parent=1 // pred_check_branch
      %6880 = sbr.rel (0) target = $region45
    $region44: #{tpu_custom_call.1} parent=1 // pred_region
      %s6882 = ssub.s32 128, 128
      %6883 = vsyncadd [#allocation4], %s6882
      %s6885 = sshll.u32 [#allocation7], 4
      %s6886 = int_to_ptr.vmem [resolvable:$true] %s6885
      %6888 = dma.vmem_to_hbm [thread:$0]  %s6886, 128, %s8, [#allocation4]
    $region45: #{tpu_custom_call.1} parent=1 // pred_fallthru
      _
    // Predicated region
    $region46: #{tpu_custom_call.1} parent=1 // pred_check
      _
    $region47: #{tpu_custom_call.1} parent=1 // pred_check_branch
      %6890 = sbr.rel (0) target = $region49
    $region48: #{tpu_custom_call.1} parent=1 // pred_region
      %6891 = dma.done [#allocation4], 128
    $region49: #{tpu_custom_call.1} parent=1 // pred_fallthru
      _
    %6892 = vsyncpa [#allocation3], 1
    %6893 = vsyncpa [#allocation6], 1
    %6894 = vsyncpa [#allocation4], 1

</llo_original>
